<compile_context>
chip_gen: v7x
topology: tpu7x:2x2x1
jax: 0.10.0
libtpu: 0.0.40
codegen_flags: <defaults>
</compile_context>

<pallas_src>
import functools

import numpy as np

import jax
import jax.numpy as jnp
from jax.experimental import pallas as pl
from jax.experimental.pallas import tpu as pltpu


# ----------------------------------------------------------------------------
# Fused kernel: Bt batch elements per grid step, all heads resident in VMEM.
# ----------------------------------------------------------------------------
def _attention_dec_kernel(tq_ref, x_ref, wq_ref, bq_ref, wkv_ref, bkv_ref,
                          wproj_ref, bproj_ref, o_ref, *, num_heads, scale):
    f32 = jnp.float32
    bf16 = jnp.bfloat16

    Bt, N, C = x_ref.shape
    nh = num_heads
    hd = C // nh
    M = Bt * N

    # Row-flatten the batch block so the linears present M = Bt*N rows to the MXU.
    tq = tq_ref[...].reshape(M, C).astype(bf16)      # already token-gathered (host)
    xb = x_ref[...].reshape(M, C).astype(bf16)

    # q = gathered_task_q @ Wq + bq, then fold the softmax scale (scalar, f32).
    q_lin = jnp.dot(tq, wq_ref[...], preferred_element_type=f32) + bq_ref[...]
    q_lin = q_lin * scale                                          # (M, C) f32
    # kv = x @ Wkv + bkv  -> (M, 2C) = [k | v]
    kv = jnp.dot(xb, wkv_ref[...], preferred_element_type=f32) + bkv_ref[...]

    q_all = q_lin.astype(bf16).reshape(Bt, N, nh, hd)
    k_all = kv[:, :C].astype(bf16).reshape(Bt, N, nh, hd)
    v_all = kv[:, C:].astype(bf16).reshape(Bt, N, nh, hd)

    # TODO(synk): for very large N (N = H*W in the thousands) the (nh, N, N)
    # f32 score tensor should be replaced by a KV-blocked online softmax
    # (flash pattern) to stay inside v7x's 64 MiB VMEM.
    outs = []
    for b in range(Bt):                       # static, small (Bt is 1-2 here)
        # One up-front head-major relayout instead of per-head width-8 slices.
        q3 = pltpu.einshape("nhd->hnd", q_all[b])                  # (nh, N, hd)
        k3 = pltpu.einshape("nhd->hnd", k_all[b])                  # (nh, N, hd)
        v3 = pltpu.einshape("nhd->hnd", v_all[b])                  # (nh, N, hd)

        # Batched-over-heads scores and AV products on the MXU.
        s = jnp.einsum("hqd,hkd->hqk", q3, k3,
                       preferred_element_type=f32)                 # (nh, N, N) f32

        # softmax along last dim (f32); EUP approx reciprocal for the denom.
        m = jnp.max(s, axis=-1, keepdims=True)
        p = jnp.exp(s - m)
        denom = jnp.sum(p, axis=-1, keepdims=True)
        a = (p * pl.reciprocal(denom, approx=True)).astype(bf16)   # (nh, N, N)

        o3 = jnp.einsum("hqk,hkd->hqd", a, v3,
                        preferred_element_type=f32)                # (nh, N, hd) f32

        # Back to token-major, lane-dense (N, C) bf16 for the projection.
        ob = pltpu.einshape("hnd->nhd", o3.astype(bf16)).reshape(N, C)
        outs.append(ob)

    o_cat = outs[0] if Bt == 1 else jnp.concatenate(outs, axis=0)  # (M, C) bf16

    # Head-concat + output projection as ONE K=C matmul (attn/proj dropout p=0).
    out = jnp.dot(o_cat, wproj_ref[...], preferred_element_type=f32) + bproj_ref[...]
    o_ref[...] = out.reshape(Bt, N, C).astype(o_ref.dtype)


# ----------------------------------------------------------------------------
# Batch-tile choice: batch rows per step for MXU efficiency, but keep >=2 grid
# steps when B > 1 so both v7x TensorCores get work; Bt must divide B exactly.
# ----------------------------------------------------------------------------
def _choose_bt(B, N):
    row_budget = 1024                      # (Bt*N, *) activation slabs stay small
    bt = max(1, min(B, row_budget // max(N, 1)))
    if B > 1:
        bt = min(bt, -(-B // 2))           # >= 2 grid steps (one per v7x TC)
    while B % bt:                          # exact divisor -> no padded blocks
        bt -= 1
    return bt


# ----------------------------------------------------------------------------
# Parameter construction (deterministic, mirrors module __init__ shapes)
# ----------------------------------------------------------------------------
def init_params(key, dim, num_heads, qkv_bias=False, qk_scale=None):
    head_dim = dim // num_heads
    k_q, k_kv, k_proj, k_tq = jax.random.split(key, 4)
    return {
        "dim": dim,
        "num_heads": num_heads,
        "scale": qk_scale if qk_scale is not None else head_dim ** (-0.5),
        # nn.Linear weights stored transposed (in, out), trunc_normal std=0.02
        "wq": 0.02 * jax.random.normal(k_q, (dim, dim), jnp.float32),
        "bq": jnp.zeros((1, dim), jnp.float32),            # qkv_bias=False -> zero
        "wkv": 0.02 * jax.random.normal(k_kv, (dim, 2 * dim), jnp.float32),
        "bkv": jnp.zeros((1, 2 * dim), jnp.float32),       # qkv_bias=False -> zero
        "wproj": 0.02 * jax.random.normal(k_proj, (dim, dim), jnp.float32),
        "bproj": jnp.zeros((1, dim), jnp.float32),         # init constant 0
        # task_query = nn.Parameter(torch.randn(1, 48, dim))
        "task_query": jax.random.normal(k_tq, (1, 48, dim), jnp.float32),
    }


# ----------------------------------------------------------------------------
# Forward pass: single fused pallas_call, grid=(B//Bt,).
# ----------------------------------------------------------------------------
def attention_dec_forward(params, x, H, W, task_q):
    B, N, C = x.shape
    num_heads = params["num_heads"]
    scale = float(params["scale"])
    tq_param = params["task_query"]                         # (1, 48, C)

    if task_q is None:
        # TODO(synk): original PyTorch errors for B>1 on this path; we broadcast.
        task_q_full = jnp.broadcast_to(tq_param, (B,) + tq_param.shape[1:])
    else:
        self_tq = (jnp.broadcast_to(tq_param, (B,) + tq_param.shape[1:])
                   if B > 1 else tq_param)
        task_q_full = jnp.concatenate([task_q, self_tq], axis=1)   # (B, Tq, C)
    Tq = task_q_full.shape[1]

    # F.interpolate(q, size=(N, hd), mode='nearest') is identity along head_dim
    # and a static row gather idx = floor(i*Tq/N) along tokens.  The gather
    # commutes with the row-wise q linear, so do it here (host-side, static
    # indices) and feed already-(B, N, C) queries to the kernel.
    idx = jnp.asarray((np.arange(N) * Tq) // N, dtype=jnp.int32)
    tq_gathered = jnp.take(task_q_full, idx, axis=1)        # (B, N, C)

    bf16 = jnp.bfloat16
    wq = params["wq"].astype(bf16)
    wkv = params["wkv"].astype(bf16)
    wproj = params["wproj"].astype(bf16)

    Bt = _choose_bt(B, N)
    grid = (B // Bt,)

    kern = functools.partial(_attention_dec_kernel, num_heads=num_heads,
                             scale=scale)
    out = pl.pallas_call(
        kern,
        out_shape=jax.ShapeDtypeStruct((B, N, C), x.dtype),
        grid=grid,
        in_specs=[
            pl.BlockSpec((Bt, N, C), lambda g: (g, 0, 0)),      # gathered task_q
            pl.BlockSpec((Bt, N, C), lambda g: (g, 0, 0)),      # x
            pl.BlockSpec((C, C), lambda g: (0, 0)),             # wq   (bf16)
            pl.BlockSpec((1, C), lambda g: (0, 0)),             # bq
            pl.BlockSpec((C, 2 * C), lambda g: (0, 0)),         # wkv  (bf16)
            pl.BlockSpec((1, 2 * C), lambda g: (0, 0)),         # bkv
            pl.BlockSpec((C, C), lambda g: (0, 0)),             # wproj (bf16)
            pl.BlockSpec((1, C), lambda g: (0, 0)),             # bproj
        ],
        out_specs=pl.BlockSpec((Bt, N, C), lambda g: (g, 0, 0)),
        compiler_params=pltpu.CompilerParams(
            dimension_semantics=("parallel",),                  # batch blocks -> 2 TCs on v7x
        ),
    )(tq_gathered, x, wq, params["bq"], wkv, params["bkv"],
      wproj, params["bproj"])
    return out


# ----------------------------------------------------------------------------
# Pure-JAX reference (mirrors the PyTorch module) for a correctness check.
# ----------------------------------------------------------------------------
def _reference_forward(params, x, H, W, task_q):
    B, N, C = x.shape
    nh = params["num_heads"]
    hd = C // nh
    scale = params["scale"]
    tqp = params["task_query"]
    if task_q is None:
        tq = jnp.broadcast_to(tqp, (B,) + tqp.shape[1:])
    else:
        stq = jnp.broadcast_to(tqp, (B,) + tqp.shape[1:]) if B > 1 else tqp
        tq = jnp.concatenate([task_q, stq], axis=1)
    Tq = tq.shape[1]
    q = (tq.reshape(B * Tq, C) @ params["wq"] + params["bq"])
    q = q.reshape(B, Tq, nh, hd).transpose(0, 2, 1, 3)                 # (B,h,Tq,hd)
    kv = (x.reshape(B * N, C) @ params["wkv"] + params["bkv"])
    kv = kv.reshape(B, N, 2, nh, hd).transpose(2, 0, 3, 1, 4)
    k, v = kv[0], kv[1]                                                # (B,h,N,hd)
    idx = (jnp.arange(N) * Tq) // N
    q = jnp.take(q, idx, axis=2)                                       # (B,h,N,hd)
    s = jnp.einsum("bhqd,bhkd->bhqk", q, k) * scale
    a = jax.nn.softmax(s, axis=-1)
    o = jnp.einsum("bhqk,bhkd->bhqd", a, v).transpose(0, 2, 1, 3).reshape(B, N, C)
    return o @ params["wproj"] + params["bproj"]


# ----------------------------------------------------------------------------
if __name__ == "__main__":
    key = jax.random.PRNGKey(0)
    k_params, k_x, k_tq = jax.random.split(key, 3)

    B, H, W, C, num_heads = 2, 8, 8, 64, 8
    N = H * W

    params = init_params(k_params, C, num_heads)
    x = jax.random.normal(k_x, (B, N, C), jnp.float32)
    task_q_in = jax.random.normal(k_tq, (B, 16, C), jnp.float32)

    out = attention_dec_forward(params, x, H, W, task_q_in)
    out = jax.block_until_ready(out)
    assert out.shape == (B, N, C), out.shape
    assert bool(jnp.all(jnp.isfinite(out)))

    # correctness vs pure-JAX reference (loose tol: bf16 MXU + approx reciprocal)
    ref = _reference_forward(params, x, H, W, task_q_in)
    err = float(jnp.max(jnp.abs(out - ref)))
    tol = 5e-3 + 5e-2 * float(jnp.max(jnp.abs(ref)))
    assert err < tol, (err, tol)

    print("KERNEL_OK")
</pallas_src>

<mosaic_0001>
module attributes {stable_mosaic.version = 11 : i64} {
  func.func @_attention_dec_kernel(%arg0: i32, %arg1: memref<1x64x64xf32, #tpu.memory_space<vmem>>, %arg2: memref<1x64x64xf32, #tpu.memory_space<vmem>>, %arg3: memref<64x64xbf16, #tpu.memory_space<vmem>>, %arg4: memref<1x64xf32, #tpu.memory_space<vmem>>, %arg5: memref<64x128xbf16, #tpu.memory_space<vmem>>, %arg6: memref<1x128xf32, #tpu.memory_space<vmem>>, %arg7: memref<64x64xbf16, #tpu.memory_space<vmem>>, %arg8: memref<1x64xf32, #tpu.memory_space<vmem>>, %arg9: memref<1x64x64xf32, #tpu.memory_space<vmem>>) attributes {dimension_semantics = [#tpu.dimension_semantics<parallel>], iteration_bounds = array<i64: 2>, scalar_prefetch = 0 : i64, scratch_operands = 0 : i64, tpu.core_type = #tpu.core_type<tc>, window_params = [{transform_indices = @transform_0, window_bounds = array<i64: 1, 64, 64>}, {transform_indices = @transform_1, window_bounds = array<i64: 1, 64, 64>}, {pipeline_mode = #tpu.pipeline_mode<synchronous>, transform_indices = @transform_2, window_bounds = array<i64: 64, 64>}, {pipeline_mode = #tpu.pipeline_mode<synchronous>, transform_indices = @transform_3, window_bounds = array<i64: 1, 64>}, {pipeline_mode = #tpu.pipeline_mode<synchronous>, transform_indices = @transform_4, window_bounds = array<i64: 64, 128>}, {pipeline_mode = #tpu.pipeline_mode<synchronous>, transform_indices = @transform_5, window_bounds = array<i64: 1, 128>}, {pipeline_mode = #tpu.pipeline_mode<synchronous>, transform_indices = @transform_6, window_bounds = array<i64: 64, 64>}, {pipeline_mode = #tpu.pipeline_mode<synchronous>, transform_indices = @transform_7, window_bounds = array<i64: 1, 64>}, {transform_indices = @transform_8, window_bounds = array<i64: 1, 64, 64>}]} {
    %c0 = arith.constant 0 : index
    %c0_0 = arith.constant 0 : index
    %c0_1 = arith.constant 0 : index
    %0 = vector.load %arg1[%c0, %c0_0, %c0_1] : memref<1x64x64xf32, #tpu.memory_space<vmem>>, vector<1x64x64xf32>
    %1 = vector.shape_cast %0 : vector<1x64x64xf32> to vector<64x64xf32>
    %2 = arith.truncf %1 : vector<64x64xf32> to vector<64x64xbf16>
    %c0_2 = arith.constant 0 : index
    %c0_3 = arith.constant 0 : index
    %c0_4 = arith.constant 0 : index
    %3 = vector.load %arg2[%c0_2, %c0_3, %c0_4] : memref<1x64x64xf32, #tpu.memory_space<vmem>>, vector<1x64x64xf32>
    %4 = vector.shape_cast %3 : vector<1x64x64xf32> to vector<64x64xf32>
    %5 = arith.truncf %4 : vector<64x64xf32> to vector<64x64xbf16>
    %c0_5 = arith.constant 0 : index
    %c0_6 = arith.constant 0 : index
    %6 = vector.load %arg3[%c0_5, %c0_6] : memref<64x64xbf16, #tpu.memory_space<vmem>>, vector<64x64xbf16>
    %cst = arith.constant dense<0.000000e+00> : vector<64x64xf32>
    %7 = tpu.matmul %2, %6, %cst {dimension_numbers = #tpu.dot_dimension_numbers<[1], [0], [0], [1], [0, 0, 1, 1], [], []>} : vector<64x64xbf16>, vector<64x64xbf16>, vector<64x64xf32> -> vector<64x64xf32>
    %c0_7 = arith.constant 0 : index
    %c0_8 = arith.constant 0 : index
    %8 = vector.load %arg4[%c0_7, %c0_8] : memref<1x64xf32, #tpu.memory_space<vmem>>, vector<1x64xf32>
    %9 = vector.broadcast %8 : vector<1x64xf32> to vector<64x64xf32>
    %10 = arith.addf %7, %9 : vector<64x64xf32>
    %cst_9 = arith.constant 0.353553385 : f32
    %11 = vector.broadcast %cst_9 : f32 to vector<64x64xf32>
    %12 = arith.mulf %10, %11 : vector<64x64xf32>
    %c0_10 = arith.constant 0 : index
    %c0_11 = arith.constant 0 : index
    %13 = vector.load %arg5[%c0_10, %c0_11] : memref<64x128xbf16, #tpu.memory_space<vmem>>, vector<64x128xbf16>
    %cst_12 = arith.constant dense<0.000000e+00> : vector<64x128xf32>
    %14 = tpu.matmul %5, %13, %cst_12 {dimension_numbers = #tpu.dot_dimension_numbers<[1], [0], [0], [1], [0, 0, 1, 1], [], []>} : vector<64x64xbf16>, vector<64x128xbf16>, vector<64x128xf32> -> vector<64x128xf32>
    %c0_13 = arith.constant 0 : index
    %c0_14 = arith.constant 0 : index
    %15 = vector.load %arg6[%c0_13, %c0_14] : memref<1x128xf32, #tpu.memory_space<vmem>>, vector<1x128xf32>
    %16 = vector.broadcast %15 : vector<1x128xf32> to vector<64x128xf32>
    %17 = arith.addf %14, %16 : vector<64x128xf32>
    %18 = arith.truncf %12 : vector<64x64xf32> to vector<64x64xbf16>
    %19 = vector.shape_cast %18 : vector<64x64xbf16> to vector<1x64x8x8xbf16>
    %20 = vector.extract_strided_slice %17 {offsets = [0, 0], sizes = [64, 64], strides = [1, 1]} : vector<64x128xf32> to vector<64x64xf32>
    %21 = arith.truncf %20 : vector<64x64xf32> to vector<64x64xbf16>
    %22 = vector.shape_cast %21 : vector<64x64xbf16> to vector<1x64x8x8xbf16>
    %23 = vector.extract_strided_slice %17 {offsets = [0, 64], sizes = [64, 64], strides = [1, 1]} : vector<64x128xf32> to vector<64x64xf32>
    %24 = arith.truncf %23 : vector<64x64xf32> to vector<64x64xbf16>
    %25 = vector.shape_cast %24 : vector<64x64xbf16> to vector<1x64x8x8xbf16>
    %26 = vector.shape_cast %19 : vector<1x64x8x8xbf16> to vector<64x8x8xbf16>
    %27 = tpu.transpose %26, [1, 0, 2] : vector<64x8x8xbf16> -> vector<8x64x8xbf16>
    %28 = vector.shape_cast %22 : vector<1x64x8x8xbf16> to vector<64x8x8xbf16>
    %29 = tpu.transpose %28, [1, 0, 2] : vector<64x8x8xbf16> -> vector<8x64x8xbf16>
    %30 = vector.shape_cast %25 : vector<1x64x8x8xbf16> to vector<64x8x8xbf16>
    %31 = tpu.transpose %30, [1, 0, 2] : vector<64x8x8xbf16> -> vector<8x64x8xbf16>
    "tpu.trace_start"() <{level = 10 : i32, message = "hqd,hkd->hqk"}> : () -> ()
    %cst_15 = arith.constant dense<0.000000e+00> : vector<8x64x64xf32>
    %32 = tpu.matmul %27, %29, %cst_15 {dimension_numbers = #tpu.dot_dimension_numbers<[2], [2], [1], [1], [0, 0, 0, 1, 1, 1], [0], [0]>} : vector<8x64x8xbf16>, vector<8x64x8xbf16>, vector<8x64x64xf32> -> vector<8x64x64xf32>
    "tpu.trace_stop"() : () -> ()
    %cst_16 = arith.constant dense<0xFF800000> : vector<8x64xf32>
    %33 = vector.multi_reduction <maximumf>, %32, %cst_16 [2] : vector<8x64x64xf32> to vector<8x64xf32>
    %34 = vector.shape_cast %33 : vector<8x64xf32> to vector<8x64x1xf32>
    %35 = vector.broadcast %34 : vector<8x64x1xf32> to vector<8x64x64xf32>
    %36 = arith.subf %32, %35 : vector<8x64x64xf32>
    %37 = math.exp %36 : vector<8x64x64xf32>
    %cst_17 = arith.constant dense<0.000000e+00> : vector<8x64xf32>
    %38 = vector.multi_reduction <add>, %37, %cst_17 [2] : vector<8x64x64xf32> to vector<8x64xf32>
    %39 = vector.shape_cast %38 : vector<8x64xf32> to vector<8x64x1xf32>
    %40 = tpu.reciprocal %39 {approx = true} : vector<8x64x1xf32> -> vector<8x64x1xf32>
    %41 = vector.broadcast %40 : vector<8x64x1xf32> to vector<8x64x64xf32>
    %42 = arith.mulf %37, %41 : vector<8x64x64xf32>
    %43 = arith.truncf %42 : vector<8x64x64xf32> to vector<8x64x64xbf16>
    "tpu.trace_start"() <{level = 10 : i32, message = "hqk,hkd->hqd"}> : () -> ()
    %cst_18 = arith.constant dense<0.000000e+00> : vector<8x64x8xf32>
    %44 = tpu.matmul %43, %31, %cst_18 {dimension_numbers = #tpu.dot_dimension_numbers<[2], [1], [1], [2], [0, 0, 0, 1, 1, 2], [0], [0]>} : vector<8x64x64xbf16>, vector<8x64x8xbf16>, vector<8x64x8xf32> -> vector<8x64x8xf32>
    "tpu.trace_stop"() : () -> ()
    %45 = arith.truncf %44 : vector<8x64x8xf32> to vector<8x64x8xbf16>
    %46 = tpu.transpose %45, [1, 0, 2] : vector<8x64x8xbf16> -> vector<64x8x8xbf16>
    %47 = vector.shape_cast %46 : vector<64x8x8xbf16> to vector<64x64xbf16>
    %c0_19 = arith.constant 0 : index
    %c0_20 = arith.constant 0 : index
    %48 = vector.load %arg7[%c0_19, %c0_20] : memref<64x64xbf16, #tpu.memory_space<vmem>>, vector<64x64xbf16>
    %cst_21 = arith.constant dense<0.000000e+00> : vector<64x64xf32>
    %49 = tpu.matmul %47, %48, %cst_21 {dimension_numbers = #tpu.dot_dimension_numbers<[1], [0], [0], [1], [0, 0, 1, 1], [], []>} : vector<64x64xbf16>, vector<64x64xbf16>, vector<64x64xf32> -> vector<64x64xf32>
    %c0_22 = arith.constant 0 : index
    %c0_23 = arith.constant 0 : index
    %50 = vector.load %arg8[%c0_22, %c0_23] : memref<1x64xf32, #tpu.memory_space<vmem>>, vector<1x64xf32>
    %51 = vector.broadcast %50 : vector<1x64xf32> to vector<64x64xf32>
    %52 = arith.addf %49, %51 : vector<64x64xf32>
    %53 = vector.shape_cast %52 : vector<64x64xf32> to vector<1x64x64xf32>
    %c0_24 = arith.constant 0 : index
    %c0_25 = arith.constant 0 : index
    %c0_26 = arith.constant 0 : index
    %54 = vector.load %arg9[%c0_24, %c0_25, %c0_26] : memref<1x64x64xf32, #tpu.memory_space<vmem>>, vector<1x64x64xf32>
    tpu.vector_store %arg9[%c0_24, %c0_25, %c0_26], %53 {strides = array<i32>} : memref<1x64x64xf32, #tpu.memory_space<vmem>>, vector<1x64x64xf32>,
    return
  }
  func.func @transform_0(%arg0: i32) -> (i32, i32, i32) {
    %c0_i32 = arith.constant 0 : i32
    %c0_i32_0 = arith.constant 0 : i32
    %c0_i32_1 = arith.constant 0 : i32
    return %arg0, %c0_i32, %c0_i32_0 : i32, i32, i32
  }
  func.func @transform_1(%arg0: i32) -> (i32, i32, i32) {
    %c0_i32 = arith.constant 0 : i32
    %c0_i32_0 = arith.constant 0 : i32
    %c0_i32_1 = arith.constant 0 : i32
    return %arg0, %c0_i32, %c0_i32_0 : i32, i32, i32
  }
  func.func @transform_2(%arg0: i32) -> (i32, i32) {
    %c0_i32 = arith.constant 0 : i32
    %c0_i32_0 = arith.constant 0 : i32
    %c0_i32_1 = arith.constant 0 : i32
    return %c0_i32, %c0_i32_0 : i32, i32
  }
  func.func @transform_3(%arg0: i32) -> (i32, i32) {
    %c0_i32 = arith.constant 0 : i32
    %c0_i32_0 = arith.constant 0 : i32
    %c0_i32_1 = arith.constant 0 : i32
    return %c0_i32, %c0_i32_0 : i32, i32
  }
  func.func @transform_4(%arg0: i32) -> (i32, i32) {
    %c0_i32 = arith.constant 0 : i32
    %c0_i32_0 = arith.constant 0 : i32
    %c0_i32_1 = arith.constant 0 : i32
    return %c0_i32, %c0_i32_0 : i32, i32
  }
  func.func @transform_5(%arg0: i32) -> (i32, i32) {
    %c0_i32 = arith.constant 0 : i32
    %c0_i32_0 = arith.constant 0 : i32
    %c0_i32_1 = arith.constant 0 : i32
    return %c0_i32, %c0_i32_0 : i32, i32
  }
  func.func @transform_6(%arg0: i32) -> (i32, i32) {
    %c0_i32 = arith.constant 0 : i32
    %c0_i32_0 = arith.constant 0 : i32
    %c0_i32_1 = arith.constant 0 : i32
    return %c0_i32, %c0_i32_0 : i32, i32
  }
  func.func @transform_7(%arg0: i32) -> (i32, i32) {
    %c0_i32 = arith.constant 0 : i32
    %c0_i32_0 = arith.constant 0 : i32
    %c0_i32_1 = arith.constant 0 : i32
    return %c0_i32, %c0_i32_0 : i32, i32
  }
  func.func @transform_8(%arg0: i32) -> (i32, i32, i32) {
    %c0_i32 = arith.constant 0 : i32
    %c0_i32_0 = arith.constant 0 : i32
    %c0_i32_1 = arith.constant 0 : i32
    return %arg0, %c0_i32, %c0_i32_0 : i32, i32, i32
  }
}

</mosaic_0001>

<llo_original>
// kernel: tpu_custom_call.1
$region0: #{tpu_custom_call.1}
  #allocation0 [shape = 'u32[]', space=smem, size = 0x4, offset = 0x4, fixed_abs, tag = 'smem constant byte address 0x4 - core index']
  #allocation1 [shape = 'u32[144,128]{1,0:T(1,128)}', space=vmem, size = 0x12000, scoped, tag = 'internal scratch']
  %s0 = inlined_call_operand.hbm [shape: f32[2,64,64], index: 0, kind: input, shape index: {}]
  %s1 = inlined_call_operand.hbm [shape: f32[2,64,64], index: 1, kind: input, shape index: {}]
  %s2 = inlined_call_operand.hbm [shape: bf16[64,64], index: 2, kind: input, shape index: {}]
  %s3 = inlined_call_operand.vmem [shape: f32[1,64], index: 3, kind: input, shape index: {}]
  %s4 = inlined_call_operand.hbm [shape: bf16[64,128], index: 4, kind: input, shape index: {}]
  %s5 = inlined_call_operand.vmem [shape: f32[1,128], index: 5, kind: input, shape index: {}]
  %s6 = inlined_call_operand.hbm [shape: bf16[64,64], index: 6, kind: input, shape index: {}]
  %s7 = inlined_call_operand.vmem [shape: f32[1,64], index: 7, kind: input, shape index: {}]
  %s8 = inlined_call_operand.hbm [shape: f32[2,64,64], index: 8, kind: output, shape index: {}]
  %s9 = sld [smem:[#allocation0]]
  $region85: #{tpu_custom_call.1} parent=0
    _
  %s11 = ssub.s32 1, %s9
  %s12 = scalar_select 0, %s11, %s9
  $region1: #{tpu_custom_call.1} parent=0
    #allocation2 [shape = 'u8[65536]{0}', space=vmem, size = 0x10000, scoped, tag = 'input window, operand 0']
    #allocation3 [shape = 's32[2]{0}', space=sflag, size = 0x8, scoped, tag = 'scoped memory for tpu_custom_call.1']
    #allocation4 [shape = 's32[2]{0}', space=sflag, size = 0x8, scoped, tag = 'scoped memory for tpu_custom_call.1']
    #allocation5 [shape = 'u8[65536]{0}', space=vmem, size = 0x10000, scoped, tag = 'input window, operand 1']
    #allocation6 [shape = 's32[2]{0}', space=sflag, size = 0x8, scoped, tag = 'scoped memory for tpu_custom_call.1']
    #allocation7 [shape = 'u8[16384]{0}', space=vmem, size = 0x4000, scoped, tag = 'input window, operand 2, single buffered']
    #allocation8 [shape = 'u8[16384]{0}', space=vmem, size = 0x4000, scoped, tag = 'input window, operand 4, single buffered']
    #allocation9 [shape = 's32[1]{0}', space=sflag, size = 0x4, scoped, tag = 'scoped memory for tpu_custom_call.1']
    #allocation10 [shape = 'u8[16384]{0}', space=vmem, size = 0x4000, scoped, tag = 'input window, operand 6, single buffered']
    #allocation11 [shape = 'u8[65536]{0}', space=vmem, size = 0x10000, scoped, tag = 'output window, operand 0']
    %13 = vsyncpa [#allocation3], 0
    %s14 = scalar_lea.sflag [#allocation3], 1
    %15 = vsyncpa %s14, 0
    %16 = vsyncpa [#allocation6], 0
    %s17 = scalar_lea.sflag [#allocation6], 1
    %18 = vsyncpa %s17, 0
    %19 = vsyncpa [#allocation9], 0
    %20 = vsyncpa [#allocation4], 0
    %s21 = scalar_lea.sflag [#allocation4], 1
    %22 = vsyncpa %s21, 0
    loop: start=0, step=1, limit=4
    $region2: #{tpu_custom_call.1} parent=1 // loop_pre_header
      _
    $region3: #{tpu_custom_call.1} parent=1 // loop_header
      %s24 = sphi 0, %s28
      %p25 = scmp.ge.s32.totalorder %s24, 4
      %s34 = sphi 0, %s36
      %s37 = sphi 0, %s34
      %s38 = sphi 0, %s37
      %s54 = sphi 0, %s38
      %s60 = sphi 0, %s62
      %s63 = sphi 0, %s60
      %s64 = sphi 0, %s63
      %s80 = sphi 0, %s64
      %s84 = sphi 0, %s84
      %s86 = sphi 0, %s84
      %s87 = sphi 0, %s86
      %s101 = sphi 0, %s87
      %s105 = sphi 0, %s105
      %s107 = sphi 0, %s105
      %s108 = sphi 0, %s107
      %s122 = sphi 0, %s108
      %s126 = sphi 0, %s126
      %s128 = sphi 0, %s126
      %s129 = sphi 0, %s128
      %s143 = sphi 0, %s129
      %s147 = sphi 0, %s147
      %s149 = sphi 0, %s147
      %s150 = sphi 0, %s149
      %s164 = sphi 0, %s150
      %s168 = sphi 0, %s168
      %s170 = sphi 0, %s168
      %s171 = sphi 0, %s170
      %s185 = sphi 0, %s171
      %s189 = sphi 0, %s189
      %s191 = sphi 0, %s189
      %s192 = sphi 0, %s191
      %s206 = sphi 0, %s192
      %s212 = sphi 0, %s214
      %s215 = sphi 0, %s212
      %s216 = sphi 0, %s215
      %s232 = sphi 0, %s216
    $region4: #{tpu_custom_call.1} parent=1 // loop_header_branch
      %27 = sbr.rel (%p25) target = $region8
    $region5: #{tpu_custom_call.1} parent=1 // loop_body
      %s29 = ssub.s32 %s24, 1
      %s30 = ssub.s32 %s24, 2
      %s31 = sadd.s32 %s24, 1
      %s32 = ssub.s32 %s24, %s31
      %p33 = scmp.eq.s32.totalorder %s32, 0
      %s35 = sadd.s32 %s34, 1
      %s36 = scalar_select %p33, %s34, %s35
      %p39 = pneg %p33
      %p40 = scmp.eq.s32.totalorder %s24, 1
      %p41 = por %p39, %p40
      %p42 = scmp.ne.s32.totalorder %s34, %s37
      %p43 = scmp.eq.s32.totalorder %s24, 0
      %p44 = por %p42, %p43
      %p45 = scmp.ne.s32.totalorder %s34, %s37
      %p46 = scmp.eq.s32.totalorder %s29, 1
      %p47 = por %p45, %p46
      %p48 = scmp.ne.s32.totalorder %s37, %s38
      %p49 = scmp.eq.s32.totalorder %s29, 0
      %p50 = por %p48, %p49
      %p51 = scmp.ne.s32.totalorder %s37, %s38
      %p52 = scmp.eq.s32.totalorder %s30, 1
      %p53 = por %p51, %p52
      %p55 = scmp.ne.s32.totalorder %s38, %s54
      %p56 = scmp.eq.s32.totalorder %s30, 0
      %p57 = por %p55, %p56
      %s58 = ssub.s32 %s24, %s31
      %p59 = scmp.eq.s32.totalorder %s58, 0
      %s61 = sadd.s32 %s60, 1
      %s62 = scalar_select %p59, %s60, %s61
      %p65 = pneg %p59
      %p66 = scmp.eq.s32.totalorder %s24, 1
      %p67 = por %p65, %p66
      %p68 = scmp.ne.s32.totalorder %s60, %s63
      %p69 = scmp.eq.s32.totalorder %s24, 0
      %p70 = por %p68, %p69
      %p71 = scmp.ne.s32.totalorder %s60, %s63
      %p72 = scmp.eq.s32.totalorder %s29, 1
      %p73 = por %p71, %p72
      %p74 = scmp.ne.s32.totalorder %s63, %s64
      %p75 = scmp.eq.s32.totalorder %s29, 0
      %p76 = por %p74, %p75
      %p77 = scmp.ne.s32.totalorder %s63, %s64
      %p78 = scmp.eq.s32.totalorder %s30, 1
      %p79 = por %p77, %p78
      %p81 = scmp.ne.s32.totalorder %s64, %s80
      %p82 = scmp.eq.s32.totalorder %s30, 0
      %p83 = por %p81, %p82
      %s85 = sadd.s32 %s84, 1
      %p88 = scmp.eq.s32.totalorder %s24, 1
      %p89 = scmp.ne.s32.totalorder %s84, %s86
      %p90 = scmp.eq.s32.totalorder %s24, 0
      %p91 = por %p89, %p90
      %p92 = scmp.ne.s32.totalorder %s84, %s86
      %p93 = scmp.eq.s32.totalorder %s29, 1
      %p94 = por %p92, %p93
      %p95 = scmp.ne.s32.totalorder %s86, %s87
      %p96 = scmp.eq.s32.totalorder %s29, 0
      %p97 = por %p95, %p96
      %p98 = scmp.ne.s32.totalorder %s86, %s87
      %p99 = scmp.eq.s32.totalorder %s30, 1
      %p100 = por %p98, %p99
      %p102 = scmp.ne.s32.totalorder %s87, %s101
      %p103 = scmp.eq.s32.totalorder %s30, 0
      %p104 = por %p102, %p103
      %s106 = sadd.s32 %s105, 1
      %p109 = scmp.eq.s32.totalorder %s24, 1
      %p110 = scmp.ne.s32.totalorder %s105, %s107
      %p111 = scmp.eq.s32.totalorder %s24, 0
      %p112 = por %p110, %p111
      %p113 = scmp.ne.s32.totalorder %s105, %s107
      %p114 = scmp.eq.s32.totalorder %s29, 1
      %p115 = por %p113, %p114
      %p116 = scmp.ne.s32.totalorder %s107, %s108
      %p117 = scmp.eq.s32.totalorder %s29, 0
      %p118 = por %p116, %p117
      %p119 = scmp.ne.s32.totalorder %s107, %s108
      %p120 = scmp.eq.s32.totalorder %s30, 1
      %p121 = por %p119, %p120
      %p123 = scmp.ne.s32.totalorder %s108, %s122
      %p124 = scmp.eq.s32.totalorder %s30, 0
      %p125 = por %p123, %p124
      %s127 = sadd.s32 %s126, 1
      %p130 = scmp.eq.s32.totalorder %s24, 1
      %p131 = scmp.ne.s32.totalorder %s126, %s128
      %p132 = scmp.eq.s32.totalorder %s24, 0
      %p133 = por %p131, %p132
      %p134 = scmp.ne.s32.totalorder %s126, %s128
      %p135 = scmp.eq.s32.totalorder %s29, 1
      %p136 = por %p134, %p135
      %p137 = scmp.ne.s32.totalorder %s128, %s129
      %p138 = scmp.eq.s32.totalorder %s29, 0
      %p139 = por %p137, %p138
      %p140 = scmp.ne.s32.totalorder %s128, %s129
      %p141 = scmp.eq.s32.totalorder %s30, 1
      %p142 = por %p140, %p141
      %p144 = scmp.ne.s32.totalorder %s129, %s143
      %p145 = scmp.eq.s32.totalorder %s30, 0
      %p146 = por %p144, %p145
      %s148 = sadd.s32 %s147, 1
      %p151 = scmp.eq.s32.totalorder %s24, 1
      %p152 = scmp.ne.s32.totalorder %s147, %s149
      %p153 = scmp.eq.s32.totalorder %s24, 0
      %p154 = por %p152, %p153
      %p155 = scmp.ne.s32.totalorder %s147, %s149
      %p156 = scmp.eq.s32.totalorder %s29, 1
      %p157 = por %p155, %p156
      %p158 = scmp.ne.s32.totalorder %s149, %s150
      %p159 = scmp.eq.s32.totalorder %s29, 0
      %p160 = por %p158, %p159
      %p161 = scmp.ne.s32.totalorder %s149, %s150
      %p162 = scmp.eq.s32.totalorder %s30, 1
      %p163 = por %p161, %p162
      %p165 = scmp.ne.s32.totalorder %s150, %s164
      %p166 = scmp.eq.s32.totalorder %s30, 0
      %p167 = por %p165, %p166
      %s169 = sadd.s32 %s168, 1
      %p172 = scmp.eq.s32.totalorder %s24, 1
      %p173 = scmp.ne.s32.totalorder %s168, %s170
      %p174 = scmp.eq.s32.totalorder %s24, 0
      %p175 = por %p173, %p174
      %p176 = scmp.ne.s32.totalorder %s168, %s170
      %p177 = scmp.eq.s32.totalorder %s29, 1
      %p178 = por %p176, %p177
      %p179 = scmp.ne.s32.totalorder %s170, %s171
      %p180 = scmp.eq.s32.totalorder %s29, 0
      %p181 = por %p179, %p180
      %p182 = scmp.ne.s32.totalorder %s170, %s171
      %p183 = scmp.eq.s32.totalorder %s30, 1
      %p184 = por %p182, %p183
      %p186 = scmp.ne.s32.totalorder %s171, %s185
      %p187 = scmp.eq.s32.totalorder %s30, 0
      %p188 = por %p186, %p187
      %s190 = sadd.s32 %s189, 1
      %p193 = scmp.eq.s32.totalorder %s24, 1
      %p194 = scmp.ne.s32.totalorder %s189, %s191
      %p195 = scmp.eq.s32.totalorder %s24, 0
      %p196 = por %p194, %p195
      %p197 = scmp.ne.s32.totalorder %s189, %s191
      %p198 = scmp.eq.s32.totalorder %s29, 1
      %p199 = por %p197, %p198
      %p200 = scmp.ne.s32.totalorder %s191, %s192
      %p201 = scmp.eq.s32.totalorder %s29, 0
      %p202 = por %p200, %p201
      %p203 = scmp.ne.s32.totalorder %s191, %s192
      %p204 = scmp.eq.s32.totalorder %s30, 1
      %p205 = por %p203, %p204
      %p207 = scmp.ne.s32.totalorder %s192, %s206
      %p208 = scmp.eq.s32.totalorder %s30, 0
      %p209 = por %p207, %p208
      %s210 = ssub.s32 %s24, %s31
      %p211 = scmp.eq.s32.totalorder %s210, 0
      %s213 = sadd.s32 %s212, 1
      %s214 = scalar_select %p211, %s212, %s213
      %p217 = pneg %p211
      %p218 = scmp.eq.s32.totalorder %s24, 1
      %p219 = por %p217, %p218
      %p220 = scmp.ne.s32.totalorder %s212, %s215
      %p221 = scmp.eq.s32.totalorder %s24, 0
      %p222 = por %p220, %p221
      %p223 = scmp.ne.s32.totalorder %s212, %s215
      %p224 = scmp.eq.s32.totalorder %s29, 1
      %p225 = por %p223, %p224
      %p226 = scmp.ne.s32.totalorder %s215, %s216
      %p227 = scmp.eq.s32.totalorder %s29, 0
      %p228 = por %p226, %p227
      %p229 = scmp.ne.s32.totalorder %s215, %s216
      %p230 = scmp.eq.s32.totalorder %s30, 1
      %p231 = por %p229, %p230
      %p233 = scmp.ne.s32.totalorder %s216, %s232
      %p234 = scmp.eq.s32.totalorder %s30, 0
      %p235 = por %p233, %p234
      %p236 = scmp.le.s32.totalorder 1, %s24
      %p237 = scmp.lt.s32.totalorder %s24, 3
      %p238 = pnand %p236, %p237
      %p239 = pneg %p238
      // Predicated region
      $region9: #{tpu_custom_call.1} parent=5 // pred_check
        _
      $region10: #{tpu_custom_call.1} parent=5 // pred_check_branch
        %241 = sbr.rel (%p238) target = $region12
      $region11: #{tpu_custom_call.1} parent=5 // pred_region
        %s242 = ssub.s32 %s24, 1
        // Predicated region
        $region13: #{tpu_custom_call.1} parent=11 // pred_check
          %p243 = pneg %p97
        $region14: #{tpu_custom_call.1} parent=11 // pred_check_branch
          %245 = sbr.rel (%p243) target = $region16
        $region15: #{tpu_custom_call.1} parent=11 // pred_region
          %s247 = ssub.s32 512, 512
          %248 = vsyncadd [#allocation6], %s247
          %s249 = sshll.u32 [#allocation7], 4
          %s250 = int_to_ptr.vmem [resolvable:$true] %s249
          %255 = dma.hbm_to_vmem [thread:$0]  %s2, 512, %s250, [#allocation6], 64, 64, 4
        $region16: #{tpu_custom_call.1} parent=11 // pred_fallthru
          _
        // Predicated region
        $region17: #{tpu_custom_call.1} parent=11 // pred_check
          %p256 = pneg %p118
        $region18: #{tpu_custom_call.1} parent=11 // pred_check_branch
          %258 = sbr.rel (%p256) target = $region20
        $region19: #{tpu_custom_call.1} parent=11 // pred_region
          _
        $region20: #{tpu_custom_call.1} parent=11 // pred_fallthru
          _
        // Predicated region
        $region21: #{tpu_custom_call.1} parent=11 // pred_check
          %p259 = pneg %p139
        $region22: #{tpu_custom_call.1} parent=11 // pred_check_branch
          %261 = sbr.rel (%p259) target = $region24
        $region23: #{tpu_custom_call.1} parent=11 // pred_region
          %s263 = ssub.s32 512, 512
          %264 = vsyncadd [#allocation9], %s263
          %s265 = sshll.u32 [#allocation8], 4
          %s266 = int_to_ptr.vmem [resolvable:$true] %s265
          %271 = dma.hbm_to_vmem [thread:$0]  %s4, 512, %s266, [#allocation9], 64, 64, 4
        $region24: #{tpu_custom_call.1} parent=11 // pred_fallthru
          _
        // Predicated region
        $region25: #{tpu_custom_call.1} parent=11 // pred_check
          %p272 = pneg %p160
        $region26: #{tpu_custom_call.1} parent=11 // pred_check_branch
          %274 = sbr.rel (%p272) target = $region28
        $region27: #{tpu_custom_call.1} parent=11 // pred_region
          _
        $region28: #{tpu_custom_call.1} parent=11 // pred_fallthru
          _
        // Predicated region
        $region29: #{tpu_custom_call.1} parent=11 // pred_check
          %p275 = pneg %p181
        $region30: #{tpu_custom_call.1} parent=11 // pred_check_branch
          %277 = sbr.rel (%p275) target = $region32
        $region31: #{tpu_custom_call.1} parent=11 // pred_region
          %s279 = ssub.s32 512, 512
          %280 = vsyncadd [#allocation9], %s279
          %s281 = sshll.u32 [#allocation10], 4
          %s282 = int_to_ptr.vmem [resolvable:$true] %s281
          %287 = dma.hbm_to_vmem [thread:$0]  %s6, 512, %s282, [#allocation9], 64, 64, 4
        $region32: #{tpu_custom_call.1} parent=11 // pred_fallthru
          _
        // Predicated region
        $region33: #{tpu_custom_call.1} parent=11 // pred_check
          %p288 = pneg %p202
        $region34: #{tpu_custom_call.1} parent=11 // pred_check_branch
          %290 = sbr.rel (%p288) target = $region36
        $region35: #{tpu_custom_call.1} parent=11 // pred_region
          _
        $region36: #{tpu_custom_call.1} parent=11 // pred_fallthru
          _
      $region12: #{tpu_custom_call.1} parent=5 // pred_fallthru
        _
      %p291 = scmp.lt.s32.totalorder %s24, 2
      // Predicated region
      $region37: #{tpu_custom_call.1} parent=5 // pred_check
        %p292 = pneg %p291
      $region38: #{tpu_custom_call.1} parent=5 // pred_check_branch
        %294 = sbr.rel (%p292) target = $region40
      $region39: #{tpu_custom_call.1} parent=5 // pred_region
        // Predicated region
        $region41: #{tpu_custom_call.1} parent=39 // pred_check
          %p295 = pneg %p44
        $region42: #{tpu_custom_call.1} parent=39 // pred_check_branch
          %297 = sbr.rel (%p295) target = $region44
        $region43: #{tpu_custom_call.1} parent=39 // pred_region
          %s298 = sand.u32 %s34, 1
          %s299 = scalar_lea.sflag [#allocation3], %s298
          %s300 = sand.u32 %s34, 1
          %s301 = smul.addr %s300, 64
          %s302 = scalar_lea.vmem [#allocation2], %s301
          %s304 = ssub.s32 1024, 1024
          %305 = vsyncadd %s299, %s304
          %s306 = smul.addr %s24, 8
          %s307 = smul.addr %s306, 128
          %s308 = scalar_lea.hbm %s0, %s307
          %s309 = sshll.u32 %s302, 4
          %s310 = int_to_ptr.vmem [resolvable:$true] %s309
          %315 = dma.hbm_to_vmem [thread:$0]  %s308, 1024, %s310, %s299, 128, 128, 8
        $region44: #{tpu_custom_call.1} parent=39 // pred_fallthru
          _
        // Predicated region
        $region45: #{tpu_custom_call.1} parent=39 // pred_check
          %p316 = pneg %p70
        $region46: #{tpu_custom_call.1} parent=39 // pred_check_branch
          %318 = sbr.rel (%p316) target = $region48
        $region47: #{tpu_custom_call.1} parent=39 // pred_region
          %s319 = sand.u32 %s24, 1
          %s320 = scalar_lea.sflag [#allocation6], %s319
          %s321 = sand.u32 %s60, 1
          %s322 = smul.addr %s321, 64
          %s323 = scalar_lea.vmem [#allocation5], %s322
          %s325 = ssub.s32 1024, 1024
          %326 = vsyncadd %s320, %s325
          %s327 = smul.addr %s24, 8
          %s328 = smul.addr %s327, 128
          %s329 = scalar_lea.hbm %s1, %s328
          %s330 = sshll.u32 %s323, 4
          %s331 = int_to_ptr.vmem [resolvable:$true] %s330
          %336 = dma.hbm_to_vmem [thread:$0]  %s329, 1024, %s331, %s320, 128, 128, 8
        $region48: #{tpu_custom_call.1} parent=39 // pred_fallthru
          _
      $region40: #{tpu_custom_call.1} parent=5 // pred_fallthru
        _
      %p337 = scmp.le.s32.totalorder 1, %s24
      %p338 = scmp.lt.s32.totalorder %s24, 3
      %p339 = pnand %p337, %p338
      %p340 = pneg %p339
      // Predicated region
      $region49: #{tpu_custom_call.1} parent=5 // pred_check
        _
      $region50: #{tpu_custom_call.1} parent=5 // pred_check_branch
        %342 = sbr.rel (%p339) target = $region52
      $region51: #{tpu_custom_call.1} parent=5 // pred_region
        %s343 = ssub.s32 %s24, 1
        %s344 = sand.u32 %s37, 1
        %s345 = scalar_lea.sflag [#allocation3], %s344
        %s346 = sand.u32 %s37, 1
        %s347 = smul.addr %s346, 64
        %s348 = scalar_lea.vmem [#allocation2], %s347
        // Predicated region
        $region53: #{tpu_custom_call.1} parent=51 // pred_check
          %p349 = pneg %p50
        $region54: #{tpu_custom_call.1} parent=51 // pred_check_branch
          %351 = sbr.rel (%p349) target = $region56
        $region55: #{tpu_custom_call.1} parent=51 // pred_region
          %352 = dma.done %s345, 1024
        $region56: #{tpu_custom_call.1} parent=51 // pred_fallthru
          _
        %s353 = sand.u32 %s29, 1
        %s354 = scalar_lea.sflag [#allocation6], %s353
        %s355 = sand.u32 %s63, 1
        %s356 = smul.addr %s355, 64
        %s357 = scalar_lea.vmem [#allocation5], %s356
        // Predicated region
        $region57: #{tpu_custom_call.1} parent=51 // pred_check
          %p358 = pneg %p76
        $region58: #{tpu_custom_call.1} parent=51 // pred_check_branch
          %360 = sbr.rel (%p358) target = $region60
        $region59: #{tpu_custom_call.1} parent=51 // pred_region
          %361 = dma.done %s354, 1024
        $region60: #{tpu_custom_call.1} parent=51 // pred_fallthru
          _
        // Predicated region
        $region61: #{tpu_custom_call.1} parent=51 // pred_check
          %p362 = pneg %p97
        $region62: #{tpu_custom_call.1} parent=51 // pred_check_branch
          %364 = sbr.rel (%p362) target = $region64
        $region63: #{tpu_custom_call.1} parent=51 // pred_region
          %365 = dma.done [#allocation6], 512
        $region64: #{tpu_custom_call.1} parent=51 // pred_fallthru
          _
        // Predicated region
        $region65: #{tpu_custom_call.1} parent=51 // pred_check
          %p366 = pneg %p139
        $region66: #{tpu_custom_call.1} parent=51 // pred_check_branch
          %368 = sbr.rel (%p366) target = $region68
        $region67: #{tpu_custom_call.1} parent=51 // pred_region
          %369 = dma.done [#allocation9], 512
        $region68: #{tpu_custom_call.1} parent=51 // pred_fallthru
          _
        // Predicated region
        $region69: #{tpu_custom_call.1} parent=51 // pred_check
          %p370 = pneg %p181
        $region70: #{tpu_custom_call.1} parent=51 // pred_check_branch
          %372 = sbr.rel (%p370) target = $region72
        $region71: #{tpu_custom_call.1} parent=51 // pred_region
          %373 = dma.done [#allocation9], 512
        $region72: #{tpu_custom_call.1} parent=51 // pred_fallthru
          _
        %s374 = sand.u32 %s37, 1
        %s375 = scalar_lea.sflag [#allocation3], %s374
        %s376 = sand.u32 %s37, 1
        %s377 = smul.addr %s376, 64
        %s378 = scalar_lea.vmem [#allocation2], %s377
        %p379 = pneg %p50
        %p380 = pneg %p47
        %s381 = sand.u32 %s29, 1
        %s382 = scalar_lea.sflag [#allocation6], %s381
        %s383 = sand.u32 %s63, 1
        %s384 = smul.addr %s383, 64
        %s385 = scalar_lea.vmem [#allocation5], %s384
        %p386 = pneg %p76
        %p387 = pneg %p73
        %p388 = pneg %p97
        %p389 = pneg %p94
        %p390 = pneg %p118
        %p391 = pneg %p115
        %p392 = pneg %p139
        %p393 = pneg %p136
        %p394 = pneg %p160
        %p395 = pneg %p157
        %p396 = pneg %p181
        %p397 = pneg %p178
        %p398 = pneg %p202
        %p399 = pneg %p199
        %p400 = pneg %p228
        %p401 = pneg %p225
        %s402 = sand.u32 %s215, 1
        %s403 = scalar_lea.sflag [#allocation4], %s402
        %s404 = sand.u32 %s215, 1
        %s405 = smul.addr %s404, 64
        %s406 = scalar_lea.vmem [#allocation11], %s405
        %v408 = vld [vmem:[%s348] sm:$0xff]
        %v409 = vld [vmem:[%s348 + $0x8] sm:$0xff]
        %v410 = vld [vmem:[%s348 + $0x10] sm:$0xff]
        %v411 = vld [vmem:[%s348 + $0x18] sm:$0xff]
        %v412 = vld [vmem:[%s348 + $0x20] sm:$0xff]
        %v413 = vld [vmem:[%s348 + $0x28] sm:$0xff]
        %v414 = vld [vmem:[%s348 + $0x30] sm:$0xff]
        %v415 = vld [vmem:[%s348 + $0x38] sm:$0xff]
        %v416 = vpack.c.bf16 %v409, %v408
        %v417 = vpack.c.bf16 %v411, %v410
        %v418 = vpack.c.bf16 %v413, %v412
        %v419 = vpack.c.bf16 %v415, %v414
        %v420 = vld [vmem:[%s357] sm:$0xff]
        %v421 = vld [vmem:[%s357 + $0x8] sm:$0xff]
        %v422 = vld [vmem:[%s357 + $0x10] sm:$0xff]
        %v423 = vld [vmem:[%s357 + $0x18] sm:$0xff]
        %v424 = vld [vmem:[%s357 + $0x20] sm:$0xff]
        %v425 = vld [vmem:[%s357 + $0x28] sm:$0xff]
        %v426 = vld [vmem:[%s357 + $0x30] sm:$0xff]
        %v427 = vld [vmem:[%s357 + $0x38] sm:$0xff]
        %v428 = vpack.c.bf16 %v421, %v420
        %v429 = vpack.c.bf16 %v423, %v422
        %v430 = vpack.c.bf16 %v425, %v424
        %v431 = vpack.c.bf16 %v427, %v426
        %v432 = vld [vmem:[#allocation7] sm:$0xf]
        %v433 = vld [vmem:[#allocation7 + $0x4] sm:$0xf]
        %v434 = vld [vmem:[#allocation7 + $0x8] sm:$0xf]
        %v435 = vld [vmem:[#allocation7 + $0xc] sm:$0xf]
        %v436 = vld [vmem:[#allocation7 + $0x10] sm:$0xf]
        %v437 = vld [vmem:[#allocation7 + $0x14] sm:$0xf]
        %v438 = vld [vmem:[#allocation7 + $0x18] sm:$0xf]
        %v439 = vld [vmem:[#allocation7 + $0x1c] sm:$0xf]
        %v440 = vld [vmem:[%s3] sm:$0x1]
        %v442 = vlaneseq
        %v443 = vshrl.u32 %v442, 7
        %v444 = vsub.s32 0, %v443
        %v445 = vrot.slane %v440, %v444
        %v455 = vunpack.c.l.b16 %v432
        %v456 = vunpack.c.l.b16 %v433
        %v457 = vunpack.c.l.b16 %v434
        %v458 = vunpack.c.l.b16 %v435
        %v459 = vunpack.c.l.b16 %v436
        %v460 = vunpack.c.l.b16 %v437
        %v461 = vunpack.c.l.b16 %v438
        %v462 = vunpack.c.l.b16 %v439
        %v463 = vpack.c.b16 %v456, %v455
        %v464 = vpack.c.b16 %v458, %v457
        %v465 = vpack.c.b16 %v460, %v459
        %v466 = vpack.c.b16 %v462, %v461
        %vm471 = vcmask 523264
        %v473 = vsel %vm471, %v416, 0
        %v476 = vsel %vm471, %v417, 0
        %v479 = vsel %vm471, %v418, 0
        %v482 = vsel %vm471, %v419, 0
        %484 = vmatprep.subr.bf16.mxu0 0
        %485 = vmatpush1.bf16.msra.mxu0 %v463
        %486 = vmatprep.subr.bf16.mxu0 0
        %487 = vmatpush1.bf16.msra.mxu0 %v464
        %488 = vmatprep.subr.bf16.mxu0 0
        %489 = vmatpush1.bf16.msra.mxu0 %v465
        %490 = vmatprep.subr.bf16.mxu0 0
        %491 = vmatpush1.bf16.msra.mxu0 %v466
        %492 = vmatprep.subr.bf16.mxu0 0
        %493 = vmatpush1.bf16.msra.mxu0 0
        %494 = vmatprep.subr.bf16.mxu0 0
        %495 = vmatpush1.bf16.msra.mxu0 0
        %496 = vmatprep.subr.bf16.mxu0 0
        %497 = vmatpush1.bf16.msra.mxu0 0
        %498 = vmatprep.subr.bf16.mxu0 0
        %499 = vmatpush1.bf16.msra.mxu0 0
        %500 = vmatprep.subr.bf16.mxu0 0
        %501 = vmatpush1.bf16.msra.mxu0 0
        %502 = vmatprep.subr.bf16.mxu0 0
        %503 = vmatpush1.bf16.msra.mxu0 0
        %504 = vmatprep.subr.bf16.mxu0 0
        %505 = vmatpush1.bf16.msra.mxu0 0
        %506 = vmatprep.subr.bf16.mxu0 0
        %507 = vmatpush1.bf16.msra.mxu0 0
        %508 = vmatprep.subr.bf16.mxu0 0
        %509 = vmatpush1.bf16.msra.mxu0 0
        %510 = vmatprep.subr.bf16.mxu0 0
        %511 = vmatpush1.bf16.msra.mxu0 0
        %512 = vmatprep.subr.bf16.mxu0 0
        %513 = vmatpush1.bf16.msra.mxu0 0
        %514 = vmatprep.subr.bf16.mxu0 0
        %515 = vmatpush1.bf16.msra.mxu0 0
        %516 = vmatprep.mubr.bf16.mxu0 0
        %517 = vmatmul.mubr.bf16.gmra.mrb[0].mxu0 %v473
        %v518 = vpop.f32.mrb[0].mxu0
        %v519 = vadd.f32 %v445, %v518
        %v520 = vpop.f32.mrb[0].mxu0
        %v521 = vpop.f32.mrb[0].mxu0
        %v522 = vadd.f32 %v445, %v521
        %v523 = vpop.f32.mrb[0].mxu0
        %524 = vmatprep.mubr.bf16.mxu0 0
        %525 = vmatmul.mubr.bf16.gmra.mrb[0].mxu0 %v476
        %v526 = vpop.f32.mrb[0].mxu0
        %v527 = vadd.f32 %v445, %v526
        %v528 = vpop.f32.mrb[0].mxu0
        %v529 = vpop.f32.mrb[0].mxu0
        %v530 = vadd.f32 %v445, %v529
        %v531 = vpop.f32.mrb[0].mxu0
        %532 = vmatprep.mubr.bf16.mxu0 0
        %533 = vmatmul.mubr.bf16.gmra.mrb[0].mxu0 %v479
        %v534 = vpop.f32.mrb[0].mxu0
        %v535 = vadd.f32 %v445, %v534
        %v536 = vpop.f32.mrb[0].mxu0
        %v537 = vpop.f32.mrb[0].mxu0
        %v538 = vadd.f32 %v445, %v537
        %v539 = vpop.f32.mrb[0].mxu0
        %540 = vmatprep.mubr.bf16.mxu0 0
        %541 = vmatmul.mubr.bf16.gmra.mrb[0].mxu0 %v482
        %v542 = vpop.f32.mrb[0].mxu0
        %v543 = vadd.f32 %v445, %v542
        %v544 = vpop.f32.mrb[0].mxu0
        %v545 = vpop.f32.mrb[0].mxu0
        %v546 = vadd.f32 %v445, %v545
        %v547 = vpop.f32.mrb[0].mxu0
        %548 = vdwg.mxu0
        %v549 = vmul.f32 %v519, 0.35355338
        %v550 = vmul.f32 %v522, 0.35355338
        %v551 = vmul.f32 %v527, 0.35355338
        %v552 = vmul.f32 %v530, 0.35355338
        %v553 = vmul.f32 %v535, 0.35355338
        %v554 = vmul.f32 %v538, 0.35355338
        %v555 = vmul.f32 %v543, 0.35355338
        %v556 = vmul.f32 %v546, 0.35355338
        %v557 = vld [vmem:[#allocation8] sm:$0xf]
        %v558 = vld [vmem:[#allocation8 + $0x4] sm:$0xf]
        %v559 = vld [vmem:[#allocation8 + $0x8] sm:$0xf]
        %v560 = vld [vmem:[#allocation8 + $0xc] sm:$0xf]
        %v561 = vld [vmem:[#allocation8 + $0x10] sm:$0xf]
        %v562 = vld [vmem:[#allocation8 + $0x14] sm:$0xf]
        %v563 = vld [vmem:[#allocation8 + $0x18] sm:$0xf]
        %v564 = vld [vmem:[#allocation8 + $0x1c] sm:$0xf]
        %v565 = vld [vmem:[%s5] sm:$0x1]
        %v567 = vlaneseq
        %v568 = vshrl.u32 %v567, 7
        %v569 = vsub.s32 0, %v568
        %v570 = vrot.slane %v565, %v569
        %v580 = vunpack.c.l.b16 %v557
        %v581 = vunpack.c.l.b16 %v558
        %v582 = vunpack.c.l.b16 %v559
        %v583 = vunpack.c.l.b16 %v560
        %v584 = vunpack.c.l.b16 %v561
        %v585 = vunpack.c.l.b16 %v562
        %v586 = vunpack.c.l.b16 %v563
        %v587 = vunpack.c.l.b16 %v564
        %v588 = vpack.c.b16 %v581, %v580
        %v589 = vpack.c.b16 %v583, %v582
        %v590 = vpack.c.b16 %v585, %v584
        %v591 = vpack.c.b16 %v587, %v586
        %v597 = vsel %vm471, %v428, 0
        %v600 = vsel %vm471, %v429, 0
        %v603 = vsel %vm471, %v430, 0
        %v606 = vsel %vm471, %v431, 0
        %608 = vmatprep.subr.bf16.mxu0 0
        %609 = vmatpush1.bf16.msra.mxu0 %v588
        %610 = vmatprep.subr.bf16.mxu0 0
        %611 = vmatpush1.bf16.msra.mxu0 %v589
        %612 = vmatprep.subr.bf16.mxu0 0
        %613 = vmatpush1.bf16.msra.mxu0 %v590
        %614 = vmatprep.subr.bf16.mxu0 0
        %615 = vmatpush1.bf16.msra.mxu0 %v591
        %616 = vmatprep.subr.bf16.mxu0 0
        %617 = vmatpush1.bf16.msra.mxu0 0
        %618 = vmatprep.subr.bf16.mxu0 0
        %619 = vmatpush1.bf16.msra.mxu0 0
        %620 = vmatprep.subr.bf16.mxu0 0
        %621 = vmatpush1.bf16.msra.mxu0 0
        %622 = vmatprep.subr.bf16.mxu0 0
        %623 = vmatpush1.bf16.msra.mxu0 0
        %624 = vmatprep.subr.bf16.mxu0 0
        %625 = vmatpush1.bf16.msra.mxu0 0
        %626 = vmatprep.subr.bf16.mxu0 0
        %627 = vmatpush1.bf16.msra.mxu0 0
        %628 = vmatprep.subr.bf16.mxu0 0
        %629 = vmatpush1.bf16.msra.mxu0 0
        %630 = vmatprep.subr.bf16.mxu0 0
        %631 = vmatpush1.bf16.msra.mxu0 0
        %632 = vmatprep.subr.bf16.mxu0 0
        %633 = vmatpush1.bf16.msra.mxu0 0
        %634 = vmatprep.subr.bf16.mxu0 0
        %635 = vmatpush1.bf16.msra.mxu0 0
        %636 = vmatprep.subr.bf16.mxu0 0
        %637 = vmatpush1.bf16.msra.mxu0 0
        %638 = vmatprep.subr.bf16.mxu0 0
        %639 = vmatpush1.bf16.msra.mxu0 0
        %640 = vmatprep.mubr.bf16.mxu0 0
        %641 = vmatmul.mubr.bf16.gmra.mrb[0].mxu0 %v597
        %v642 = vpop.f32.mrb[0].mxu0
        %v643 = vadd.f32 %v570, %v642
        %v644 = vpop.f32.mrb[0].mxu0
        %v645 = vpop.f32.mrb[0].mxu0
        %v646 = vadd.f32 %v570, %v645
        %v647 = vpop.f32.mrb[0].mxu0
        %648 = vmatprep.mubr.bf16.mxu0 0
        %649 = vmatmul.mubr.bf16.gmra.mrb[0].mxu0 %v600
        %v650 = vpop.f32.mrb[0].mxu0
        %v651 = vadd.f32 %v570, %v650
        %v652 = vpop.f32.mrb[0].mxu0
        %v653 = vpop.f32.mrb[0].mxu0
        %v654 = vadd.f32 %v570, %v653
        %v655 = vpop.f32.mrb[0].mxu0
        %656 = vmatprep.mubr.bf16.mxu0 0
        %657 = vmatmul.mubr.bf16.gmra.mrb[0].mxu0 %v603
        %v658 = vpop.f32.mrb[0].mxu0
        %v659 = vadd.f32 %v570, %v658
        %v660 = vpop.f32.mrb[0].mxu0
        %v661 = vpop.f32.mrb[0].mxu0
        %v662 = vadd.f32 %v570, %v661
        %v663 = vpop.f32.mrb[0].mxu0
        %664 = vmatprep.mubr.bf16.mxu0 0
        %665 = vmatmul.mubr.bf16.gmra.mrb[0].mxu0 %v606
        %v666 = vpop.f32.mrb[0].mxu0
        %v667 = vadd.f32 %v570, %v666
        %v668 = vpop.f32.mrb[0].mxu0
        %v669 = vpop.f32.mrb[0].mxu0
        %v670 = vadd.f32 %v570, %v669
        %v671 = vpop.f32.mrb[0].mxu0
        %672 = vdwg.mxu0
        %v673 = vpack.c.bf16 %v550, %v549
        %v674 = vpack.c.bf16 %v552, %v551
        %v675 = vpack.c.bf16 %v554, %v553
        %v676 = vpack.c.bf16 %v556, %v555
        %v677 = vpack.c.bf16 %v646, %v643
        %v678 = vpack.c.bf16 %v654, %v651
        %v679 = vpack.c.bf16 %v662, %v659
        %v680 = vpack.c.bf16 %v670, %v667
        %685 = vrot.lane.b32.xlu0 %v673, 120
        %v686 = vpop.permute.xlu0 %685
        %687 = vrot.lane.b32.xlu0 %v674, 120
        %v688 = vpop.permute.xlu0 %687
        %689 = vrot.lane.b32.xlu0 %v675, 120
        %v690 = vpop.permute.xlu0 %689
        %691 = vrot.lane.b32.xlu0 %v676, 120
        %v692 = vpop.permute.xlu0 %691
        %693 = vrot.lane.b32.xlu0 %v673, 112
        %v694 = vpop.permute.xlu0 %693
        %695 = vrot.lane.b32.xlu0 %v674, 112
        %v696 = vpop.permute.xlu0 %695
        %697 = vrot.lane.b32.xlu0 %v675, 112
        %v698 = vpop.permute.xlu0 %697
        %699 = vrot.lane.b32.xlu0 %v676, 112
        %v700 = vpop.permute.xlu0 %699
        %701 = vrot.lane.b32.xlu0 %v673, 104
        %v702 = vpop.permute.xlu0 %701
        %703 = vrot.lane.b32.xlu0 %v674, 104
        %v704 = vpop.permute.xlu0 %703
        %705 = vrot.lane.b32.xlu0 %v675, 104
        %v706 = vpop.permute.xlu0 %705
        %707 = vrot.lane.b32.xlu0 %v676, 104
        %v708 = vpop.permute.xlu0 %707
        %709 = vrot.lane.b32.xlu0 %v673, 96
        %v710 = vpop.permute.xlu0 %709
        %711 = vrot.lane.b32.xlu0 %v674, 96
        %v712 = vpop.permute.xlu0 %711
        %713 = vrot.lane.b32.xlu0 %v675, 96
        %v714 = vpop.permute.xlu0 %713
        %715 = vrot.lane.b32.xlu0 %v676, 96
        %v716 = vpop.permute.xlu0 %715
        %717 = vrot.lane.b32.xlu0 %v673, 88
        %v718 = vpop.permute.xlu0 %717
        %719 = vrot.lane.b32.xlu0 %v674, 88
        %v720 = vpop.permute.xlu0 %719
        %721 = vrot.lane.b32.xlu0 %v675, 88
        %v722 = vpop.permute.xlu0 %721
        %723 = vrot.lane.b32.xlu0 %v676, 88
        %v724 = vpop.permute.xlu0 %723
        %725 = vrot.lane.b32.xlu0 %v673, 80
        %v726 = vpop.permute.xlu0 %725
        %727 = vrot.lane.b32.xlu0 %v674, 80
        %v728 = vpop.permute.xlu0 %727
        %729 = vrot.lane.b32.xlu0 %v675, 80
        %v730 = vpop.permute.xlu0 %729
        %731 = vrot.lane.b32.xlu0 %v676, 80
        %v732 = vpop.permute.xlu0 %731
        %733 = vrot.lane.b32.xlu0 %v673, 72
        %v734 = vpop.permute.xlu0 %733
        %735 = vrot.lane.b32.xlu0 %v674, 72
        %v736 = vpop.permute.xlu0 %735
        %737 = vrot.lane.b32.xlu0 %v675, 72
        %v738 = vpop.permute.xlu0 %737
        %739 = vrot.lane.b32.xlu0 %v676, 72
        %v740 = vpop.permute.xlu0 %739
        %v743 = vpack.i.b16 %v686, %v673
        %v745 = vshrl.u32 %v673, 16
        %v746 = vshrl.u32 %v686, 16
        %v747 = vpack.i.b16 %v746, %v745
        %v751 = vpack.i.b16 %v702, %v694
        %v753 = vshrl.u32 %v694, 16
        %v754 = vshrl.u32 %v702, 16
        %v755 = vpack.i.b16 %v754, %v753
        %v759 = vpack.i.b16 %v718, %v710
        %v761 = vshrl.u32 %v710, 16
        %v762 = vshrl.u32 %v718, 16
        %v763 = vpack.i.b16 %v762, %v761
        %v767 = vpack.i.b16 %v734, %v726
        %v769 = vshrl.u32 %v726, 16
        %v770 = vshrl.u32 %v734, 16
        %v771 = vpack.i.b16 %v770, %v769
        %v775 = vpack.i.b16 %v688, %v674
        %v777 = vshrl.u32 %v674, 16
        %v778 = vshrl.u32 %v688, 16
        %v779 = vpack.i.b16 %v778, %v777
        %v783 = vpack.i.b16 %v704, %v696
        %v785 = vshrl.u32 %v696, 16
        %v786 = vshrl.u32 %v704, 16
        %v787 = vpack.i.b16 %v786, %v785
        %v791 = vpack.i.b16 %v720, %v712
        %v793 = vshrl.u32 %v712, 16
        %v794 = vshrl.u32 %v720, 16
        %v795 = vpack.i.b16 %v794, %v793
        %v799 = vpack.i.b16 %v736, %v728
        %v801 = vshrl.u32 %v728, 16
        %v802 = vshrl.u32 %v736, 16
        %v803 = vpack.i.b16 %v802, %v801
        %v807 = vpack.i.b16 %v690, %v675
        %v809 = vshrl.u32 %v675, 16
        %v810 = vshrl.u32 %v690, 16
        %v811 = vpack.i.b16 %v810, %v809
        %v815 = vpack.i.b16 %v706, %v698
        %v817 = vshrl.u32 %v698, 16
        %v818 = vshrl.u32 %v706, 16
        %v819 = vpack.i.b16 %v818, %v817
        %v823 = vpack.i.b16 %v722, %v714
        %v825 = vshrl.u32 %v714, 16
        %v826 = vshrl.u32 %v722, 16
        %v827 = vpack.i.b16 %v826, %v825
        %v831 = vpack.i.b16 %v738, %v730
        %v833 = vshrl.u32 %v730, 16
        %v834 = vshrl.u32 %v738, 16
        %v835 = vpack.i.b16 %v834, %v833
        %v839 = vpack.i.b16 %v692, %v676
        %v841 = vshrl.u32 %v676, 16
        %v842 = vshrl.u32 %v692, 16
        %v843 = vpack.i.b16 %v842, %v841
        %v847 = vpack.i.b16 %v708, %v700
        %v849 = vshrl.u32 %v700, 16
        %v850 = vshrl.u32 %v708, 16
        %v851 = vpack.i.b16 %v850, %v849
        %v855 = vpack.i.b16 %v724, %v716
        %v857 = vshrl.u32 %v716, 16
        %v858 = vshrl.u32 %v724, 16
        %v859 = vpack.i.b16 %v858, %v857
        %v863 = vpack.i.b16 %v740, %v732
        %v865 = vshrl.u32 %v732, 16
        %v866 = vshrl.u32 %v740, 16
        %v867 = vpack.i.b16 %v866, %v865
        %v869 = vcombine.low %v743, %v759
        %v870 = vcombine.high %v743, %v759
        %v872 = vunpack.c.l.s4 1983009808
        %v873 = vunpack.c.0.s8 %v872
        %v874 = vlaneseq
        %v875 = vshrl.u32 %v874, 7
        %v876 = vsub.s32 %v873, %v875
        %v877 = vrot.slane %v869, %v876
        %v879 = vunpack.c.l.s4 1983009808
        %v880 = vunpack.c.0.s8 %v879
        %v881 = vlaneseq
        %v882 = vshrl.u32 %v881, 7
        %v883 = vsub.s32 %v880, %v882
        %v884 = vrot.slane %v870, %v883
        %v885 = vcombine.low %v751, %v767
        %v886 = vcombine.high %v751, %v767
        %v888 = vunpack.c.l.s4 1983009808
        %v889 = vunpack.c.0.s8 %v888
        %v890 = vlaneseq
        %v891 = vshrl.u32 %v890, 7
        %v892 = vsub.s32 %v889, %v891
        %v893 = vrot.slane %v885, %v892
        %v895 = vunpack.c.l.s4 1983009808
        %v896 = vunpack.c.0.s8 %v895
        %v897 = vlaneseq
        %v898 = vshrl.u32 %v897, 7
        %v899 = vsub.s32 %v896, %v898
        %v900 = vrot.slane %v886, %v899
        %v901 = vcombine.low %v877, %v893
        %v902 = vcombine.high %v877, %v893
        %v904 = vunpack.c.l.s4 1934713408
        %v905 = vunpack.c.0.s8 %v904
        %v906 = vlaneseq
        %v907 = vshrl.u32 %v906, 7
        %v908 = vsub.s32 %v905, %v907
        %v909 = vrot.slane %v901, %v908
        %v911 = vunpack.c.l.s4 1934713408
        %v912 = vunpack.c.0.s8 %v911
        %v913 = vlaneseq
        %v914 = vshrl.u32 %v913, 7
        %v915 = vsub.s32 %v912, %v914
        %v916 = vrot.slane %v902, %v915
        %v917 = vcombine.low %v884, %v900
        %v918 = vcombine.high %v884, %v900
        %v920 = vunpack.c.l.s4 1934713408
        %v921 = vunpack.c.0.s8 %v920
        %v922 = vlaneseq
        %v923 = vshrl.u32 %v922, 7
        %v924 = vsub.s32 %v921, %v923
        %v925 = vrot.slane %v917, %v924
        %v927 = vunpack.c.l.s4 1934713408
        %v928 = vunpack.c.0.s8 %v927
        %v929 = vlaneseq
        %v930 = vshrl.u32 %v929, 7
        %v931 = vsub.s32 %v928, %v930
        %v932 = vrot.slane %v918, %v931
        %v933 = vcombine.high %v909, 0
        %v934 = vcombine.high %v916, 0
        %v935 = vcombine.high %v925, 0
        %v936 = vcombine.high %v932, 0
        %v937 = vcombine.low %v747, %v763
        %v938 = vcombine.high %v747, %v763
        %v940 = vunpack.c.l.s4 1983009808
        %v941 = vunpack.c.0.s8 %v940
        %v942 = vlaneseq
        %v943 = vshrl.u32 %v942, 7
        %v944 = vsub.s32 %v941, %v943
        %v945 = vrot.slane %v937, %v944
        %v947 = vunpack.c.l.s4 1983009808
        %v948 = vunpack.c.0.s8 %v947
        %v949 = vlaneseq
        %v950 = vshrl.u32 %v949, 7
        %v951 = vsub.s32 %v948, %v950
        %v952 = vrot.slane %v938, %v951
        %v953 = vcombine.low %v755, %v771
        %v954 = vcombine.high %v755, %v771
        %v956 = vunpack.c.l.s4 1983009808
        %v957 = vunpack.c.0.s8 %v956
        %v958 = vlaneseq
        %v959 = vshrl.u32 %v958, 7
        %v960 = vsub.s32 %v957, %v959
        %v961 = vrot.slane %v953, %v960
        %v963 = vunpack.c.l.s4 1983009808
        %v964 = vunpack.c.0.s8 %v963
        %v965 = vlaneseq
        %v966 = vshrl.u32 %v965, 7
        %v967 = vsub.s32 %v964, %v966
        %v968 = vrot.slane %v954, %v967
        %v969 = vcombine.low %v945, %v961
        %v970 = vcombine.high %v945, %v961
        %v972 = vunpack.c.l.s4 1934713408
        %v973 = vunpack.c.0.s8 %v972
        %v974 = vlaneseq
        %v975 = vshrl.u32 %v974, 7
        %v976 = vsub.s32 %v973, %v975
        %v977 = vrot.slane %v969, %v976
        %v979 = vunpack.c.l.s4 1934713408
        %v980 = vunpack.c.0.s8 %v979
        %v981 = vlaneseq
        %v982 = vshrl.u32 %v981, 7
        %v983 = vsub.s32 %v980, %v982
        %v984 = vrot.slane %v970, %v983
        %v985 = vcombine.low %v952, %v968
        %v986 = vcombine.high %v952, %v968
        %v988 = vunpack.c.l.s4 1934713408
        %v989 = vunpack.c.0.s8 %v988
        %v990 = vlaneseq
        %v991 = vshrl.u32 %v990, 7
        %v992 = vsub.s32 %v989, %v991
        %v993 = vrot.slane %v985, %v992
        %v995 = vunpack.c.l.s4 1934713408
        %v996 = vunpack.c.0.s8 %v995
        %v997 = vlaneseq
        %v998 = vshrl.u32 %v997, 7
        %v999 = vsub.s32 %v996, %v998
        %v1000 = vrot.slane %v986, %v999
        %v1001 = vcombine.high %v977, 0
        %v1002 = vcombine.high %v984, 0
        %v1003 = vcombine.high %v993, 0
        %v1004 = vcombine.high %v1000, 0
        %v1005 = vcombine.low %v775, %v791
        %v1006 = vcombine.high %v775, %v791
        %v1008 = vunpack.c.l.s4 1983009808
        %v1009 = vunpack.c.0.s8 %v1008
        %v1010 = vlaneseq
        %v1011 = vshrl.u32 %v1010, 7
        %v1012 = vsub.s32 %v1009, %v1011
        %v1013 = vrot.slane %v1005, %v1012
        %v1015 = vunpack.c.l.s4 1983009808
        %v1016 = vunpack.c.0.s8 %v1015
        %v1017 = vlaneseq
        %v1018 = vshrl.u32 %v1017, 7
        %v1019 = vsub.s32 %v1016, %v1018
        %v1020 = vrot.slane %v1006, %v1019
        %v1021 = vcombine.low %v783, %v799
        %v1022 = vcombine.high %v783, %v799
        %v1024 = vunpack.c.l.s4 1983009808
        %v1025 = vunpack.c.0.s8 %v1024
        %v1026 = vlaneseq
        %v1027 = vshrl.u32 %v1026, 7
        %v1028 = vsub.s32 %v1025, %v1027
        %v1029 = vrot.slane %v1021, %v1028
        %v1031 = vunpack.c.l.s4 1983009808
        %v1032 = vunpack.c.0.s8 %v1031
        %v1033 = vlaneseq
        %v1034 = vshrl.u32 %v1033, 7
        %v1035 = vsub.s32 %v1032, %v1034
        %v1036 = vrot.slane %v1022, %v1035
        %v1037 = vcombine.low %v1013, %v1029
        %v1038 = vcombine.high %v1013, %v1029
        %v1040 = vunpack.c.l.s4 1934713408
        %v1041 = vunpack.c.0.s8 %v1040
        %v1042 = vlaneseq
        %v1043 = vshrl.u32 %v1042, 7
        %v1044 = vsub.s32 %v1041, %v1043
        %v1045 = vrot.slane %v1037, %v1044
        %v1047 = vunpack.c.l.s4 1934713408
        %v1048 = vunpack.c.0.s8 %v1047
        %v1049 = vlaneseq
        %v1050 = vshrl.u32 %v1049, 7
        %v1051 = vsub.s32 %v1048, %v1050
        %v1052 = vrot.slane %v1038, %v1051
        %v1053 = vcombine.low %v1020, %v1036
        %v1054 = vcombine.high %v1020, %v1036
        %v1056 = vunpack.c.l.s4 1934713408
        %v1057 = vunpack.c.0.s8 %v1056
        %v1058 = vlaneseq
        %v1059 = vshrl.u32 %v1058, 7
        %v1060 = vsub.s32 %v1057, %v1059
        %v1061 = vrot.slane %v1053, %v1060
        %v1063 = vunpack.c.l.s4 1934713408
        %v1064 = vunpack.c.0.s8 %v1063
        %v1065 = vlaneseq
        %v1066 = vshrl.u32 %v1065, 7
        %v1067 = vsub.s32 %v1064, %v1066
        %v1068 = vrot.slane %v1054, %v1067
        %v1069 = vcombine.high %v1045, 0
        %v1070 = vcombine.high %v1052, 0
        %v1071 = vcombine.high %v1061, 0
        %v1072 = vcombine.high %v1068, 0
        %v1073 = vcombine.low %v779, %v795
        %v1074 = vcombine.high %v779, %v795
        %v1076 = vunpack.c.l.s4 1983009808
        %v1077 = vunpack.c.0.s8 %v1076
        %v1078 = vlaneseq
        %v1079 = vshrl.u32 %v1078, 7
        %v1080 = vsub.s32 %v1077, %v1079
        %v1081 = vrot.slane %v1073, %v1080
        %v1083 = vunpack.c.l.s4 1983009808
        %v1084 = vunpack.c.0.s8 %v1083
        %v1085 = vlaneseq
        %v1086 = vshrl.u32 %v1085, 7
        %v1087 = vsub.s32 %v1084, %v1086
        %v1088 = vrot.slane %v1074, %v1087
        %v1089 = vcombine.low %v787, %v803
        %v1090 = vcombine.high %v787, %v803
        %v1092 = vunpack.c.l.s4 1983009808
        %v1093 = vunpack.c.0.s8 %v1092
        %v1094 = vlaneseq
        %v1095 = vshrl.u32 %v1094, 7
        %v1096 = vsub.s32 %v1093, %v1095
        %v1097 = vrot.slane %v1089, %v1096
        %v1099 = vunpack.c.l.s4 1983009808
        %v1100 = vunpack.c.0.s8 %v1099
        %v1101 = vlaneseq
        %v1102 = vshrl.u32 %v1101, 7
        %v1103 = vsub.s32 %v1100, %v1102
        %v1104 = vrot.slane %v1090, %v1103
        %v1105 = vcombine.low %v1081, %v1097
        %v1106 = vcombine.high %v1081, %v1097
        %v1108 = vunpack.c.l.s4 1934713408
        %v1109 = vunpack.c.0.s8 %v1108
        %v1110 = vlaneseq
        %v1111 = vshrl.u32 %v1110, 7
        %v1112 = vsub.s32 %v1109, %v1111
        %v1113 = vrot.slane %v1105, %v1112
        %v1115 = vunpack.c.l.s4 1934713408
        %v1116 = vunpack.c.0.s8 %v1115
        %v1117 = vlaneseq
        %v1118 = vshrl.u32 %v1117, 7
        %v1119 = vsub.s32 %v1116, %v1118
        %v1120 = vrot.slane %v1106, %v1119
        %v1121 = vcombine.low %v1088, %v1104
        %v1122 = vcombine.high %v1088, %v1104
        %v1124 = vunpack.c.l.s4 1934713408
        %v1125 = vunpack.c.0.s8 %v1124
        %v1126 = vlaneseq
        %v1127 = vshrl.u32 %v1126, 7
        %v1128 = vsub.s32 %v1125, %v1127
        %v1129 = vrot.slane %v1121, %v1128
        %v1131 = vunpack.c.l.s4 1934713408
        %v1132 = vunpack.c.0.s8 %v1131
        %v1133 = vlaneseq
        %v1134 = vshrl.u32 %v1133, 7
        %v1135 = vsub.s32 %v1132, %v1134
        %v1136 = vrot.slane %v1122, %v1135
        %v1137 = vcombine.high %v1113, 0
        %v1138 = vcombine.high %v1120, 0
        %v1139 = vcombine.high %v1129, 0
        %v1140 = vcombine.high %v1136, 0
        %v1141 = vcombine.low %v807, %v823
        %v1142 = vcombine.high %v807, %v823
        %v1144 = vunpack.c.l.s4 1983009808
        %v1145 = vunpack.c.0.s8 %v1144
        %v1146 = vlaneseq
        %v1147 = vshrl.u32 %v1146, 7
        %v1148 = vsub.s32 %v1145, %v1147
        %v1149 = vrot.slane %v1141, %v1148
        %v1151 = vunpack.c.l.s4 1983009808
        %v1152 = vunpack.c.0.s8 %v1151
        %v1153 = vlaneseq
        %v1154 = vshrl.u32 %v1153, 7
        %v1155 = vsub.s32 %v1152, %v1154
        %v1156 = vrot.slane %v1142, %v1155
        %v1157 = vcombine.low %v815, %v831
        %v1158 = vcombine.high %v815, %v831
        %v1160 = vunpack.c.l.s4 1983009808
        %v1161 = vunpack.c.0.s8 %v1160
        %v1162 = vlaneseq
        %v1163 = vshrl.u32 %v1162, 7
        %v1164 = vsub.s32 %v1161, %v1163
        %v1165 = vrot.slane %v1157, %v1164
        %v1167 = vunpack.c.l.s4 1983009808
        %v1168 = vunpack.c.0.s8 %v1167
        %v1169 = vlaneseq
        %v1170 = vshrl.u32 %v1169, 7
        %v1171 = vsub.s32 %v1168, %v1170
        %v1172 = vrot.slane %v1158, %v1171
        %v1173 = vcombine.low %v1149, %v1165
        %v1174 = vcombine.high %v1149, %v1165
        %v1176 = vunpack.c.l.s4 1934713408
        %v1177 = vunpack.c.0.s8 %v1176
        %v1178 = vlaneseq
        %v1179 = vshrl.u32 %v1178, 7
        %v1180 = vsub.s32 %v1177, %v1179
        %v1181 = vrot.slane %v1173, %v1180
        %v1183 = vunpack.c.l.s4 1934713408
        %v1184 = vunpack.c.0.s8 %v1183
        %v1185 = vlaneseq
        %v1186 = vshrl.u32 %v1185, 7
        %v1187 = vsub.s32 %v1184, %v1186
        %v1188 = vrot.slane %v1174, %v1187
        %v1189 = vcombine.low %v1156, %v1172
        %v1190 = vcombine.high %v1156, %v1172
        %v1192 = vunpack.c.l.s4 1934713408
        %v1193 = vunpack.c.0.s8 %v1192
        %v1194 = vlaneseq
        %v1195 = vshrl.u32 %v1194, 7
        %v1196 = vsub.s32 %v1193, %v1195
        %v1197 = vrot.slane %v1189, %v1196
        %v1199 = vunpack.c.l.s4 1934713408
        %v1200 = vunpack.c.0.s8 %v1199
        %v1201 = vlaneseq
        %v1202 = vshrl.u32 %v1201, 7
        %v1203 = vsub.s32 %v1200, %v1202
        %v1204 = vrot.slane %v1190, %v1203
        %v1205 = vcombine.high %v1181, 0
        %v1206 = vcombine.high %v1188, 0
        %v1207 = vcombine.high %v1197, 0
        %v1208 = vcombine.high %v1204, 0
        %v1209 = vcombine.low %v811, %v827
        %v1210 = vcombine.high %v811, %v827
        %v1212 = vunpack.c.l.s4 1983009808
        %v1213 = vunpack.c.0.s8 %v1212
        %v1214 = vlaneseq
        %v1215 = vshrl.u32 %v1214, 7
        %v1216 = vsub.s32 %v1213, %v1215
        %v1217 = vrot.slane %v1209, %v1216
        %v1219 = vunpack.c.l.s4 1983009808
        %v1220 = vunpack.c.0.s8 %v1219
        %v1221 = vlaneseq
        %v1222 = vshrl.u32 %v1221, 7
        %v1223 = vsub.s32 %v1220, %v1222
        %v1224 = vrot.slane %v1210, %v1223
        %v1225 = vcombine.low %v819, %v835
        %v1226 = vcombine.high %v819, %v835
        %v1228 = vunpack.c.l.s4 1983009808
        %v1229 = vunpack.c.0.s8 %v1228
        %v1230 = vlaneseq
        %v1231 = vshrl.u32 %v1230, 7
        %v1232 = vsub.s32 %v1229, %v1231
        %v1233 = vrot.slane %v1225, %v1232
        %v1235 = vunpack.c.l.s4 1983009808
        %v1236 = vunpack.c.0.s8 %v1235
        %v1237 = vlaneseq
        %v1238 = vshrl.u32 %v1237, 7
        %v1239 = vsub.s32 %v1236, %v1238
        %v1240 = vrot.slane %v1226, %v1239
        %v1241 = vcombine.low %v1217, %v1233
        %v1242 = vcombine.high %v1217, %v1233
        %v1244 = vunpack.c.l.s4 1934713408
        %v1245 = vunpack.c.0.s8 %v1244
        %v1246 = vlaneseq
        %v1247 = vshrl.u32 %v1246, 7
        %v1248 = vsub.s32 %v1245, %v1247
        %v1249 = vrot.slane %v1241, %v1248
        %v1251 = vunpack.c.l.s4 1934713408
        %v1252 = vunpack.c.0.s8 %v1251
        %v1253 = vlaneseq
        %v1254 = vshrl.u32 %v1253, 7
        %v1255 = vsub.s32 %v1252, %v1254
        %v1256 = vrot.slane %v1242, %v1255
        %v1257 = vcombine.low %v1224, %v1240
        %v1258 = vcombine.high %v1224, %v1240
        %v1260 = vunpack.c.l.s4 1934713408
        %v1261 = vunpack.c.0.s8 %v1260
        %v1262 = vlaneseq
        %v1263 = vshrl.u32 %v1262, 7
        %v1264 = vsub.s32 %v1261, %v1263
        %v1265 = vrot.slane %v1257, %v1264
        %v1267 = vunpack.c.l.s4 1934713408
        %v1268 = vunpack.c.0.s8 %v1267
        %v1269 = vlaneseq
        %v1270 = vshrl.u32 %v1269, 7
        %v1271 = vsub.s32 %v1268, %v1270
        %v1272 = vrot.slane %v1258, %v1271
        %v1273 = vcombine.high %v1249, 0
        %v1274 = vcombine.high %v1256, 0
        %v1275 = vcombine.high %v1265, 0
        %v1276 = vcombine.high %v1272, 0
        %v1277 = vcombine.low %v839, %v855
        %v1278 = vcombine.high %v839, %v855
        %v1280 = vunpack.c.l.s4 1983009808
        %v1281 = vunpack.c.0.s8 %v1280
        %v1282 = vlaneseq
        %v1283 = vshrl.u32 %v1282, 7
        %v1284 = vsub.s32 %v1281, %v1283
        %v1285 = vrot.slane %v1277, %v1284
        %v1287 = vunpack.c.l.s4 1983009808
        %v1288 = vunpack.c.0.s8 %v1287
        %v1289 = vlaneseq
        %v1290 = vshrl.u32 %v1289, 7
        %v1291 = vsub.s32 %v1288, %v1290
        %v1292 = vrot.slane %v1278, %v1291
        %v1293 = vcombine.low %v847, %v863
        %v1294 = vcombine.high %v847, %v863
        %v1296 = vunpack.c.l.s4 1983009808
        %v1297 = vunpack.c.0.s8 %v1296
        %v1298 = vlaneseq
        %v1299 = vshrl.u32 %v1298, 7
        %v1300 = vsub.s32 %v1297, %v1299
        %v1301 = vrot.slane %v1293, %v1300
        %v1303 = vunpack.c.l.s4 1983009808
        %v1304 = vunpack.c.0.s8 %v1303
        %v1305 = vlaneseq
        %v1306 = vshrl.u32 %v1305, 7
        %v1307 = vsub.s32 %v1304, %v1306
        %v1308 = vrot.slane %v1294, %v1307
        %v1309 = vcombine.low %v1285, %v1301
        %v1310 = vcombine.high %v1285, %v1301
        %v1312 = vunpack.c.l.s4 1934713408
        %v1313 = vunpack.c.0.s8 %v1312
        %v1314 = vlaneseq
        %v1315 = vshrl.u32 %v1314, 7
        %v1316 = vsub.s32 %v1313, %v1315
        %v1317 = vrot.slane %v1309, %v1316
        %v1319 = vunpack.c.l.s4 1934713408
        %v1320 = vunpack.c.0.s8 %v1319
        %v1321 = vlaneseq
        %v1322 = vshrl.u32 %v1321, 7
        %v1323 = vsub.s32 %v1320, %v1322
        %v1324 = vrot.slane %v1310, %v1323
        %v1325 = vcombine.low %v1292, %v1308
        %v1326 = vcombine.high %v1292, %v1308
        %v1328 = vunpack.c.l.s4 1934713408
        %v1329 = vunpack.c.0.s8 %v1328
        %v1330 = vlaneseq
        %v1331 = vshrl.u32 %v1330, 7
        %v1332 = vsub.s32 %v1329, %v1331
        %v1333 = vrot.slane %v1325, %v1332
        %v1335 = vunpack.c.l.s4 1934713408
        %v1336 = vunpack.c.0.s8 %v1335
        %v1337 = vlaneseq
        %v1338 = vshrl.u32 %v1337, 7
        %v1339 = vsub.s32 %v1336, %v1338
        %v1340 = vrot.slane %v1326, %v1339
        %v1341 = vcombine.high %v1317, 0
        %v1342 = vcombine.high %v1324, 0
        %v1343 = vcombine.high %v1333, 0
        %v1344 = vcombine.high %v1340, 0
        %v1345 = vcombine.low %v843, %v859
        %v1346 = vcombine.high %v843, %v859
        %v1348 = vunpack.c.l.s4 1983009808
        %v1349 = vunpack.c.0.s8 %v1348
        %v1350 = vlaneseq
        %v1351 = vshrl.u32 %v1350, 7
        %v1352 = vsub.s32 %v1349, %v1351
        %v1353 = vrot.slane %v1345, %v1352
        %v1355 = vunpack.c.l.s4 1983009808
        %v1356 = vunpack.c.0.s8 %v1355
        %v1357 = vlaneseq
        %v1358 = vshrl.u32 %v1357, 7
        %v1359 = vsub.s32 %v1356, %v1358
        %v1360 = vrot.slane %v1346, %v1359
        %v1361 = vcombine.low %v851, %v867
        %v1362 = vcombine.high %v851, %v867
        %v1364 = vunpack.c.l.s4 1983009808
        %v1365 = vunpack.c.0.s8 %v1364
        %v1366 = vlaneseq
        %v1367 = vshrl.u32 %v1366, 7
        %v1368 = vsub.s32 %v1365, %v1367
        %v1369 = vrot.slane %v1361, %v1368
        %v1371 = vunpack.c.l.s4 1983009808
        %v1372 = vunpack.c.0.s8 %v1371
        %v1373 = vlaneseq
        %v1374 = vshrl.u32 %v1373, 7
        %v1375 = vsub.s32 %v1372, %v1374
        %v1376 = vrot.slane %v1362, %v1375
        %v1377 = vcombine.low %v1353, %v1369
        %v1378 = vcombine.high %v1353, %v1369
        %v1380 = vunpack.c.l.s4 1934713408
        %v1381 = vunpack.c.0.s8 %v1380
        %v1382 = vlaneseq
        %v1383 = vshrl.u32 %v1382, 7
        %v1384 = vsub.s32 %v1381, %v1383
        %v1385 = vrot.slane %v1377, %v1384
        %v1387 = vunpack.c.l.s4 1934713408
        %v1388 = vunpack.c.0.s8 %v1387
        %v1389 = vlaneseq
        %v1390 = vshrl.u32 %v1389, 7
        %v1391 = vsub.s32 %v1388, %v1390
        %v1392 = vrot.slane %v1378, %v1391
        %v1393 = vcombine.low %v1360, %v1376
        %v1394 = vcombine.high %v1360, %v1376
        %v1396 = vunpack.c.l.s4 1934713408
        %v1397 = vunpack.c.0.s8 %v1396
        %v1398 = vlaneseq
        %v1399 = vshrl.u32 %v1398, 7
        %v1400 = vsub.s32 %v1397, %v1399
        %v1401 = vrot.slane %v1393, %v1400
        %v1403 = vunpack.c.l.s4 1934713408
        %v1404 = vunpack.c.0.s8 %v1403
        %v1405 = vlaneseq
        %v1406 = vshrl.u32 %v1405, 7
        %v1407 = vsub.s32 %v1404, %v1406
        %v1408 = vrot.slane %v1394, %v1407
        %v1409 = vcombine.high %v1385, 0
        %v1410 = vcombine.high %v1392, 0
        %v1411 = vcombine.high %v1401, 0
        %v1412 = vcombine.high %v1408, 0
        %v1413 = vcombine.low %v909, %v916
        %v1415 = vunpack.c.l.s4 1983009808
        %v1416 = vunpack.c.0.s8 %v1415
        %v1417 = vlaneseq
        %v1418 = vshrl.u32 %v1417, 7
        %v1419 = vsub.s32 %v1416, %v1418
        %v1420 = vrot.slane %v1413, %v1419
        %v1421 = vcombine.low %v933, %v934
        %v1423 = vunpack.c.l.s4 1983009808
        %v1424 = vunpack.c.0.s8 %v1423
        %v1425 = vlaneseq
        %v1426 = vshrl.u32 %v1425, 7
        %v1427 = vsub.s32 %v1424, %v1426
        %v1428 = vrot.slane %v1421, %v1427
        %v1429 = vcombine.low %v925, %v932
        %v1431 = vunpack.c.l.s4 1983009808
        %v1432 = vunpack.c.0.s8 %v1431
        %v1433 = vlaneseq
        %v1434 = vshrl.u32 %v1433, 7
        %v1435 = vsub.s32 %v1432, %v1434
        %v1436 = vrot.slane %v1429, %v1435
        %v1437 = vcombine.low %v935, %v936
        %v1439 = vunpack.c.l.s4 1983009808
        %v1440 = vunpack.c.0.s8 %v1439
        %v1441 = vlaneseq
        %v1442 = vshrl.u32 %v1441, 7
        %v1443 = vsub.s32 %v1440, %v1442
        %v1444 = vrot.slane %v1437, %v1443
        %v1445 = vcombine.low %v1420, %v1428
        %v1446 = vcombine.high %v1420, %v1428
        %v1448 = vunpack.c.l.s4 1934713408
        %v1449 = vunpack.c.0.s8 %v1448
        %v1450 = vlaneseq
        %v1451 = vshrl.u32 %v1450, 7
        %v1452 = vsub.s32 %v1449, %v1451
        %v1453 = vrot.slane %v1445, %v1452
        %v1455 = vunpack.c.l.s4 1934713408
        %v1456 = vunpack.c.0.s8 %v1455
        %v1457 = vlaneseq
        %v1458 = vshrl.u32 %v1457, 7
        %v1459 = vsub.s32 %v1456, %v1458
        %v1460 = vrot.slane %v1446, %v1459
        %v1461 = vcombine.low %v1436, %v1444
        %v1462 = vcombine.high %v1436, %v1444
        %v1464 = vunpack.c.l.s4 1934713408
        %v1465 = vunpack.c.0.s8 %v1464
        %v1466 = vlaneseq
        %v1467 = vshrl.u32 %v1466, 7
        %v1468 = vsub.s32 %v1465, %v1467
        %v1469 = vrot.slane %v1461, %v1468
        %v1471 = vunpack.c.l.s4 1934713408
        %v1472 = vunpack.c.0.s8 %v1471
        %v1473 = vlaneseq
        %v1474 = vshrl.u32 %v1473, 7
        %v1475 = vsub.s32 %v1472, %v1474
        %v1476 = vrot.slane %v1462, %v1475
        %v1477 = vcombine.low %v1453, %v1469
        %v1478 = vcombine.high %v1453, %v1469
        %v1479 = vcombine.low %v1460, %v1476
        %v1480 = vcombine.high %v1460, %v1476
        %v1481 = vcombine.low %v977, %v984
        %v1483 = vunpack.c.l.s4 1983009808
        %v1484 = vunpack.c.0.s8 %v1483
        %v1485 = vlaneseq
        %v1486 = vshrl.u32 %v1485, 7
        %v1487 = vsub.s32 %v1484, %v1486
        %v1488 = vrot.slane %v1481, %v1487
        %v1489 = vcombine.low %v1001, %v1002
        %v1491 = vunpack.c.l.s4 1983009808
        %v1492 = vunpack.c.0.s8 %v1491
        %v1493 = vlaneseq
        %v1494 = vshrl.u32 %v1493, 7
        %v1495 = vsub.s32 %v1492, %v1494
        %v1496 = vrot.slane %v1489, %v1495
        %v1497 = vcombine.low %v993, %v1000
        %v1499 = vunpack.c.l.s4 1983009808
        %v1500 = vunpack.c.0.s8 %v1499
        %v1501 = vlaneseq
        %v1502 = vshrl.u32 %v1501, 7
        %v1503 = vsub.s32 %v1500, %v1502
        %v1504 = vrot.slane %v1497, %v1503
        %v1505 = vcombine.low %v1003, %v1004
        %v1507 = vunpack.c.l.s4 1983009808
        %v1508 = vunpack.c.0.s8 %v1507
        %v1509 = vlaneseq
        %v1510 = vshrl.u32 %v1509, 7
        %v1511 = vsub.s32 %v1508, %v1510
        %v1512 = vrot.slane %v1505, %v1511
        %v1513 = vcombine.low %v1488, %v1496
        %v1514 = vcombine.high %v1488, %v1496
        %v1516 = vunpack.c.l.s4 1934713408
        %v1517 = vunpack.c.0.s8 %v1516
        %v1518 = vlaneseq
        %v1519 = vshrl.u32 %v1518, 7
        %v1520 = vsub.s32 %v1517, %v1519
        %v1521 = vrot.slane %v1513, %v1520
        %v1523 = vunpack.c.l.s4 1934713408
        %v1524 = vunpack.c.0.s8 %v1523
        %v1525 = vlaneseq
        %v1526 = vshrl.u32 %v1525, 7
        %v1527 = vsub.s32 %v1524, %v1526
        %v1528 = vrot.slane %v1514, %v1527
        %v1529 = vcombine.low %v1504, %v1512
        %v1530 = vcombine.high %v1504, %v1512
        %v1532 = vunpack.c.l.s4 1934713408
        %v1533 = vunpack.c.0.s8 %v1532
        %v1534 = vlaneseq
        %v1535 = vshrl.u32 %v1534, 7
        %v1536 = vsub.s32 %v1533, %v1535
        %v1537 = vrot.slane %v1529, %v1536
        %v1539 = vunpack.c.l.s4 1934713408
        %v1540 = vunpack.c.0.s8 %v1539
        %v1541 = vlaneseq
        %v1542 = vshrl.u32 %v1541, 7
        %v1543 = vsub.s32 %v1540, %v1542
        %v1544 = vrot.slane %v1530, %v1543
        %v1545 = vcombine.low %v1521, %v1537
        %v1546 = vcombine.high %v1521, %v1537
        %v1547 = vcombine.low %v1528, %v1544
        %v1548 = vcombine.high %v1528, %v1544
        %v1549 = vcombine.low %v1045, %v1052
        %v1551 = vunpack.c.l.s4 1983009808
        %v1552 = vunpack.c.0.s8 %v1551
        %v1553 = vlaneseq
        %v1554 = vshrl.u32 %v1553, 7
        %v1555 = vsub.s32 %v1552, %v1554
        %v1556 = vrot.slane %v1549, %v1555
        %v1557 = vcombine.low %v1069, %v1070
        %v1559 = vunpack.c.l.s4 1983009808
        %v1560 = vunpack.c.0.s8 %v1559
        %v1561 = vlaneseq
        %v1562 = vshrl.u32 %v1561, 7
        %v1563 = vsub.s32 %v1560, %v1562
        %v1564 = vrot.slane %v1557, %v1563
        %v1565 = vcombine.low %v1061, %v1068
        %v1567 = vunpack.c.l.s4 1983009808
        %v1568 = vunpack.c.0.s8 %v1567
        %v1569 = vlaneseq
        %v1570 = vshrl.u32 %v1569, 7
        %v1571 = vsub.s32 %v1568, %v1570
        %v1572 = vrot.slane %v1565, %v1571
        %v1573 = vcombine.low %v1071, %v1072
        %v1575 = vunpack.c.l.s4 1983009808
        %v1576 = vunpack.c.0.s8 %v1575
        %v1577 = vlaneseq
        %v1578 = vshrl.u32 %v1577, 7
        %v1579 = vsub.s32 %v1576, %v1578
        %v1580 = vrot.slane %v1573, %v1579
        %v1581 = vcombine.low %v1556, %v1564
        %v1582 = vcombine.high %v1556, %v1564
        %v1584 = vunpack.c.l.s4 1934713408
        %v1585 = vunpack.c.0.s8 %v1584
        %v1586 = vlaneseq
        %v1587 = vshrl.u32 %v1586, 7
        %v1588 = vsub.s32 %v1585, %v1587
        %v1589 = vrot.slane %v1581, %v1588
        %v1591 = vunpack.c.l.s4 1934713408
        %v1592 = vunpack.c.0.s8 %v1591
        %v1593 = vlaneseq
        %v1594 = vshrl.u32 %v1593, 7
        %v1595 = vsub.s32 %v1592, %v1594
        %v1596 = vrot.slane %v1582, %v1595
        %v1597 = vcombine.low %v1572, %v1580
        %v1598 = vcombine.high %v1572, %v1580
        %v1600 = vunpack.c.l.s4 1934713408
        %v1601 = vunpack.c.0.s8 %v1600
        %v1602 = vlaneseq
        %v1603 = vshrl.u32 %v1602, 7
        %v1604 = vsub.s32 %v1601, %v1603
        %v1605 = vrot.slane %v1597, %v1604
        %v1607 = vunpack.c.l.s4 1934713408
        %v1608 = vunpack.c.0.s8 %v1607
        %v1609 = vlaneseq
        %v1610 = vshrl.u32 %v1609, 7
        %v1611 = vsub.s32 %v1608, %v1610
        %v1612 = vrot.slane %v1598, %v1611
        %v1613 = vcombine.low %v1589, %v1605
        %v1614 = vcombine.high %v1589, %v1605
        %v1615 = vcombine.low %v1596, %v1612
        %v1616 = vcombine.high %v1596, %v1612
        %v1617 = vcombine.low %v1113, %v1120
        %v1619 = vunpack.c.l.s4 1983009808
        %v1620 = vunpack.c.0.s8 %v1619
        %v1621 = vlaneseq
        %v1622 = vshrl.u32 %v1621, 7
        %v1623 = vsub.s32 %v1620, %v1622
        %v1624 = vrot.slane %v1617, %v1623
        %v1625 = vcombine.low %v1137, %v1138
        %v1627 = vunpack.c.l.s4 1983009808
        %v1628 = vunpack.c.0.s8 %v1627
        %v1629 = vlaneseq
        %v1630 = vshrl.u32 %v1629, 7
        %v1631 = vsub.s32 %v1628, %v1630
        %v1632 = vrot.slane %v1625, %v1631
        %v1633 = vcombine.low %v1129, %v1136
        %v1635 = vunpack.c.l.s4 1983009808
        %v1636 = vunpack.c.0.s8 %v1635
        %v1637 = vlaneseq
        %v1638 = vshrl.u32 %v1637, 7
        %v1639 = vsub.s32 %v1636, %v1638
        %v1640 = vrot.slane %v1633, %v1639
        %v1641 = vcombine.low %v1139, %v1140
        %v1643 = vunpack.c.l.s4 1983009808
        %v1644 = vunpack.c.0.s8 %v1643
        %v1645 = vlaneseq
        %v1646 = vshrl.u32 %v1645, 7
        %v1647 = vsub.s32 %v1644, %v1646
        %v1648 = vrot.slane %v1641, %v1647
        %v1649 = vcombine.low %v1624, %v1632
        %v1650 = vcombine.high %v1624, %v1632
        %v1652 = vunpack.c.l.s4 1934713408
        %v1653 = vunpack.c.0.s8 %v1652
        %v1654 = vlaneseq
        %v1655 = vshrl.u32 %v1654, 7
        %v1656 = vsub.s32 %v1653, %v1655
        %v1657 = vrot.slane %v1649, %v1656
        %v1659 = vunpack.c.l.s4 1934713408
        %v1660 = vunpack.c.0.s8 %v1659
        %v1661 = vlaneseq
        %v1662 = vshrl.u32 %v1661, 7
        %v1663 = vsub.s32 %v1660, %v1662
        %v1664 = vrot.slane %v1650, %v1663
        %v1665 = vcombine.low %v1640, %v1648
        %v1666 = vcombine.high %v1640, %v1648
        %v1668 = vunpack.c.l.s4 1934713408
        %v1669 = vunpack.c.0.s8 %v1668
        %v1670 = vlaneseq
        %v1671 = vshrl.u32 %v1670, 7
        %v1672 = vsub.s32 %v1669, %v1671
        %v1673 = vrot.slane %v1665, %v1672
        %v1675 = vunpack.c.l.s4 1934713408
        %v1676 = vunpack.c.0.s8 %v1675
        %v1677 = vlaneseq
        %v1678 = vshrl.u32 %v1677, 7
        %v1679 = vsub.s32 %v1676, %v1678
        %v1680 = vrot.slane %v1666, %v1679
        %v1681 = vcombine.low %v1657, %v1673
        %v1682 = vcombine.high %v1657, %v1673
        %v1683 = vcombine.low %v1664, %v1680
        %v1684 = vcombine.high %v1664, %v1680
        %v1685 = vcombine.low %v1181, %v1188
        %v1687 = vunpack.c.l.s4 1983009808
        %v1688 = vunpack.c.0.s8 %v1687
        %v1689 = vlaneseq
        %v1690 = vshrl.u32 %v1689, 7
        %v1691 = vsub.s32 %v1688, %v1690
        %v1692 = vrot.slane %v1685, %v1691
        %v1693 = vcombine.low %v1205, %v1206
        %v1695 = vunpack.c.l.s4 1983009808
        %v1696 = vunpack.c.0.s8 %v1695
        %v1697 = vlaneseq
        %v1698 = vshrl.u32 %v1697, 7
        %v1699 = vsub.s32 %v1696, %v1698
        %v1700 = vrot.slane %v1693, %v1699
        %v1701 = vcombine.low %v1197, %v1204
        %v1703 = vunpack.c.l.s4 1983009808
        %v1704 = vunpack.c.0.s8 %v1703
        %v1705 = vlaneseq
        %v1706 = vshrl.u32 %v1705, 7
        %v1707 = vsub.s32 %v1704, %v1706
        %v1708 = vrot.slane %v1701, %v1707
        %v1709 = vcombine.low %v1207, %v1208
        %v1711 = vunpack.c.l.s4 1983009808
        %v1712 = vunpack.c.0.s8 %v1711
        %v1713 = vlaneseq
        %v1714 = vshrl.u32 %v1713, 7
        %v1715 = vsub.s32 %v1712, %v1714
        %v1716 = vrot.slane %v1709, %v1715
        %v1717 = vcombine.low %v1692, %v1700
        %v1718 = vcombine.high %v1692, %v1700
        %v1720 = vunpack.c.l.s4 1934713408
        %v1721 = vunpack.c.0.s8 %v1720
        %v1722 = vlaneseq
        %v1723 = vshrl.u32 %v1722, 7
        %v1724 = vsub.s32 %v1721, %v1723
        %v1725 = vrot.slane %v1717, %v1724
        %v1727 = vunpack.c.l.s4 1934713408
        %v1728 = vunpack.c.0.s8 %v1727
        %v1729 = vlaneseq
        %v1730 = vshrl.u32 %v1729, 7
        %v1731 = vsub.s32 %v1728, %v1730
        %v1732 = vrot.slane %v1718, %v1731
        %v1733 = vcombine.low %v1708, %v1716
        %v1734 = vcombine.high %v1708, %v1716
        %v1736 = vunpack.c.l.s4 1934713408
        %v1737 = vunpack.c.0.s8 %v1736
        %v1738 = vlaneseq
        %v1739 = vshrl.u32 %v1738, 7
        %v1740 = vsub.s32 %v1737, %v1739
        %v1741 = vrot.slane %v1733, %v1740
        %v1743 = vunpack.c.l.s4 1934713408
        %v1744 = vunpack.c.0.s8 %v1743
        %v1745 = vlaneseq
        %v1746 = vshrl.u32 %v1745, 7
        %v1747 = vsub.s32 %v1744, %v1746
        %v1748 = vrot.slane %v1734, %v1747
        %v1749 = vcombine.low %v1725, %v1741
        %v1750 = vcombine.high %v1725, %v1741
        %v1751 = vcombine.low %v1732, %v1748
        %v1752 = vcombine.high %v1732, %v1748
        %v1753 = vcombine.low %v1249, %v1256
        %v1755 = vunpack.c.l.s4 1983009808
        %v1756 = vunpack.c.0.s8 %v1755
        %v1757 = vlaneseq
        %v1758 = vshrl.u32 %v1757, 7
        %v1759 = vsub.s32 %v1756, %v1758
        %v1760 = vrot.slane %v1753, %v1759
        %v1761 = vcombine.low %v1273, %v1274
        %v1763 = vunpack.c.l.s4 1983009808
        %v1764 = vunpack.c.0.s8 %v1763
        %v1765 = vlaneseq
        %v1766 = vshrl.u32 %v1765, 7
        %v1767 = vsub.s32 %v1764, %v1766
        %v1768 = vrot.slane %v1761, %v1767
        %v1769 = vcombine.low %v1265, %v1272
        %v1771 = vunpack.c.l.s4 1983009808
        %v1772 = vunpack.c.0.s8 %v1771
        %v1773 = vlaneseq
        %v1774 = vshrl.u32 %v1773, 7
        %v1775 = vsub.s32 %v1772, %v1774
        %v1776 = vrot.slane %v1769, %v1775
        %v1777 = vcombine.low %v1275, %v1276
        %v1779 = vunpack.c.l.s4 1983009808
        %v1780 = vunpack.c.0.s8 %v1779
        %v1781 = vlaneseq
        %v1782 = vshrl.u32 %v1781, 7
        %v1783 = vsub.s32 %v1780, %v1782
        %v1784 = vrot.slane %v1777, %v1783
        %v1785 = vcombine.low %v1760, %v1768
        %v1786 = vcombine.high %v1760, %v1768
        %v1788 = vunpack.c.l.s4 1934713408
        %v1789 = vunpack.c.0.s8 %v1788
        %v1790 = vlaneseq
        %v1791 = vshrl.u32 %v1790, 7
        %v1792 = vsub.s32 %v1789, %v1791
        %v1793 = vrot.slane %v1785, %v1792
        %v1795 = vunpack.c.l.s4 1934713408
        %v1796 = vunpack.c.0.s8 %v1795
        %v1797 = vlaneseq
        %v1798 = vshrl.u32 %v1797, 7
        %v1799 = vsub.s32 %v1796, %v1798
        %v1800 = vrot.slane %v1786, %v1799
        %v1801 = vcombine.low %v1776, %v1784
        %v1802 = vcombine.high %v1776, %v1784
        %v1804 = vunpack.c.l.s4 1934713408
        %v1805 = vunpack.c.0.s8 %v1804
        %v1806 = vlaneseq
        %v1807 = vshrl.u32 %v1806, 7
        %v1808 = vsub.s32 %v1805, %v1807
        %v1809 = vrot.slane %v1801, %v1808
        %v1811 = vunpack.c.l.s4 1934713408
        %v1812 = vunpack.c.0.s8 %v1811
        %v1813 = vlaneseq
        %v1814 = vshrl.u32 %v1813, 7
        %v1815 = vsub.s32 %v1812, %v1814
        %v1816 = vrot.slane %v1802, %v1815
        %v1817 = vcombine.low %v1793, %v1809
        %v1818 = vcombine.high %v1793, %v1809
        %v1819 = vcombine.low %v1800, %v1816
        %v1820 = vcombine.high %v1800, %v1816
        %v1821 = vcombine.low %v1317, %v1324
        %v1823 = vunpack.c.l.s4 1983009808
        %v1824 = vunpack.c.0.s8 %v1823
        %v1825 = vlaneseq
        %v1826 = vshrl.u32 %v1825, 7
        %v1827 = vsub.s32 %v1824, %v1826
        %v1828 = vrot.slane %v1821, %v1827
        %v1829 = vcombine.low %v1341, %v1342
        %v1831 = vunpack.c.l.s4 1983009808
        %v1832 = vunpack.c.0.s8 %v1831
        %v1833 = vlaneseq
        %v1834 = vshrl.u32 %v1833, 7
        %v1835 = vsub.s32 %v1832, %v1834
        %v1836 = vrot.slane %v1829, %v1835
        %v1837 = vcombine.low %v1333, %v1340
        %v1839 = vunpack.c.l.s4 1983009808
        %v1840 = vunpack.c.0.s8 %v1839
        %v1841 = vlaneseq
        %v1842 = vshrl.u32 %v1841, 7
        %v1843 = vsub.s32 %v1840, %v1842
        %v1844 = vrot.slane %v1837, %v1843
        %v1845 = vcombine.low %v1343, %v1344
        %v1847 = vunpack.c.l.s4 1983009808
        %v1848 = vunpack.c.0.s8 %v1847
        %v1849 = vlaneseq
        %v1850 = vshrl.u32 %v1849, 7
        %v1851 = vsub.s32 %v1848, %v1850
        %v1852 = vrot.slane %v1845, %v1851
        %v1853 = vcombine.low %v1828, %v1836
        %v1854 = vcombine.high %v1828, %v1836
        %v1856 = vunpack.c.l.s4 1934713408
        %v1857 = vunpack.c.0.s8 %v1856
        %v1858 = vlaneseq
        %v1859 = vshrl.u32 %v1858, 7
        %v1860 = vsub.s32 %v1857, %v1859
        %v1861 = vrot.slane %v1853, %v1860
        %v1863 = vunpack.c.l.s4 1934713408
        %v1864 = vunpack.c.0.s8 %v1863
        %v1865 = vlaneseq
        %v1866 = vshrl.u32 %v1865, 7
        %v1867 = vsub.s32 %v1864, %v1866
        %v1868 = vrot.slane %v1854, %v1867
        %v1869 = vcombine.low %v1844, %v1852
        %v1870 = vcombine.high %v1844, %v1852
        %v1872 = vunpack.c.l.s4 1934713408
        %v1873 = vunpack.c.0.s8 %v1872
        %v1874 = vlaneseq
        %v1875 = vshrl.u32 %v1874, 7
        %v1876 = vsub.s32 %v1873, %v1875
        %v1877 = vrot.slane %v1869, %v1876
        %v1879 = vunpack.c.l.s4 1934713408
        %v1880 = vunpack.c.0.s8 %v1879
        %v1881 = vlaneseq
        %v1882 = vshrl.u32 %v1881, 7
        %v1883 = vsub.s32 %v1880, %v1882
        %v1884 = vrot.slane %v1870, %v1883
        %v1885 = vcombine.low %v1861, %v1877
        %v1886 = vcombine.high %v1861, %v1877
        %v1887 = vcombine.low %v1868, %v1884
        %v1888 = vcombine.high %v1868, %v1884
        %v1889 = vcombine.low %v1385, %v1392
        %v1891 = vunpack.c.l.s4 1983009808
        %v1892 = vunpack.c.0.s8 %v1891
        %v1893 = vlaneseq
        %v1894 = vshrl.u32 %v1893, 7
        %v1895 = vsub.s32 %v1892, %v1894
        %v1896 = vrot.slane %v1889, %v1895
        %v1897 = vcombine.low %v1409, %v1410
        %v1899 = vunpack.c.l.s4 1983009808
        %v1900 = vunpack.c.0.s8 %v1899
        %v1901 = vlaneseq
        %v1902 = vshrl.u32 %v1901, 7
        %v1903 = vsub.s32 %v1900, %v1902
        %v1904 = vrot.slane %v1897, %v1903
        %v1905 = vcombine.low %v1401, %v1408
        %v1907 = vunpack.c.l.s4 1983009808
        %v1908 = vunpack.c.0.s8 %v1907
        %v1909 = vlaneseq
        %v1910 = vshrl.u32 %v1909, 7
        %v1911 = vsub.s32 %v1908, %v1910
        %v1912 = vrot.slane %v1905, %v1911
        %v1913 = vcombine.low %v1411, %v1412
        %v1915 = vunpack.c.l.s4 1983009808
        %v1916 = vunpack.c.0.s8 %v1915
        %v1917 = vlaneseq
        %v1918 = vshrl.u32 %v1917, 7
        %v1919 = vsub.s32 %v1916, %v1918
        %v1920 = vrot.slane %v1913, %v1919
        %v1921 = vcombine.low %v1896, %v1904
        %v1922 = vcombine.high %v1896, %v1904
        %v1924 = vunpack.c.l.s4 1934713408
        %v1925 = vunpack.c.0.s8 %v1924
        %v1926 = vlaneseq
        %v1927 = vshrl.u32 %v1926, 7
        %v1928 = vsub.s32 %v1925, %v1927
        %v1929 = vrot.slane %v1921, %v1928
        %v1931 = vunpack.c.l.s4 1934713408
        %v1932 = vunpack.c.0.s8 %v1931
        %v1933 = vlaneseq
        %v1934 = vshrl.u32 %v1933, 7
        %v1935 = vsub.s32 %v1932, %v1934
        %v1936 = vrot.slane %v1922, %v1935
        %v1937 = vcombine.low %v1912, %v1920
        %v1938 = vcombine.high %v1912, %v1920
        %v1940 = vunpack.c.l.s4 1934713408
        %v1941 = vunpack.c.0.s8 %v1940
        %v1942 = vlaneseq
        %v1943 = vshrl.u32 %v1942, 7
        %v1944 = vsub.s32 %v1941, %v1943
        %v1945 = vrot.slane %v1937, %v1944
        %v1947 = vunpack.c.l.s4 1934713408
        %v1948 = vunpack.c.0.s8 %v1947
        %v1949 = vlaneseq
        %v1950 = vshrl.u32 %v1949, 7
        %v1951 = vsub.s32 %v1948, %v1950
        %v1952 = vrot.slane %v1938, %v1951
        %v1953 = vcombine.low %v1929, %v1945
        %v1954 = vcombine.high %v1929, %v1945
        %v1955 = vcombine.low %v1936, %v1952
        %v1956 = vcombine.high %v1936, %v1952
        %v1959 = vpack.i.b16 %v1545, %v1477
        %v1960 = vshrl.u32 %v1477, 16
        %v1961 = vshrl.u32 %v1545, 16
        %v1962 = vpack.i.b16 %v1961, %v1960
        %v1965 = vpack.i.b16 %v1546, %v1478
        %v1966 = vshrl.u32 %v1478, 16
        %v1967 = vshrl.u32 %v1546, 16
        %v1968 = vpack.i.b16 %v1967, %v1966
        %v1971 = vpack.i.b16 %v1547, %v1479
        %v1972 = vshrl.u32 %v1479, 16
        %v1973 = vshrl.u32 %v1547, 16
        %v1974 = vpack.i.b16 %v1973, %v1972
        %v1977 = vpack.i.b16 %v1548, %v1480
        %v1978 = vshrl.u32 %v1480, 16
        %v1979 = vshrl.u32 %v1548, 16
        %v1980 = vpack.i.b16 %v1979, %v1978
        %v1983 = vpack.i.b16 %v1681, %v1613
        %v1984 = vshrl.u32 %v1613, 16
        %v1985 = vshrl.u32 %v1681, 16
        %v1986 = vpack.i.b16 %v1985, %v1984
        %v1989 = vpack.i.b16 %v1682, %v1614
        %v1990 = vshrl.u32 %v1614, 16
        %v1991 = vshrl.u32 %v1682, 16
        %v1992 = vpack.i.b16 %v1991, %v1990
        %v1995 = vpack.i.b16 %v1683, %v1615
        %v1996 = vshrl.u32 %v1615, 16
        %v1997 = vshrl.u32 %v1683, 16
        %v1998 = vpack.i.b16 %v1997, %v1996
        %v2001 = vpack.i.b16 %v1684, %v1616
        %v2002 = vshrl.u32 %v1616, 16
        %v2003 = vshrl.u32 %v1684, 16
        %v2004 = vpack.i.b16 %v2003, %v2002
        %v2007 = vpack.i.b16 %v1817, %v1749
        %v2008 = vshrl.u32 %v1749, 16
        %v2009 = vshrl.u32 %v1817, 16
        %v2010 = vpack.i.b16 %v2009, %v2008
        %v2013 = vpack.i.b16 %v1818, %v1750
        %v2014 = vshrl.u32 %v1750, 16
        %v2015 = vshrl.u32 %v1818, 16
        %v2016 = vpack.i.b16 %v2015, %v2014
        %v2019 = vpack.i.b16 %v1819, %v1751
        %v2020 = vshrl.u32 %v1751, 16
        %v2021 = vshrl.u32 %v1819, 16
        %v2022 = vpack.i.b16 %v2021, %v2020
        %v2025 = vpack.i.b16 %v1820, %v1752
        %v2026 = vshrl.u32 %v1752, 16
        %v2027 = vshrl.u32 %v1820, 16
        %v2028 = vpack.i.b16 %v2027, %v2026
        %v2031 = vpack.i.b16 %v1953, %v1885
        %v2032 = vshrl.u32 %v1885, 16
        %v2033 = vshrl.u32 %v1953, 16
        %v2034 = vpack.i.b16 %v2033, %v2032
        %v2037 = vpack.i.b16 %v1954, %v1886
        %v2038 = vshrl.u32 %v1886, 16
        %v2039 = vshrl.u32 %v1954, 16
        %v2040 = vpack.i.b16 %v2039, %v2038
        %v2043 = vpack.i.b16 %v1955, %v1887
        %v2044 = vshrl.u32 %v1887, 16
        %v2045 = vshrl.u32 %v1955, 16
        %v2046 = vpack.i.b16 %v2045, %v2044
        %v2049 = vpack.i.b16 %v1956, %v1888
        %v2050 = vshrl.u32 %v1888, 16
        %v2051 = vshrl.u32 %v1956, 16
        %v2052 = vpack.i.b16 %v2051, %v2050
        %2057 = vrot.lane.b32.xlu0 %v677, 120
        %v2058 = vpop.permute.xlu0 %2057
        %2059 = vrot.lane.b32.xlu0 %v678, 120
        %v2060 = vpop.permute.xlu0 %2059
        %2061 = vrot.lane.b32.xlu0 %v679, 120
        %v2062 = vpop.permute.xlu0 %2061
        %2063 = vrot.lane.b32.xlu0 %v680, 120
        %v2064 = vpop.permute.xlu0 %2063
        %2065 = vrot.lane.b32.xlu0 %v677, 112
        %v2066 = vpop.permute.xlu0 %2065
        %2067 = vrot.lane.b32.xlu0 %v678, 112
        %v2068 = vpop.permute.xlu0 %2067
        %2069 = vrot.lane.b32.xlu0 %v679, 112
        %v2070 = vpop.permute.xlu0 %2069
        %2071 = vrot.lane.b32.xlu0 %v680, 112
        %v2072 = vpop.permute.xlu0 %2071
        %2073 = vrot.lane.b32.xlu0 %v677, 104
        %v2074 = vpop.permute.xlu0 %2073
        %2075 = vrot.lane.b32.xlu0 %v678, 104
        %v2076 = vpop.permute.xlu0 %2075
        %2077 = vrot.lane.b32.xlu0 %v679, 104
        %v2078 = vpop.permute.xlu0 %2077
        %2079 = vrot.lane.b32.xlu0 %v680, 104
        %v2080 = vpop.permute.xlu0 %2079
        %2081 = vrot.lane.b32.xlu0 %v677, 96
        %v2082 = vpop.permute.xlu0 %2081
        %2083 = vrot.lane.b32.xlu0 %v678, 96
        %v2084 = vpop.permute.xlu0 %2083
        %2085 = vrot.lane.b32.xlu0 %v679, 96
        %v2086 = vpop.permute.xlu0 %2085
        %2087 = vrot.lane.b32.xlu0 %v680, 96
        %v2088 = vpop.permute.xlu0 %2087
        %2089 = vrot.lane.b32.xlu0 %v677, 88
        %v2090 = vpop.permute.xlu0 %2089
        %2091 = vrot.lane.b32.xlu0 %v678, 88
        %v2092 = vpop.permute.xlu0 %2091
        %2093 = vrot.lane.b32.xlu0 %v679, 88
        %v2094 = vpop.permute.xlu0 %2093
        %2095 = vrot.lane.b32.xlu0 %v680, 88
        %v2096 = vpop.permute.xlu0 %2095
        %2097 = vrot.lane.b32.xlu0 %v677, 80
        %v2098 = vpop.permute.xlu0 %2097
        %2099 = vrot.lane.b32.xlu0 %v678, 80
        %v2100 = vpop.permute.xlu0 %2099
        %2101 = vrot.lane.b32.xlu0 %v679, 80
        %v2102 = vpop.permute.xlu0 %2101
        %2103 = vrot.lane.b32.xlu0 %v680, 80
        %v2104 = vpop.permute.xlu0 %2103
        %2105 = vrot.lane.b32.xlu0 %v677, 72
        %v2106 = vpop.permute.xlu0 %2105
        %2107 = vrot.lane.b32.xlu0 %v678, 72
        %v2108 = vpop.permute.xlu0 %2107
        %2109 = vrot.lane.b32.xlu0 %v679, 72
        %v2110 = vpop.permute.xlu0 %2109
        %2111 = vrot.lane.b32.xlu0 %v680, 72
        %v2112 = vpop.permute.xlu0 %2111
        %v2115 = vpack.i.b16 %v2058, %v677
        %v2117 = vshrl.u32 %v677, 16
        %v2118 = vshrl.u32 %v2058, 16
        %v2119 = vpack.i.b16 %v2118, %v2117
        %v2123 = vpack.i.b16 %v2074, %v2066
        %v2125 = vshrl.u32 %v2066, 16
        %v2126 = vshrl.u32 %v2074, 16
        %v2127 = vpack.i.b16 %v2126, %v2125
        %v2131 = vpack.i.b16 %v2090, %v2082
        %v2133 = vshrl.u32 %v2082, 16
        %v2134 = vshrl.u32 %v2090, 16
        %v2135 = vpack.i.b16 %v2134, %v2133
        %v2139 = vpack.i.b16 %v2106, %v2098
        %v2141 = vshrl.u32 %v2098, 16
        %v2142 = vshrl.u32 %v2106, 16
        %v2143 = vpack.i.b16 %v2142, %v2141
        %v2147 = vpack.i.b16 %v2060, %v678
        %v2149 = vshrl.u32 %v678, 16
        %v2150 = vshrl.u32 %v2060, 16
        %v2151 = vpack.i.b16 %v2150, %v2149
        %v2155 = vpack.i.b16 %v2076, %v2068
        %v2157 = vshrl.u32 %v2068, 16
        %v2158 = vshrl.u32 %v2076, 16
        %v2159 = vpack.i.b16 %v2158, %v2157
        %v2163 = vpack.i.b16 %v2092, %v2084
        %v2165 = vshrl.u32 %v2084, 16
        %v2166 = vshrl.u32 %v2092, 16
        %v2167 = vpack.i.b16 %v2166, %v2165
        %v2171 = vpack.i.b16 %v2108, %v2100
        %v2173 = vshrl.u32 %v2100, 16
        %v2174 = vshrl.u32 %v2108, 16
        %v2175 = vpack.i.b16 %v2174, %v2173
        %v2179 = vpack.i.b16 %v2062, %v679
        %v2181 = vshrl.u32 %v679, 16
        %v2182 = vshrl.u32 %v2062, 16
        %v2183 = vpack.i.b16 %v2182, %v2181
        %v2187 = vpack.i.b16 %v2078, %v2070
        %v2189 = vshrl.u32 %v2070, 16
        %v2190 = vshrl.u32 %v2078, 16
        %v2191 = vpack.i.b16 %v2190, %v2189
        %v2195 = vpack.i.b16 %v2094, %v2086
        %v2197 = vshrl.u32 %v2086, 16
        %v2198 = vshrl.u32 %v2094, 16
        %v2199 = vpack.i.b16 %v2198, %v2197
        %v2203 = vpack.i.b16 %v2110, %v2102
        %v2205 = vshrl.u32 %v2102, 16
        %v2206 = vshrl.u32 %v2110, 16
        %v2207 = vpack.i.b16 %v2206, %v2205
        %v2211 = vpack.i.b16 %v2064, %v680
        %v2213 = vshrl.u32 %v680, 16
        %v2214 = vshrl.u32 %v2064, 16
        %v2215 = vpack.i.b16 %v2214, %v2213
        %v2219 = vpack.i.b16 %v2080, %v2072
        %v2221 = vshrl.u32 %v2072, 16
        %v2222 = vshrl.u32 %v2080, 16
        %v2223 = vpack.i.b16 %v2222, %v2221
        %v2227 = vpack.i.b16 %v2096, %v2088
        %v2229 = vshrl.u32 %v2088, 16
        %v2230 = vshrl.u32 %v2096, 16
        %v2231 = vpack.i.b16 %v2230, %v2229
        %v2235 = vpack.i.b16 %v2112, %v2104
        %v2237 = vshrl.u32 %v2104, 16
        %v2238 = vshrl.u32 %v2112, 16
        %v2239 = vpack.i.b16 %v2238, %v2237
        %v2241 = vcombine.low %v2115, %v2131
        %v2242 = vcombine.high %v2115, %v2131
        %v2244 = vunpack.c.l.s4 1983009808
        %v2245 = vunpack.c.0.s8 %v2244
        %v2246 = vlaneseq
        %v2247 = vshrl.u32 %v2246, 7
        %v2248 = vsub.s32 %v2245, %v2247
        %v2249 = vrot.slane %v2241, %v2248
        %v2251 = vunpack.c.l.s4 1983009808
        %v2252 = vunpack.c.0.s8 %v2251
        %v2253 = vlaneseq
        %v2254 = vshrl.u32 %v2253, 7
        %v2255 = vsub.s32 %v2252, %v2254
        %v2256 = vrot.slane %v2242, %v2255
        %v2257 = vcombine.low %v2123, %v2139
        %v2258 = vcombine.high %v2123, %v2139
        %v2260 = vunpack.c.l.s4 1983009808
        %v2261 = vunpack.c.0.s8 %v2260
        %v2262 = vlaneseq
        %v2263 = vshrl.u32 %v2262, 7
        %v2264 = vsub.s32 %v2261, %v2263
        %v2265 = vrot.slane %v2257, %v2264
        %v2267 = vunpack.c.l.s4 1983009808
        %v2268 = vunpack.c.0.s8 %v2267
        %v2269 = vlaneseq
        %v2270 = vshrl.u32 %v2269, 7
        %v2271 = vsub.s32 %v2268, %v2270
        %v2272 = vrot.slane %v2258, %v2271
        %v2273 = vcombine.low %v2249, %v2265
        %v2274 = vcombine.high %v2249, %v2265
        %v2276 = vunpack.c.l.s4 1934713408
        %v2277 = vunpack.c.0.s8 %v2276
        %v2278 = vlaneseq
        %v2279 = vshrl.u32 %v2278, 7
        %v2280 = vsub.s32 %v2277, %v2279
        %v2281 = vrot.slane %v2273, %v2280
        %v2283 = vunpack.c.l.s4 1934713408
        %v2284 = vunpack.c.0.s8 %v2283
        %v2285 = vlaneseq
        %v2286 = vshrl.u32 %v2285, 7
        %v2287 = vsub.s32 %v2284, %v2286
        %v2288 = vrot.slane %v2274, %v2287
        %v2289 = vcombine.low %v2256, %v2272
        %v2290 = vcombine.high %v2256, %v2272
        %v2292 = vunpack.c.l.s4 1934713408
        %v2293 = vunpack.c.0.s8 %v2292
        %v2294 = vlaneseq
        %v2295 = vshrl.u32 %v2294, 7
        %v2296 = vsub.s32 %v2293, %v2295
        %v2297 = vrot.slane %v2289, %v2296
        %v2299 = vunpack.c.l.s4 1934713408
        %v2300 = vunpack.c.0.s8 %v2299
        %v2301 = vlaneseq
        %v2302 = vshrl.u32 %v2301, 7
        %v2303 = vsub.s32 %v2300, %v2302
        %v2304 = vrot.slane %v2290, %v2303
        %v2305 = vcombine.high %v2281, 0
        %v2306 = vcombine.high %v2288, 0
        %v2307 = vcombine.high %v2297, 0
        %v2308 = vcombine.high %v2304, 0
        %v2309 = vcombine.low %v2119, %v2135
        %v2310 = vcombine.high %v2119, %v2135
        %v2312 = vunpack.c.l.s4 1983009808
        %v2313 = vunpack.c.0.s8 %v2312
        %v2314 = vlaneseq
        %v2315 = vshrl.u32 %v2314, 7
        %v2316 = vsub.s32 %v2313, %v2315
        %v2317 = vrot.slane %v2309, %v2316
        %v2319 = vunpack.c.l.s4 1983009808
        %v2320 = vunpack.c.0.s8 %v2319
        %v2321 = vlaneseq
        %v2322 = vshrl.u32 %v2321, 7
        %v2323 = vsub.s32 %v2320, %v2322
        %v2324 = vrot.slane %v2310, %v2323
        %v2325 = vcombine.low %v2127, %v2143
        %v2326 = vcombine.high %v2127, %v2143
        %v2328 = vunpack.c.l.s4 1983009808
        %v2329 = vunpack.c.0.s8 %v2328
        %v2330 = vlaneseq
        %v2331 = vshrl.u32 %v2330, 7
        %v2332 = vsub.s32 %v2329, %v2331
        %v2333 = vrot.slane %v2325, %v2332
        %v2335 = vunpack.c.l.s4 1983009808
        %v2336 = vunpack.c.0.s8 %v2335
        %v2337 = vlaneseq
        %v2338 = vshrl.u32 %v2337, 7
        %v2339 = vsub.s32 %v2336, %v2338
        %v2340 = vrot.slane %v2326, %v2339
        %v2341 = vcombine.low %v2317, %v2333
        %v2342 = vcombine.high %v2317, %v2333
        %v2344 = vunpack.c.l.s4 1934713408
        %v2345 = vunpack.c.0.s8 %v2344
        %v2346 = vlaneseq
        %v2347 = vshrl.u32 %v2346, 7
        %v2348 = vsub.s32 %v2345, %v2347
        %v2349 = vrot.slane %v2341, %v2348
        %v2351 = vunpack.c.l.s4 1934713408
        %v2352 = vunpack.c.0.s8 %v2351
        %v2353 = vlaneseq
        %v2354 = vshrl.u32 %v2353, 7
        %v2355 = vsub.s32 %v2352, %v2354
        %v2356 = vrot.slane %v2342, %v2355
        %v2357 = vcombine.low %v2324, %v2340
        %v2358 = vcombine.high %v2324, %v2340
        %v2360 = vunpack.c.l.s4 1934713408
        %v2361 = vunpack.c.0.s8 %v2360
        %v2362 = vlaneseq
        %v2363 = vshrl.u32 %v2362, 7
        %v2364 = vsub.s32 %v2361, %v2363
        %v2365 = vrot.slane %v2357, %v2364
        %v2367 = vunpack.c.l.s4 1934713408
        %v2368 = vunpack.c.0.s8 %v2367
        %v2369 = vlaneseq
        %v2370 = vshrl.u32 %v2369, 7
        %v2371 = vsub.s32 %v2368, %v2370
        %v2372 = vrot.slane %v2358, %v2371
        %v2373 = vcombine.high %v2349, 0
        %v2374 = vcombine.high %v2356, 0
        %v2375 = vcombine.high %v2365, 0
        %v2376 = vcombine.high %v2372, 0
        %v2377 = vcombine.low %v2147, %v2163
        %v2378 = vcombine.high %v2147, %v2163
        %v2380 = vunpack.c.l.s4 1983009808
        %v2381 = vunpack.c.0.s8 %v2380
        %v2382 = vlaneseq
        %v2383 = vshrl.u32 %v2382, 7
        %v2384 = vsub.s32 %v2381, %v2383
        %v2385 = vrot.slane %v2377, %v2384
        %v2387 = vunpack.c.l.s4 1983009808
        %v2388 = vunpack.c.0.s8 %v2387
        %v2389 = vlaneseq
        %v2390 = vshrl.u32 %v2389, 7
        %v2391 = vsub.s32 %v2388, %v2390
        %v2392 = vrot.slane %v2378, %v2391
        %v2393 = vcombine.low %v2155, %v2171
        %v2394 = vcombine.high %v2155, %v2171
        %v2396 = vunpack.c.l.s4 1983009808
        %v2397 = vunpack.c.0.s8 %v2396
        %v2398 = vlaneseq
        %v2399 = vshrl.u32 %v2398, 7
        %v2400 = vsub.s32 %v2397, %v2399
        %v2401 = vrot.slane %v2393, %v2400
        %v2403 = vunpack.c.l.s4 1983009808
        %v2404 = vunpack.c.0.s8 %v2403
        %v2405 = vlaneseq
        %v2406 = vshrl.u32 %v2405, 7
        %v2407 = vsub.s32 %v2404, %v2406
        %v2408 = vrot.slane %v2394, %v2407
        %v2409 = vcombine.low %v2385, %v2401
        %v2410 = vcombine.high %v2385, %v2401
        %v2412 = vunpack.c.l.s4 1934713408
        %v2413 = vunpack.c.0.s8 %v2412
        %v2414 = vlaneseq
        %v2415 = vshrl.u32 %v2414, 7
        %v2416 = vsub.s32 %v2413, %v2415
        %v2417 = vrot.slane %v2409, %v2416
        %v2419 = vunpack.c.l.s4 1934713408
        %v2420 = vunpack.c.0.s8 %v2419
        %v2421 = vlaneseq
        %v2422 = vshrl.u32 %v2421, 7
        %v2423 = vsub.s32 %v2420, %v2422
        %v2424 = vrot.slane %v2410, %v2423
        %v2425 = vcombine.low %v2392, %v2408
        %v2426 = vcombine.high %v2392, %v2408
        %v2428 = vunpack.c.l.s4 1934713408
        %v2429 = vunpack.c.0.s8 %v2428
        %v2430 = vlaneseq
        %v2431 = vshrl.u32 %v2430, 7
        %v2432 = vsub.s32 %v2429, %v2431
        %v2433 = vrot.slane %v2425, %v2432
        %v2435 = vunpack.c.l.s4 1934713408
        %v2436 = vunpack.c.0.s8 %v2435
        %v2437 = vlaneseq
        %v2438 = vshrl.u32 %v2437, 7
        %v2439 = vsub.s32 %v2436, %v2438
        %v2440 = vrot.slane %v2426, %v2439
        %v2441 = vcombine.high %v2417, 0
        %v2442 = vcombine.high %v2424, 0
        %v2443 = vcombine.high %v2433, 0
        %v2444 = vcombine.high %v2440, 0
        %v2445 = vcombine.low %v2151, %v2167
        %v2446 = vcombine.high %v2151, %v2167
        %v2448 = vunpack.c.l.s4 1983009808
        %v2449 = vunpack.c.0.s8 %v2448
        %v2450 = vlaneseq
        %v2451 = vshrl.u32 %v2450, 7
        %v2452 = vsub.s32 %v2449, %v2451
        %v2453 = vrot.slane %v2445, %v2452
        %v2455 = vunpack.c.l.s4 1983009808
        %v2456 = vunpack.c.0.s8 %v2455
        %v2457 = vlaneseq
        %v2458 = vshrl.u32 %v2457, 7
        %v2459 = vsub.s32 %v2456, %v2458
        %v2460 = vrot.slane %v2446, %v2459
        %v2461 = vcombine.low %v2159, %v2175
        %v2462 = vcombine.high %v2159, %v2175
        %v2464 = vunpack.c.l.s4 1983009808
        %v2465 = vunpack.c.0.s8 %v2464
        %v2466 = vlaneseq
        %v2467 = vshrl.u32 %v2466, 7
        %v2468 = vsub.s32 %v2465, %v2467
        %v2469 = vrot.slane %v2461, %v2468
        %v2471 = vunpack.c.l.s4 1983009808
        %v2472 = vunpack.c.0.s8 %v2471
        %v2473 = vlaneseq
        %v2474 = vshrl.u32 %v2473, 7
        %v2475 = vsub.s32 %v2472, %v2474
        %v2476 = vrot.slane %v2462, %v2475
        %v2477 = vcombine.low %v2453, %v2469
        %v2478 = vcombine.high %v2453, %v2469
        %v2480 = vunpack.c.l.s4 1934713408
        %v2481 = vunpack.c.0.s8 %v2480
        %v2482 = vlaneseq
        %v2483 = vshrl.u32 %v2482, 7
        %v2484 = vsub.s32 %v2481, %v2483
        %v2485 = vrot.slane %v2477, %v2484
        %v2487 = vunpack.c.l.s4 1934713408
        %v2488 = vunpack.c.0.s8 %v2487
        %v2489 = vlaneseq
        %v2490 = vshrl.u32 %v2489, 7
        %v2491 = vsub.s32 %v2488, %v2490
        %v2492 = vrot.slane %v2478, %v2491
        %v2493 = vcombine.low %v2460, %v2476
        %v2494 = vcombine.high %v2460, %v2476
        %v2496 = vunpack.c.l.s4 1934713408
        %v2497 = vunpack.c.0.s8 %v2496
        %v2498 = vlaneseq
        %v2499 = vshrl.u32 %v2498, 7
        %v2500 = vsub.s32 %v2497, %v2499
        %v2501 = vrot.slane %v2493, %v2500
        %v2503 = vunpack.c.l.s4 1934713408
        %v2504 = vunpack.c.0.s8 %v2503
        %v2505 = vlaneseq
        %v2506 = vshrl.u32 %v2505, 7
        %v2507 = vsub.s32 %v2504, %v2506
        %v2508 = vrot.slane %v2494, %v2507
        %v2509 = vcombine.high %v2485, 0
        %v2510 = vcombine.high %v2492, 0
        %v2511 = vcombine.high %v2501, 0
        %v2512 = vcombine.high %v2508, 0
        %v2513 = vcombine.low %v2179, %v2195
        %v2514 = vcombine.high %v2179, %v2195
        %v2516 = vunpack.c.l.s4 1983009808
        %v2517 = vunpack.c.0.s8 %v2516
        %v2518 = vlaneseq
        %v2519 = vshrl.u32 %v2518, 7
        %v2520 = vsub.s32 %v2517, %v2519
        %v2521 = vrot.slane %v2513, %v2520
        %v2523 = vunpack.c.l.s4 1983009808
        %v2524 = vunpack.c.0.s8 %v2523
        %v2525 = vlaneseq
        %v2526 = vshrl.u32 %v2525, 7
        %v2527 = vsub.s32 %v2524, %v2526
        %v2528 = vrot.slane %v2514, %v2527
        %v2529 = vcombine.low %v2187, %v2203
        %v2530 = vcombine.high %v2187, %v2203
        %v2532 = vunpack.c.l.s4 1983009808
        %v2533 = vunpack.c.0.s8 %v2532
        %v2534 = vlaneseq
        %v2535 = vshrl.u32 %v2534, 7
        %v2536 = vsub.s32 %v2533, %v2535
        %v2537 = vrot.slane %v2529, %v2536
        %v2539 = vunpack.c.l.s4 1983009808
        %v2540 = vunpack.c.0.s8 %v2539
        %v2541 = vlaneseq
        %v2542 = vshrl.u32 %v2541, 7
        %v2543 = vsub.s32 %v2540, %v2542
        %v2544 = vrot.slane %v2530, %v2543
        %v2545 = vcombine.low %v2521, %v2537
        %v2546 = vcombine.high %v2521, %v2537
        %v2548 = vunpack.c.l.s4 1934713408
        %v2549 = vunpack.c.0.s8 %v2548
        %v2550 = vlaneseq
        %v2551 = vshrl.u32 %v2550, 7
        %v2552 = vsub.s32 %v2549, %v2551
        %v2553 = vrot.slane %v2545, %v2552
        %v2555 = vunpack.c.l.s4 1934713408
        %v2556 = vunpack.c.0.s8 %v2555
        %v2557 = vlaneseq
        %v2558 = vshrl.u32 %v2557, 7
        %v2559 = vsub.s32 %v2556, %v2558
        %v2560 = vrot.slane %v2546, %v2559
        %v2561 = vcombine.low %v2528, %v2544
        %v2562 = vcombine.high %v2528, %v2544
        %v2564 = vunpack.c.l.s4 1934713408
        %v2565 = vunpack.c.0.s8 %v2564
        %v2566 = vlaneseq
        %v2567 = vshrl.u32 %v2566, 7
        %v2568 = vsub.s32 %v2565, %v2567
        %v2569 = vrot.slane %v2561, %v2568
        %v2571 = vunpack.c.l.s4 1934713408
        %v2572 = vunpack.c.0.s8 %v2571
        %v2573 = vlaneseq
        %v2574 = vshrl.u32 %v2573, 7
        %v2575 = vsub.s32 %v2572, %v2574
        %v2576 = vrot.slane %v2562, %v2575
        %v2577 = vcombine.high %v2553, 0
        %v2578 = vcombine.high %v2560, 0
        %v2579 = vcombine.high %v2569, 0
        %v2580 = vcombine.high %v2576, 0
        %v2581 = vcombine.low %v2183, %v2199
        %v2582 = vcombine.high %v2183, %v2199
        %v2584 = vunpack.c.l.s4 1983009808
        %v2585 = vunpack.c.0.s8 %v2584
        %v2586 = vlaneseq
        %v2587 = vshrl.u32 %v2586, 7
        %v2588 = vsub.s32 %v2585, %v2587
        %v2589 = vrot.slane %v2581, %v2588
        %v2591 = vunpack.c.l.s4 1983009808
        %v2592 = vunpack.c.0.s8 %v2591
        %v2593 = vlaneseq
        %v2594 = vshrl.u32 %v2593, 7
        %v2595 = vsub.s32 %v2592, %v2594
        %v2596 = vrot.slane %v2582, %v2595
        %v2597 = vcombine.low %v2191, %v2207
        %v2598 = vcombine.high %v2191, %v2207
        %v2600 = vunpack.c.l.s4 1983009808
        %v2601 = vunpack.c.0.s8 %v2600
        %v2602 = vlaneseq
        %v2603 = vshrl.u32 %v2602, 7
        %v2604 = vsub.s32 %v2601, %v2603
        %v2605 = vrot.slane %v2597, %v2604
        %v2607 = vunpack.c.l.s4 1983009808
        %v2608 = vunpack.c.0.s8 %v2607
        %v2609 = vlaneseq
        %v2610 = vshrl.u32 %v2609, 7
        %v2611 = vsub.s32 %v2608, %v2610
        %v2612 = vrot.slane %v2598, %v2611
        %v2613 = vcombine.low %v2589, %v2605
        %v2614 = vcombine.high %v2589, %v2605
        %v2616 = vunpack.c.l.s4 1934713408
        %v2617 = vunpack.c.0.s8 %v2616
        %v2618 = vlaneseq
        %v2619 = vshrl.u32 %v2618, 7
        %v2620 = vsub.s32 %v2617, %v2619
        %v2621 = vrot.slane %v2613, %v2620
        %v2623 = vunpack.c.l.s4 1934713408
        %v2624 = vunpack.c.0.s8 %v2623
        %v2625 = vlaneseq
        %v2626 = vshrl.u32 %v2625, 7
        %v2627 = vsub.s32 %v2624, %v2626
        %v2628 = vrot.slane %v2614, %v2627
        %v2629 = vcombine.low %v2596, %v2612
        %v2630 = vcombine.high %v2596, %v2612
        %v2632 = vunpack.c.l.s4 1934713408
        %v2633 = vunpack.c.0.s8 %v2632
        %v2634 = vlaneseq
        %v2635 = vshrl.u32 %v2634, 7
        %v2636 = vsub.s32 %v2633, %v2635
        %v2637 = vrot.slane %v2629, %v2636
        %v2639 = vunpack.c.l.s4 1934713408
        %v2640 = vunpack.c.0.s8 %v2639
        %v2641 = vlaneseq
        %v2642 = vshrl.u32 %v2641, 7
        %v2643 = vsub.s32 %v2640, %v2642
        %v2644 = vrot.slane %v2630, %v2643
        %v2645 = vcombine.high %v2621, 0
        %v2646 = vcombine.high %v2628, 0
        %v2647 = vcombine.high %v2637, 0
        %v2648 = vcombine.high %v2644, 0
        %v2649 = vcombine.low %v2211, %v2227
        %v2650 = vcombine.high %v2211, %v2227
        %v2652 = vunpack.c.l.s4 1983009808
        %v2653 = vunpack.c.0.s8 %v2652
        %v2654 = vlaneseq
        %v2655 = vshrl.u32 %v2654, 7
        %v2656 = vsub.s32 %v2653, %v2655
        %v2657 = vrot.slane %v2649, %v2656
        %v2659 = vunpack.c.l.s4 1983009808
        %v2660 = vunpack.c.0.s8 %v2659
        %v2661 = vlaneseq
        %v2662 = vshrl.u32 %v2661, 7
        %v2663 = vsub.s32 %v2660, %v2662
        %v2664 = vrot.slane %v2650, %v2663
        %v2665 = vcombine.low %v2219, %v2235
        %v2666 = vcombine.high %v2219, %v2235
        %v2668 = vunpack.c.l.s4 1983009808
        %v2669 = vunpack.c.0.s8 %v2668
        %v2670 = vlaneseq
        %v2671 = vshrl.u32 %v2670, 7
        %v2672 = vsub.s32 %v2669, %v2671
        %v2673 = vrot.slane %v2665, %v2672
        %v2675 = vunpack.c.l.s4 1983009808
        %v2676 = vunpack.c.0.s8 %v2675
        %v2677 = vlaneseq
        %v2678 = vshrl.u32 %v2677, 7
        %v2679 = vsub.s32 %v2676, %v2678
        %v2680 = vrot.slane %v2666, %v2679
        %v2681 = vcombine.low %v2657, %v2673
        %v2682 = vcombine.high %v2657, %v2673
        %v2684 = vunpack.c.l.s4 1934713408
        %v2685 = vunpack.c.0.s8 %v2684
        %v2686 = vlaneseq
        %v2687 = vshrl.u32 %v2686, 7
        %v2688 = vsub.s32 %v2685, %v2687
        %v2689 = vrot.slane %v2681, %v2688
        %v2691 = vunpack.c.l.s4 1934713408
        %v2692 = vunpack.c.0.s8 %v2691
        %v2693 = vlaneseq
        %v2694 = vshrl.u32 %v2693, 7
        %v2695 = vsub.s32 %v2692, %v2694
        %v2696 = vrot.slane %v2682, %v2695
        %v2697 = vcombine.low %v2664, %v2680
        %v2698 = vcombine.high %v2664, %v2680
        %v2700 = vunpack.c.l.s4 1934713408
        %v2701 = vunpack.c.0.s8 %v2700
        %v2702 = vlaneseq
        %v2703 = vshrl.u32 %v2702, 7
        %v2704 = vsub.s32 %v2701, %v2703
        %v2705 = vrot.slane %v2697, %v2704
        %v2707 = vunpack.c.l.s4 1934713408
        %v2708 = vunpack.c.0.s8 %v2707
        %v2709 = vlaneseq
        %v2710 = vshrl.u32 %v2709, 7
        %v2711 = vsub.s32 %v2708, %v2710
        %v2712 = vrot.slane %v2698, %v2711
        %v2713 = vcombine.high %v2689, 0
        %v2714 = vcombine.high %v2696, 0
        %v2715 = vcombine.high %v2705, 0
        %v2716 = vcombine.high %v2712, 0
        %v2717 = vcombine.low %v2215, %v2231
        %v2718 = vcombine.high %v2215, %v2231
        %v2720 = vunpack.c.l.s4 1983009808
        %v2721 = vunpack.c.0.s8 %v2720
        %v2722 = vlaneseq
        %v2723 = vshrl.u32 %v2722, 7
        %v2724 = vsub.s32 %v2721, %v2723
        %v2725 = vrot.slane %v2717, %v2724
        %v2727 = vunpack.c.l.s4 1983009808
        %v2728 = vunpack.c.0.s8 %v2727
        %v2729 = vlaneseq
        %v2730 = vshrl.u32 %v2729, 7
        %v2731 = vsub.s32 %v2728, %v2730
        %v2732 = vrot.slane %v2718, %v2731
        %v2733 = vcombine.low %v2223, %v2239
        %v2734 = vcombine.high %v2223, %v2239
        %v2736 = vunpack.c.l.s4 1983009808
        %v2737 = vunpack.c.0.s8 %v2736
        %v2738 = vlaneseq
        %v2739 = vshrl.u32 %v2738, 7
        %v2740 = vsub.s32 %v2737, %v2739
        %v2741 = vrot.slane %v2733, %v2740
        %v2743 = vunpack.c.l.s4 1983009808
        %v2744 = vunpack.c.0.s8 %v2743
        %v2745 = vlaneseq
        %v2746 = vshrl.u32 %v2745, 7
        %v2747 = vsub.s32 %v2744, %v2746
        %v2748 = vrot.slane %v2734, %v2747
        %v2749 = vcombine.low %v2725, %v2741
        %v2750 = vcombine.high %v2725, %v2741
        %v2752 = vunpack.c.l.s4 1934713408
        %v2753 = vunpack.c.0.s8 %v2752
        %v2754 = vlaneseq
        %v2755 = vshrl.u32 %v2754, 7
        %v2756 = vsub.s32 %v2753, %v2755
        %v2757 = vrot.slane %v2749, %v2756
        %v2759 = vunpack.c.l.s4 1934713408
        %v2760 = vunpack.c.0.s8 %v2759
        %v2761 = vlaneseq
        %v2762 = vshrl.u32 %v2761, 7
        %v2763 = vsub.s32 %v2760, %v2762
        %v2764 = vrot.slane %v2750, %v2763
        %v2765 = vcombine.low %v2732, %v2748
        %v2766 = vcombine.high %v2732, %v2748
        %v2768 = vunpack.c.l.s4 1934713408
        %v2769 = vunpack.c.0.s8 %v2768
        %v2770 = vlaneseq
        %v2771 = vshrl.u32 %v2770, 7
        %v2772 = vsub.s32 %v2769, %v2771
        %v2773 = vrot.slane %v2765, %v2772
        %v2775 = vunpack.c.l.s4 1934713408
        %v2776 = vunpack.c.0.s8 %v2775
        %v2777 = vlaneseq
        %v2778 = vshrl.u32 %v2777, 7
        %v2779 = vsub.s32 %v2776, %v2778
        %v2780 = vrot.slane %v2766, %v2779
        %v2781 = vcombine.high %v2757, 0
        %v2782 = vcombine.high %v2764, 0
        %v2783 = vcombine.high %v2773, 0
        %v2784 = vcombine.high %v2780, 0
        %v2785 = vcombine.low %v2281, %v2288
        %v2787 = vunpack.c.l.s4 1983009808
        %v2788 = vunpack.c.0.s8 %v2787
        %v2789 = vlaneseq
        %v2790 = vshrl.u32 %v2789, 7
        %v2791 = vsub.s32 %v2788, %v2790
        %v2792 = vrot.slane %v2785, %v2791
        %v2793 = vcombine.low %v2305, %v2306
        %v2795 = vunpack.c.l.s4 1983009808
        %v2796 = vunpack.c.0.s8 %v2795
        %v2797 = vlaneseq
        %v2798 = vshrl.u32 %v2797, 7
        %v2799 = vsub.s32 %v2796, %v2798
        %v2800 = vrot.slane %v2793, %v2799
        %v2801 = vcombine.low %v2297, %v2304
        %v2803 = vunpack.c.l.s4 1983009808
        %v2804 = vunpack.c.0.s8 %v2803
        %v2805 = vlaneseq
        %v2806 = vshrl.u32 %v2805, 7
        %v2807 = vsub.s32 %v2804, %v2806
        %v2808 = vrot.slane %v2801, %v2807
        %v2809 = vcombine.low %v2307, %v2308
        %v2811 = vunpack.c.l.s4 1983009808
        %v2812 = vunpack.c.0.s8 %v2811
        %v2813 = vlaneseq
        %v2814 = vshrl.u32 %v2813, 7
        %v2815 = vsub.s32 %v2812, %v2814
        %v2816 = vrot.slane %v2809, %v2815
        %v2817 = vcombine.low %v2792, %v2800
        %v2818 = vcombine.high %v2792, %v2800
        %v2820 = vunpack.c.l.s4 1934713408
        %v2821 = vunpack.c.0.s8 %v2820
        %v2822 = vlaneseq
        %v2823 = vshrl.u32 %v2822, 7
        %v2824 = vsub.s32 %v2821, %v2823
        %v2825 = vrot.slane %v2817, %v2824
        %v2827 = vunpack.c.l.s4 1934713408
        %v2828 = vunpack.c.0.s8 %v2827
        %v2829 = vlaneseq
        %v2830 = vshrl.u32 %v2829, 7
        %v2831 = vsub.s32 %v2828, %v2830
        %v2832 = vrot.slane %v2818, %v2831
        %v2833 = vcombine.low %v2808, %v2816
        %v2834 = vcombine.high %v2808, %v2816
        %v2836 = vunpack.c.l.s4 1934713408
        %v2837 = vunpack.c.0.s8 %v2836
        %v2838 = vlaneseq
        %v2839 = vshrl.u32 %v2838, 7
        %v2840 = vsub.s32 %v2837, %v2839
        %v2841 = vrot.slane %v2833, %v2840
        %v2843 = vunpack.c.l.s4 1934713408
        %v2844 = vunpack.c.0.s8 %v2843
        %v2845 = vlaneseq
        %v2846 = vshrl.u32 %v2845, 7
        %v2847 = vsub.s32 %v2844, %v2846
        %v2848 = vrot.slane %v2834, %v2847
        %v2849 = vcombine.low %v2825, %v2841
        %v2850 = vcombine.high %v2825, %v2841
        %v2851 = vcombine.low %v2832, %v2848
        %v2852 = vcombine.high %v2832, %v2848
        %v2853 = vcombine.low %v2349, %v2356
        %v2855 = vunpack.c.l.s4 1983009808
        %v2856 = vunpack.c.0.s8 %v2855
        %v2857 = vlaneseq
        %v2858 = vshrl.u32 %v2857, 7
        %v2859 = vsub.s32 %v2856, %v2858
        %v2860 = vrot.slane %v2853, %v2859
        %v2861 = vcombine.low %v2373, %v2374
        %v2863 = vunpack.c.l.s4 1983009808
        %v2864 = vunpack.c.0.s8 %v2863
        %v2865 = vlaneseq
        %v2866 = vshrl.u32 %v2865, 7
        %v2867 = vsub.s32 %v2864, %v2866
        %v2868 = vrot.slane %v2861, %v2867
        %v2869 = vcombine.low %v2365, %v2372
        %v2871 = vunpack.c.l.s4 1983009808
        %v2872 = vunpack.c.0.s8 %v2871
        %v2873 = vlaneseq
        %v2874 = vshrl.u32 %v2873, 7
        %v2875 = vsub.s32 %v2872, %v2874
        %v2876 = vrot.slane %v2869, %v2875
        %v2877 = vcombine.low %v2375, %v2376
        %v2879 = vunpack.c.l.s4 1983009808
        %v2880 = vunpack.c.0.s8 %v2879
        %v2881 = vlaneseq
        %v2882 = vshrl.u32 %v2881, 7
        %v2883 = vsub.s32 %v2880, %v2882
        %v2884 = vrot.slane %v2877, %v2883
        %v2885 = vcombine.low %v2860, %v2868
        %v2886 = vcombine.high %v2860, %v2868
        %v2888 = vunpack.c.l.s4 1934713408
        %v2889 = vunpack.c.0.s8 %v2888
        %v2890 = vlaneseq
        %v2891 = vshrl.u32 %v2890, 7
        %v2892 = vsub.s32 %v2889, %v2891
        %v2893 = vrot.slane %v2885, %v2892
        %v2895 = vunpack.c.l.s4 1934713408
        %v2896 = vunpack.c.0.s8 %v2895
        %v2897 = vlaneseq
        %v2898 = vshrl.u32 %v2897, 7
        %v2899 = vsub.s32 %v2896, %v2898
        %v2900 = vrot.slane %v2886, %v2899
        %v2901 = vcombine.low %v2876, %v2884
        %v2902 = vcombine.high %v2876, %v2884
        %v2904 = vunpack.c.l.s4 1934713408
        %v2905 = vunpack.c.0.s8 %v2904
        %v2906 = vlaneseq
        %v2907 = vshrl.u32 %v2906, 7
        %v2908 = vsub.s32 %v2905, %v2907
        %v2909 = vrot.slane %v2901, %v2908
        %v2911 = vunpack.c.l.s4 1934713408
        %v2912 = vunpack.c.0.s8 %v2911
        %v2913 = vlaneseq
        %v2914 = vshrl.u32 %v2913, 7
        %v2915 = vsub.s32 %v2912, %v2914
        %v2916 = vrot.slane %v2902, %v2915
        %v2917 = vcombine.low %v2893, %v2909
        %v2918 = vcombine.high %v2893, %v2909
        %v2919 = vcombine.low %v2900, %v2916
        %v2920 = vcombine.high %v2900, %v2916
        %v2921 = vcombine.low %v2417, %v2424
        %v2923 = vunpack.c.l.s4 1983009808
        %v2924 = vunpack.c.0.s8 %v2923
        %v2925 = vlaneseq
        %v2926 = vshrl.u32 %v2925, 7
        %v2927 = vsub.s32 %v2924, %v2926
        %v2928 = vrot.slane %v2921, %v2927
        %v2929 = vcombine.low %v2441, %v2442
        %v2931 = vunpack.c.l.s4 1983009808
        %v2932 = vunpack.c.0.s8 %v2931
        %v2933 = vlaneseq
        %v2934 = vshrl.u32 %v2933, 7
        %v2935 = vsub.s32 %v2932, %v2934
        %v2936 = vrot.slane %v2929, %v2935
        %v2937 = vcombine.low %v2433, %v2440
        %v2939 = vunpack.c.l.s4 1983009808
        %v2940 = vunpack.c.0.s8 %v2939
        %v2941 = vlaneseq
        %v2942 = vshrl.u32 %v2941, 7
        %v2943 = vsub.s32 %v2940, %v2942
        %v2944 = vrot.slane %v2937, %v2943
        %v2945 = vcombine.low %v2443, %v2444
        %v2947 = vunpack.c.l.s4 1983009808
        %v2948 = vunpack.c.0.s8 %v2947
        %v2949 = vlaneseq
        %v2950 = vshrl.u32 %v2949, 7
        %v2951 = vsub.s32 %v2948, %v2950
        %v2952 = vrot.slane %v2945, %v2951
        %v2953 = vcombine.low %v2928, %v2936
        %v2954 = vcombine.high %v2928, %v2936
        %v2956 = vunpack.c.l.s4 1934713408
        %v2957 = vunpack.c.0.s8 %v2956
        %v2958 = vlaneseq
        %v2959 = vshrl.u32 %v2958, 7
        %v2960 = vsub.s32 %v2957, %v2959
        %v2961 = vrot.slane %v2953, %v2960
        %v2963 = vunpack.c.l.s4 1934713408
        %v2964 = vunpack.c.0.s8 %v2963
        %v2965 = vlaneseq
        %v2966 = vshrl.u32 %v2965, 7
        %v2967 = vsub.s32 %v2964, %v2966
        %v2968 = vrot.slane %v2954, %v2967
        %v2969 = vcombine.low %v2944, %v2952
        %v2970 = vcombine.high %v2944, %v2952
        %v2972 = vunpack.c.l.s4 1934713408
        %v2973 = vunpack.c.0.s8 %v2972
        %v2974 = vlaneseq
        %v2975 = vshrl.u32 %v2974, 7
        %v2976 = vsub.s32 %v2973, %v2975
        %v2977 = vrot.slane %v2969, %v2976
        %v2979 = vunpack.c.l.s4 1934713408
        %v2980 = vunpack.c.0.s8 %v2979
        %v2981 = vlaneseq
        %v2982 = vshrl.u32 %v2981, 7
        %v2983 = vsub.s32 %v2980, %v2982
        %v2984 = vrot.slane %v2970, %v2983
        %v2985 = vcombine.low %v2961, %v2977
        %v2986 = vcombine.high %v2961, %v2977
        %v2987 = vcombine.low %v2968, %v2984
        %v2988 = vcombine.high %v2968, %v2984
        %v2989 = vcombine.low %v2485, %v2492
        %v2991 = vunpack.c.l.s4 1983009808
        %v2992 = vunpack.c.0.s8 %v2991
        %v2993 = vlaneseq
        %v2994 = vshrl.u32 %v2993, 7
        %v2995 = vsub.s32 %v2992, %v2994
        %v2996 = vrot.slane %v2989, %v2995
        %v2997 = vcombine.low %v2509, %v2510
        %v2999 = vunpack.c.l.s4 1983009808
        %v3000 = vunpack.c.0.s8 %v2999
        %v3001 = vlaneseq
        %v3002 = vshrl.u32 %v3001, 7
        %v3003 = vsub.s32 %v3000, %v3002
        %v3004 = vrot.slane %v2997, %v3003
        %v3005 = vcombine.low %v2501, %v2508
        %v3007 = vunpack.c.l.s4 1983009808
        %v3008 = vunpack.c.0.s8 %v3007
        %v3009 = vlaneseq
        %v3010 = vshrl.u32 %v3009, 7
        %v3011 = vsub.s32 %v3008, %v3010
        %v3012 = vrot.slane %v3005, %v3011
        %v3013 = vcombine.low %v2511, %v2512
        %v3015 = vunpack.c.l.s4 1983009808
        %v3016 = vunpack.c.0.s8 %v3015
        %v3017 = vlaneseq
        %v3018 = vshrl.u32 %v3017, 7
        %v3019 = vsub.s32 %v3016, %v3018
        %v3020 = vrot.slane %v3013, %v3019
        %v3021 = vcombine.low %v2996, %v3004
        %v3022 = vcombine.high %v2996, %v3004
        %v3024 = vunpack.c.l.s4 1934713408
        %v3025 = vunpack.c.0.s8 %v3024
        %v3026 = vlaneseq
        %v3027 = vshrl.u32 %v3026, 7
        %v3028 = vsub.s32 %v3025, %v3027
        %v3029 = vrot.slane %v3021, %v3028
        %v3031 = vunpack.c.l.s4 1934713408
        %v3032 = vunpack.c.0.s8 %v3031
        %v3033 = vlaneseq
        %v3034 = vshrl.u32 %v3033, 7
        %v3035 = vsub.s32 %v3032, %v3034
        %v3036 = vrot.slane %v3022, %v3035
        %v3037 = vcombine.low %v3012, %v3020
        %v3038 = vcombine.high %v3012, %v3020
        %v3040 = vunpack.c.l.s4 1934713408
        %v3041 = vunpack.c.0.s8 %v3040
        %v3042 = vlaneseq
        %v3043 = vshrl.u32 %v3042, 7
        %v3044 = vsub.s32 %v3041, %v3043
        %v3045 = vrot.slane %v3037, %v3044
        %v3047 = vunpack.c.l.s4 1934713408
        %v3048 = vunpack.c.0.s8 %v3047
        %v3049 = vlaneseq
        %v3050 = vshrl.u32 %v3049, 7
        %v3051 = vsub.s32 %v3048, %v3050
        %v3052 = vrot.slane %v3038, %v3051
        %v3053 = vcombine.low %v3029, %v3045
        %v3054 = vcombine.high %v3029, %v3045
        %v3055 = vcombine.low %v3036, %v3052
        %v3056 = vcombine.high %v3036, %v3052
        %v3057 = vcombine.low %v2553, %v2560
        %v3059 = vunpack.c.l.s4 1983009808
        %v3060 = vunpack.c.0.s8 %v3059
        %v3061 = vlaneseq
        %v3062 = vshrl.u32 %v3061, 7
        %v3063 = vsub.s32 %v3060, %v3062
        %v3064 = vrot.slane %v3057, %v3063
        %v3065 = vcombine.low %v2577, %v2578
        %v3067 = vunpack.c.l.s4 1983009808
        %v3068 = vunpack.c.0.s8 %v3067
        %v3069 = vlaneseq
        %v3070 = vshrl.u32 %v3069, 7
        %v3071 = vsub.s32 %v3068, %v3070
        %v3072 = vrot.slane %v3065, %v3071
        %v3073 = vcombine.low %v2569, %v2576
        %v3075 = vunpack.c.l.s4 1983009808
        %v3076 = vunpack.c.0.s8 %v3075
        %v3077 = vlaneseq
        %v3078 = vshrl.u32 %v3077, 7
        %v3079 = vsub.s32 %v3076, %v3078
        %v3080 = vrot.slane %v3073, %v3079
        %v3081 = vcombine.low %v2579, %v2580
        %v3083 = vunpack.c.l.s4 1983009808
        %v3084 = vunpack.c.0.s8 %v3083
        %v3085 = vlaneseq
        %v3086 = vshrl.u32 %v3085, 7
        %v3087 = vsub.s32 %v3084, %v3086
        %v3088 = vrot.slane %v3081, %v3087
        %v3089 = vcombine.low %v3064, %v3072
        %v3090 = vcombine.high %v3064, %v3072
        %v3092 = vunpack.c.l.s4 1934713408
        %v3093 = vunpack.c.0.s8 %v3092
        %v3094 = vlaneseq
        %v3095 = vshrl.u32 %v3094, 7
        %v3096 = vsub.s32 %v3093, %v3095
        %v3097 = vrot.slane %v3089, %v3096
        %v3099 = vunpack.c.l.s4 1934713408
        %v3100 = vunpack.c.0.s8 %v3099
        %v3101 = vlaneseq
        %v3102 = vshrl.u32 %v3101, 7
        %v3103 = vsub.s32 %v3100, %v3102
        %v3104 = vrot.slane %v3090, %v3103
        %v3105 = vcombine.low %v3080, %v3088
        %v3106 = vcombine.high %v3080, %v3088
        %v3108 = vunpack.c.l.s4 1934713408
        %v3109 = vunpack.c.0.s8 %v3108
        %v3110 = vlaneseq
        %v3111 = vshrl.u32 %v3110, 7
        %v3112 = vsub.s32 %v3109, %v3111
        %v3113 = vrot.slane %v3105, %v3112
        %v3115 = vunpack.c.l.s4 1934713408
        %v3116 = vunpack.c.0.s8 %v3115
        %v3117 = vlaneseq
        %v3118 = vshrl.u32 %v3117, 7
        %v3119 = vsub.s32 %v3116, %v3118
        %v3120 = vrot.slane %v3106, %v3119
        %v3121 = vcombine.low %v3097, %v3113
        %v3122 = vcombine.high %v3097, %v3113
        %v3123 = vcombine.low %v3104, %v3120
        %v3124 = vcombine.high %v3104, %v3120
        %v3125 = vcombine.low %v2621, %v2628
        %v3127 = vunpack.c.l.s4 1983009808
        %v3128 = vunpack.c.0.s8 %v3127
        %v3129 = vlaneseq
        %v3130 = vshrl.u32 %v3129, 7
        %v3131 = vsub.s32 %v3128, %v3130
        %v3132 = vrot.slane %v3125, %v3131
        %v3133 = vcombine.low %v2645, %v2646
        %v3135 = vunpack.c.l.s4 1983009808
        %v3136 = vunpack.c.0.s8 %v3135
        %v3137 = vlaneseq
        %v3138 = vshrl.u32 %v3137, 7
        %v3139 = vsub.s32 %v3136, %v3138
        %v3140 = vrot.slane %v3133, %v3139
        %v3141 = vcombine.low %v2637, %v2644
        %v3143 = vunpack.c.l.s4 1983009808
        %v3144 = vunpack.c.0.s8 %v3143
        %v3145 = vlaneseq
        %v3146 = vshrl.u32 %v3145, 7
        %v3147 = vsub.s32 %v3144, %v3146
        %v3148 = vrot.slane %v3141, %v3147
        %v3149 = vcombine.low %v2647, %v2648
        %v3151 = vunpack.c.l.s4 1983009808
        %v3152 = vunpack.c.0.s8 %v3151
        %v3153 = vlaneseq
        %v3154 = vshrl.u32 %v3153, 7
        %v3155 = vsub.s32 %v3152, %v3154
        %v3156 = vrot.slane %v3149, %v3155
        %v3157 = vcombine.low %v3132, %v3140
        %v3158 = vcombine.high %v3132, %v3140
        %v3160 = vunpack.c.l.s4 1934713408
        %v3161 = vunpack.c.0.s8 %v3160
        %v3162 = vlaneseq
        %v3163 = vshrl.u32 %v3162, 7
        %v3164 = vsub.s32 %v3161, %v3163
        %v3165 = vrot.slane %v3157, %v3164
        %v3167 = vunpack.c.l.s4 1934713408
        %v3168 = vunpack.c.0.s8 %v3167
        %v3169 = vlaneseq
        %v3170 = vshrl.u32 %v3169, 7
        %v3171 = vsub.s32 %v3168, %v3170
        %v3172 = vrot.slane %v3158, %v3171
        %v3173 = vcombine.low %v3148, %v3156
        %v3174 = vcombine.high %v3148, %v3156
        %v3176 = vunpack.c.l.s4 1934713408
        %v3177 = vunpack.c.0.s8 %v3176
        %v3178 = vlaneseq
        %v3179 = vshrl.u32 %v3178, 7
        %v3180 = vsub.s32 %v3177, %v3179
        %v3181 = vrot.slane %v3173, %v3180
        %v3183 = vunpack.c.l.s4 1934713408
        %v3184 = vunpack.c.0.s8 %v3183
        %v3185 = vlaneseq
        %v3186 = vshrl.u32 %v3185, 7
        %v3187 = vsub.s32 %v3184, %v3186
        %v3188 = vrot.slane %v3174, %v3187
        %v3189 = vcombine.low %v3165, %v3181
        %v3190 = vcombine.high %v3165, %v3181
        %v3191 = vcombine.low %v3172, %v3188
        %v3192 = vcombine.high %v3172, %v3188
        %v3193 = vcombine.low %v2689, %v2696
        %v3195 = vunpack.c.l.s4 1983009808
        %v3196 = vunpack.c.0.s8 %v3195
        %v3197 = vlaneseq
        %v3198 = vshrl.u32 %v3197, 7
        %v3199 = vsub.s32 %v3196, %v3198
        %v3200 = vrot.slane %v3193, %v3199
        %v3201 = vcombine.low %v2713, %v2714
        %v3203 = vunpack.c.l.s4 1983009808
        %v3204 = vunpack.c.0.s8 %v3203
        %v3205 = vlaneseq
        %v3206 = vshrl.u32 %v3205, 7
        %v3207 = vsub.s32 %v3204, %v3206
        %v3208 = vrot.slane %v3201, %v3207
        %v3209 = vcombine.low %v2705, %v2712
        %v3211 = vunpack.c.l.s4 1983009808
        %v3212 = vunpack.c.0.s8 %v3211
        %v3213 = vlaneseq
        %v3214 = vshrl.u32 %v3213, 7
        %v3215 = vsub.s32 %v3212, %v3214
        %v3216 = vrot.slane %v3209, %v3215
        %v3217 = vcombine.low %v2715, %v2716
        %v3219 = vunpack.c.l.s4 1983009808
        %v3220 = vunpack.c.0.s8 %v3219
        %v3221 = vlaneseq
        %v3222 = vshrl.u32 %v3221, 7
        %v3223 = vsub.s32 %v3220, %v3222
        %v3224 = vrot.slane %v3217, %v3223
        %v3225 = vcombine.low %v3200, %v3208
        %v3226 = vcombine.high %v3200, %v3208
        %v3228 = vunpack.c.l.s4 1934713408
        %v3229 = vunpack.c.0.s8 %v3228
        %v3230 = vlaneseq
        %v3231 = vshrl.u32 %v3230, 7
        %v3232 = vsub.s32 %v3229, %v3231
        %v3233 = vrot.slane %v3225, %v3232
        %v3235 = vunpack.c.l.s4 1934713408
        %v3236 = vunpack.c.0.s8 %v3235
        %v3237 = vlaneseq
        %v3238 = vshrl.u32 %v3237, 7
        %v3239 = vsub.s32 %v3236, %v3238
        %v3240 = vrot.slane %v3226, %v3239
        %v3241 = vcombine.low %v3216, %v3224
        %v3242 = vcombine.high %v3216, %v3224
        %v3244 = vunpack.c.l.s4 1934713408
        %v3245 = vunpack.c.0.s8 %v3244
        %v3246 = vlaneseq
        %v3247 = vshrl.u32 %v3246, 7
        %v3248 = vsub.s32 %v3245, %v3247
        %v3249 = vrot.slane %v3241, %v3248
        %v3251 = vunpack.c.l.s4 1934713408
        %v3252 = vunpack.c.0.s8 %v3251
        %v3253 = vlaneseq
        %v3254 = vshrl.u32 %v3253, 7
        %v3255 = vsub.s32 %v3252, %v3254
        %v3256 = vrot.slane %v3242, %v3255
        %v3257 = vcombine.low %v3233, %v3249
        %v3258 = vcombine.high %v3233, %v3249
        %v3259 = vcombine.low %v3240, %v3256
        %v3260 = vcombine.high %v3240, %v3256
        %v3261 = vcombine.low %v2757, %v2764
        %v3263 = vunpack.c.l.s4 1983009808
        %v3264 = vunpack.c.0.s8 %v3263
        %v3265 = vlaneseq
        %v3266 = vshrl.u32 %v3265, 7
        %v3267 = vsub.s32 %v3264, %v3266
        %v3268 = vrot.slane %v3261, %v3267
        %v3269 = vcombine.low %v2781, %v2782
        %v3271 = vunpack.c.l.s4 1983009808
        %v3272 = vunpack.c.0.s8 %v3271
        %v3273 = vlaneseq
        %v3274 = vshrl.u32 %v3273, 7
        %v3275 = vsub.s32 %v3272, %v3274
        %v3276 = vrot.slane %v3269, %v3275
        %v3277 = vcombine.low %v2773, %v2780
        %v3279 = vunpack.c.l.s4 1983009808
        %v3280 = vunpack.c.0.s8 %v3279
        %v3281 = vlaneseq
        %v3282 = vshrl.u32 %v3281, 7
        %v3283 = vsub.s32 %v3280, %v3282
        %v3284 = vrot.slane %v3277, %v3283
        %v3285 = vcombine.low %v2783, %v2784
        %v3287 = vunpack.c.l.s4 1983009808
        %v3288 = vunpack.c.0.s8 %v3287
        %v3289 = vlaneseq
        %v3290 = vshrl.u32 %v3289, 7
        %v3291 = vsub.s32 %v3288, %v3290
        %v3292 = vrot.slane %v3285, %v3291
        %v3293 = vcombine.low %v3268, %v3276
        %v3294 = vcombine.high %v3268, %v3276
        %v3296 = vunpack.c.l.s4 1934713408
        %v3297 = vunpack.c.0.s8 %v3296
        %v3298 = vlaneseq
        %v3299 = vshrl.u32 %v3298, 7
        %v3300 = vsub.s32 %v3297, %v3299
        %v3301 = vrot.slane %v3293, %v3300
        %v3303 = vunpack.c.l.s4 1934713408
        %v3304 = vunpack.c.0.s8 %v3303
        %v3305 = vlaneseq
        %v3306 = vshrl.u32 %v3305, 7
        %v3307 = vsub.s32 %v3304, %v3306
        %v3308 = vrot.slane %v3294, %v3307
        %v3309 = vcombine.low %v3284, %v3292
        %v3310 = vcombine.high %v3284, %v3292
        %v3312 = vunpack.c.l.s4 1934713408
        %v3313 = vunpack.c.0.s8 %v3312
        %v3314 = vlaneseq
        %v3315 = vshrl.u32 %v3314, 7
        %v3316 = vsub.s32 %v3313, %v3315
        %v3317 = vrot.slane %v3309, %v3316
        %v3319 = vunpack.c.l.s4 1934713408
        %v3320 = vunpack.c.0.s8 %v3319
        %v3321 = vlaneseq
        %v3322 = vshrl.u32 %v3321, 7
        %v3323 = vsub.s32 %v3320, %v3322
        %v3324 = vrot.slane %v3310, %v3323
        %v3325 = vcombine.low %v3301, %v3317
        %v3326 = vcombine.high %v3301, %v3317
        %v3327 = vcombine.low %v3308, %v3324
        %v3328 = vcombine.high %v3308, %v3324
        %v3331 = vpack.i.b16 %v2917, %v2849
        %v3332 = vshrl.u32 %v2849, 16
        %v3333 = vshrl.u32 %v2917, 16
        %v3334 = vpack.i.b16 %v3333, %v3332
        %v3337 = vpack.i.b16 %v2918, %v2850
        %v3338 = vshrl.u32 %v2850, 16
        %v3339 = vshrl.u32 %v2918, 16
        %v3340 = vpack.i.b16 %v3339, %v3338
        %v3343 = vpack.i.b16 %v2919, %v2851
        %v3344 = vshrl.u32 %v2851, 16
        %v3345 = vshrl.u32 %v2919, 16
        %v3346 = vpack.i.b16 %v3345, %v3344
        %v3349 = vpack.i.b16 %v2920, %v2852
        %v3350 = vshrl.u32 %v2852, 16
        %v3351 = vshrl.u32 %v2920, 16
        %v3352 = vpack.i.b16 %v3351, %v3350
        %v3355 = vpack.i.b16 %v3053, %v2985
        %v3356 = vshrl.u32 %v2985, 16
        %v3357 = vshrl.u32 %v3053, 16
        %v3358 = vpack.i.b16 %v3357, %v3356
        %v3361 = vpack.i.b16 %v3054, %v2986
        %v3362 = vshrl.u32 %v2986, 16
        %v3363 = vshrl.u32 %v3054, 16
        %v3364 = vpack.i.b16 %v3363, %v3362
        %v3367 = vpack.i.b16 %v3055, %v2987
        %v3368 = vshrl.u32 %v2987, 16
        %v3369 = vshrl.u32 %v3055, 16
        %v3370 = vpack.i.b16 %v3369, %v3368
        %v3373 = vpack.i.b16 %v3056, %v2988
        %v3374 = vshrl.u32 %v2988, 16
        %v3375 = vshrl.u32 %v3056, 16
        %v3376 = vpack.i.b16 %v3375, %v3374
        %v3379 = vpack.i.b16 %v3189, %v3121
        %v3380 = vshrl.u32 %v3121, 16
        %v3381 = vshrl.u32 %v3189, 16
        %v3382 = vpack.i.b16 %v3381, %v3380
        %v3385 = vpack.i.b16 %v3190, %v3122
        %v3386 = vshrl.u32 %v3122, 16
        %v3387 = vshrl.u32 %v3190, 16
        %v3388 = vpack.i.b16 %v3387, %v3386
        %v3391 = vpack.i.b16 %v3191, %v3123
        %v3392 = vshrl.u32 %v3123, 16
        %v3393 = vshrl.u32 %v3191, 16
        %v3394 = vpack.i.b16 %v3393, %v3392
        %v3397 = vpack.i.b16 %v3192, %v3124
        %v3398 = vshrl.u32 %v3124, 16
        %v3399 = vshrl.u32 %v3192, 16
        %v3400 = vpack.i.b16 %v3399, %v3398
        %v3403 = vpack.i.b16 %v3325, %v3257
        %v3404 = vshrl.u32 %v3257, 16
        %v3405 = vshrl.u32 %v3325, 16
        %v3406 = vpack.i.b16 %v3405, %v3404
        %v3409 = vpack.i.b16 %v3326, %v3258
        %v3410 = vshrl.u32 %v3258, 16
        %v3411 = vshrl.u32 %v3326, 16
        %v3412 = vpack.i.b16 %v3411, %v3410
        %v3415 = vpack.i.b16 %v3327, %v3259
        %v3416 = vshrl.u32 %v3259, 16
        %v3417 = vshrl.u32 %v3327, 16
        %v3418 = vpack.i.b16 %v3417, %v3416
        %v3421 = vpack.i.b16 %v3328, %v3260
        %v3422 = vshrl.u32 %v3260, 16
        %v3423 = vshrl.u32 %v3328, 16
        %v3424 = vpack.i.b16 %v3423, %v3422
        %3425 = vrot.lane.b32.xlu0 %v677, 64
        %v3426 = vpop.permute.xlu0 %3425
        %3427 = vrot.lane.b32.xlu0 %v678, 64
        %v3428 = vpop.permute.xlu0 %3427
        %3429 = vrot.lane.b32.xlu0 %v679, 64
        %v3430 = vpop.permute.xlu0 %3429
        %3431 = vrot.lane.b32.xlu0 %v680, 64
        %v3432 = vpop.permute.xlu0 %3431
        %3433 = vrot.lane.b32.xlu0 %v2058, 64
        %v3434 = vpop.permute.xlu0 %3433
        %3435 = vrot.lane.b32.xlu0 %v2060, 64
        %v3436 = vpop.permute.xlu0 %3435
        %3437 = vrot.lane.b32.xlu0 %v2062, 64
        %v3438 = vpop.permute.xlu0 %3437
        %3439 = vrot.lane.b32.xlu0 %v2064, 64
        %v3440 = vpop.permute.xlu0 %3439
        %3441 = vrot.lane.b32.xlu0 %v2066, 64
        %v3442 = vpop.permute.xlu0 %3441
        %3443 = vrot.lane.b32.xlu0 %v2068, 64
        %v3444 = vpop.permute.xlu0 %3443
        %3445 = vrot.lane.b32.xlu0 %v2070, 64
        %v3446 = vpop.permute.xlu0 %3445
        %3447 = vrot.lane.b32.xlu0 %v2072, 64
        %v3448 = vpop.permute.xlu0 %3447
        %3449 = vrot.lane.b32.xlu0 %v2074, 64
        %v3450 = vpop.permute.xlu0 %3449
        %3451 = vrot.lane.b32.xlu0 %v2076, 64
        %v3452 = vpop.permute.xlu0 %3451
        %3453 = vrot.lane.b32.xlu0 %v2078, 64
        %v3454 = vpop.permute.xlu0 %3453
        %3455 = vrot.lane.b32.xlu0 %v2080, 64
        %v3456 = vpop.permute.xlu0 %3455
        %3457 = vrot.lane.b32.xlu0 %v2082, 64
        %v3458 = vpop.permute.xlu0 %3457
        %3459 = vrot.lane.b32.xlu0 %v2084, 64
        %v3460 = vpop.permute.xlu0 %3459
        %3461 = vrot.lane.b32.xlu0 %v2086, 64
        %v3462 = vpop.permute.xlu0 %3461
        %3463 = vrot.lane.b32.xlu0 %v2088, 64
        %v3464 = vpop.permute.xlu0 %3463
        %3465 = vrot.lane.b32.xlu0 %v2090, 64
        %v3466 = vpop.permute.xlu0 %3465
        %3467 = vrot.lane.b32.xlu0 %v2092, 64
        %v3468 = vpop.permute.xlu0 %3467
        %3469 = vrot.lane.b32.xlu0 %v2094, 64
        %v3470 = vpop.permute.xlu0 %3469
        %3471 = vrot.lane.b32.xlu0 %v2096, 64
        %v3472 = vpop.permute.xlu0 %3471
        %3473 = vrot.lane.b32.xlu0 %v2098, 64
        %v3474 = vpop.permute.xlu0 %3473
        %3475 = vrot.lane.b32.xlu0 %v2100, 64
        %v3476 = vpop.permute.xlu0 %3475
        %3477 = vrot.lane.b32.xlu0 %v2102, 64
        %v3478 = vpop.permute.xlu0 %3477
        %3479 = vrot.lane.b32.xlu0 %v2104, 64
        %v3480 = vpop.permute.xlu0 %3479
        %3481 = vrot.lane.b32.xlu0 %v2106, 64
        %v3482 = vpop.permute.xlu0 %3481
        %3483 = vrot.lane.b32.xlu0 %v2108, 64
        %v3484 = vpop.permute.xlu0 %3483
        %3485 = vrot.lane.b32.xlu0 %v2110, 64
        %v3486 = vpop.permute.xlu0 %3485
        %3487 = vrot.lane.b32.xlu0 %v2112, 64
        %v3488 = vpop.permute.xlu0 %3487
        %v3491 = vpack.i.b16 %v3434, %v3426
        %v3493 = vshrl.u32 %v3426, 16
        %v3494 = vshrl.u32 %v3434, 16
        %v3495 = vpack.i.b16 %v3494, %v3493
        %v3499 = vpack.i.b16 %v3450, %v3442
        %v3501 = vshrl.u32 %v3442, 16
        %v3502 = vshrl.u32 %v3450, 16
        %v3503 = vpack.i.b16 %v3502, %v3501
        %v3507 = vpack.i.b16 %v3466, %v3458
        %v3509 = vshrl.u32 %v3458, 16
        %v3510 = vshrl.u32 %v3466, 16
        %v3511 = vpack.i.b16 %v3510, %v3509
        %v3515 = vpack.i.b16 %v3482, %v3474
        %v3517 = vshrl.u32 %v3474, 16
        %v3518 = vshrl.u32 %v3482, 16
        %v3519 = vpack.i.b16 %v3518, %v3517
        %v3523 = vpack.i.b16 %v3436, %v3428
        %v3525 = vshrl.u32 %v3428, 16
        %v3526 = vshrl.u32 %v3436, 16
        %v3527 = vpack.i.b16 %v3526, %v3525
        %v3531 = vpack.i.b16 %v3452, %v3444
        %v3533 = vshrl.u32 %v3444, 16
        %v3534 = vshrl.u32 %v3452, 16
        %v3535 = vpack.i.b16 %v3534, %v3533
        %v3539 = vpack.i.b16 %v3468, %v3460
        %v3541 = vshrl.u32 %v3460, 16
        %v3542 = vshrl.u32 %v3468, 16
        %v3543 = vpack.i.b16 %v3542, %v3541
        %v3547 = vpack.i.b16 %v3484, %v3476
        %v3549 = vshrl.u32 %v3476, 16
        %v3550 = vshrl.u32 %v3484, 16
        %v3551 = vpack.i.b16 %v3550, %v3549
        %v3555 = vpack.i.b16 %v3438, %v3430
        %v3557 = vshrl.u32 %v3430, 16
        %v3558 = vshrl.u32 %v3438, 16
        %v3559 = vpack.i.b16 %v3558, %v3557
        %v3563 = vpack.i.b16 %v3454, %v3446
        %v3565 = vshrl.u32 %v3446, 16
        %v3566 = vshrl.u32 %v3454, 16
        %v3567 = vpack.i.b16 %v3566, %v3565
        %v3571 = vpack.i.b16 %v3470, %v3462
        %v3573 = vshrl.u32 %v3462, 16
        %v3574 = vshrl.u32 %v3470, 16
        %v3575 = vpack.i.b16 %v3574, %v3573
        %v3579 = vpack.i.b16 %v3486, %v3478
        %v3581 = vshrl.u32 %v3478, 16
        %v3582 = vshrl.u32 %v3486, 16
        %v3583 = vpack.i.b16 %v3582, %v3581
        %v3587 = vpack.i.b16 %v3440, %v3432
        %v3589 = vshrl.u32 %v3432, 16
        %v3590 = vshrl.u32 %v3440, 16
        %v3591 = vpack.i.b16 %v3590, %v3589
        %v3595 = vpack.i.b16 %v3456, %v3448
        %v3597 = vshrl.u32 %v3448, 16
        %v3598 = vshrl.u32 %v3456, 16
        %v3599 = vpack.i.b16 %v3598, %v3597
        %v3603 = vpack.i.b16 %v3472, %v3464
        %v3605 = vshrl.u32 %v3464, 16
        %v3606 = vshrl.u32 %v3472, 16
        %v3607 = vpack.i.b16 %v3606, %v3605
        %v3611 = vpack.i.b16 %v3488, %v3480
        %v3613 = vshrl.u32 %v3480, 16
        %v3614 = vshrl.u32 %v3488, 16
        %v3615 = vpack.i.b16 %v3614, %v3613
        %v3617 = vcombine.low %v3491, %v3507
        %v3618 = vcombine.high %v3491, %v3507
        %v3620 = vunpack.c.l.s4 1983009808
        %v3621 = vunpack.c.0.s8 %v3620
        %v3622 = vlaneseq
        %v3623 = vshrl.u32 %v3622, 7
        %v3624 = vsub.s32 %v3621, %v3623
        %v3625 = vrot.slane %v3617, %v3624
        %v3627 = vunpack.c.l.s4 1983009808
        %v3628 = vunpack.c.0.s8 %v3627
        %v3629 = vlaneseq
        %v3630 = vshrl.u32 %v3629, 7
        %v3631 = vsub.s32 %v3628, %v3630
        %v3632 = vrot.slane %v3618, %v3631
        %v3633 = vcombine.low %v3499, %v3515
        %v3634 = vcombine.high %v3499, %v3515
        %v3636 = vunpack.c.l.s4 1983009808
        %v3637 = vunpack.c.0.s8 %v3636
        %v3638 = vlaneseq
        %v3639 = vshrl.u32 %v3638, 7
        %v3640 = vsub.s32 %v3637, %v3639
        %v3641 = vrot.slane %v3633, %v3640
        %v3643 = vunpack.c.l.s4 1983009808
        %v3644 = vunpack.c.0.s8 %v3643
        %v3645 = vlaneseq
        %v3646 = vshrl.u32 %v3645, 7
        %v3647 = vsub.s32 %v3644, %v3646
        %v3648 = vrot.slane %v3634, %v3647
        %v3649 = vcombine.low %v3625, %v3641
        %v3650 = vcombine.high %v3625, %v3641
        %v3652 = vunpack.c.l.s4 1934713408
        %v3653 = vunpack.c.0.s8 %v3652
        %v3654 = vlaneseq
        %v3655 = vshrl.u32 %v3654, 7
        %v3656 = vsub.s32 %v3653, %v3655
        %v3657 = vrot.slane %v3649, %v3656
        %v3659 = vunpack.c.l.s4 1934713408
        %v3660 = vunpack.c.0.s8 %v3659
        %v3661 = vlaneseq
        %v3662 = vshrl.u32 %v3661, 7
        %v3663 = vsub.s32 %v3660, %v3662
        %v3664 = vrot.slane %v3650, %v3663
        %v3665 = vcombine.low %v3632, %v3648
        %v3666 = vcombine.high %v3632, %v3648
        %v3668 = vunpack.c.l.s4 1934713408
        %v3669 = vunpack.c.0.s8 %v3668
        %v3670 = vlaneseq
        %v3671 = vshrl.u32 %v3670, 7
        %v3672 = vsub.s32 %v3669, %v3671
        %v3673 = vrot.slane %v3665, %v3672
        %v3675 = vunpack.c.l.s4 1934713408
        %v3676 = vunpack.c.0.s8 %v3675
        %v3677 = vlaneseq
        %v3678 = vshrl.u32 %v3677, 7
        %v3679 = vsub.s32 %v3676, %v3678
        %v3680 = vrot.slane %v3666, %v3679
        %v3681 = vcombine.high %v3657, 0
        %v3682 = vcombine.high %v3664, 0
        %v3683 = vcombine.high %v3673, 0
        %v3684 = vcombine.high %v3680, 0
        %v3685 = vcombine.low %v3495, %v3511
        %v3686 = vcombine.high %v3495, %v3511
        %v3688 = vunpack.c.l.s4 1983009808
        %v3689 = vunpack.c.0.s8 %v3688
        %v3690 = vlaneseq
        %v3691 = vshrl.u32 %v3690, 7
        %v3692 = vsub.s32 %v3689, %v3691
        %v3693 = vrot.slane %v3685, %v3692
        %v3695 = vunpack.c.l.s4 1983009808
        %v3696 = vunpack.c.0.s8 %v3695
        %v3697 = vlaneseq
        %v3698 = vshrl.u32 %v3697, 7
        %v3699 = vsub.s32 %v3696, %v3698
        %v3700 = vrot.slane %v3686, %v3699
        %v3701 = vcombine.low %v3503, %v3519
        %v3702 = vcombine.high %v3503, %v3519
        %v3704 = vunpack.c.l.s4 1983009808
        %v3705 = vunpack.c.0.s8 %v3704
        %v3706 = vlaneseq
        %v3707 = vshrl.u32 %v3706, 7
        %v3708 = vsub.s32 %v3705, %v3707
        %v3709 = vrot.slane %v3701, %v3708
        %v3711 = vunpack.c.l.s4 1983009808
        %v3712 = vunpack.c.0.s8 %v3711
        %v3713 = vlaneseq
        %v3714 = vshrl.u32 %v3713, 7
        %v3715 = vsub.s32 %v3712, %v3714
        %v3716 = vrot.slane %v3702, %v3715
        %v3717 = vcombine.low %v3693, %v3709
        %v3718 = vcombine.high %v3693, %v3709
        %v3720 = vunpack.c.l.s4 1934713408
        %v3721 = vunpack.c.0.s8 %v3720
        %v3722 = vlaneseq
        %v3723 = vshrl.u32 %v3722, 7
        %v3724 = vsub.s32 %v3721, %v3723
        %v3725 = vrot.slane %v3717, %v3724
        %v3727 = vunpack.c.l.s4 1934713408
        %v3728 = vunpack.c.0.s8 %v3727
        %v3729 = vlaneseq
        %v3730 = vshrl.u32 %v3729, 7
        %v3731 = vsub.s32 %v3728, %v3730
        %v3732 = vrot.slane %v3718, %v3731
        %v3733 = vcombine.low %v3700, %v3716
        %v3734 = vcombine.high %v3700, %v3716
        %v3736 = vunpack.c.l.s4 1934713408
        %v3737 = vunpack.c.0.s8 %v3736
        %v3738 = vlaneseq
        %v3739 = vshrl.u32 %v3738, 7
        %v3740 = vsub.s32 %v3737, %v3739
        %v3741 = vrot.slane %v3733, %v3740
        %v3743 = vunpack.c.l.s4 1934713408
        %v3744 = vunpack.c.0.s8 %v3743
        %v3745 = vlaneseq
        %v3746 = vshrl.u32 %v3745, 7
        %v3747 = vsub.s32 %v3744, %v3746
        %v3748 = vrot.slane %v3734, %v3747
        %v3749 = vcombine.high %v3725, 0
        %v3750 = vcombine.high %v3732, 0
        %v3751 = vcombine.high %v3741, 0
        %v3752 = vcombine.high %v3748, 0
        %v3753 = vcombine.low %v3523, %v3539
        %v3754 = vcombine.high %v3523, %v3539
        %v3756 = vunpack.c.l.s4 1983009808
        %v3757 = vunpack.c.0.s8 %v3756
        %v3758 = vlaneseq
        %v3759 = vshrl.u32 %v3758, 7
        %v3760 = vsub.s32 %v3757, %v3759
        %v3761 = vrot.slane %v3753, %v3760
        %v3763 = vunpack.c.l.s4 1983009808
        %v3764 = vunpack.c.0.s8 %v3763
        %v3765 = vlaneseq
        %v3766 = vshrl.u32 %v3765, 7
        %v3767 = vsub.s32 %v3764, %v3766
        %v3768 = vrot.slane %v3754, %v3767
        %v3769 = vcombine.low %v3531, %v3547
        %v3770 = vcombine.high %v3531, %v3547
        %v3772 = vunpack.c.l.s4 1983009808
        %v3773 = vunpack.c.0.s8 %v3772
        %v3774 = vlaneseq
        %v3775 = vshrl.u32 %v3774, 7
        %v3776 = vsub.s32 %v3773, %v3775
        %v3777 = vrot.slane %v3769, %v3776
        %v3779 = vunpack.c.l.s4 1983009808
        %v3780 = vunpack.c.0.s8 %v3779
        %v3781 = vlaneseq
        %v3782 = vshrl.u32 %v3781, 7
        %v3783 = vsub.s32 %v3780, %v3782
        %v3784 = vrot.slane %v3770, %v3783
        %v3785 = vcombine.low %v3761, %v3777
        %v3786 = vcombine.high %v3761, %v3777
        %v3788 = vunpack.c.l.s4 1934713408
        %v3789 = vunpack.c.0.s8 %v3788
        %v3790 = vlaneseq
        %v3791 = vshrl.u32 %v3790, 7
        %v3792 = vsub.s32 %v3789, %v3791
        %v3793 = vrot.slane %v3785, %v3792
        %v3795 = vunpack.c.l.s4 1934713408
        %v3796 = vunpack.c.0.s8 %v3795
        %v3797 = vlaneseq
        %v3798 = vshrl.u32 %v3797, 7
        %v3799 = vsub.s32 %v3796, %v3798
        %v3800 = vrot.slane %v3786, %v3799
        %v3801 = vcombine.low %v3768, %v3784
        %v3802 = vcombine.high %v3768, %v3784
        %v3804 = vunpack.c.l.s4 1934713408
        %v3805 = vunpack.c.0.s8 %v3804
        %v3806 = vlaneseq
        %v3807 = vshrl.u32 %v3806, 7
        %v3808 = vsub.s32 %v3805, %v3807
        %v3809 = vrot.slane %v3801, %v3808
        %v3811 = vunpack.c.l.s4 1934713408
        %v3812 = vunpack.c.0.s8 %v3811
        %v3813 = vlaneseq
        %v3814 = vshrl.u32 %v3813, 7
        %v3815 = vsub.s32 %v3812, %v3814
        %v3816 = vrot.slane %v3802, %v3815
        %v3817 = vcombine.high %v3793, 0
        %v3818 = vcombine.high %v3800, 0
        %v3819 = vcombine.high %v3809, 0
        %v3820 = vcombine.high %v3816, 0
        %v3821 = vcombine.low %v3527, %v3543
        %v3822 = vcombine.high %v3527, %v3543
        %v3824 = vunpack.c.l.s4 1983009808
        %v3825 = vunpack.c.0.s8 %v3824
        %v3826 = vlaneseq
        %v3827 = vshrl.u32 %v3826, 7
        %v3828 = vsub.s32 %v3825, %v3827
        %v3829 = vrot.slane %v3821, %v3828
        %v3831 = vunpack.c.l.s4 1983009808
        %v3832 = vunpack.c.0.s8 %v3831
        %v3833 = vlaneseq
        %v3834 = vshrl.u32 %v3833, 7
        %v3835 = vsub.s32 %v3832, %v3834
        %v3836 = vrot.slane %v3822, %v3835
        %v3837 = vcombine.low %v3535, %v3551
        %v3838 = vcombine.high %v3535, %v3551
        %v3840 = vunpack.c.l.s4 1983009808
        %v3841 = vunpack.c.0.s8 %v3840
        %v3842 = vlaneseq
        %v3843 = vshrl.u32 %v3842, 7
        %v3844 = vsub.s32 %v3841, %v3843
        %v3845 = vrot.slane %v3837, %v3844
        %v3847 = vunpack.c.l.s4 1983009808
        %v3848 = vunpack.c.0.s8 %v3847
        %v3849 = vlaneseq
        %v3850 = vshrl.u32 %v3849, 7
        %v3851 = vsub.s32 %v3848, %v3850
        %v3852 = vrot.slane %v3838, %v3851
        %v3853 = vcombine.low %v3829, %v3845
        %v3854 = vcombine.high %v3829, %v3845
        %v3856 = vunpack.c.l.s4 1934713408
        %v3857 = vunpack.c.0.s8 %v3856
        %v3858 = vlaneseq
        %v3859 = vshrl.u32 %v3858, 7
        %v3860 = vsub.s32 %v3857, %v3859
        %v3861 = vrot.slane %v3853, %v3860
        %v3863 = vunpack.c.l.s4 1934713408
        %v3864 = vunpack.c.0.s8 %v3863
        %v3865 = vlaneseq
        %v3866 = vshrl.u32 %v3865, 7
        %v3867 = vsub.s32 %v3864, %v3866
        %v3868 = vrot.slane %v3854, %v3867
        %v3869 = vcombine.low %v3836, %v3852
        %v3870 = vcombine.high %v3836, %v3852
        %v3872 = vunpack.c.l.s4 1934713408
        %v3873 = vunpack.c.0.s8 %v3872
        %v3874 = vlaneseq
        %v3875 = vshrl.u32 %v3874, 7
        %v3876 = vsub.s32 %v3873, %v3875
        %v3877 = vrot.slane %v3869, %v3876
        %v3879 = vunpack.c.l.s4 1934713408
        %v3880 = vunpack.c.0.s8 %v3879
        %v3881 = vlaneseq
        %v3882 = vshrl.u32 %v3881, 7
        %v3883 = vsub.s32 %v3880, %v3882
        %v3884 = vrot.slane %v3870, %v3883
        %v3885 = vcombine.high %v3861, 0
        %v3886 = vcombine.high %v3868, 0
        %v3887 = vcombine.high %v3877, 0
        %v3888 = vcombine.high %v3884, 0
        %v3889 = vcombine.low %v3555, %v3571
        %v3890 = vcombine.high %v3555, %v3571
        %v3892 = vunpack.c.l.s4 1983009808
        %v3893 = vunpack.c.0.s8 %v3892
        %v3894 = vlaneseq
        %v3895 = vshrl.u32 %v3894, 7
        %v3896 = vsub.s32 %v3893, %v3895
        %v3897 = vrot.slane %v3889, %v3896
        %v3899 = vunpack.c.l.s4 1983009808
        %v3900 = vunpack.c.0.s8 %v3899
        %v3901 = vlaneseq
        %v3902 = vshrl.u32 %v3901, 7
        %v3903 = vsub.s32 %v3900, %v3902
        %v3904 = vrot.slane %v3890, %v3903
        %v3905 = vcombine.low %v3563, %v3579
        %v3906 = vcombine.high %v3563, %v3579
        %v3908 = vunpack.c.l.s4 1983009808
        %v3909 = vunpack.c.0.s8 %v3908
        %v3910 = vlaneseq
        %v3911 = vshrl.u32 %v3910, 7
        %v3912 = vsub.s32 %v3909, %v3911
        %v3913 = vrot.slane %v3905, %v3912
        %v3915 = vunpack.c.l.s4 1983009808
        %v3916 = vunpack.c.0.s8 %v3915
        %v3917 = vlaneseq
        %v3918 = vshrl.u32 %v3917, 7
        %v3919 = vsub.s32 %v3916, %v3918
        %v3920 = vrot.slane %v3906, %v3919
        %v3921 = vcombine.low %v3897, %v3913
        %v3922 = vcombine.high %v3897, %v3913
        %v3924 = vunpack.c.l.s4 1934713408
        %v3925 = vunpack.c.0.s8 %v3924
        %v3926 = vlaneseq
        %v3927 = vshrl.u32 %v3926, 7
        %v3928 = vsub.s32 %v3925, %v3927
        %v3929 = vrot.slane %v3921, %v3928
        %v3931 = vunpack.c.l.s4 1934713408
        %v3932 = vunpack.c.0.s8 %v3931
        %v3933 = vlaneseq
        %v3934 = vshrl.u32 %v3933, 7
        %v3935 = vsub.s32 %v3932, %v3934
        %v3936 = vrot.slane %v3922, %v3935
        %v3937 = vcombine.low %v3904, %v3920
        %v3938 = vcombine.high %v3904, %v3920
        %v3940 = vunpack.c.l.s4 1934713408
        %v3941 = vunpack.c.0.s8 %v3940
        %v3942 = vlaneseq
        %v3943 = vshrl.u32 %v3942, 7
        %v3944 = vsub.s32 %v3941, %v3943
        %v3945 = vrot.slane %v3937, %v3944
        %v3947 = vunpack.c.l.s4 1934713408
        %v3948 = vunpack.c.0.s8 %v3947
        %v3949 = vlaneseq
        %v3950 = vshrl.u32 %v3949, 7
        %v3951 = vsub.s32 %v3948, %v3950
        %v3952 = vrot.slane %v3938, %v3951
        %v3953 = vcombine.high %v3929, 0
        %v3954 = vcombine.high %v3936, 0
        %v3955 = vcombine.high %v3945, 0
        %v3956 = vcombine.high %v3952, 0
        %v3957 = vcombine.low %v3559, %v3575
        %v3958 = vcombine.high %v3559, %v3575
        %v3960 = vunpack.c.l.s4 1983009808
        %v3961 = vunpack.c.0.s8 %v3960
        %v3962 = vlaneseq
        %v3963 = vshrl.u32 %v3962, 7
        %v3964 = vsub.s32 %v3961, %v3963
        %v3965 = vrot.slane %v3957, %v3964
        %v3967 = vunpack.c.l.s4 1983009808
        %v3968 = vunpack.c.0.s8 %v3967
        %v3969 = vlaneseq
        %v3970 = vshrl.u32 %v3969, 7
        %v3971 = vsub.s32 %v3968, %v3970
        %v3972 = vrot.slane %v3958, %v3971
        %v3973 = vcombine.low %v3567, %v3583
        %v3974 = vcombine.high %v3567, %v3583
        %v3976 = vunpack.c.l.s4 1983009808
        %v3977 = vunpack.c.0.s8 %v3976
        %v3978 = vlaneseq
        %v3979 = vshrl.u32 %v3978, 7
        %v3980 = vsub.s32 %v3977, %v3979
        %v3981 = vrot.slane %v3973, %v3980
        %v3983 = vunpack.c.l.s4 1983009808
        %v3984 = vunpack.c.0.s8 %v3983
        %v3985 = vlaneseq
        %v3986 = vshrl.u32 %v3985, 7
        %v3987 = vsub.s32 %v3984, %v3986
        %v3988 = vrot.slane %v3974, %v3987
        %v3989 = vcombine.low %v3965, %v3981
        %v3990 = vcombine.high %v3965, %v3981
        %v3992 = vunpack.c.l.s4 1934713408
        %v3993 = vunpack.c.0.s8 %v3992
        %v3994 = vlaneseq
        %v3995 = vshrl.u32 %v3994, 7
        %v3996 = vsub.s32 %v3993, %v3995
        %v3997 = vrot.slane %v3989, %v3996
        %v3999 = vunpack.c.l.s4 1934713408
        %v4000 = vunpack.c.0.s8 %v3999
        %v4001 = vlaneseq
        %v4002 = vshrl.u32 %v4001, 7
        %v4003 = vsub.s32 %v4000, %v4002
        %v4004 = vrot.slane %v3990, %v4003
        %v4005 = vcombine.low %v3972, %v3988
        %v4006 = vcombine.high %v3972, %v3988
        %v4008 = vunpack.c.l.s4 1934713408
        %v4009 = vunpack.c.0.s8 %v4008
        %v4010 = vlaneseq
        %v4011 = vshrl.u32 %v4010, 7
        %v4012 = vsub.s32 %v4009, %v4011
        %v4013 = vrot.slane %v4005, %v4012
        %v4015 = vunpack.c.l.s4 1934713408
        %v4016 = vunpack.c.0.s8 %v4015
        %v4017 = vlaneseq
        %v4018 = vshrl.u32 %v4017, 7
        %v4019 = vsub.s32 %v4016, %v4018
        %v4020 = vrot.slane %v4006, %v4019
        %v4021 = vcombine.high %v3997, 0
        %v4022 = vcombine.high %v4004, 0
        %v4023 = vcombine.high %v4013, 0
        %v4024 = vcombine.high %v4020, 0
        %v4025 = vcombine.low %v3587, %v3603
        %v4026 = vcombine.high %v3587, %v3603
        %v4028 = vunpack.c.l.s4 1983009808
        %v4029 = vunpack.c.0.s8 %v4028
        %v4030 = vlaneseq
        %v4031 = vshrl.u32 %v4030, 7
        %v4032 = vsub.s32 %v4029, %v4031
        %v4033 = vrot.slane %v4025, %v4032
        %v4035 = vunpack.c.l.s4 1983009808
        %v4036 = vunpack.c.0.s8 %v4035
        %v4037 = vlaneseq
        %v4038 = vshrl.u32 %v4037, 7
        %v4039 = vsub.s32 %v4036, %v4038
        %v4040 = vrot.slane %v4026, %v4039
        %v4041 = vcombine.low %v3595, %v3611
        %v4042 = vcombine.high %v3595, %v3611
        %v4044 = vunpack.c.l.s4 1983009808
        %v4045 = vunpack.c.0.s8 %v4044
        %v4046 = vlaneseq
        %v4047 = vshrl.u32 %v4046, 7
        %v4048 = vsub.s32 %v4045, %v4047
        %v4049 = vrot.slane %v4041, %v4048
        %v4051 = vunpack.c.l.s4 1983009808
        %v4052 = vunpack.c.0.s8 %v4051
        %v4053 = vlaneseq
        %v4054 = vshrl.u32 %v4053, 7
        %v4055 = vsub.s32 %v4052, %v4054
        %v4056 = vrot.slane %v4042, %v4055
        %v4057 = vcombine.low %v4033, %v4049
        %v4058 = vcombine.high %v4033, %v4049
        %v4060 = vunpack.c.l.s4 1934713408
        %v4061 = vunpack.c.0.s8 %v4060
        %v4062 = vlaneseq
        %v4063 = vshrl.u32 %v4062, 7
        %v4064 = vsub.s32 %v4061, %v4063
        %v4065 = vrot.slane %v4057, %v4064
        %v4067 = vunpack.c.l.s4 1934713408
        %v4068 = vunpack.c.0.s8 %v4067
        %v4069 = vlaneseq
        %v4070 = vshrl.u32 %v4069, 7
        %v4071 = vsub.s32 %v4068, %v4070
        %v4072 = vrot.slane %v4058, %v4071
        %v4073 = vcombine.low %v4040, %v4056
        %v4074 = vcombine.high %v4040, %v4056
        %v4076 = vunpack.c.l.s4 1934713408
        %v4077 = vunpack.c.0.s8 %v4076
        %v4078 = vlaneseq
        %v4079 = vshrl.u32 %v4078, 7
        %v4080 = vsub.s32 %v4077, %v4079
        %v4081 = vrot.slane %v4073, %v4080
        %v4083 = vunpack.c.l.s4 1934713408
        %v4084 = vunpack.c.0.s8 %v4083
        %v4085 = vlaneseq
        %v4086 = vshrl.u32 %v4085, 7
        %v4087 = vsub.s32 %v4084, %v4086
        %v4088 = vrot.slane %v4074, %v4087
        %v4089 = vcombine.high %v4065, 0
        %v4090 = vcombine.high %v4072, 0
        %v4091 = vcombine.high %v4081, 0
        %v4092 = vcombine.high %v4088, 0
        %v4093 = vcombine.low %v3591, %v3607
        %v4094 = vcombine.high %v3591, %v3607
        %v4096 = vunpack.c.l.s4 1983009808
        %v4097 = vunpack.c.0.s8 %v4096
        %v4098 = vlaneseq
        %v4099 = vshrl.u32 %v4098, 7
        %v4100 = vsub.s32 %v4097, %v4099
        %v4101 = vrot.slane %v4093, %v4100
        %v4103 = vunpack.c.l.s4 1983009808
        %v4104 = vunpack.c.0.s8 %v4103
        %v4105 = vlaneseq
        %v4106 = vshrl.u32 %v4105, 7
        %v4107 = vsub.s32 %v4104, %v4106
        %v4108 = vrot.slane %v4094, %v4107
        %v4109 = vcombine.low %v3599, %v3615
        %v4110 = vcombine.high %v3599, %v3615
        %v4112 = vunpack.c.l.s4 1983009808
        %v4113 = vunpack.c.0.s8 %v4112
        %v4114 = vlaneseq
        %v4115 = vshrl.u32 %v4114, 7
        %v4116 = vsub.s32 %v4113, %v4115
        %v4117 = vrot.slane %v4109, %v4116
        %v4119 = vunpack.c.l.s4 1983009808
        %v4120 = vunpack.c.0.s8 %v4119
        %v4121 = vlaneseq
        %v4122 = vshrl.u32 %v4121, 7
        %v4123 = vsub.s32 %v4120, %v4122
        %v4124 = vrot.slane %v4110, %v4123
        %v4125 = vcombine.low %v4101, %v4117
        %v4126 = vcombine.high %v4101, %v4117
        %v4128 = vunpack.c.l.s4 1934713408
        %v4129 = vunpack.c.0.s8 %v4128
        %v4130 = vlaneseq
        %v4131 = vshrl.u32 %v4130, 7
        %v4132 = vsub.s32 %v4129, %v4131
        %v4133 = vrot.slane %v4125, %v4132
        %v4135 = vunpack.c.l.s4 1934713408
        %v4136 = vunpack.c.0.s8 %v4135
        %v4137 = vlaneseq
        %v4138 = vshrl.u32 %v4137, 7
        %v4139 = vsub.s32 %v4136, %v4138
        %v4140 = vrot.slane %v4126, %v4139
        %v4141 = vcombine.low %v4108, %v4124
        %v4142 = vcombine.high %v4108, %v4124
        %v4144 = vunpack.c.l.s4 1934713408
        %v4145 = vunpack.c.0.s8 %v4144
        %v4146 = vlaneseq
        %v4147 = vshrl.u32 %v4146, 7
        %v4148 = vsub.s32 %v4145, %v4147
        %v4149 = vrot.slane %v4141, %v4148
        %v4151 = vunpack.c.l.s4 1934713408
        %v4152 = vunpack.c.0.s8 %v4151
        %v4153 = vlaneseq
        %v4154 = vshrl.u32 %v4153, 7
        %v4155 = vsub.s32 %v4152, %v4154
        %v4156 = vrot.slane %v4142, %v4155
        %v4157 = vcombine.high %v4133, 0
        %v4158 = vcombine.high %v4140, 0
        %v4159 = vcombine.high %v4149, 0
        %v4160 = vcombine.high %v4156, 0
        %v4161 = vcombine.low %v3657, %v3664
        %v4163 = vunpack.c.l.s4 1983009808
        %v4164 = vunpack.c.0.s8 %v4163
        %v4165 = vlaneseq
        %v4166 = vshrl.u32 %v4165, 7
        %v4167 = vsub.s32 %v4164, %v4166
        %v4168 = vrot.slane %v4161, %v4167
        %v4169 = vcombine.low %v3681, %v3682
        %v4171 = vunpack.c.l.s4 1983009808
        %v4172 = vunpack.c.0.s8 %v4171
        %v4173 = vlaneseq
        %v4174 = vshrl.u32 %v4173, 7
        %v4175 = vsub.s32 %v4172, %v4174
        %v4176 = vrot.slane %v4169, %v4175
        %v4177 = vcombine.low %v3673, %v3680
        %v4179 = vunpack.c.l.s4 1983009808
        %v4180 = vunpack.c.0.s8 %v4179
        %v4181 = vlaneseq
        %v4182 = vshrl.u32 %v4181, 7
        %v4183 = vsub.s32 %v4180, %v4182
        %v4184 = vrot.slane %v4177, %v4183
        %v4185 = vcombine.low %v3683, %v3684
        %v4187 = vunpack.c.l.s4 1983009808
        %v4188 = vunpack.c.0.s8 %v4187
        %v4189 = vlaneseq
        %v4190 = vshrl.u32 %v4189, 7
        %v4191 = vsub.s32 %v4188, %v4190
        %v4192 = vrot.slane %v4185, %v4191
        %v4193 = vcombine.low %v4168, %v4176
        %v4194 = vcombine.high %v4168, %v4176
        %v4196 = vunpack.c.l.s4 1934713408
        %v4197 = vunpack.c.0.s8 %v4196
        %v4198 = vlaneseq
        %v4199 = vshrl.u32 %v4198, 7
        %v4200 = vsub.s32 %v4197, %v4199
        %v4201 = vrot.slane %v4193, %v4200
        %v4203 = vunpack.c.l.s4 1934713408
        %v4204 = vunpack.c.0.s8 %v4203
        %v4205 = vlaneseq
        %v4206 = vshrl.u32 %v4205, 7
        %v4207 = vsub.s32 %v4204, %v4206
        %v4208 = vrot.slane %v4194, %v4207
        %v4209 = vcombine.low %v4184, %v4192
        %v4210 = vcombine.high %v4184, %v4192
        %v4212 = vunpack.c.l.s4 1934713408
        %v4213 = vunpack.c.0.s8 %v4212
        %v4214 = vlaneseq
        %v4215 = vshrl.u32 %v4214, 7
        %v4216 = vsub.s32 %v4213, %v4215
        %v4217 = vrot.slane %v4209, %v4216
        %v4219 = vunpack.c.l.s4 1934713408
        %v4220 = vunpack.c.0.s8 %v4219
        %v4221 = vlaneseq
        %v4222 = vshrl.u32 %v4221, 7
        %v4223 = vsub.s32 %v4220, %v4222
        %v4224 = vrot.slane %v4210, %v4223
        %v4225 = vcombine.low %v4201, %v4217
        %v4226 = vcombine.high %v4201, %v4217
        %v4227 = vcombine.low %v4208, %v4224
        %v4228 = vcombine.high %v4208, %v4224
        %v4229 = vcombine.low %v3725, %v3732
        %v4231 = vunpack.c.l.s4 1983009808
        %v4232 = vunpack.c.0.s8 %v4231
        %v4233 = vlaneseq
        %v4234 = vshrl.u32 %v4233, 7
        %v4235 = vsub.s32 %v4232, %v4234
        %v4236 = vrot.slane %v4229, %v4235
        %v4237 = vcombine.low %v3749, %v3750
        %v4239 = vunpack.c.l.s4 1983009808
        %v4240 = vunpack.c.0.s8 %v4239
        %v4241 = vlaneseq
        %v4242 = vshrl.u32 %v4241, 7
        %v4243 = vsub.s32 %v4240, %v4242
        %v4244 = vrot.slane %v4237, %v4243
        %v4245 = vcombine.low %v3741, %v3748
        %v4247 = vunpack.c.l.s4 1983009808
        %v4248 = vunpack.c.0.s8 %v4247
        %v4249 = vlaneseq
        %v4250 = vshrl.u32 %v4249, 7
        %v4251 = vsub.s32 %v4248, %v4250
        %v4252 = vrot.slane %v4245, %v4251
        %v4253 = vcombine.low %v3751, %v3752
        %v4255 = vunpack.c.l.s4 1983009808
        %v4256 = vunpack.c.0.s8 %v4255
        %v4257 = vlaneseq
        %v4258 = vshrl.u32 %v4257, 7
        %v4259 = vsub.s32 %v4256, %v4258
        %v4260 = vrot.slane %v4253, %v4259
        %v4261 = vcombine.low %v4236, %v4244
        %v4262 = vcombine.high %v4236, %v4244
        %v4264 = vunpack.c.l.s4 1934713408
        %v4265 = vunpack.c.0.s8 %v4264
        %v4266 = vlaneseq
        %v4267 = vshrl.u32 %v4266, 7
        %v4268 = vsub.s32 %v4265, %v4267
        %v4269 = vrot.slane %v4261, %v4268
        %v4271 = vunpack.c.l.s4 1934713408
        %v4272 = vunpack.c.0.s8 %v4271
        %v4273 = vlaneseq
        %v4274 = vshrl.u32 %v4273, 7
        %v4275 = vsub.s32 %v4272, %v4274
        %v4276 = vrot.slane %v4262, %v4275
        %v4277 = vcombine.low %v4252, %v4260
        %v4278 = vcombine.high %v4252, %v4260
        %v4280 = vunpack.c.l.s4 1934713408
        %v4281 = vunpack.c.0.s8 %v4280
        %v4282 = vlaneseq
        %v4283 = vshrl.u32 %v4282, 7
        %v4284 = vsub.s32 %v4281, %v4283
        %v4285 = vrot.slane %v4277, %v4284
        %v4287 = vunpack.c.l.s4 1934713408
        %v4288 = vunpack.c.0.s8 %v4287
        %v4289 = vlaneseq
        %v4290 = vshrl.u32 %v4289, 7
        %v4291 = vsub.s32 %v4288, %v4290
        %v4292 = vrot.slane %v4278, %v4291
        %v4293 = vcombine.low %v4269, %v4285
        %v4294 = vcombine.high %v4269, %v4285
        %v4295 = vcombine.low %v4276, %v4292
        %v4296 = vcombine.high %v4276, %v4292
        %v4297 = vcombine.low %v3793, %v3800
        %v4299 = vunpack.c.l.s4 1983009808
        %v4300 = vunpack.c.0.s8 %v4299
        %v4301 = vlaneseq
        %v4302 = vshrl.u32 %v4301, 7
        %v4303 = vsub.s32 %v4300, %v4302
        %v4304 = vrot.slane %v4297, %v4303
        %v4305 = vcombine.low %v3817, %v3818
        %v4307 = vunpack.c.l.s4 1983009808
        %v4308 = vunpack.c.0.s8 %v4307
        %v4309 = vlaneseq
        %v4310 = vshrl.u32 %v4309, 7
        %v4311 = vsub.s32 %v4308, %v4310
        %v4312 = vrot.slane %v4305, %v4311
        %v4313 = vcombine.low %v3809, %v3816
        %v4315 = vunpack.c.l.s4 1983009808
        %v4316 = vunpack.c.0.s8 %v4315
        %v4317 = vlaneseq
        %v4318 = vshrl.u32 %v4317, 7
        %v4319 = vsub.s32 %v4316, %v4318
        %v4320 = vrot.slane %v4313, %v4319
        %v4321 = vcombine.low %v3819, %v3820
        %v4323 = vunpack.c.l.s4 1983009808
        %v4324 = vunpack.c.0.s8 %v4323
        %v4325 = vlaneseq
        %v4326 = vshrl.u32 %v4325, 7
        %v4327 = vsub.s32 %v4324, %v4326
        %v4328 = vrot.slane %v4321, %v4327
        %v4329 = vcombine.low %v4304, %v4312
        %v4330 = vcombine.high %v4304, %v4312
        %v4332 = vunpack.c.l.s4 1934713408
        %v4333 = vunpack.c.0.s8 %v4332
        %v4334 = vlaneseq
        %v4335 = vshrl.u32 %v4334, 7
        %v4336 = vsub.s32 %v4333, %v4335
        %v4337 = vrot.slane %v4329, %v4336
        %v4339 = vunpack.c.l.s4 1934713408
        %v4340 = vunpack.c.0.s8 %v4339
        %v4341 = vlaneseq
        %v4342 = vshrl.u32 %v4341, 7
        %v4343 = vsub.s32 %v4340, %v4342
        %v4344 = vrot.slane %v4330, %v4343
        %v4345 = vcombine.low %v4320, %v4328
        %v4346 = vcombine.high %v4320, %v4328
        %v4348 = vunpack.c.l.s4 1934713408
        %v4349 = vunpack.c.0.s8 %v4348
        %v4350 = vlaneseq
        %v4351 = vshrl.u32 %v4350, 7
        %v4352 = vsub.s32 %v4349, %v4351
        %v4353 = vrot.slane %v4345, %v4352
        %v4355 = vunpack.c.l.s4 1934713408
        %v4356 = vunpack.c.0.s8 %v4355
        %v4357 = vlaneseq
        %v4358 = vshrl.u32 %v4357, 7
        %v4359 = vsub.s32 %v4356, %v4358
        %v4360 = vrot.slane %v4346, %v4359
        %v4361 = vcombine.low %v4337, %v4353
        %v4362 = vcombine.high %v4337, %v4353
        %v4363 = vcombine.low %v4344, %v4360
        %v4364 = vcombine.high %v4344, %v4360
        %v4365 = vcombine.low %v3861, %v3868
        %v4367 = vunpack.c.l.s4 1983009808
        %v4368 = vunpack.c.0.s8 %v4367
        %v4369 = vlaneseq
        %v4370 = vshrl.u32 %v4369, 7
        %v4371 = vsub.s32 %v4368, %v4370
        %v4372 = vrot.slane %v4365, %v4371
        %v4373 = vcombine.low %v3885, %v3886
        %v4375 = vunpack.c.l.s4 1983009808
        %v4376 = vunpack.c.0.s8 %v4375
        %v4377 = vlaneseq
        %v4378 = vshrl.u32 %v4377, 7
        %v4379 = vsub.s32 %v4376, %v4378
        %v4380 = vrot.slane %v4373, %v4379
        %v4381 = vcombine.low %v3877, %v3884
        %v4383 = vunpack.c.l.s4 1983009808
        %v4384 = vunpack.c.0.s8 %v4383
        %v4385 = vlaneseq
        %v4386 = vshrl.u32 %v4385, 7
        %v4387 = vsub.s32 %v4384, %v4386
        %v4388 = vrot.slane %v4381, %v4387
        %v4389 = vcombine.low %v3887, %v3888
        %v4391 = vunpack.c.l.s4 1983009808
        %v4392 = vunpack.c.0.s8 %v4391
        %v4393 = vlaneseq
        %v4394 = vshrl.u32 %v4393, 7
        %v4395 = vsub.s32 %v4392, %v4394
        %v4396 = vrot.slane %v4389, %v4395
        %v4397 = vcombine.low %v4372, %v4380
        %v4398 = vcombine.high %v4372, %v4380
        %v4400 = vunpack.c.l.s4 1934713408
        %v4401 = vunpack.c.0.s8 %v4400
        %v4402 = vlaneseq
        %v4403 = vshrl.u32 %v4402, 7
        %v4404 = vsub.s32 %v4401, %v4403
        %v4405 = vrot.slane %v4397, %v4404
        %v4407 = vunpack.c.l.s4 1934713408
        %v4408 = vunpack.c.0.s8 %v4407
        %v4409 = vlaneseq
        %v4410 = vshrl.u32 %v4409, 7
        %v4411 = vsub.s32 %v4408, %v4410
        %v4412 = vrot.slane %v4398, %v4411
        %v4413 = vcombine.low %v4388, %v4396
        %v4414 = vcombine.high %v4388, %v4396
        %v4416 = vunpack.c.l.s4 1934713408
        %v4417 = vunpack.c.0.s8 %v4416
        %v4418 = vlaneseq
        %v4419 = vshrl.u32 %v4418, 7
        %v4420 = vsub.s32 %v4417, %v4419
        %v4421 = vrot.slane %v4413, %v4420
        %v4423 = vunpack.c.l.s4 1934713408
        %v4424 = vunpack.c.0.s8 %v4423
        %v4425 = vlaneseq
        %v4426 = vshrl.u32 %v4425, 7
        %v4427 = vsub.s32 %v4424, %v4426
        %v4428 = vrot.slane %v4414, %v4427
        %v4429 = vcombine.low %v4405, %v4421
        %v4430 = vcombine.high %v4405, %v4421
        %v4431 = vcombine.low %v4412, %v4428
        %v4432 = vcombine.high %v4412, %v4428
        %v4433 = vcombine.low %v3929, %v3936
        %v4435 = vunpack.c.l.s4 1983009808
        %v4436 = vunpack.c.0.s8 %v4435
        %v4437 = vlaneseq
        %v4438 = vshrl.u32 %v4437, 7
        %v4439 = vsub.s32 %v4436, %v4438
        %v4440 = vrot.slane %v4433, %v4439
        %v4441 = vcombine.low %v3953, %v3954
        %v4443 = vunpack.c.l.s4 1983009808
        %v4444 = vunpack.c.0.s8 %v4443
        %v4445 = vlaneseq
        %v4446 = vshrl.u32 %v4445, 7
        %v4447 = vsub.s32 %v4444, %v4446
        %v4448 = vrot.slane %v4441, %v4447
        %v4449 = vcombine.low %v3945, %v3952
        %v4451 = vunpack.c.l.s4 1983009808
        %v4452 = vunpack.c.0.s8 %v4451
        %v4453 = vlaneseq
        %v4454 = vshrl.u32 %v4453, 7
        %v4455 = vsub.s32 %v4452, %v4454
        %v4456 = vrot.slane %v4449, %v4455
        %v4457 = vcombine.low %v3955, %v3956
        %v4459 = vunpack.c.l.s4 1983009808
        %v4460 = vunpack.c.0.s8 %v4459
        %v4461 = vlaneseq
        %v4462 = vshrl.u32 %v4461, 7
        %v4463 = vsub.s32 %v4460, %v4462
        %v4464 = vrot.slane %v4457, %v4463
        %v4465 = vcombine.low %v4440, %v4448
        %v4466 = vcombine.high %v4440, %v4448
        %v4468 = vunpack.c.l.s4 1934713408
        %v4469 = vunpack.c.0.s8 %v4468
        %v4470 = vlaneseq
        %v4471 = vshrl.u32 %v4470, 7
        %v4472 = vsub.s32 %v4469, %v4471
        %v4473 = vrot.slane %v4465, %v4472
        %v4475 = vunpack.c.l.s4 1934713408
        %v4476 = vunpack.c.0.s8 %v4475
        %v4477 = vlaneseq
        %v4478 = vshrl.u32 %v4477, 7
        %v4479 = vsub.s32 %v4476, %v4478
        %v4480 = vrot.slane %v4466, %v4479
        %v4481 = vcombine.low %v4456, %v4464
        %v4482 = vcombine.high %v4456, %v4464
        %v4484 = vunpack.c.l.s4 1934713408
        %v4485 = vunpack.c.0.s8 %v4484
        %v4486 = vlaneseq
        %v4487 = vshrl.u32 %v4486, 7
        %v4488 = vsub.s32 %v4485, %v4487
        %v4489 = vrot.slane %v4481, %v4488
        %v4491 = vunpack.c.l.s4 1934713408
        %v4492 = vunpack.c.0.s8 %v4491
        %v4493 = vlaneseq
        %v4494 = vshrl.u32 %v4493, 7
        %v4495 = vsub.s32 %v4492, %v4494
        %v4496 = vrot.slane %v4482, %v4495
        %v4497 = vcombine.low %v4473, %v4489
        %v4498 = vcombine.high %v4473, %v4489
        %v4499 = vcombine.low %v4480, %v4496
        %v4500 = vcombine.high %v4480, %v4496
        %v4501 = vcombine.low %v3997, %v4004
        %v4503 = vunpack.c.l.s4 1983009808
        %v4504 = vunpack.c.0.s8 %v4503
        %v4505 = vlaneseq
        %v4506 = vshrl.u32 %v4505, 7
        %v4507 = vsub.s32 %v4504, %v4506
        %v4508 = vrot.slane %v4501, %v4507
        %v4509 = vcombine.low %v4021, %v4022
        %v4511 = vunpack.c.l.s4 1983009808
        %v4512 = vunpack.c.0.s8 %v4511
        %v4513 = vlaneseq
        %v4514 = vshrl.u32 %v4513, 7
        %v4515 = vsub.s32 %v4512, %v4514
        %v4516 = vrot.slane %v4509, %v4515
        %v4517 = vcombine.low %v4013, %v4020
        %v4519 = vunpack.c.l.s4 1983009808
        %v4520 = vunpack.c.0.s8 %v4519
        %v4521 = vlaneseq
        %v4522 = vshrl.u32 %v4521, 7
        %v4523 = vsub.s32 %v4520, %v4522
        %v4524 = vrot.slane %v4517, %v4523
        %v4525 = vcombine.low %v4023, %v4024
        %v4527 = vunpack.c.l.s4 1983009808
        %v4528 = vunpack.c.0.s8 %v4527
        %v4529 = vlaneseq
        %v4530 = vshrl.u32 %v4529, 7
        %v4531 = vsub.s32 %v4528, %v4530
        %v4532 = vrot.slane %v4525, %v4531
        %v4533 = vcombine.low %v4508, %v4516
        %v4534 = vcombine.high %v4508, %v4516
        %v4536 = vunpack.c.l.s4 1934713408
        %v4537 = vunpack.c.0.s8 %v4536
        %v4538 = vlaneseq
        %v4539 = vshrl.u32 %v4538, 7
        %v4540 = vsub.s32 %v4537, %v4539
        %v4541 = vrot.slane %v4533, %v4540
        %v4543 = vunpack.c.l.s4 1934713408
        %v4544 = vunpack.c.0.s8 %v4543
        %v4545 = vlaneseq
        %v4546 = vshrl.u32 %v4545, 7
        %v4547 = vsub.s32 %v4544, %v4546
        %v4548 = vrot.slane %v4534, %v4547
        %v4549 = vcombine.low %v4524, %v4532
        %v4550 = vcombine.high %v4524, %v4532
        %v4552 = vunpack.c.l.s4 1934713408
        %v4553 = vunpack.c.0.s8 %v4552
        %v4554 = vlaneseq
        %v4555 = vshrl.u32 %v4554, 7
        %v4556 = vsub.s32 %v4553, %v4555
        %v4557 = vrot.slane %v4549, %v4556
        %v4559 = vunpack.c.l.s4 1934713408
        %v4560 = vunpack.c.0.s8 %v4559
        %v4561 = vlaneseq
        %v4562 = vshrl.u32 %v4561, 7
        %v4563 = vsub.s32 %v4560, %v4562
        %v4564 = vrot.slane %v4550, %v4563
        %v4565 = vcombine.low %v4541, %v4557
        %v4566 = vcombine.high %v4541, %v4557
        %v4567 = vcombine.low %v4548, %v4564
        %v4568 = vcombine.high %v4548, %v4564
        %v4569 = vcombine.low %v4065, %v4072
        %v4571 = vunpack.c.l.s4 1983009808
        %v4572 = vunpack.c.0.s8 %v4571
        %v4573 = vlaneseq
        %v4574 = vshrl.u32 %v4573, 7
        %v4575 = vsub.s32 %v4572, %v4574
        %v4576 = vrot.slane %v4569, %v4575
        %v4577 = vcombine.low %v4089, %v4090
        %v4579 = vunpack.c.l.s4 1983009808
        %v4580 = vunpack.c.0.s8 %v4579
        %v4581 = vlaneseq
        %v4582 = vshrl.u32 %v4581, 7
        %v4583 = vsub.s32 %v4580, %v4582
        %v4584 = vrot.slane %v4577, %v4583
        %v4585 = vcombine.low %v4081, %v4088
        %v4587 = vunpack.c.l.s4 1983009808
        %v4588 = vunpack.c.0.s8 %v4587
        %v4589 = vlaneseq
        %v4590 = vshrl.u32 %v4589, 7
        %v4591 = vsub.s32 %v4588, %v4590
        %v4592 = vrot.slane %v4585, %v4591
        %v4593 = vcombine.low %v4091, %v4092
        %v4595 = vunpack.c.l.s4 1983009808
        %v4596 = vunpack.c.0.s8 %v4595
        %v4597 = vlaneseq
        %v4598 = vshrl.u32 %v4597, 7
        %v4599 = vsub.s32 %v4596, %v4598
        %v4600 = vrot.slane %v4593, %v4599
        %v4601 = vcombine.low %v4576, %v4584
        %v4602 = vcombine.high %v4576, %v4584
        %v4604 = vunpack.c.l.s4 1934713408
        %v4605 = vunpack.c.0.s8 %v4604
        %v4606 = vlaneseq
        %v4607 = vshrl.u32 %v4606, 7
        %v4608 = vsub.s32 %v4605, %v4607
        %v4609 = vrot.slane %v4601, %v4608
        %v4611 = vunpack.c.l.s4 1934713408
        %v4612 = vunpack.c.0.s8 %v4611
        %v4613 = vlaneseq
        %v4614 = vshrl.u32 %v4613, 7
        %v4615 = vsub.s32 %v4612, %v4614
        %v4616 = vrot.slane %v4602, %v4615
        %v4617 = vcombine.low %v4592, %v4600
        %v4618 = vcombine.high %v4592, %v4600
        %v4620 = vunpack.c.l.s4 1934713408
        %v4621 = vunpack.c.0.s8 %v4620
        %v4622 = vlaneseq
        %v4623 = vshrl.u32 %v4622, 7
        %v4624 = vsub.s32 %v4621, %v4623
        %v4625 = vrot.slane %v4617, %v4624
        %v4627 = vunpack.c.l.s4 1934713408
        %v4628 = vunpack.c.0.s8 %v4627
        %v4629 = vlaneseq
        %v4630 = vshrl.u32 %v4629, 7
        %v4631 = vsub.s32 %v4628, %v4630
        %v4632 = vrot.slane %v4618, %v4631
        %v4633 = vcombine.low %v4609, %v4625
        %v4634 = vcombine.high %v4609, %v4625
        %v4635 = vcombine.low %v4616, %v4632
        %v4636 = vcombine.high %v4616, %v4632
        %v4637 = vcombine.low %v4133, %v4140
        %v4639 = vunpack.c.l.s4 1983009808
        %v4640 = vunpack.c.0.s8 %v4639
        %v4641 = vlaneseq
        %v4642 = vshrl.u32 %v4641, 7
        %v4643 = vsub.s32 %v4640, %v4642
        %v4644 = vrot.slane %v4637, %v4643
        %v4645 = vcombine.low %v4157, %v4158
        %v4647 = vunpack.c.l.s4 1983009808
        %v4648 = vunpack.c.0.s8 %v4647
        %v4649 = vlaneseq
        %v4650 = vshrl.u32 %v4649, 7
        %v4651 = vsub.s32 %v4648, %v4650
        %v4652 = vrot.slane %v4645, %v4651
        %v4653 = vcombine.low %v4149, %v4156
        %v4655 = vunpack.c.l.s4 1983009808
        %v4656 = vunpack.c.0.s8 %v4655
        %v4657 = vlaneseq
        %v4658 = vshrl.u32 %v4657, 7
        %v4659 = vsub.s32 %v4656, %v4658
        %v4660 = vrot.slane %v4653, %v4659
        %v4661 = vcombine.low %v4159, %v4160
        %v4663 = vunpack.c.l.s4 1983009808
        %v4664 = vunpack.c.0.s8 %v4663
        %v4665 = vlaneseq
        %v4666 = vshrl.u32 %v4665, 7
        %v4667 = vsub.s32 %v4664, %v4666
        %v4668 = vrot.slane %v4661, %v4667
        %v4669 = vcombine.low %v4644, %v4652
        %v4670 = vcombine.high %v4644, %v4652
        %v4672 = vunpack.c.l.s4 1934713408
        %v4673 = vunpack.c.0.s8 %v4672
        %v4674 = vlaneseq
        %v4675 = vshrl.u32 %v4674, 7
        %v4676 = vsub.s32 %v4673, %v4675
        %v4677 = vrot.slane %v4669, %v4676
        %v4679 = vunpack.c.l.s4 1934713408
        %v4680 = vunpack.c.0.s8 %v4679
        %v4681 = vlaneseq
        %v4682 = vshrl.u32 %v4681, 7
        %v4683 = vsub.s32 %v4680, %v4682
        %v4684 = vrot.slane %v4670, %v4683
        %v4685 = vcombine.low %v4660, %v4668
        %v4686 = vcombine.high %v4660, %v4668
        %v4688 = vunpack.c.l.s4 1934713408
        %v4689 = vunpack.c.0.s8 %v4688
        %v4690 = vlaneseq
        %v4691 = vshrl.u32 %v4690, 7
        %v4692 = vsub.s32 %v4689, %v4691
        %v4693 = vrot.slane %v4685, %v4692
        %v4695 = vunpack.c.l.s4 1934713408
        %v4696 = vunpack.c.0.s8 %v4695
        %v4697 = vlaneseq
        %v4698 = vshrl.u32 %v4697, 7
        %v4699 = vsub.s32 %v4696, %v4698
        %v4700 = vrot.slane %v4686, %v4699
        %v4701 = vcombine.low %v4677, %v4693
        %v4702 = vcombine.high %v4677, %v4693
        %v4703 = vcombine.low %v4684, %v4700
        %v4704 = vcombine.high %v4684, %v4700
        %v4707 = vpack.i.b16 %v4293, %v4225
        %v4709 = vshrl.u32 %v4225, 16
        %v4710 = vshrl.u32 %v4293, 16
        %v4711 = vpack.i.b16 %v4710, %v4709
        %v4715 = vpack.i.b16 %v4294, %v4226
        %v4717 = vshrl.u32 %v4226, 16
        %v4718 = vshrl.u32 %v4294, 16
        %v4719 = vpack.i.b16 %v4718, %v4717
        %v4723 = vpack.i.b16 %v4295, %v4227
        %v4725 = vshrl.u32 %v4227, 16
        %v4726 = vshrl.u32 %v4295, 16
        %v4727 = vpack.i.b16 %v4726, %v4725
        %v4731 = vpack.i.b16 %v4296, %v4228
        %v4733 = vshrl.u32 %v4228, 16
        %v4734 = vshrl.u32 %v4296, 16
        %v4735 = vpack.i.b16 %v4734, %v4733
        %v4739 = vpack.i.b16 %v4429, %v4361
        %v4741 = vshrl.u32 %v4361, 16
        %v4742 = vshrl.u32 %v4429, 16
        %v4743 = vpack.i.b16 %v4742, %v4741
        %v4747 = vpack.i.b16 %v4430, %v4362
        %v4749 = vshrl.u32 %v4362, 16
        %v4750 = vshrl.u32 %v4430, 16
        %v4751 = vpack.i.b16 %v4750, %v4749
        %v4755 = vpack.i.b16 %v4431, %v4363
        %v4757 = vshrl.u32 %v4363, 16
        %v4758 = vshrl.u32 %v4431, 16
        %v4759 = vpack.i.b16 %v4758, %v4757
        %v4763 = vpack.i.b16 %v4432, %v4364
        %v4765 = vshrl.u32 %v4364, 16
        %v4766 = vshrl.u32 %v4432, 16
        %v4767 = vpack.i.b16 %v4766, %v4765
        %v4771 = vpack.i.b16 %v4565, %v4497
        %v4773 = vshrl.u32 %v4497, 16
        %v4774 = vshrl.u32 %v4565, 16
        %v4775 = vpack.i.b16 %v4774, %v4773
        %v4779 = vpack.i.b16 %v4566, %v4498
        %v4781 = vshrl.u32 %v4498, 16
        %v4782 = vshrl.u32 %v4566, 16
        %v4783 = vpack.i.b16 %v4782, %v4781
        %v4787 = vpack.i.b16 %v4567, %v4499
        %v4789 = vshrl.u32 %v4499, 16
        %v4790 = vshrl.u32 %v4567, 16
        %v4791 = vpack.i.b16 %v4790, %v4789
        %v4795 = vpack.i.b16 %v4568, %v4500
        %v4797 = vshrl.u32 %v4500, 16
        %v4798 = vshrl.u32 %v4568, 16
        %v4799 = vpack.i.b16 %v4798, %v4797
        %v4803 = vpack.i.b16 %v4701, %v4633
        %v4805 = vshrl.u32 %v4633, 16
        %v4806 = vshrl.u32 %v4701, 16
        %v4807 = vpack.i.b16 %v4806, %v4805
        %v4811 = vpack.i.b16 %v4702, %v4634
        %v4813 = vshrl.u32 %v4634, 16
        %v4814 = vshrl.u32 %v4702, 16
        %v4815 = vpack.i.b16 %v4814, %v4813
        %v4819 = vpack.i.b16 %v4703, %v4635
        %v4821 = vshrl.u32 %v4635, 16
        %v4822 = vshrl.u32 %v4703, 16
        %v4823 = vpack.i.b16 %v4822, %v4821
        %v4827 = vpack.i.b16 %v4704, %v4636
        %v4829 = vshrl.u32 %v4636, 16
        %v4830 = vshrl.u32 %v4704, 16
        %v4831 = vpack.i.b16 %v4830, %v4829
        %vm4833 = vcmask 64512
        %v4835 = vsel %vm4833, %v1959, 0
        %v4838 = vsel %vm4833, %v1983, 0
        %v4841 = vsel %vm4833, %v2007, 0
        %v4844 = vsel %vm4833, %v2031, 0
        %v4847 = vsel %vm4833, %v3331, 0
        %v4850 = vsel %vm4833, %v3355, 0
        %v4853 = vsel %vm4833, %v3379, 0
        %v4856 = vsel %vm4833, %v3403, 0
        %4858 = vmatprep.subr.bf16.mxu0 0
        %4859 = vmatpush1.bf16.xpose.msra.mxu0 %v4847
        %4860 = vmatprep.subr.bf16.mxu0 0
        %4861 = vmatpush1.bf16.xpose.msra.mxu0 %v4850
        %4862 = vmatprep.subr.bf16.mxu0 0
        %4863 = vmatpush1.bf16.xpose.msra.mxu0 %v4853
        %4864 = vmatprep.subr.bf16.mxu0 0
        %4865 = vmatpush1.bf16.xpose.msra.mxu0 %v4856
        %4866 = vmatprep.subr.bf16.mxu0 0
        %4867 = vmatpush1.bf16.xpose.msra.mxu0 0
        %4868 = vmatprep.subr.bf16.mxu0 0
        %4869 = vmatpush1.bf16.xpose.msra.mxu0 0
        %4870 = vmatprep.subr.bf16.mxu0 0
        %4871 = vmatpush1.bf16.xpose.msra.mxu0 0
        %4872 = vmatprep.subr.bf16.mxu0 0
        %4873 = vmatpush1.bf16.xpose.msra.mxu0 0
        %4874 = vmatprep.subr.bf16.mxu0 0
        %4875 = vmatpush1.bf16.xpose.msra.mxu0 0
        %4876 = vmatprep.subr.bf16.mxu0 0
        %4877 = vmatpush1.bf16.xpose.msra.mxu0 0
        %4878 = vmatprep.subr.bf16.mxu0 0
        %4879 = vmatpush1.bf16.xpose.msra.mxu0 0
        %4880 = vmatprep.subr.bf16.mxu0 0
        %4881 = vmatpush1.bf16.xpose.msra.mxu0 0
        %4882 = vmatprep.subr.bf16.mxu0 0
        %4883 = vmatpush1.bf16.xpose.msra.mxu0 0
        %4884 = vmatprep.subr.bf16.mxu0 0
        %4885 = vmatpush1.bf16.xpose.msra.mxu0 0
        %4886 = vmatprep.subr.bf16.mxu0 0
        %4887 = vmatpush1.bf16.xpose.msra.mxu0 0
        %4888 = vmatprep.subr.bf16.mxu0 0
        %4889 = vmatpush1.bf16.xpose.msra.mxu0 0
        %4890 = vmatprep.mubr.bf16.mxu0 0
        %4891 = vmatmul.mubr.bf16.gmra.mrb[0].mxu0 %v4835
        %v4892 = vpop.f32.mrb[0].mxu0
        %v4893 = vadd.f32 0.0, %v4892
        %v4894 = vpop.f32.mrb[0].mxu0
        %v4895 = vpop.f32.mrb[0].mxu0
        %v4896 = vadd.f32 0.0, %v4895
        %v4897 = vpop.f32.mrb[0].mxu0
        %4898 = vmatprep.mubr.bf16.mxu0 0
        %4899 = vmatmul.mubr.bf16.gmra.mrb[0].mxu0 %v4838
        %v4900 = vpop.f32.mrb[0].mxu0
        %v4901 = vadd.f32 0.0, %v4900
        %v4902 = vpop.f32.mrb[0].mxu0
        %v4903 = vpop.f32.mrb[0].mxu0
        %v4904 = vadd.f32 0.0, %v4903
        %v4905 = vpop.f32.mrb[0].mxu0
        %4906 = vmatprep.mubr.bf16.mxu0 0
        %4907 = vmatmul.mubr.bf16.gmra.mrb[0].mxu0 %v4841
        %v4908 = vpop.f32.mrb[0].mxu0
        %v4909 = vadd.f32 0.0, %v4908
        %v4910 = vpop.f32.mrb[0].mxu0
        %v4911 = vpop.f32.mrb[0].mxu0
        %v4912 = vadd.f32 0.0, %v4911
        %v4913 = vpop.f32.mrb[0].mxu0
        %4914 = vmatprep.mubr.bf16.mxu0 0
        %4915 = vmatmul.mubr.bf16.gmra.mrb[0].mxu0 %v4844
        %v4916 = vpop.f32.mrb[0].mxu0
        %v4917 = vadd.f32 0.0, %v4916
        %v4918 = vpop.f32.mrb[0].mxu0
        %v4919 = vpop.f32.mrb[0].mxu0
        %v4920 = vadd.f32 0.0, %v4919
        %v4921 = vpop.f32.mrb[0].mxu0
        %4922 = vdwg.mxu0
        %v4924 = vsel %vm4833, %v1962, 0
        %v4927 = vsel %vm4833, %v1986, 0
        %v4930 = vsel %vm4833, %v2010, 0
        %v4933 = vsel %vm4833, %v2034, 0
        %v4936 = vsel %vm4833, %v3334, 0
        %v4939 = vsel %vm4833, %v3358, 0
        %v4942 = vsel %vm4833, %v3382, 0
        %v4945 = vsel %vm4833, %v3406, 0
        %4947 = vmatprep.subr.bf16.mxu0 0
        %4948 = vmatpush1.bf16.xpose.msra.mxu0 %v4936
        %4949 = vmatprep.subr.bf16.mxu0 0
        %4950 = vmatpush1.bf16.xpose.msra.mxu0 %v4939
        %4951 = vmatprep.subr.bf16.mxu0 0
        %4952 = vmatpush1.bf16.xpose.msra.mxu0 %v4942
        %4953 = vmatprep.subr.bf16.mxu0 0
        %4954 = vmatpush1.bf16.xpose.msra.mxu0 %v4945
        %4955 = vmatprep.subr.bf16.mxu0 0
        %4956 = vmatpush1.bf16.xpose.msra.mxu0 0
        %4957 = vmatprep.subr.bf16.mxu0 0
        %4958 = vmatpush1.bf16.xpose.msra.mxu0 0
        %4959 = vmatprep.subr.bf16.mxu0 0
        %4960 = vmatpush1.bf16.xpose.msra.mxu0 0
        %4961 = vmatprep.subr.bf16.mxu0 0
        %4962 = vmatpush1.bf16.xpose.msra.mxu0 0
        %4963 = vmatprep.subr.bf16.mxu0 0
        %4964 = vmatpush1.bf16.xpose.msra.mxu0 0
        %4965 = vmatprep.subr.bf16.mxu0 0
        %4966 = vmatpush1.bf16.xpose.msra.mxu0 0
        %4967 = vmatprep.subr.bf16.mxu0 0
        %4968 = vmatpush1.bf16.xpose.msra.mxu0 0
        %4969 = vmatprep.subr.bf16.mxu0 0
        %4970 = vmatpush1.bf16.xpose.msra.mxu0 0
        %4971 = vmatprep.subr.bf16.mxu0 0
        %4972 = vmatpush1.bf16.xpose.msra.mxu0 0
        %4973 = vmatprep.subr.bf16.mxu0 0
        %4974 = vmatpush1.bf16.xpose.msra.mxu0 0
        %4975 = vmatprep.subr.bf16.mxu0 0
        %4976 = vmatpush1.bf16.xpose.msra.mxu0 0
        %4977 = vmatprep.subr.bf16.mxu0 0
        %4978 = vmatpush1.bf16.xpose.msra.mxu0 0
        %4979 = vmatprep.mubr.bf16.mxu0 0
        %4980 = vmatmul.mubr.bf16.gmra.mrb[0].mxu0 %v4924
        %v4981 = vpop.f32.mrb[0].mxu0
        %v4982 = vadd.f32 0.0, %v4981
        %v4983 = vpop.f32.mrb[0].mxu0
        %v4984 = vpop.f32.mrb[0].mxu0
        %v4985 = vadd.f32 0.0, %v4984
        %v4986 = vpop.f32.mrb[0].mxu0
        %4987 = vmatprep.mubr.bf16.mxu0 0
        %4988 = vmatmul.mubr.bf16.gmra.mrb[0].mxu0 %v4927
        %v4989 = vpop.f32.mrb[0].mxu0
        %v4990 = vadd.f32 0.0, %v4989
        %v4991 = vpop.f32.mrb[0].mxu0
        %v4992 = vpop.f32.mrb[0].mxu0
        %v4993 = vadd.f32 0.0, %v4992
        %v4994 = vpop.f32.mrb[0].mxu0
        %4995 = vmatprep.mubr.bf16.mxu0 0
        %4996 = vmatmul.mubr.bf16.gmra.mrb[0].mxu0 %v4930
        %v4997 = vpop.f32.mrb[0].mxu0
        %v4998 = vadd.f32 0.0, %v4997
        %v4999 = vpop.f32.mrb[0].mxu0
        %v5000 = vpop.f32.mrb[0].mxu0
        %v5001 = vadd.f32 0.0, %v5000
        %v5002 = vpop.f32.mrb[0].mxu0
        %5003 = vmatprep.mubr.bf16.mxu0 0
        %5004 = vmatmul.mubr.bf16.gmra.mrb[0].mxu0 %v4933
        %v5005 = vpop.f32.mrb[0].mxu0
        %v5006 = vadd.f32 0.0, %v5005
        %v5007 = vpop.f32.mrb[0].mxu0
        %v5008 = vpop.f32.mrb[0].mxu0
        %v5009 = vadd.f32 0.0, %v5008
        %v5010 = vpop.f32.mrb[0].mxu0
        %5011 = vdwg.mxu0
        %v5013 = vsel %vm4833, %v1965, 0
        %v5016 = vsel %vm4833, %v1989, 0
        %v5019 = vsel %vm4833, %v2013, 0
        %v5022 = vsel %vm4833, %v2037, 0
        %v5025 = vsel %vm4833, %v3337, 0
        %v5028 = vsel %vm4833, %v3361, 0
        %v5031 = vsel %vm4833, %v3385, 0
        %v5034 = vsel %vm4833, %v3409, 0
        %5036 = vmatprep.subr.bf16.mxu0 0
        %5037 = vmatpush1.bf16.xpose.msra.mxu0 %v5025
        %5038 = vmatprep.subr.bf16.mxu0 0
        %5039 = vmatpush1.bf16.xpose.msra.mxu0 %v5028
        %5040 = vmatprep.subr.bf16.mxu0 0
        %5041 = vmatpush1.bf16.xpose.msra.mxu0 %v5031
        %5042 = vmatprep.subr.bf16.mxu0 0
        %5043 = vmatpush1.bf16.xpose.msra.mxu0 %v5034
        %5044 = vmatprep.subr.bf16.mxu0 0
        %5045 = vmatpush1.bf16.xpose.msra.mxu0 0
        %5046 = vmatprep.subr.bf16.mxu0 0
        %5047 = vmatpush1.bf16.xpose.msra.mxu0 0
        %5048 = vmatprep.subr.bf16.mxu0 0
        %5049 = vmatpush1.bf16.xpose.msra.mxu0 0
        %5050 = vmatprep.subr.bf16.mxu0 0
        %5051 = vmatpush1.bf16.xpose.msra.mxu0 0
        %5052 = vmatprep.subr.bf16.mxu0 0
        %5053 = vmatpush1.bf16.xpose.msra.mxu0 0
        %5054 = vmatprep.subr.bf16.mxu0 0
        %5055 = vmatpush1.bf16.xpose.msra.mxu0 0
        %5056 = vmatprep.subr.bf16.mxu0 0
        %5057 = vmatpush1.bf16.xpose.msra.mxu0 0
        %5058 = vmatprep.subr.bf16.mxu0 0
        %5059 = vmatpush1.bf16.xpose.msra.mxu0 0
        %5060 = vmatprep.subr.bf16.mxu0 0
        %5061 = vmatpush1.bf16.xpose.msra.mxu0 0
        %5062 = vmatprep.subr.bf16.mxu0 0
        %5063 = vmatpush1.bf16.xpose.msra.mxu0 0
        %5064 = vmatprep.subr.bf16.mxu0 0
        %5065 = vmatpush1.bf16.xpose.msra.mxu0 0
        %5066 = vmatprep.subr.bf16.mxu0 0
        %5067 = vmatpush1.bf16.xpose.msra.mxu0 0
        %5068 = vmatprep.mubr.bf16.mxu0 0
        %5069 = vmatmul.mubr.bf16.gmra.mrb[0].mxu0 %v5013
        %v5070 = vpop.f32.mrb[0].mxu0
        %v5071 = vadd.f32 0.0, %v5070
        %v5072 = vpop.f32.mrb[0].mxu0
        %v5073 = vpop.f32.mrb[0].mxu0
        %v5074 = vadd.f32 0.0, %v5073
        %v5075 = vpop.f32.mrb[0].mxu0
        %5076 = vmatprep.mubr.bf16.mxu0 0
        %5077 = vmatmul.mubr.bf16.gmra.mrb[0].mxu0 %v5016
        %v5078 = vpop.f32.mrb[0].mxu0
        %v5079 = vadd.f32 0.0, %v5078
        %v5080 = vpop.f32.mrb[0].mxu0
        %v5081 = vpop.f32.mrb[0].mxu0
        %v5082 = vadd.f32 0.0, %v5081
        %v5083 = vpop.f32.mrb[0].mxu0
        %5084 = vmatprep.mubr.bf16.mxu0 0
        %5085 = vmatmul.mubr.bf16.gmra.mrb[0].mxu0 %v5019
        %v5086 = vpop.f32.mrb[0].mxu0
        %v5087 = vadd.f32 0.0, %v5086
        %v5088 = vpop.f32.mrb[0].mxu0
        %v5089 = vpop.f32.mrb[0].mxu0
        %v5090 = vadd.f32 0.0, %v5089
        %v5091 = vpop.f32.mrb[0].mxu0
        %5092 = vmatprep.mubr.bf16.mxu0 0
        %5093 = vmatmul.mubr.bf16.gmra.mrb[0].mxu0 %v5022
        %v5094 = vpop.f32.mrb[0].mxu0
        %v5095 = vadd.f32 0.0, %v5094
        %v5096 = vpop.f32.mrb[0].mxu0
        %v5097 = vpop.f32.mrb[0].mxu0
        %v5098 = vadd.f32 0.0, %v5097
        %v5099 = vpop.f32.mrb[0].mxu0
        %5100 = vdwg.mxu0
        %v5102 = vsel %vm4833, %v1968, 0
        %v5105 = vsel %vm4833, %v1992, 0
        %v5108 = vsel %vm4833, %v2016, 0
        %v5111 = vsel %vm4833, %v2040, 0
        %v5114 = vsel %vm4833, %v3340, 0
        %v5117 = vsel %vm4833, %v3364, 0
        %v5120 = vsel %vm4833, %v3388, 0
        %v5123 = vsel %vm4833, %v3412, 0
        %5125 = vmatprep.subr.bf16.mxu0 0
        %5126 = vmatpush1.bf16.xpose.msra.mxu0 %v5114
        %5127 = vmatprep.subr.bf16.mxu0 0
        %5128 = vmatpush1.bf16.xpose.msra.mxu0 %v5117
        %5129 = vmatprep.subr.bf16.mxu0 0
        %5130 = vmatpush1.bf16.xpose.msra.mxu0 %v5120
        %5131 = vmatprep.subr.bf16.mxu0 0
        %5132 = vmatpush1.bf16.xpose.msra.mxu0 %v5123
        %5133 = vmatprep.subr.bf16.mxu0 0
        %5134 = vmatpush1.bf16.xpose.msra.mxu0 0
        %5135 = vmatprep.subr.bf16.mxu0 0
        %5136 = vmatpush1.bf16.xpose.msra.mxu0 0
        %5137 = vmatprep.subr.bf16.mxu0 0
        %5138 = vmatpush1.bf16.xpose.msra.mxu0 0
        %5139 = vmatprep.subr.bf16.mxu0 0
        %5140 = vmatpush1.bf16.xpose.msra.mxu0 0
        %5141 = vmatprep.subr.bf16.mxu0 0
        %5142 = vmatpush1.bf16.xpose.msra.mxu0 0
        %5143 = vmatprep.subr.bf16.mxu0 0
        %5144 = vmatpush1.bf16.xpose.msra.mxu0 0
        %5145 = vmatprep.subr.bf16.mxu0 0
        %5146 = vmatpush1.bf16.xpose.msra.mxu0 0
        %5147 = vmatprep.subr.bf16.mxu0 0
        %5148 = vmatpush1.bf16.xpose.msra.mxu0 0
        %5149 = vmatprep.subr.bf16.mxu0 0
        %5150 = vmatpush1.bf16.xpose.msra.mxu0 0
        %5151 = vmatprep.subr.bf16.mxu0 0
        %5152 = vmatpush1.bf16.xpose.msra.mxu0 0
        %5153 = vmatprep.subr.bf16.mxu0 0
        %5154 = vmatpush1.bf16.xpose.msra.mxu0 0
        %5155 = vmatprep.subr.bf16.mxu0 0
        %5156 = vmatpush1.bf16.xpose.msra.mxu0 0
        %5157 = vmatprep.mubr.bf16.mxu0 0
        %5158 = vmatmul.mubr.bf16.gmra.mrb[0].mxu0 %v5102
        %v5159 = vpop.f32.mrb[0].mxu0
        %v5160 = vadd.f32 0.0, %v5159
        %v5161 = vpop.f32.mrb[0].mxu0
        %v5162 = vpop.f32.mrb[0].mxu0
        %v5163 = vadd.f32 0.0, %v5162
        %v5164 = vpop.f32.mrb[0].mxu0
        %5165 = vmatprep.mubr.bf16.mxu0 0
        %5166 = vmatmul.mubr.bf16.gmra.mrb[0].mxu0 %v5105
        %v5167 = vpop.f32.mrb[0].mxu0
        %v5168 = vadd.f32 0.0, %v5167
        %v5169 = vpop.f32.mrb[0].mxu0
        %v5170 = vpop.f32.mrb[0].mxu0
        %v5171 = vadd.f32 0.0, %v5170
        %v5172 = vpop.f32.mrb[0].mxu0
        %5173 = vmatprep.mubr.bf16.mxu0 0
        %5174 = vmatmul.mubr.bf16.gmra.mrb[0].mxu0 %v5108
        %v5175 = vpop.f32.mrb[0].mxu0
        %v5176 = vadd.f32 0.0, %v5175
        %v5177 = vpop.f32.mrb[0].mxu0
        %v5178 = vpop.f32.mrb[0].mxu0
        %v5179 = vadd.f32 0.0, %v5178
        %v5180 = vpop.f32.mrb[0].mxu0
        %5181 = vmatprep.mubr.bf16.mxu0 0
        %5182 = vmatmul.mubr.bf16.gmra.mrb[0].mxu0 %v5111
        %v5183 = vpop.f32.mrb[0].mxu0
        %v5184 = vadd.f32 0.0, %v5183
        %v5185 = vpop.f32.mrb[0].mxu0
        %v5186 = vpop.f32.mrb[0].mxu0
        %v5187 = vadd.f32 0.0, %v5186
        %v5188 = vpop.f32.mrb[0].mxu0
        %5189 = vdwg.mxu0
        %v5191 = vsel %vm4833, %v1971, 0
        %v5194 = vsel %vm4833, %v1995, 0
        %v5197 = vsel %vm4833, %v2019, 0
        %v5200 = vsel %vm4833, %v2043, 0
        %v5203 = vsel %vm4833, %v3343, 0
        %v5206 = vsel %vm4833, %v3367, 0
        %v5209 = vsel %vm4833, %v3391, 0
        %v5212 = vsel %vm4833, %v3415, 0
        %5214 = vmatprep.subr.bf16.mxu0 0
        %5215 = vmatpush1.bf16.xpose.msra.mxu0 %v5203
        %5216 = vmatprep.subr.bf16.mxu0 0
        %5217 = vmatpush1.bf16.xpose.msra.mxu0 %v5206
        %5218 = vmatprep.subr.bf16.mxu0 0
        %5219 = vmatpush1.bf16.xpose.msra.mxu0 %v5209
        %5220 = vmatprep.subr.bf16.mxu0 0
        %5221 = vmatpush1.bf16.xpose.msra.mxu0 %v5212
        %5222 = vmatprep.subr.bf16.mxu0 0
        %5223 = vmatpush1.bf16.xpose.msra.mxu0 0
        %5224 = vmatprep.subr.bf16.mxu0 0
        %5225 = vmatpush1.bf16.xpose.msra.mxu0 0
        %5226 = vmatprep.subr.bf16.mxu0 0
        %5227 = vmatpush1.bf16.xpose.msra.mxu0 0
        %5228 = vmatprep.subr.bf16.mxu0 0
        %5229 = vmatpush1.bf16.xpose.msra.mxu0 0
        %5230 = vmatprep.subr.bf16.mxu0 0
        %5231 = vmatpush1.bf16.xpose.msra.mxu0 0
        %5232 = vmatprep.subr.bf16.mxu0 0
        %5233 = vmatpush1.bf16.xpose.msra.mxu0 0
        %5234 = vmatprep.subr.bf16.mxu0 0
        %5235 = vmatpush1.bf16.xpose.msra.mxu0 0
        %5236 = vmatprep.subr.bf16.mxu0 0
        %5237 = vmatpush1.bf16.xpose.msra.mxu0 0
        %5238 = vmatprep.subr.bf16.mxu0 0
        %5239 = vmatpush1.bf16.xpose.msra.mxu0 0
        %5240 = vmatprep.subr.bf16.mxu0 0
        %5241 = vmatpush1.bf16.xpose.msra.mxu0 0
        %5242 = vmatprep.subr.bf16.mxu0 0
        %5243 = vmatpush1.bf16.xpose.msra.mxu0 0
        %5244 = vmatprep.subr.bf16.mxu0 0
        %5245 = vmatpush1.bf16.xpose.msra.mxu0 0
        %5246 = vmatprep.mubr.bf16.mxu0 0
        %5247 = vmatmul.mubr.bf16.gmra.mrb[0].mxu0 %v5191
        %v5248 = vpop.f32.mrb[0].mxu0
        %v5249 = vadd.f32 0.0, %v5248
        %v5250 = vpop.f32.mrb[0].mxu0
        %v5251 = vpop.f32.mrb[0].mxu0
        %v5252 = vadd.f32 0.0, %v5251
        %v5253 = vpop.f32.mrb[0].mxu0
        %5254 = vmatprep.mubr.bf16.mxu0 0
        %5255 = vmatmul.mubr.bf16.gmra.mrb[0].mxu0 %v5194
        %v5256 = vpop.f32.mrb[0].mxu0
        %v5257 = vadd.f32 0.0, %v5256
        %v5258 = vpop.f32.mrb[0].mxu0
        %v5259 = vpop.f32.mrb[0].mxu0
        %v5260 = vadd.f32 0.0, %v5259
        %v5261 = vpop.f32.mrb[0].mxu0
        %5262 = vmatprep.mubr.bf16.mxu0 0
        %5263 = vmatmul.mubr.bf16.gmra.mrb[0].mxu0 %v5197
        %v5264 = vpop.f32.mrb[0].mxu0
        %v5265 = vadd.f32 0.0, %v5264
        %v5266 = vpop.f32.mrb[0].mxu0
        %v5267 = vpop.f32.mrb[0].mxu0
        %v5268 = vadd.f32 0.0, %v5267
        %v5269 = vpop.f32.mrb[0].mxu0
        %5270 = vmatprep.mubr.bf16.mxu0 0
        %5271 = vmatmul.mubr.bf16.gmra.mrb[0].mxu0 %v5200
        %v5272 = vpop.f32.mrb[0].mxu0
        %v5273 = vadd.f32 0.0, %v5272
        %v5274 = vpop.f32.mrb[0].mxu0
        %v5275 = vpop.f32.mrb[0].mxu0
        %v5276 = vadd.f32 0.0, %v5275
        %v5277 = vpop.f32.mrb[0].mxu0
        %5278 = vdwg.mxu0
        %v5280 = vsel %vm4833, %v1974, 0
        %v5283 = vsel %vm4833, %v1998, 0
        %v5286 = vsel %vm4833, %v2022, 0
        %v5289 = vsel %vm4833, %v2046, 0
        %v5292 = vsel %vm4833, %v3346, 0
        %v5295 = vsel %vm4833, %v3370, 0
        %v5298 = vsel %vm4833, %v3394, 0
        %v5301 = vsel %vm4833, %v3418, 0
        %5303 = vmatprep.subr.bf16.mxu0 0
        %5304 = vmatpush1.bf16.xpose.msra.mxu0 %v5292
        %5305 = vmatprep.subr.bf16.mxu0 0
        %5306 = vmatpush1.bf16.xpose.msra.mxu0 %v5295
        %5307 = vmatprep.subr.bf16.mxu0 0
        %5308 = vmatpush1.bf16.xpose.msra.mxu0 %v5298
        %5309 = vmatprep.subr.bf16.mxu0 0
        %5310 = vmatpush1.bf16.xpose.msra.mxu0 %v5301
        %5311 = vmatprep.subr.bf16.mxu0 0
        %5312 = vmatpush1.bf16.xpose.msra.mxu0 0
        %5313 = vmatprep.subr.bf16.mxu0 0
        %5314 = vmatpush1.bf16.xpose.msra.mxu0 0
        %5315 = vmatprep.subr.bf16.mxu0 0
        %5316 = vmatpush1.bf16.xpose.msra.mxu0 0
        %5317 = vmatprep.subr.bf16.mxu0 0
        %5318 = vmatpush1.bf16.xpose.msra.mxu0 0
        %5319 = vmatprep.subr.bf16.mxu0 0
        %5320 = vmatpush1.bf16.xpose.msra.mxu0 0
        %5321 = vmatprep.subr.bf16.mxu0 0
        %5322 = vmatpush1.bf16.xpose.msra.mxu0 0
        %5323 = vmatprep.subr.bf16.mxu0 0
        %5324 = vmatpush1.bf16.xpose.msra.mxu0 0
        %5325 = vmatprep.subr.bf16.mxu0 0
        %5326 = vmatpush1.bf16.xpose.msra.mxu0 0
        %5327 = vmatprep.subr.bf16.mxu0 0
        %5328 = vmatpush1.bf16.xpose.msra.mxu0 0
        %5329 = vmatprep.subr.bf16.mxu0 0
        %5330 = vmatpush1.bf16.xpose.msra.mxu0 0
        %5331 = vmatprep.subr.bf16.mxu0 0
        %5332 = vmatpush1.bf16.xpose.msra.mxu0 0
        %5333 = vmatprep.subr.bf16.mxu0 0
        %5334 = vmatpush1.bf16.xpose.msra.mxu0 0
        %5335 = vmatprep.mubr.bf16.mxu0 0
        %5336 = vmatmul.mubr.bf16.gmra.mrb[0].mxu0 %v5280
        %v5337 = vpop.f32.mrb[0].mxu0
        %v5338 = vadd.f32 0.0, %v5337
        %v5339 = vpop.f32.mrb[0].mxu0
        %v5340 = vpop.f32.mrb[0].mxu0
        %v5341 = vadd.f32 0.0, %v5340
        %v5342 = vpop.f32.mrb[0].mxu0
        %5343 = vmatprep.mubr.bf16.mxu0 0
        %5344 = vmatmul.mubr.bf16.gmra.mrb[0].mxu0 %v5283
        %v5345 = vpop.f32.mrb[0].mxu0
        %v5346 = vadd.f32 0.0, %v5345
        %v5347 = vpop.f32.mrb[0].mxu0
        %v5348 = vpop.f32.mrb[0].mxu0
        %v5349 = vadd.f32 0.0, %v5348
        %v5350 = vpop.f32.mrb[0].mxu0
        %5351 = vmatprep.mubr.bf16.mxu0 0
        %5352 = vmatmul.mubr.bf16.gmra.mrb[0].mxu0 %v5286
        %v5353 = vpop.f32.mrb[0].mxu0
        %v5354 = vadd.f32 0.0, %v5353
        %v5355 = vpop.f32.mrb[0].mxu0
        %v5356 = vpop.f32.mrb[0].mxu0
        %v5357 = vadd.f32 0.0, %v5356
        %v5358 = vpop.f32.mrb[0].mxu0
        %5359 = vmatprep.mubr.bf16.mxu0 0
        %5360 = vmatmul.mubr.bf16.gmra.mrb[0].mxu0 %v5289
        %v5361 = vpop.f32.mrb[0].mxu0
        %v5362 = vadd.f32 0.0, %v5361
        %v5363 = vpop.f32.mrb[0].mxu0
        %v5364 = vpop.f32.mrb[0].mxu0
        %v5365 = vadd.f32 0.0, %v5364
        %v5366 = vpop.f32.mrb[0].mxu0
        %5367 = vdwg.mxu0
        %v5369 = vsel %vm4833, %v1977, 0
        %v5372 = vsel %vm4833, %v2001, 0
        %v5375 = vsel %vm4833, %v2025, 0
        %v5378 = vsel %vm4833, %v2049, 0
        %v5381 = vsel %vm4833, %v3349, 0
        %v5384 = vsel %vm4833, %v3373, 0
        %v5387 = vsel %vm4833, %v3397, 0
        %v5390 = vsel %vm4833, %v3421, 0
        %5392 = vmatprep.subr.bf16.mxu0 0
        %5393 = vmatpush1.bf16.xpose.msra.mxu0 %v5381
        %5394 = vmatprep.subr.bf16.mxu0 0
        %5395 = vmatpush1.bf16.xpose.msra.mxu0 %v5384
        %5396 = vmatprep.subr.bf16.mxu0 0
        %5397 = vmatpush1.bf16.xpose.msra.mxu0 %v5387
        %5398 = vmatprep.subr.bf16.mxu0 0
        %5399 = vmatpush1.bf16.xpose.msra.mxu0 %v5390
        %5400 = vmatprep.subr.bf16.mxu0 0
        %5401 = vmatpush1.bf16.xpose.msra.mxu0 0
        %5402 = vmatprep.subr.bf16.mxu0 0
        %5403 = vmatpush1.bf16.xpose.msra.mxu0 0
        %5404 = vmatprep.subr.bf16.mxu0 0
        %5405 = vmatpush1.bf16.xpose.msra.mxu0 0
        %5406 = vmatprep.subr.bf16.mxu0 0
        %5407 = vmatpush1.bf16.xpose.msra.mxu0 0
        %5408 = vmatprep.subr.bf16.mxu0 0
        %5409 = vmatpush1.bf16.xpose.msra.mxu0 0
        %5410 = vmatprep.subr.bf16.mxu0 0
        %5411 = vmatpush1.bf16.xpose.msra.mxu0 0
        %5412 = vmatprep.subr.bf16.mxu0 0
        %5413 = vmatpush1.bf16.xpose.msra.mxu0 0
        %5414 = vmatprep.subr.bf16.mxu0 0
        %5415 = vmatpush1.bf16.xpose.msra.mxu0 0
        %5416 = vmatprep.subr.bf16.mxu0 0
        %5417 = vmatpush1.bf16.xpose.msra.mxu0 0
        %5418 = vmatprep.subr.bf16.mxu0 0
        %5419 = vmatpush1.bf16.xpose.msra.mxu0 0
        %5420 = vmatprep.subr.bf16.mxu0 0
        %5421 = vmatpush1.bf16.xpose.msra.mxu0 0
        %5422 = vmatprep.subr.bf16.mxu0 0
        %5423 = vmatpush1.bf16.xpose.msra.mxu0 0
        %5424 = vmatprep.mubr.bf16.mxu0 0
        %5425 = vmatmul.mubr.bf16.gmra.mrb[0].mxu0 %v5369
        %v5426 = vpop.f32.mrb[0].mxu0
        %v5427 = vadd.f32 0.0, %v5426
        %v5428 = vpop.f32.mrb[0].mxu0
        %v5429 = vpop.f32.mrb[0].mxu0
        %v5430 = vadd.f32 0.0, %v5429
        %v5431 = vpop.f32.mrb[0].mxu0
        %5432 = vmatprep.mubr.bf16.mxu0 0
        %5433 = vmatmul.mubr.bf16.gmra.mrb[0].mxu0 %v5372
        %v5434 = vpop.f32.mrb[0].mxu0
        %v5435 = vadd.f32 0.0, %v5434
        %v5436 = vpop.f32.mrb[0].mxu0
        %v5437 = vpop.f32.mrb[0].mxu0
        %v5438 = vadd.f32 0.0, %v5437
        %v5439 = vpop.f32.mrb[0].mxu0
        %5440 = vmatprep.mubr.bf16.mxu0 0
        %5441 = vmatmul.mubr.bf16.gmra.mrb[0].mxu0 %v5375
        %v5442 = vpop.f32.mrb[0].mxu0
        %v5443 = vadd.f32 0.0, %v5442
        %v5444 = vpop.f32.mrb[0].mxu0
        %v5445 = vpop.f32.mrb[0].mxu0
        %v5446 = vadd.f32 0.0, %v5445
        %v5447 = vpop.f32.mrb[0].mxu0
        %5448 = vmatprep.mubr.bf16.mxu0 0
        %5449 = vmatmul.mubr.bf16.gmra.mrb[0].mxu0 %v5378
        %v5450 = vpop.f32.mrb[0].mxu0
        %v5451 = vadd.f32 0.0, %v5450
        %v5452 = vpop.f32.mrb[0].mxu0
        %v5453 = vpop.f32.mrb[0].mxu0
        %v5454 = vadd.f32 0.0, %v5453
        %v5455 = vpop.f32.mrb[0].mxu0
        %5456 = vdwg.mxu0
        %v5458 = vsel %vm4833, %v1980, 0
        %v5461 = vsel %vm4833, %v2004, 0
        %v5464 = vsel %vm4833, %v2028, 0
        %v5467 = vsel %vm4833, %v2052, 0
        %v5470 = vsel %vm4833, %v3352, 0
        %v5473 = vsel %vm4833, %v3376, 0
        %v5476 = vsel %vm4833, %v3400, 0
        %v5479 = vsel %vm4833, %v3424, 0
        %5481 = vmatprep.subr.bf16.mxu0 0
        %5482 = vmatpush1.bf16.xpose.msra.mxu0 %v5470
        %5483 = vmatprep.subr.bf16.mxu0 0
        %5484 = vmatpush1.bf16.xpose.msra.mxu0 %v5473
        %5485 = vmatprep.subr.bf16.mxu0 0
        %5486 = vmatpush1.bf16.xpose.msra.mxu0 %v5476
        %5487 = vmatprep.subr.bf16.mxu0 0
        %5488 = vmatpush1.bf16.xpose.msra.mxu0 %v5479
        %5489 = vmatprep.subr.bf16.mxu0 0
        %5490 = vmatpush1.bf16.xpose.msra.mxu0 0
        %5491 = vmatprep.subr.bf16.mxu0 0
        %5492 = vmatpush1.bf16.xpose.msra.mxu0 0
        %5493 = vmatprep.subr.bf16.mxu0 0
        %5494 = vmatpush1.bf16.xpose.msra.mxu0 0
        %5495 = vmatprep.subr.bf16.mxu0 0
        %5496 = vmatpush1.bf16.xpose.msra.mxu0 0
        %5497 = vmatprep.subr.bf16.mxu0 0
        %5498 = vmatpush1.bf16.xpose.msra.mxu0 0
        %5499 = vmatprep.subr.bf16.mxu0 0
        %5500 = vmatpush1.bf16.xpose.msra.mxu0 0
        %5501 = vmatprep.subr.bf16.mxu0 0
        %5502 = vmatpush1.bf16.xpose.msra.mxu0 0
        %5503 = vmatprep.subr.bf16.mxu0 0
        %5504 = vmatpush1.bf16.xpose.msra.mxu0 0
        %5505 = vmatprep.subr.bf16.mxu0 0
        %5506 = vmatpush1.bf16.xpose.msra.mxu0 0
        %5507 = vmatprep.subr.bf16.mxu0 0
        %5508 = vmatpush1.bf16.xpose.msra.mxu0 0
        %5509 = vmatprep.subr.bf16.mxu0 0
        %5510 = vmatpush1.bf16.xpose.msra.mxu0 0
        %5511 = vmatprep.subr.bf16.mxu0 0
        %5512 = vmatpush1.bf16.xpose.msra.mxu0 0
        %5513 = vmatprep.mubr.bf16.mxu0 0
        %5514 = vmatmul.mubr.bf16.gmra.mrb[0].mxu0 %v5458
        %v5515 = vpop.f32.mrb[0].mxu0
        %v5516 = vadd.f32 0.0, %v5515
        %v5517 = vpop.f32.mrb[0].mxu0
        %v5518 = vpop.f32.mrb[0].mxu0
        %v5519 = vadd.f32 0.0, %v5518
        %v5520 = vpop.f32.mrb[0].mxu0
        %5521 = vmatprep.mubr.bf16.mxu0 0
        %5522 = vmatmul.mubr.bf16.gmra.mrb[0].mxu0 %v5461
        %v5523 = vpop.f32.mrb[0].mxu0
        %v5524 = vadd.f32 0.0, %v5523
        %v5525 = vpop.f32.mrb[0].mxu0
        %v5526 = vpop.f32.mrb[0].mxu0
        %v5527 = vadd.f32 0.0, %v5526
        %v5528 = vpop.f32.mrb[0].mxu0
        %5529 = vmatprep.mubr.bf16.mxu0 0
        %5530 = vmatmul.mubr.bf16.gmra.mrb[0].mxu0 %v5464
        %v5531 = vpop.f32.mrb[0].mxu0
        %v5532 = vadd.f32 0.0, %v5531
        %v5533 = vpop.f32.mrb[0].mxu0
        %v5534 = vpop.f32.mrb[0].mxu0
        %v5535 = vadd.f32 0.0, %v5534
        %v5536 = vpop.f32.mrb[0].mxu0
        %5537 = vmatprep.mubr.bf16.mxu0 0
        %5538 = vmatmul.mubr.bf16.gmra.mrb[0].mxu0 %v5467
        %v5539 = vpop.f32.mrb[0].mxu0
        %v5540 = vadd.f32 0.0, %v5539
        %v5541 = vpop.f32.mrb[0].mxu0
        %v5542 = vpop.f32.mrb[0].mxu0
        %v5543 = vadd.f32 0.0, %v5542
        %v5544 = vpop.f32.mrb[0].mxu0
        %5545 = vdwg.mxu0
        %v5546 = vsel %vm471, %v4893, -inf
        %5547 = vmax.xlane.f32.xlu0 %v5546
        %v5548 = vpop.xlane.xlu0 %5547
        %v5549 = vsel %vm471, %v4896, -inf
        %5550 = vmax.xlane.f32.xlu0 %v5549
        %v5551 = vpop.xlane.xlu0 %5550
        %v5552 = vsel %vm471, %v4901, -inf
        %5553 = vmax.xlane.f32.xlu0 %v5552
        %v5554 = vpop.xlane.xlu0 %5553
        %v5555 = vsel %vm471, %v4904, -inf
        %5556 = vmax.xlane.f32.xlu0 %v5555
        %v5557 = vpop.xlane.xlu0 %5556
        %v5558 = vsel %vm471, %v4909, -inf
        %5559 = vmax.xlane.f32.xlu0 %v5558
        %v5560 = vpop.xlane.xlu0 %5559
        %v5561 = vsel %vm471, %v4912, -inf
        %5562 = vmax.xlane.f32.xlu0 %v5561
        %v5563 = vpop.xlane.xlu0 %5562
        %v5564 = vsel %vm471, %v4917, -inf
        %5565 = vmax.xlane.f32.xlu0 %v5564
        %v5566 = vpop.xlane.xlu0 %5565
        %v5567 = vsel %vm471, %v4920, -inf
        %5568 = vmax.xlane.f32.xlu0 %v5567
        %v5569 = vpop.xlane.xlu0 %5568
        %v5570 = vsel %vm471, %v4982, -inf
        %5571 = vmax.xlane.f32.xlu0 %v5570
        %v5572 = vpop.xlane.xlu0 %5571
        %v5573 = vsel %vm471, %v4985, -inf
        %5574 = vmax.xlane.f32.xlu0 %v5573
        %v5575 = vpop.xlane.xlu0 %5574
        %v5576 = vsel %vm471, %v4990, -inf
        %5577 = vmax.xlane.f32.xlu0 %v5576
        %v5578 = vpop.xlane.xlu0 %5577
        %v5579 = vsel %vm471, %v4993, -inf
        %5580 = vmax.xlane.f32.xlu0 %v5579
        %v5581 = vpop.xlane.xlu0 %5580
        %v5582 = vsel %vm471, %v4998, -inf
        %5583 = vmax.xlane.f32.xlu0 %v5582
        %v5584 = vpop.xlane.xlu0 %5583
        %v5585 = vsel %vm471, %v5001, -inf
        %5586 = vmax.xlane.f32.xlu0 %v5585
        %v5587 = vpop.xlane.xlu0 %5586
        %v5588 = vsel %vm471, %v5006, -inf
        %5589 = vmax.xlane.f32.xlu0 %v5588
        %v5590 = vpop.xlane.xlu0 %5589
        %v5591 = vsel %vm471, %v5009, -inf
        %5592 = vmax.xlane.f32.xlu0 %v5591
        %v5593 = vpop.xlane.xlu0 %5592
        %v5594 = vsel %vm471, %v5071, -inf
        %5595 = vmax.xlane.f32.xlu0 %v5594
        %v5596 = vpop.xlane.xlu0 %5595
        %v5597 = vsel %vm471, %v5074, -inf
        %5598 = vmax.xlane.f32.xlu0 %v5597
        %v5599 = vpop.xlane.xlu0 %5598
        %v5600 = vsel %vm471, %v5079, -inf
        %5601 = vmax.xlane.f32.xlu0 %v5600
        %v5602 = vpop.xlane.xlu0 %5601
        %v5603 = vsel %vm471, %v5082, -inf
        %5604 = vmax.xlane.f32.xlu0 %v5603
        %v5605 = vpop.xlane.xlu0 %5604
        %v5606 = vsel %vm471, %v5087, -inf
        %5607 = vmax.xlane.f32.xlu0 %v5606
        %v5608 = vpop.xlane.xlu0 %5607
        %v5609 = vsel %vm471, %v5090, -inf
        %5610 = vmax.xlane.f32.xlu0 %v5609
        %v5611 = vpop.xlane.xlu0 %5610
        %v5612 = vsel %vm471, %v5095, -inf
        %5613 = vmax.xlane.f32.xlu0 %v5612
        %v5614 = vpop.xlane.xlu0 %5613
        %v5615 = vsel %vm471, %v5098, -inf
        %5616 = vmax.xlane.f32.xlu0 %v5615
        %v5617 = vpop.xlane.xlu0 %5616
        %v5618 = vsel %vm471, %v5160, -inf
        %5619 = vmax.xlane.f32.xlu0 %v5618
        %v5620 = vpop.xlane.xlu0 %5619
        %v5621 = vsel %vm471, %v5163, -inf
        %5622 = vmax.xlane.f32.xlu0 %v5621
        %v5623 = vpop.xlane.xlu0 %5622
        %v5624 = vsel %vm471, %v5168, -inf
        %5625 = vmax.xlane.f32.xlu0 %v5624
        %v5626 = vpop.xlane.xlu0 %5625
        %v5627 = vsel %vm471, %v5171, -inf
        %5628 = vmax.xlane.f32.xlu0 %v5627
        %v5629 = vpop.xlane.xlu0 %5628
        %v5630 = vsel %vm471, %v5176, -inf
        %5631 = vmax.xlane.f32.xlu0 %v5630
        %v5632 = vpop.xlane.xlu0 %5631
        %v5633 = vsel %vm471, %v5179, -inf
        %5634 = vmax.xlane.f32.xlu0 %v5633
        %v5635 = vpop.xlane.xlu0 %5634
        %v5636 = vsel %vm471, %v5184, -inf
        %5637 = vmax.xlane.f32.xlu0 %v5636
        %v5638 = vpop.xlane.xlu0 %5637
        %v5639 = vsel %vm471, %v5187, -inf
        %5640 = vmax.xlane.f32.xlu0 %v5639
        %v5641 = vpop.xlane.xlu0 %5640
        %v5642 = vsel %vm471, %v5249, -inf
        %5643 = vmax.xlane.f32.xlu0 %v5642
        %v5644 = vpop.xlane.xlu0 %5643
        %v5645 = vsel %vm471, %v5252, -inf
        %5646 = vmax.xlane.f32.xlu0 %v5645
        %v5647 = vpop.xlane.xlu0 %5646
        %v5648 = vsel %vm471, %v5257, -inf
        %5649 = vmax.xlane.f32.xlu0 %v5648
        %v5650 = vpop.xlane.xlu0 %5649
        %v5651 = vsel %vm471, %v5260, -inf
        %5652 = vmax.xlane.f32.xlu0 %v5651
        %v5653 = vpop.xlane.xlu0 %5652
        %v5654 = vsel %vm471, %v5265, -inf
        %5655 = vmax.xlane.f32.xlu0 %v5654
        %v5656 = vpop.xlane.xlu0 %5655
        %v5657 = vsel %vm471, %v5268, -inf
        %5658 = vmax.xlane.f32.xlu0 %v5657
        %v5659 = vpop.xlane.xlu0 %5658
        %v5660 = vsel %vm471, %v5273, -inf
        %5661 = vmax.xlane.f32.xlu0 %v5660
        %v5662 = vpop.xlane.xlu0 %5661
        %v5663 = vsel %vm471, %v5276, -inf
        %5664 = vmax.xlane.f32.xlu0 %v5663
        %v5665 = vpop.xlane.xlu0 %5664
        %v5666 = vsel %vm471, %v5338, -inf
        %5667 = vmax.xlane.f32.xlu0 %v5666
        %v5668 = vpop.xlane.xlu0 %5667
        %v5669 = vsel %vm471, %v5341, -inf
        %5670 = vmax.xlane.f32.xlu0 %v5669
        %v5671 = vpop.xlane.xlu0 %5670
        %v5672 = vsel %vm471, %v5346, -inf
        %5673 = vmax.xlane.f32.xlu0 %v5672
        %v5674 = vpop.xlane.xlu0 %5673
        %v5675 = vsel %vm471, %v5349, -inf
        %5676 = vmax.xlane.f32.xlu0 %v5675
        %v5677 = vpop.xlane.xlu0 %5676
        %v5678 = vsel %vm471, %v5354, -inf
        %5679 = vmax.xlane.f32.xlu0 %v5678
        %v5680 = vpop.xlane.xlu0 %5679
        %v5681 = vsel %vm471, %v5357, -inf
        %5682 = vmax.xlane.f32.xlu0 %v5681
        %v5683 = vpop.xlane.xlu0 %5682
        %v5684 = vsel %vm471, %v5362, -inf
        %5685 = vmax.xlane.f32.xlu0 %v5684
        %v5686 = vpop.xlane.xlu0 %5685
        %v5687 = vsel %vm471, %v5365, -inf
        %5688 = vmax.xlane.f32.xlu0 %v5687
        %v5689 = vpop.xlane.xlu0 %5688
        %v5690 = vsel %vm471, %v5427, -inf
        %5691 = vmax.xlane.f32.xlu0 %v5690
        %v5692 = vpop.xlane.xlu0 %5691
        %v5693 = vsel %vm471, %v5430, -inf
        %5694 = vmax.xlane.f32.xlu0 %v5693
        %v5695 = vpop.xlane.xlu0 %5694
        %v5696 = vsel %vm471, %v5435, -inf
        %5697 = vmax.xlane.f32.xlu0 %v5696
        %v5698 = vpop.xlane.xlu0 %5697
        %v5699 = vsel %vm471, %v5438, -inf
        %5700 = vmax.xlane.f32.xlu0 %v5699
        %v5701 = vpop.xlane.xlu0 %5700
        %v5702 = vsel %vm471, %v5443, -inf
        %5703 = vmax.xlane.f32.xlu0 %v5702
        %v5704 = vpop.xlane.xlu0 %5703
        %v5705 = vsel %vm471, %v5446, -inf
        %5706 = vmax.xlane.f32.xlu0 %v5705
        %v5707 = vpop.xlane.xlu0 %5706
        %v5708 = vsel %vm471, %v5451, -inf
        %5709 = vmax.xlane.f32.xlu0 %v5708
        %v5710 = vpop.xlane.xlu0 %5709
        %v5711 = vsel %vm471, %v5454, -inf
        %5712 = vmax.xlane.f32.xlu0 %v5711
        %v5713 = vpop.xlane.xlu0 %5712
        %v5714 = vsel %vm471, %v5516, -inf
        %5715 = vmax.xlane.f32.xlu0 %v5714
        %v5716 = vpop.xlane.xlu0 %5715
        %v5717 = vsel %vm471, %v5519, -inf
        %5718 = vmax.xlane.f32.xlu0 %v5717
        %v5719 = vpop.xlane.xlu0 %5718
        %v5720 = vsel %vm471, %v5524, -inf
        %5721 = vmax.xlane.f32.xlu0 %v5720
        %v5722 = vpop.xlane.xlu0 %5721
        %v5723 = vsel %vm471, %v5527, -inf
        %5724 = vmax.xlane.f32.xlu0 %v5723
        %v5725 = vpop.xlane.xlu0 %5724
        %v5726 = vsel %vm471, %v5532, -inf
        %5727 = vmax.xlane.f32.xlu0 %v5726
        %v5728 = vpop.xlane.xlu0 %5727
        %v5729 = vsel %vm471, %v5535, -inf
        %5730 = vmax.xlane.f32.xlu0 %v5729
        %v5731 = vpop.xlane.xlu0 %5730
        %v5732 = vsel %vm471, %v5540, -inf
        %5733 = vmax.xlane.f32.xlu0 %v5732
        %v5734 = vpop.xlane.xlu0 %5733
        %v5735 = vsel %vm471, %v5543, -inf
        %5736 = vmax.xlane.f32.xlu0 %v5735
        %v5737 = vpop.xlane.xlu0 %5736
        %v5738 = vsub.f32 %v4893, %v5548
        %v5739 = vsub.f32 %v4896, %v5551
        %v5740 = vsub.f32 %v4901, %v5554
        %v5741 = vsub.f32 %v4904, %v5557
        %v5742 = vsub.f32 %v4909, %v5560
        %v5743 = vsub.f32 %v4912, %v5563
        %v5744 = vsub.f32 %v4917, %v5566
        %v5745 = vsub.f32 %v4920, %v5569
        %v5746 = vsub.f32 %v4982, %v5572
        %v5747 = vsub.f32 %v4985, %v5575
        %v5748 = vsub.f32 %v4990, %v5578
        %v5749 = vsub.f32 %v4993, %v5581
        %v5750 = vsub.f32 %v4998, %v5584
        %v5751 = vsub.f32 %v5001, %v5587
        %v5752 = vsub.f32 %v5006, %v5590
        %v5753 = vsub.f32 %v5009, %v5593
        %v5754 = vsub.f32 %v5071, %v5596
        %v5755 = vsub.f32 %v5074, %v5599
        %v5756 = vsub.f32 %v5079, %v5602
        %v5757 = vsub.f32 %v5082, %v5605
        %v5758 = vsub.f32 %v5087, %v5608
        %v5759 = vsub.f32 %v5090, %v5611
        %v5760 = vsub.f32 %v5095, %v5614
        %v5761 = vsub.f32 %v5098, %v5617
        %v5762 = vsub.f32 %v5160, %v5620
        %v5763 = vsub.f32 %v5163, %v5623
        %v5764 = vsub.f32 %v5168, %v5626
        %v5765 = vsub.f32 %v5171, %v5629
        %v5766 = vsub.f32 %v5176, %v5632
        %v5767 = vsub.f32 %v5179, %v5635
        %v5768 = vsub.f32 %v5184, %v5638
        %v5769 = vsub.f32 %v5187, %v5641
        %v5770 = vsub.f32 %v5249, %v5644
        %v5771 = vsub.f32 %v5252, %v5647
        %v5772 = vsub.f32 %v5257, %v5650
        %v5773 = vsub.f32 %v5260, %v5653
        %v5774 = vsub.f32 %v5265, %v5656
        %v5775 = vsub.f32 %v5268, %v5659
        %v5776 = vsub.f32 %v5273, %v5662
        %v5777 = vsub.f32 %v5276, %v5665
        %v5778 = vsub.f32 %v5338, %v5668
        %v5779 = vsub.f32 %v5341, %v5671
        %v5780 = vsub.f32 %v5346, %v5674
        %v5781 = vsub.f32 %v5349, %v5677
        %v5782 = vsub.f32 %v5354, %v5680
        %v5783 = vsub.f32 %v5357, %v5683
        %v5784 = vsub.f32 %v5362, %v5686
        %v5785 = vsub.f32 %v5365, %v5689
        %v5786 = vsub.f32 %v5427, %v5692
        %v5787 = vsub.f32 %v5430, %v5695
        %v5788 = vsub.f32 %v5435, %v5698
        %v5789 = vsub.f32 %v5438, %v5701
        %v5790 = vsub.f32 %v5443, %v5704
        %v5791 = vsub.f32 %v5446, %v5707
        %v5792 = vsub.f32 %v5451, %v5710
        %v5793 = vsub.f32 %v5454, %v5713
        %v5794 = vsub.f32 %v5516, %v5716
        %v5795 = vsub.f32 %v5519, %v5719
        %v5796 = vsub.f32 %v5524, %v5722
        %v5797 = vsub.f32 %v5527, %v5725
        %v5798 = vsub.f32 %v5532, %v5728
        %v5799 = vsub.f32 %v5535, %v5731
        %v5800 = vsub.f32 %v5540, %v5734
        %v5801 = vsub.f32 %v5543, %v5737
        %v5802 = vmul.f32 %v5738, 1.442695
        %v5803 = vpow.pop %v5802
        %v5804 = vmul.f32 %v5739, 1.442695
        %v5805 = vpow.pop %v5804
        %v5806 = vmul.f32 %v5740, 1.442695
        %v5807 = vpow.pop %v5806
        %v5808 = vmul.f32 %v5741, 1.442695
        %v5809 = vpow.pop %v5808
        %v5810 = vmul.f32 %v5742, 1.442695
        %v5811 = vpow.pop %v5810
        %v5812 = vmul.f32 %v5743, 1.442695
        %v5813 = vpow.pop %v5812
        %v5814 = vmul.f32 %v5744, 1.442695
        %v5815 = vpow.pop %v5814
        %v5816 = vmul.f32 %v5745, 1.442695
        %v5817 = vpow.pop %v5816
        %v5818 = vmul.f32 %v5746, 1.442695
        %v5819 = vpow.pop %v5818
        %v5820 = vmul.f32 %v5747, 1.442695
        %v5821 = vpow.pop %v5820
        %v5822 = vmul.f32 %v5748, 1.442695
        %v5823 = vpow.pop %v5822
        %v5824 = vmul.f32 %v5749, 1.442695
        %v5825 = vpow.pop %v5824
        %v5826 = vmul.f32 %v5750, 1.442695
        %v5827 = vpow.pop %v5826
        %v5828 = vmul.f32 %v5751, 1.442695
        %v5829 = vpow.pop %v5828
        %v5830 = vmul.f32 %v5752, 1.442695
        %v5831 = vpow.pop %v5830
        %v5832 = vmul.f32 %v5753, 1.442695
        %v5833 = vpow.pop %v5832
        %v5834 = vmul.f32 %v5754, 1.442695
        %v5835 = vpow.pop %v5834
        %v5836 = vmul.f32 %v5755, 1.442695
        %v5837 = vpow.pop %v5836
        %v5838 = vmul.f32 %v5756, 1.442695
        %v5839 = vpow.pop %v5838
        %v5840 = vmul.f32 %v5757, 1.442695
        %v5841 = vpow.pop %v5840
        %v5842 = vmul.f32 %v5758, 1.442695
        %v5843 = vpow.pop %v5842
        %v5844 = vmul.f32 %v5759, 1.442695
        %v5845 = vpow.pop %v5844
        %v5846 = vmul.f32 %v5760, 1.442695
        %v5847 = vpow.pop %v5846
        %v5848 = vmul.f32 %v5761, 1.442695
        %v5849 = vpow.pop %v5848
        %v5850 = vmul.f32 %v5762, 1.442695
        %v5851 = vpow.pop %v5850
        %v5852 = vmul.f32 %v5763, 1.442695
        %v5853 = vpow.pop %v5852
        %v5854 = vmul.f32 %v5764, 1.442695
        %v5855 = vpow.pop %v5854
        %v5856 = vmul.f32 %v5765, 1.442695
        %v5857 = vpow.pop %v5856
        %v5858 = vmul.f32 %v5766, 1.442695
        %v5859 = vpow.pop %v5858
        %v5860 = vmul.f32 %v5767, 1.442695
        %v5861 = vpow.pop %v5860
        %v5862 = vmul.f32 %v5768, 1.442695
        %v5863 = vpow.pop %v5862
        %v5864 = vmul.f32 %v5769, 1.442695
        %v5865 = vpow.pop %v5864
        %v5866 = vmul.f32 %v5770, 1.442695
        %v5867 = vpow.pop %v5866
        %v5868 = vmul.f32 %v5771, 1.442695
        %v5869 = vpow.pop %v5868
        %v5870 = vmul.f32 %v5772, 1.442695
        %v5871 = vpow.pop %v5870
        %v5872 = vmul.f32 %v5773, 1.442695
        %v5873 = vpow.pop %v5872
        %v5874 = vmul.f32 %v5774, 1.442695
        %v5875 = vpow.pop %v5874
        %v5876 = vmul.f32 %v5775, 1.442695
        %v5877 = vpow.pop %v5876
        %v5878 = vmul.f32 %v5776, 1.442695
        %v5879 = vpow.pop %v5878
        %v5880 = vmul.f32 %v5777, 1.442695
        %v5881 = vpow.pop %v5880
        %v5882 = vmul.f32 %v5778, 1.442695
        %v5883 = vpow.pop %v5882
        %v5884 = vmul.f32 %v5779, 1.442695
        %v5885 = vpow.pop %v5884
        %v5886 = vmul.f32 %v5780, 1.442695
        %v5887 = vpow.pop %v5886
        %v5888 = vmul.f32 %v5781, 1.442695
        %v5889 = vpow.pop %v5888
        %v5890 = vmul.f32 %v5782, 1.442695
        %v5891 = vpow.pop %v5890
        %v5892 = vmul.f32 %v5783, 1.442695
        %v5893 = vpow.pop %v5892
        %v5894 = vmul.f32 %v5784, 1.442695
        %v5895 = vpow.pop %v5894
        %v5896 = vmul.f32 %v5785, 1.442695
        %v5897 = vpow.pop %v5896
        %v5898 = vmul.f32 %v5786, 1.442695
        %v5899 = vpow.pop %v5898
        %v5900 = vmul.f32 %v5787, 1.442695
        %v5901 = vpow.pop %v5900
        %v5902 = vmul.f32 %v5788, 1.442695
        %v5903 = vpow.pop %v5902
        %v5904 = vmul.f32 %v5789, 1.442695
        %v5905 = vpow.pop %v5904
        %v5906 = vmul.f32 %v5790, 1.442695
        %v5907 = vpow.pop %v5906
        %v5908 = vmul.f32 %v5791, 1.442695
        %v5909 = vpow.pop %v5908
        %v5910 = vmul.f32 %v5792, 1.442695
        %v5911 = vpow.pop %v5910
        %v5912 = vmul.f32 %v5793, 1.442695
        %v5913 = vpow.pop %v5912
        %v5914 = vmul.f32 %v5794, 1.442695
        %v5915 = vpow.pop %v5914
        %v5916 = vmul.f32 %v5795, 1.442695
        %v5917 = vpow.pop %v5916
        %v5918 = vmul.f32 %v5796, 1.442695
        %v5919 = vpow.pop %v5918
        %v5920 = vmul.f32 %v5797, 1.442695
        %v5921 = vpow.pop %v5920
        %v5922 = vmul.f32 %v5798, 1.442695
        %v5923 = vpow.pop %v5922
        %v5924 = vmul.f32 %v5799, 1.442695
        %v5925 = vpow.pop %v5924
        %v5926 = vmul.f32 %v5800, 1.442695
        %v5927 = vpow.pop %v5926
        %v5928 = vmul.f32 %v5801, 1.442695
        %v5929 = vpow.pop %v5928
        %v5930 = vsel %vm471, %v5803, 0.0
        %5931 = vadd.xlane.f32.xlu0 %v5930
        %v5932 = vpop.xlane.xlu0 %5931
        %v5933 = vsel %vm471, %v5805, 0.0
        %5934 = vadd.xlane.f32.xlu0 %v5933
        %v5935 = vpop.xlane.xlu0 %5934
        %v5936 = vsel %vm471, %v5807, 0.0
        %5937 = vadd.xlane.f32.xlu0 %v5936
        %v5938 = vpop.xlane.xlu0 %5937
        %v5939 = vsel %vm471, %v5809, 0.0
        %5940 = vadd.xlane.f32.xlu0 %v5939
        %v5941 = vpop.xlane.xlu0 %5940
        %v5942 = vsel %vm471, %v5811, 0.0
        %5943 = vadd.xlane.f32.xlu0 %v5942
        %v5944 = vpop.xlane.xlu0 %5943
        %v5945 = vsel %vm471, %v5813, 0.0
        %5946 = vadd.xlane.f32.xlu0 %v5945
        %v5947 = vpop.xlane.xlu0 %5946
        %v5948 = vsel %vm471, %v5815, 0.0
        %5949 = vadd.xlane.f32.xlu0 %v5948
        %v5950 = vpop.xlane.xlu0 %5949
        %v5951 = vsel %vm471, %v5817, 0.0
        %5952 = vadd.xlane.f32.xlu0 %v5951
        %v5953 = vpop.xlane.xlu0 %5952
        %v5954 = vsel %vm471, %v5819, 0.0
        %5955 = vadd.xlane.f32.xlu0 %v5954
        %v5956 = vpop.xlane.xlu0 %5955
        %v5957 = vsel %vm471, %v5821, 0.0
        %5958 = vadd.xlane.f32.xlu0 %v5957
        %v5959 = vpop.xlane.xlu0 %5958
        %v5960 = vsel %vm471, %v5823, 0.0
        %5961 = vadd.xlane.f32.xlu0 %v5960
        %v5962 = vpop.xlane.xlu0 %5961
        %v5963 = vsel %vm471, %v5825, 0.0
        %5964 = vadd.xlane.f32.xlu0 %v5963
        %v5965 = vpop.xlane.xlu0 %5964
        %v5966 = vsel %vm471, %v5827, 0.0
        %5967 = vadd.xlane.f32.xlu0 %v5966
        %v5968 = vpop.xlane.xlu0 %5967
        %v5969 = vsel %vm471, %v5829, 0.0
        %5970 = vadd.xlane.f32.xlu0 %v5969
        %v5971 = vpop.xlane.xlu0 %5970
        %v5972 = vsel %vm471, %v5831, 0.0
        %5973 = vadd.xlane.f32.xlu0 %v5972
        %v5974 = vpop.xlane.xlu0 %5973
        %v5975 = vsel %vm471, %v5833, 0.0
        %5976 = vadd.xlane.f32.xlu0 %v5975
        %v5977 = vpop.xlane.xlu0 %5976
        %v5978 = vsel %vm471, %v5835, 0.0
        %5979 = vadd.xlane.f32.xlu0 %v5978
        %v5980 = vpop.xlane.xlu0 %5979
        %v5981 = vsel %vm471, %v5837, 0.0
        %5982 = vadd.xlane.f32.xlu0 %v5981
        %v5983 = vpop.xlane.xlu0 %5982
        %v5984 = vsel %vm471, %v5839, 0.0
        %5985 = vadd.xlane.f32.xlu0 %v5984
        %v5986 = vpop.xlane.xlu0 %5985
        %v5987 = vsel %vm471, %v5841, 0.0
        %5988 = vadd.xlane.f32.xlu0 %v5987
        %v5989 = vpop.xlane.xlu0 %5988
        %v5990 = vsel %vm471, %v5843, 0.0
        %5991 = vadd.xlane.f32.xlu0 %v5990
        %v5992 = vpop.xlane.xlu0 %5991
        %v5993 = vsel %vm471, %v5845, 0.0
        %5994 = vadd.xlane.f32.xlu0 %v5993
        %v5995 = vpop.xlane.xlu0 %5994
        %v5996 = vsel %vm471, %v5847, 0.0
        %5997 = vadd.xlane.f32.xlu0 %v5996
        %v5998 = vpop.xlane.xlu0 %5997
        %v5999 = vsel %vm471, %v5849, 0.0
        %6000 = vadd.xlane.f32.xlu0 %v5999
        %v6001 = vpop.xlane.xlu0 %6000
        %v6002 = vsel %vm471, %v5851, 0.0
        %6003 = vadd.xlane.f32.xlu0 %v6002
        %v6004 = vpop.xlane.xlu0 %6003
        %v6005 = vsel %vm471, %v5853, 0.0
        %6006 = vadd.xlane.f32.xlu0 %v6005
        %v6007 = vpop.xlane.xlu0 %6006
        %v6008 = vsel %vm471, %v5855, 0.0
        %6009 = vadd.xlane.f32.xlu0 %v6008
        %v6010 = vpop.xlane.xlu0 %6009
        %v6011 = vsel %vm471, %v5857, 0.0
        %6012 = vadd.xlane.f32.xlu0 %v6011
        %v6013 = vpop.xlane.xlu0 %6012
        %v6014 = vsel %vm471, %v5859, 0.0
        %6015 = vadd.xlane.f32.xlu0 %v6014
        %v6016 = vpop.xlane.xlu0 %6015
        %v6017 = vsel %vm471, %v5861, 0.0
        %6018 = vadd.xlane.f32.xlu0 %v6017
        %v6019 = vpop.xlane.xlu0 %6018
        %v6020 = vsel %vm471, %v5863, 0.0
        %6021 = vadd.xlane.f32.xlu0 %v6020
        %v6022 = vpop.xlane.xlu0 %6021
        %v6023 = vsel %vm471, %v5865, 0.0
        %6024 = vadd.xlane.f32.xlu0 %v6023
        %v6025 = vpop.xlane.xlu0 %6024
        %v6026 = vsel %vm471, %v5867, 0.0
        %6027 = vadd.xlane.f32.xlu0 %v6026
        %v6028 = vpop.xlane.xlu0 %6027
        %v6029 = vsel %vm471, %v5869, 0.0
        %6030 = vadd.xlane.f32.xlu0 %v6029
        %v6031 = vpop.xlane.xlu0 %6030
        %v6032 = vsel %vm471, %v5871, 0.0
        %6033 = vadd.xlane.f32.xlu0 %v6032
        %v6034 = vpop.xlane.xlu0 %6033
        %v6035 = vsel %vm471, %v5873, 0.0
        %6036 = vadd.xlane.f32.xlu0 %v6035
        %v6037 = vpop.xlane.xlu0 %6036
        %v6038 = vsel %vm471, %v5875, 0.0
        %6039 = vadd.xlane.f32.xlu0 %v6038
        %v6040 = vpop.xlane.xlu0 %6039
        %v6041 = vsel %vm471, %v5877, 0.0
        %6042 = vadd.xlane.f32.xlu0 %v6041
        %v6043 = vpop.xlane.xlu0 %6042
        %v6044 = vsel %vm471, %v5879, 0.0
        %6045 = vadd.xlane.f32.xlu0 %v6044
        %v6046 = vpop.xlane.xlu0 %6045
        %v6047 = vsel %vm471, %v5881, 0.0
        %6048 = vadd.xlane.f32.xlu0 %v6047
        %v6049 = vpop.xlane.xlu0 %6048
        %v6050 = vsel %vm471, %v5883, 0.0
        %6051 = vadd.xlane.f32.xlu0 %v6050
        %v6052 = vpop.xlane.xlu0 %6051
        %v6053 = vsel %vm471, %v5885, 0.0
        %6054 = vadd.xlane.f32.xlu0 %v6053
        %v6055 = vpop.xlane.xlu0 %6054
        %v6056 = vsel %vm471, %v5887, 0.0
        %6057 = vadd.xlane.f32.xlu0 %v6056
        %v6058 = vpop.xlane.xlu0 %6057
        %v6059 = vsel %vm471, %v5889, 0.0
        %6060 = vadd.xlane.f32.xlu0 %v6059
        %v6061 = vpop.xlane.xlu0 %6060
        %v6062 = vsel %vm471, %v5891, 0.0
        %6063 = vadd.xlane.f32.xlu0 %v6062
        %v6064 = vpop.xlane.xlu0 %6063
        %v6065 = vsel %vm471, %v5893, 0.0
        %6066 = vadd.xlane.f32.xlu0 %v6065
        %v6067 = vpop.xlane.xlu0 %6066
        %v6068 = vsel %vm471, %v5895, 0.0
        %6069 = vadd.xlane.f32.xlu0 %v6068
        %v6070 = vpop.xlane.xlu0 %6069
        %v6071 = vsel %vm471, %v5897, 0.0
        %6072 = vadd.xlane.f32.xlu0 %v6071
        %v6073 = vpop.xlane.xlu0 %6072
        %v6074 = vsel %vm471, %v5899, 0.0
        %6075 = vadd.xlane.f32.xlu0 %v6074
        %v6076 = vpop.xlane.xlu0 %6075
        %v6077 = vsel %vm471, %v5901, 0.0
        %6078 = vadd.xlane.f32.xlu0 %v6077
        %v6079 = vpop.xlane.xlu0 %6078
        %v6080 = vsel %vm471, %v5903, 0.0
        %6081 = vadd.xlane.f32.xlu0 %v6080
        %v6082 = vpop.xlane.xlu0 %6081
        %v6083 = vsel %vm471, %v5905, 0.0
        %6084 = vadd.xlane.f32.xlu0 %v6083
        %v6085 = vpop.xlane.xlu0 %6084
        %v6086 = vsel %vm471, %v5907, 0.0
        %6087 = vadd.xlane.f32.xlu0 %v6086
        %v6088 = vpop.xlane.xlu0 %6087
        %v6089 = vsel %vm471, %v5909, 0.0
        %6090 = vadd.xlane.f32.xlu0 %v6089
        %v6091 = vpop.xlane.xlu0 %6090
        %v6092 = vsel %vm471, %v5911, 0.0
        %6093 = vadd.xlane.f32.xlu0 %v6092
        %v6094 = vpop.xlane.xlu0 %6093
        %v6095 = vsel %vm471, %v5913, 0.0
        %6096 = vadd.xlane.f32.xlu0 %v6095
        %v6097 = vpop.xlane.xlu0 %6096
        %v6098 = vsel %vm471, %v5915, 0.0
        %6099 = vadd.xlane.f32.xlu0 %v6098
        %v6100 = vpop.xlane.xlu0 %6099
        %v6101 = vsel %vm471, %v5917, 0.0
        %6102 = vadd.xlane.f32.xlu0 %v6101
        %v6103 = vpop.xlane.xlu0 %6102
        %v6104 = vsel %vm471, %v5919, 0.0
        %6105 = vadd.xlane.f32.xlu0 %v6104
        %v6106 = vpop.xlane.xlu0 %6105
        %v6107 = vsel %vm471, %v5921, 0.0
        %6108 = vadd.xlane.f32.xlu0 %v6107
        %v6109 = vpop.xlane.xlu0 %6108
        %v6110 = vsel %vm471, %v5923, 0.0
        %6111 = vadd.xlane.f32.xlu0 %v6110
        %v6112 = vpop.xlane.xlu0 %6111
        %v6113 = vsel %vm471, %v5925, 0.0
        %6114 = vadd.xlane.f32.xlu0 %v6113
        %v6115 = vpop.xlane.xlu0 %6114
        %v6116 = vsel %vm471, %v5927, 0.0
        %6117 = vadd.xlane.f32.xlu0 %v6116
        %v6118 = vpop.xlane.xlu0 %6117
        %v6119 = vsel %vm471, %v5929, 0.0
        %6120 = vadd.xlane.f32.xlu0 %v6119
        %v6121 = vpop.xlane.xlu0 %6120
        %v6122 = vrcp.pop %v5932
        %v6123 = vrcp.pop %v5935
        %v6124 = vrcp.pop %v5938
        %v6125 = vrcp.pop %v5941
        %v6126 = vrcp.pop %v5944
        %v6127 = vrcp.pop %v5947
        %v6128 = vrcp.pop %v5950
        %v6129 = vrcp.pop %v5953
        %v6130 = vrcp.pop %v5956
        %v6131 = vrcp.pop %v5959
        %v6132 = vrcp.pop %v5962
        %v6133 = vrcp.pop %v5965
        %v6134 = vrcp.pop %v5968
        %v6135 = vrcp.pop %v5971
        %v6136 = vrcp.pop %v5974
        %v6137 = vrcp.pop %v5977
        %v6138 = vrcp.pop %v5980
        %v6139 = vrcp.pop %v5983
        %v6140 = vrcp.pop %v5986
        %v6141 = vrcp.pop %v5989
        %v6142 = vrcp.pop %v5992
        %v6143 = vrcp.pop %v5995
        %v6144 = vrcp.pop %v5998
        %v6145 = vrcp.pop %v6001
        %v6146 = vrcp.pop %v6004
        %v6147 = vrcp.pop %v6007
        %v6148 = vrcp.pop %v6010
        %v6149 = vrcp.pop %v6013
        %v6150 = vrcp.pop %v6016
        %v6151 = vrcp.pop %v6019
        %v6152 = vrcp.pop %v6022
        %v6153 = vrcp.pop %v6025
        %v6154 = vrcp.pop %v6028
        %v6155 = vrcp.pop %v6031
        %v6156 = vrcp.pop %v6034
        %v6157 = vrcp.pop %v6037
        %v6158 = vrcp.pop %v6040
        %v6159 = vrcp.pop %v6043
        %v6160 = vrcp.pop %v6046
        %v6161 = vrcp.pop %v6049
        %v6162 = vrcp.pop %v6052
        %v6163 = vrcp.pop %v6055
        %v6164 = vrcp.pop %v6058
        %v6165 = vrcp.pop %v6061
        %v6166 = vrcp.pop %v6064
        %v6167 = vrcp.pop %v6067
        %v6168 = vrcp.pop %v6070
        %v6169 = vrcp.pop %v6073
        %v6170 = vrcp.pop %v6076
        %v6171 = vrcp.pop %v6079
        %v6172 = vrcp.pop %v6082
        %v6173 = vrcp.pop %v6085
        %v6174 = vrcp.pop %v6088
        %v6175 = vrcp.pop %v6091
        %v6176 = vrcp.pop %v6094
        %v6177 = vrcp.pop %v6097
        %v6178 = vrcp.pop %v6100
        %v6179 = vrcp.pop %v6103
        %v6180 = vrcp.pop %v6106
        %v6181 = vrcp.pop %v6109
        %v6182 = vrcp.pop %v6112
        %v6183 = vrcp.pop %v6115
        %v6184 = vrcp.pop %v6118
        %v6185 = vrcp.pop %v6121
        %v6186 = vmul.f32 %v5803, %v6122
        %v6187 = vmul.f32 %v5805, %v6123
        %v6188 = vmul.f32 %v5807, %v6124
        %v6189 = vmul.f32 %v5809, %v6125
        %v6190 = vmul.f32 %v5811, %v6126
        %v6191 = vmul.f32 %v5813, %v6127
        %v6192 = vmul.f32 %v5815, %v6128
        %v6193 = vmul.f32 %v5817, %v6129
        %v6194 = vmul.f32 %v5819, %v6130
        %v6195 = vmul.f32 %v5821, %v6131
        %v6196 = vmul.f32 %v5823, %v6132
        %v6197 = vmul.f32 %v5825, %v6133
        %v6198 = vmul.f32 %v5827, %v6134
        %v6199 = vmul.f32 %v5829, %v6135
        %v6200 = vmul.f32 %v5831, %v6136
        %v6201 = vmul.f32 %v5833, %v6137
        %v6202 = vmul.f32 %v5835, %v6138
        %v6203 = vmul.f32 %v5837, %v6139
        %v6204 = vmul.f32 %v5839, %v6140
        %v6205 = vmul.f32 %v5841, %v6141
        %v6206 = vmul.f32 %v5843, %v6142
        %v6207 = vmul.f32 %v5845, %v6143
        %v6208 = vmul.f32 %v5847, %v6144
        %v6209 = vmul.f32 %v5849, %v6145
        %v6210 = vmul.f32 %v5851, %v6146
        %v6211 = vmul.f32 %v5853, %v6147
        %v6212 = vmul.f32 %v5855, %v6148
        %v6213 = vmul.f32 %v5857, %v6149
        %v6214 = vmul.f32 %v5859, %v6150
        %v6215 = vmul.f32 %v5861, %v6151
        %v6216 = vmul.f32 %v5863, %v6152
        %v6217 = vmul.f32 %v5865, %v6153
        %v6218 = vmul.f32 %v5867, %v6154
        %v6219 = vmul.f32 %v5869, %v6155
        %v6220 = vmul.f32 %v5871, %v6156
        %v6221 = vmul.f32 %v5873, %v6157
        %v6222 = vmul.f32 %v5875, %v6158
        %v6223 = vmul.f32 %v5877, %v6159
        %v6224 = vmul.f32 %v5879, %v6160
        %v6225 = vmul.f32 %v5881, %v6161
        %v6226 = vmul.f32 %v5883, %v6162
        %v6227 = vmul.f32 %v5885, %v6163
        %v6228 = vmul.f32 %v5887, %v6164
        %v6229 = vmul.f32 %v5889, %v6165
        %v6230 = vmul.f32 %v5891, %v6166
        %v6231 = vmul.f32 %v5893, %v6167
        %v6232 = vmul.f32 %v5895, %v6168
        %v6233 = vmul.f32 %v5897, %v6169
        %v6234 = vmul.f32 %v5899, %v6170
        %v6235 = vmul.f32 %v5901, %v6171
        %v6236 = vmul.f32 %v5903, %v6172
        %v6237 = vmul.f32 %v5905, %v6173
        %v6238 = vmul.f32 %v5907, %v6174
        %v6239 = vmul.f32 %v5909, %v6175
        %v6240 = vmul.f32 %v5911, %v6176
        %v6241 = vmul.f32 %v5913, %v6177
        %v6242 = vmul.f32 %v5915, %v6178
        %v6243 = vmul.f32 %v5917, %v6179
        %v6244 = vmul.f32 %v5919, %v6180
        %v6245 = vmul.f32 %v5921, %v6181
        %v6246 = vmul.f32 %v5923, %v6182
        %v6247 = vmul.f32 %v5925, %v6183
        %v6248 = vmul.f32 %v5927, %v6184
        %v6249 = vmul.f32 %v5929, %v6185
        %v6250 = vpack.c.bf16 %v6187, %v6186
        %v6251 = vpack.c.bf16 %v6189, %v6188
        %v6252 = vpack.c.bf16 %v6191, %v6190
        %v6253 = vpack.c.bf16 %v6193, %v6192
        %v6254 = vpack.c.bf16 %v6195, %v6194
        %v6255 = vpack.c.bf16 %v6197, %v6196
        %v6256 = vpack.c.bf16 %v6199, %v6198
        %v6257 = vpack.c.bf16 %v6201, %v6200
        %v6258 = vpack.c.bf16 %v6203, %v6202
        %v6259 = vpack.c.bf16 %v6205, %v6204
        %v6260 = vpack.c.bf16 %v6207, %v6206
        %v6261 = vpack.c.bf16 %v6209, %v6208
        %v6262 = vpack.c.bf16 %v6211, %v6210
        %v6263 = vpack.c.bf16 %v6213, %v6212
        %v6264 = vpack.c.bf16 %v6215, %v6214
        %v6265 = vpack.c.bf16 %v6217, %v6216
        %v6266 = vpack.c.bf16 %v6219, %v6218
        %v6267 = vpack.c.bf16 %v6221, %v6220
        %v6268 = vpack.c.bf16 %v6223, %v6222
        %v6269 = vpack.c.bf16 %v6225, %v6224
        %v6270 = vpack.c.bf16 %v6227, %v6226
        %v6271 = vpack.c.bf16 %v6229, %v6228
        %v6272 = vpack.c.bf16 %v6231, %v6230
        %v6273 = vpack.c.bf16 %v6233, %v6232
        %v6274 = vpack.c.bf16 %v6235, %v6234
        %v6275 = vpack.c.bf16 %v6237, %v6236
        %v6276 = vpack.c.bf16 %v6239, %v6238
        %v6277 = vpack.c.bf16 %v6241, %v6240
        %v6278 = vpack.c.bf16 %v6243, %v6242
        %v6279 = vpack.c.bf16 %v6245, %v6244
        %v6280 = vpack.c.bf16 %v6247, %v6246
        %v6281 = vpack.c.bf16 %v6249, %v6248
        %v6283 = vsel %vm471, %v6250, 0
        %v6286 = vsel %vm471, %v6251, 0
        %v6289 = vsel %vm471, %v6252, 0
        %v6292 = vsel %vm471, %v6253, 0
        %6294 = vmatprep.subr.bf16.mxu0 0
        %6295 = vmatpush1.bf16.msra.mxu0 %v4707
        %6296 = vmatprep.subr.bf16.mxu0 0
        %6297 = vmatpush1.bf16.msra.mxu0 %v4739
        %6298 = vmatprep.subr.bf16.mxu0 0
        %6299 = vmatpush1.bf16.msra.mxu0 %v4771
        %6300 = vmatprep.subr.bf16.mxu0 0
        %6301 = vmatpush1.bf16.msra.mxu0 %v4803
        %6302 = vmatprep.subr.bf16.mxu0 0
        %6303 = vmatpush1.bf16.msra.mxu0 0
        %6304 = vmatprep.subr.bf16.mxu0 0
        %6305 = vmatpush1.bf16.msra.mxu0 0
        %6306 = vmatprep.subr.bf16.mxu0 0
        %6307 = vmatpush1.bf16.msra.mxu0 0
        %6308 = vmatprep.subr.bf16.mxu0 0
        %6309 = vmatpush1.bf16.msra.mxu0 0
        %6310 = vmatprep.subr.bf16.mxu0 0
        %6311 = vmatpush1.bf16.msra.mxu0 0
        %6312 = vmatprep.subr.bf16.mxu0 0
        %6313 = vmatpush1.bf16.msra.mxu0 0
        %6314 = vmatprep.subr.bf16.mxu0 0
        %6315 = vmatpush1.bf16.msra.mxu0 0
        %6316 = vmatprep.subr.bf16.mxu0 0
        %6317 = vmatpush1.bf16.msra.mxu0 0
        %6318 = vmatprep.subr.bf16.mxu0 0
        %6319 = vmatpush1.bf16.msra.mxu0 0
        %6320 = vmatprep.subr.bf16.mxu0 0
        %6321 = vmatpush1.bf16.msra.mxu0 0
        %6322 = vmatprep.subr.bf16.mxu0 0
        %6323 = vmatpush1.bf16.msra.mxu0 0
        %6324 = vmatprep.subr.bf16.mxu0 0
        %6325 = vmatpush1.bf16.msra.mxu0 0
        %6326 = vmatprep.mubr.bf16.mxu0 0
        %6327 = vmatmul.mubr.bf16.gmra.mrb[0].mxu0 %v6283
        %v6328 = vpop.f32.mrb[0].mxu0
        %v6329 = vadd.f32 0.0, %v6328
        %v6330 = vpop.f32.mrb[0].mxu0
        %v6331 = vpop.f32.mrb[0].mxu0
        %v6332 = vadd.f32 0.0, %v6331
        %v6333 = vpop.f32.mrb[0].mxu0
        %6334 = vmatprep.mubr.bf16.mxu0 0
        %6335 = vmatmul.mubr.bf16.gmra.mrb[0].mxu0 %v6286
        %v6336 = vpop.f32.mrb[0].mxu0
        %v6337 = vadd.f32 0.0, %v6336
        %v6338 = vpop.f32.mrb[0].mxu0
        %v6339 = vpop.f32.mrb[0].mxu0
        %v6340 = vadd.f32 0.0, %v6339
        %v6341 = vpop.f32.mrb[0].mxu0
        %6342 = vmatprep.mubr.bf16.mxu0 0
        %6343 = vmatmul.mubr.bf16.gmra.mrb[0].mxu0 %v6289
        %v6344 = vpop.f32.mrb[0].mxu0
        %v6345 = vadd.f32 0.0, %v6344
        %v6346 = vpop.f32.mrb[0].mxu0
        %v6347 = vpop.f32.mrb[0].mxu0
        %v6348 = vadd.f32 0.0, %v6347
        %v6349 = vpop.f32.mrb[0].mxu0
        %6350 = vmatprep.mubr.bf16.mxu0 0
        %6351 = vmatmul.mubr.bf16.gmra.mrb[0].mxu0 %v6292
        %v6352 = vpop.f32.mrb[0].mxu0
        %v6353 = vadd.f32 0.0, %v6352
        %v6354 = vpop.f32.mrb[0].mxu0
        %v6355 = vpop.f32.mrb[0].mxu0
        %v6356 = vadd.f32 0.0, %v6355
        %v6357 = vpop.f32.mrb[0].mxu0
        %6358 = vdwg.mxu0
        %v6360 = vsel %vm471, %v6254, 0
        %v6363 = vsel %vm471, %v6255, 0
        %v6366 = vsel %vm471, %v6256, 0
        %v6369 = vsel %vm471, %v6257, 0
        %6371 = vmatprep.subr.bf16.mxu0 0
        %6372 = vmatpush1.bf16.msra.mxu0 %v4711
        %6373 = vmatprep.subr.bf16.mxu0 0
        %6374 = vmatpush1.bf16.msra.mxu0 %v4743
        %6375 = vmatprep.subr.bf16.mxu0 0
        %6376 = vmatpush1.bf16.msra.mxu0 %v4775
        %6377 = vmatprep.subr.bf16.mxu0 0
        %6378 = vmatpush1.bf16.msra.mxu0 %v4807
        %6379 = vmatprep.subr.bf16.mxu0 0
        %6380 = vmatpush1.bf16.msra.mxu0 0
        %6381 = vmatprep.subr.bf16.mxu0 0
        %6382 = vmatpush1.bf16.msra.mxu0 0
        %6383 = vmatprep.subr.bf16.mxu0 0
        %6384 = vmatpush1.bf16.msra.mxu0 0
        %6385 = vmatprep.subr.bf16.mxu0 0
        %6386 = vmatpush1.bf16.msra.mxu0 0
        %6387 = vmatprep.subr.bf16.mxu0 0
        %6388 = vmatpush1.bf16.msra.mxu0 0
        %6389 = vmatprep.subr.bf16.mxu0 0
        %6390 = vmatpush1.bf16.msra.mxu0 0
        %6391 = vmatprep.subr.bf16.mxu0 0
        %6392 = vmatpush1.bf16.msra.mxu0 0
        %6393 = vmatprep.subr.bf16.mxu0 0
        %6394 = vmatpush1.bf16.msra.mxu0 0
        %6395 = vmatprep.subr.bf16.mxu0 0
        %6396 = vmatpush1.bf16.msra.mxu0 0
        %6397 = vmatprep.subr.bf16.mxu0 0
        %6398 = vmatpush1.bf16.msra.mxu0 0
        %6399 = vmatprep.subr.bf16.mxu0 0
        %6400 = vmatpush1.bf16.msra.mxu0 0
        %6401 = vmatprep.subr.bf16.mxu0 0
        %6402 = vmatpush1.bf16.msra.mxu0 0
        %6403 = vmatprep.mubr.bf16.mxu0 0
        %6404 = vmatmul.mubr.bf16.gmra.mrb[0].mxu0 %v6360
        %v6405 = vpop.f32.mrb[0].mxu0
        %v6406 = vadd.f32 0.0, %v6405
        %v6407 = vpop.f32.mrb[0].mxu0
        %v6408 = vpop.f32.mrb[0].mxu0
        %v6409 = vadd.f32 0.0, %v6408
        %v6410 = vpop.f32.mrb[0].mxu0
        %6411 = vmatprep.mubr.bf16.mxu0 0
        %6412 = vmatmul.mubr.bf16.gmra.mrb[0].mxu0 %v6363
        %v6413 = vpop.f32.mrb[0].mxu0
        %v6414 = vadd.f32 0.0, %v6413
        %v6415 = vpop.f32.mrb[0].mxu0
        %v6416 = vpop.f32.mrb[0].mxu0
        %v6417 = vadd.f32 0.0, %v6416
        %v6418 = vpop.f32.mrb[0].mxu0
        %6419 = vmatprep.mubr.bf16.mxu0 0
        %6420 = vmatmul.mubr.bf16.gmra.mrb[0].mxu0 %v6366
        %v6421 = vpop.f32.mrb[0].mxu0
        %v6422 = vadd.f32 0.0, %v6421
        %v6423 = vpop.f32.mrb[0].mxu0
        %v6424 = vpop.f32.mrb[0].mxu0
        %v6425 = vadd.f32 0.0, %v6424
        %v6426 = vpop.f32.mrb[0].mxu0
        %6427 = vmatprep.mubr.bf16.mxu0 0
        %6428 = vmatmul.mubr.bf16.gmra.mrb[0].mxu0 %v6369
        %v6429 = vpop.f32.mrb[0].mxu0
        %v6430 = vadd.f32 0.0, %v6429
        %v6431 = vpop.f32.mrb[0].mxu0
        %v6432 = vpop.f32.mrb[0].mxu0
        %v6433 = vadd.f32 0.0, %v6432
        %v6434 = vpop.f32.mrb[0].mxu0
        %6435 = vdwg.mxu0
        %v6437 = vsel %vm471, %v6258, 0
        %v6440 = vsel %vm471, %v6259, 0
        %v6443 = vsel %vm471, %v6260, 0
        %v6446 = vsel %vm471, %v6261, 0
        %6448 = vmatprep.subr.bf16.mxu0 0
        %6449 = vmatpush1.bf16.msra.mxu0 %v4715
        %6450 = vmatprep.subr.bf16.mxu0 0
        %6451 = vmatpush1.bf16.msra.mxu0 %v4747
        %6452 = vmatprep.subr.bf16.mxu0 0
        %6453 = vmatpush1.bf16.msra.mxu0 %v4779
        %6454 = vmatprep.subr.bf16.mxu0 0
        %6455 = vmatpush1.bf16.msra.mxu0 %v4811
        %6456 = vmatprep.subr.bf16.mxu0 0
        %6457 = vmatpush1.bf16.msra.mxu0 0
        %6458 = vmatprep.subr.bf16.mxu0 0
        %6459 = vmatpush1.bf16.msra.mxu0 0
        %6460 = vmatprep.subr.bf16.mxu0 0
        %6461 = vmatpush1.bf16.msra.mxu0 0
        %6462 = vmatprep.subr.bf16.mxu0 0
        %6463 = vmatpush1.bf16.msra.mxu0 0
        %6464 = vmatprep.subr.bf16.mxu0 0
        %6465 = vmatpush1.bf16.msra.mxu0 0
        %6466 = vmatprep.subr.bf16.mxu0 0
        %6467 = vmatpush1.bf16.msra.mxu0 0
        %6468 = vmatprep.subr.bf16.mxu0 0
        %6469 = vmatpush1.bf16.msra.mxu0 0
        %6470 = vmatprep.subr.bf16.mxu0 0
        %6471 = vmatpush1.bf16.msra.mxu0 0
        %6472 = vmatprep.subr.bf16.mxu0 0
        %6473 = vmatpush1.bf16.msra.mxu0 0
        %6474 = vmatprep.subr.bf16.mxu0 0
        %6475 = vmatpush1.bf16.msra.mxu0 0
        %6476 = vmatprep.subr.bf16.mxu0 0
        %6477 = vmatpush1.bf16.msra.mxu0 0
        %6478 = vmatprep.subr.bf16.mxu0 0
        %6479 = vmatpush1.bf16.msra.mxu0 0
        %6480 = vmatprep.mubr.bf16.mxu0 0
        %6481 = vmatmul.mubr.bf16.gmra.mrb[0].mxu0 %v6437
        %v6482 = vpop.f32.mrb[0].mxu0
        %v6483 = vadd.f32 0.0, %v6482
        %v6484 = vpop.f32.mrb[0].mxu0
        %v6485 = vpop.f32.mrb[0].mxu0
        %v6486 = vadd.f32 0.0, %v6485
        %v6487 = vpop.f32.mrb[0].mxu0
        %6488 = vmatprep.mubr.bf16.mxu0 0
        %6489 = vmatmul.mubr.bf16.gmra.mrb[0].mxu0 %v6440
        %v6490 = vpop.f32.mrb[0].mxu0
        %v6491 = vadd.f32 0.0, %v6490
        %v6492 = vpop.f32.mrb[0].mxu0
        %v6493 = vpop.f32.mrb[0].mxu0
        %v6494 = vadd.f32 0.0, %v6493
        %v6495 = vpop.f32.mrb[0].mxu0
        %6496 = vmatprep.mubr.bf16.mxu0 0
        %6497 = vmatmul.mubr.bf16.gmra.mrb[0].mxu0 %v6443
        %v6498 = vpop.f32.mrb[0].mxu0
        %v6499 = vadd.f32 0.0, %v6498
        %v6500 = vpop.f32.mrb[0].mxu0
        %v6501 = vpop.f32.mrb[0].mxu0
        %v6502 = vadd.f32 0.0, %v6501
        %v6503 = vpop.f32.mrb[0].mxu0
        %6504 = vmatprep.mubr.bf16.mxu0 0
        %6505 = vmatmul.mubr.bf16.gmra.mrb[0].mxu0 %v6446
        %v6506 = vpop.f32.mrb[0].mxu0
        %v6507 = vadd.f32 0.0, %v6506
        %v6508 = vpop.f32.mrb[0].mxu0
        %v6509 = vpop.f32.mrb[0].mxu0
        %v6510 = vadd.f32 0.0, %v6509
        %v6511 = vpop.f32.mrb[0].mxu0
        %6512 = vdwg.mxu0
        %v6514 = vsel %vm471, %v6262, 0
        %v6517 = vsel %vm471, %v6263, 0
        %v6520 = vsel %vm471, %v6264, 0
        %v6523 = vsel %vm471, %v6265, 0
        %6525 = vmatprep.subr.bf16.mxu0 0
        %6526 = vmatpush1.bf16.msra.mxu0 %v4719
        %6527 = vmatprep.subr.bf16.mxu0 0
        %6528 = vmatpush1.bf16.msra.mxu0 %v4751
        %6529 = vmatprep.subr.bf16.mxu0 0
        %6530 = vmatpush1.bf16.msra.mxu0 %v4783
        %6531 = vmatprep.subr.bf16.mxu0 0
        %6532 = vmatpush1.bf16.msra.mxu0 %v4815
        %6533 = vmatprep.subr.bf16.mxu0 0
        %6534 = vmatpush1.bf16.msra.mxu0 0
        %6535 = vmatprep.subr.bf16.mxu0 0
        %6536 = vmatpush1.bf16.msra.mxu0 0
        %6537 = vmatprep.subr.bf16.mxu0 0
        %6538 = vmatpush1.bf16.msra.mxu0 0
        %6539 = vmatprep.subr.bf16.mxu0 0
        %6540 = vmatpush1.bf16.msra.mxu0 0
        %6541 = vmatprep.subr.bf16.mxu0 0
        %6542 = vmatpush1.bf16.msra.mxu0 0
        %6543 = vmatprep.subr.bf16.mxu0 0
        %6544 = vmatpush1.bf16.msra.mxu0 0
        %6545 = vmatprep.subr.bf16.mxu0 0
        %6546 = vmatpush1.bf16.msra.mxu0 0
        %6547 = vmatprep.subr.bf16.mxu0 0
        %6548 = vmatpush1.bf16.msra.mxu0 0
        %6549 = vmatprep.subr.bf16.mxu0 0
        %6550 = vmatpush1.bf16.msra.mxu0 0
        %6551 = vmatprep.subr.bf16.mxu0 0
        %6552 = vmatpush1.bf16.msra.mxu0 0
        %6553 = vmatprep.subr.bf16.mxu0 0
        %6554 = vmatpush1.bf16.msra.mxu0 0
        %6555 = vmatprep.subr.bf16.mxu0 0
        %6556 = vmatpush1.bf16.msra.mxu0 0
        %6557 = vmatprep.mubr.bf16.mxu0 0
        %6558 = vmatmul.mubr.bf16.gmra.mrb[0].mxu0 %v6514
        %v6559 = vpop.f32.mrb[0].mxu0
        %v6560 = vadd.f32 0.0, %v6559
        %v6561 = vpop.f32.mrb[0].mxu0
        %v6562 = vpop.f32.mrb[0].mxu0
        %v6563 = vadd.f32 0.0, %v6562
        %v6564 = vpop.f32.mrb[0].mxu0
        %6565 = vmatprep.mubr.bf16.mxu0 0
        %6566 = vmatmul.mubr.bf16.gmra.mrb[0].mxu0 %v6517
        %v6567 = vpop.f32.mrb[0].mxu0
        %v6568 = vadd.f32 0.0, %v6567
        %v6569 = vpop.f32.mrb[0].mxu0
        %v6570 = vpop.f32.mrb[0].mxu0
        %v6571 = vadd.f32 0.0, %v6570
        %v6572 = vpop.f32.mrb[0].mxu0
        %6573 = vmatprep.mubr.bf16.mxu0 0
        %6574 = vmatmul.mubr.bf16.gmra.mrb[0].mxu0 %v6520
        %v6575 = vpop.f32.mrb[0].mxu0
        %v6576 = vadd.f32 0.0, %v6575
        %v6577 = vpop.f32.mrb[0].mxu0
        %v6578 = vpop.f32.mrb[0].mxu0
        %v6579 = vadd.f32 0.0, %v6578
        %v6580 = vpop.f32.mrb[0].mxu0
        %6581 = vmatprep.mubr.bf16.mxu0 0
        %6582 = vmatmul.mubr.bf16.gmra.mrb[0].mxu0 %v6523
        %v6583 = vpop.f32.mrb[0].mxu0
        %v6584 = vadd.f32 0.0, %v6583
        %v6585 = vpop.f32.mrb[0].mxu0
        %v6586 = vpop.f32.mrb[0].mxu0
        %v6587 = vadd.f32 0.0, %v6586
        %v6588 = vpop.f32.mrb[0].mxu0
        %6589 = vdwg.mxu0
        %v6591 = vsel %vm471, %v6266, 0
        %v6594 = vsel %vm471, %v6267, 0
        %v6597 = vsel %vm471, %v6268, 0
        %v6600 = vsel %vm471, %v6269, 0
        %6602 = vmatprep.subr.bf16.mxu0 0
        %6603 = vmatpush1.bf16.msra.mxu0 %v4723
        %6604 = vmatprep.subr.bf16.mxu0 0
        %6605 = vmatpush1.bf16.msra.mxu0 %v4755
        %6606 = vmatprep.subr.bf16.mxu0 0
        %6607 = vmatpush1.bf16.msra.mxu0 %v4787
        %6608 = vmatprep.subr.bf16.mxu0 0
        %6609 = vmatpush1.bf16.msra.mxu0 %v4819
        %6610 = vmatprep.subr.bf16.mxu0 0
        %6611 = vmatpush1.bf16.msra.mxu0 0
        %6612 = vmatprep.subr.bf16.mxu0 0
        %6613 = vmatpush1.bf16.msra.mxu0 0
        %6614 = vmatprep.subr.bf16.mxu0 0
        %6615 = vmatpush1.bf16.msra.mxu0 0
        %6616 = vmatprep.subr.bf16.mxu0 0
        %6617 = vmatpush1.bf16.msra.mxu0 0
        %6618 = vmatprep.subr.bf16.mxu0 0
        %6619 = vmatpush1.bf16.msra.mxu0 0
        %6620 = vmatprep.subr.bf16.mxu0 0
        %6621 = vmatpush1.bf16.msra.mxu0 0
        %6622 = vmatprep.subr.bf16.mxu0 0
        %6623 = vmatpush1.bf16.msra.mxu0 0
        %6624 = vmatprep.subr.bf16.mxu0 0
        %6625 = vmatpush1.bf16.msra.mxu0 0
        %6626 = vmatprep.subr.bf16.mxu0 0
        %6627 = vmatpush1.bf16.msra.mxu0 0
        %6628 = vmatprep.subr.bf16.mxu0 0
        %6629 = vmatpush1.bf16.msra.mxu0 0
        %6630 = vmatprep.subr.bf16.mxu0 0
        %6631 = vmatpush1.bf16.msra.mxu0 0
        %6632 = vmatprep.subr.bf16.mxu0 0
        %6633 = vmatpush1.bf16.msra.mxu0 0
        %6634 = vmatprep.mubr.bf16.mxu0 0
        %6635 = vmatmul.mubr.bf16.gmra.mrb[0].mxu0 %v6591
        %v6636 = vpop.f32.mrb[0].mxu0
        %v6637 = vadd.f32 0.0, %v6636
        %v6638 = vpop.f32.mrb[0].mxu0
        %v6639 = vpop.f32.mrb[0].mxu0
        %v6640 = vadd.f32 0.0, %v6639
        %v6641 = vpop.f32.mrb[0].mxu0
        %6642 = vmatprep.mubr.bf16.mxu0 0
        %6643 = vmatmul.mubr.bf16.gmra.mrb[0].mxu0 %v6594
        %v6644 = vpop.f32.mrb[0].mxu0
        %v6645 = vadd.f32 0.0, %v6644
        %v6646 = vpop.f32.mrb[0].mxu0
        %v6647 = vpop.f32.mrb[0].mxu0
        %v6648 = vadd.f32 0.0, %v6647
        %v6649 = vpop.f32.mrb[0].mxu0
        %6650 = vmatprep.mubr.bf16.mxu0 0
        %6651 = vmatmul.mubr.bf16.gmra.mrb[0].mxu0 %v6597
        %v6652 = vpop.f32.mrb[0].mxu0
        %v6653 = vadd.f32 0.0, %v6652
        %v6654 = vpop.f32.mrb[0].mxu0
        %v6655 = vpop.f32.mrb[0].mxu0
        %v6656 = vadd.f32 0.0, %v6655
        %v6657 = vpop.f32.mrb[0].mxu0
        %6658 = vmatprep.mubr.bf16.mxu0 0
        %6659 = vmatmul.mubr.bf16.gmra.mrb[0].mxu0 %v6600
        %v6660 = vpop.f32.mrb[0].mxu0
        %v6661 = vadd.f32 0.0, %v6660
        %v6662 = vpop.f32.mrb[0].mxu0
        %v6663 = vpop.f32.mrb[0].mxu0
        %v6664 = vadd.f32 0.0, %v6663
        %v6665 = vpop.f32.mrb[0].mxu0
        %6666 = vdwg.mxu0
        %v6668 = vsel %vm471, %v6270, 0
        %v6671 = vsel %vm471, %v6271, 0
        %v6674 = vsel %vm471, %v6272, 0
        %v6677 = vsel %vm471, %v6273, 0
        %6679 = vmatprep.subr.bf16.mxu0 0
        %6680 = vmatpush1.bf16.msra.mxu0 %v4727
        %6681 = vmatprep.subr.bf16.mxu0 0
        %6682 = vmatpush1.bf16.msra.mxu0 %v4759
        %6683 = vmatprep.subr.bf16.mxu0 0
        %6684 = vmatpush1.bf16.msra.mxu0 %v4791
        %6685 = vmatprep.subr.bf16.mxu0 0
        %6686 = vmatpush1.bf16.msra.mxu0 %v4823
        %6687 = vmatprep.subr.bf16.mxu0 0
        %6688 = vmatpush1.bf16.msra.mxu0 0
        %6689 = vmatprep.subr.bf16.mxu0 0
        %6690 = vmatpush1.bf16.msra.mxu0 0
        %6691 = vmatprep.subr.bf16.mxu0 0
        %6692 = vmatpush1.bf16.msra.mxu0 0
        %6693 = vmatprep.subr.bf16.mxu0 0
        %6694 = vmatpush1.bf16.msra.mxu0 0
        %6695 = vmatprep.subr.bf16.mxu0 0
        %6696 = vmatpush1.bf16.msra.mxu0 0
        %6697 = vmatprep.subr.bf16.mxu0 0
        %6698 = vmatpush1.bf16.msra.mxu0 0
        %6699 = vmatprep.subr.bf16.mxu0 0
        %6700 = vmatpush1.bf16.msra.mxu0 0
        %6701 = vmatprep.subr.bf16.mxu0 0
        %6702 = vmatpush1.bf16.msra.mxu0 0
        %6703 = vmatprep.subr.bf16.mxu0 0
        %6704 = vmatpush1.bf16.msra.mxu0 0
        %6705 = vmatprep.subr.bf16.mxu0 0
        %6706 = vmatpush1.bf16.msra.mxu0 0
        %6707 = vmatprep.subr.bf16.mxu0 0
        %6708 = vmatpush1.bf16.msra.mxu0 0
        %6709 = vmatprep.subr.bf16.mxu0 0
        %6710 = vmatpush1.bf16.msra.mxu0 0
        %6711 = vmatprep.mubr.bf16.mxu0 0
        %6712 = vmatmul.mubr.bf16.gmra.mrb[0].mxu0 %v6668
        %v6713 = vpop.f32.mrb[0].mxu0
        %v6714 = vadd.f32 0.0, %v6713
        %v6715 = vpop.f32.mrb[0].mxu0
        %v6716 = vpop.f32.mrb[0].mxu0
        %v6717 = vadd.f32 0.0, %v6716
        %v6718 = vpop.f32.mrb[0].mxu0
        %6719 = vmatprep.mubr.bf16.mxu0 0
        %6720 = vmatmul.mubr.bf16.gmra.mrb[0].mxu0 %v6671
        %v6721 = vpop.f32.mrb[0].mxu0
        %v6722 = vadd.f32 0.0, %v6721
        %v6723 = vpop.f32.mrb[0].mxu0
        %v6724 = vpop.f32.mrb[0].mxu0
        %v6725 = vadd.f32 0.0, %v6724
        %v6726 = vpop.f32.mrb[0].mxu0
        %6727 = vmatprep.mubr.bf16.mxu0 0
        %6728 = vmatmul.mubr.bf16.gmra.mrb[0].mxu0 %v6674
        %v6729 = vpop.f32.mrb[0].mxu0
        %v6730 = vadd.f32 0.0, %v6729
        %v6731 = vpop.f32.mrb[0].mxu0
        %v6732 = vpop.f32.mrb[0].mxu0
        %v6733 = vadd.f32 0.0, %v6732
        %v6734 = vpop.f32.mrb[0].mxu0
        %6735 = vmatprep.mubr.bf16.mxu0 0
        %6736 = vmatmul.mubr.bf16.gmra.mrb[0].mxu0 %v6677
        %v6737 = vpop.f32.mrb[0].mxu0
        %v6738 = vadd.f32 0.0, %v6737
        %v6739 = vpop.f32.mrb[0].mxu0
        %v6740 = vpop.f32.mrb[0].mxu0
        %v6741 = vadd.f32 0.0, %v6740
        %v6742 = vpop.f32.mrb[0].mxu0
        %6743 = vdwg.mxu0
        %v6745 = vsel %vm471, %v6274, 0
        %v6748 = vsel %vm471, %v6275, 0
        %v6751 = vsel %vm471, %v6276, 0
        %v6754 = vsel %vm471, %v6277, 0
        %6756 = vmatprep.subr.bf16.mxu0 0
        %6757 = vmatpush1.bf16.msra.mxu0 %v4731
        %6758 = vmatprep.subr.bf16.mxu0 0
        %6759 = vmatpush1.bf16.msra.mxu0 %v4763
        %6760 = vmatprep.subr.bf16.mxu0 0
        %6761 = vmatpush1.bf16.msra.mxu0 %v4795
        %6762 = vmatprep.subr.bf16.mxu0 0
        %6763 = vmatpush1.bf16.msra.mxu0 %v4827
        %6764 = vmatprep.subr.bf16.mxu0 0
        %6765 = vmatpush1.bf16.msra.mxu0 0
        %6766 = vmatprep.subr.bf16.mxu0 0
        %6767 = vmatpush1.bf16.msra.mxu0 0
        %6768 = vmatprep.subr.bf16.mxu0 0
        %6769 = vmatpush1.bf16.msra.mxu0 0
        %6770 = vmatprep.subr.bf16.mxu0 0
        %6771 = vmatpush1.bf16.msra.mxu0 0
        %6772 = vmatprep.subr.bf16.mxu0 0
        %6773 = vmatpush1.bf16.msra.mxu0 0
        %6774 = vmatprep.subr.bf16.mxu0 0
        %6775 = vmatpush1.bf16.msra.mxu0 0
        %6776 = vmatprep.subr.bf16.mxu0 0
        %6777 = vmatpush1.bf16.msra.mxu0 0
        %6778 = vmatprep.subr.bf16.mxu0 0
        %6779 = vmatpush1.bf16.msra.mxu0 0
        %6780 = vmatprep.subr.bf16.mxu0 0
        %6781 = vmatpush1.bf16.msra.mxu0 0
        %6782 = vmatprep.subr.bf16.mxu0 0
        %6783 = vmatpush1.bf16.msra.mxu0 0
        %6784 = vmatprep.subr.bf16.mxu0 0
        %6785 = vmatpush1.bf16.msra.mxu0 0
        %6786 = vmatprep.subr.bf16.mxu0 0
        %6787 = vmatpush1.bf16.msra.mxu0 0
        %6788 = vmatprep.mubr.bf16.mxu0 0
        %6789 = vmatmul.mubr.bf16.gmra.mrb[0].mxu0 %v6745
        %v6790 = vpop.f32.mrb[0].mxu0
        %v6791 = vadd.f32 0.0, %v6790
        %v6792 = vpop.f32.mrb[0].mxu0
        %v6793 = vpop.f32.mrb[0].mxu0
        %v6794 = vadd.f32 0.0, %v6793
        %v6795 = vpop.f32.mrb[0].mxu0
        %6796 = vmatprep.mubr.bf16.mxu0 0
        %6797 = vmatmul.mubr.bf16.gmra.mrb[0].mxu0 %v6748
        %v6798 = vpop.f32.mrb[0].mxu0
        %v6799 = vadd.f32 0.0, %v6798
        %v6800 = vpop.f32.mrb[0].mxu0
        %v6801 = vpop.f32.mrb[0].mxu0
        %v6802 = vadd.f32 0.0, %v6801
        %v6803 = vpop.f32.mrb[0].mxu0
        %6804 = vmatprep.mubr.bf16.mxu0 0
        %6805 = vmatmul.mubr.bf16.gmra.mrb[0].mxu0 %v6751
        %v6806 = vpop.f32.mrb[0].mxu0
        %v6807 = vadd.f32 0.0, %v6806
        %v6808 = vpop.f32.mrb[0].mxu0
        %v6809 = vpop.f32.mrb[0].mxu0
        %v6810 = vadd.f32 0.0, %v6809
        %v6811 = vpop.f32.mrb[0].mxu0
        %6812 = vmatprep.mubr.bf16.mxu0 0
        %6813 = vmatmul.mubr.bf16.gmra.mrb[0].mxu0 %v6754
        %v6814 = vpop.f32.mrb[0].mxu0
        %v6815 = vadd.f32 0.0, %v6814
        %v6816 = vpop.f32.mrb[0].mxu0
        %v6817 = vpop.f32.mrb[0].mxu0
        %v6818 = vadd.f32 0.0, %v6817
        %v6819 = vpop.f32.mrb[0].mxu0
        %6820 = vdwg.mxu0
        %v6822 = vsel %vm471, %v6278, 0
        %v6825 = vsel %vm471, %v6279, 0
        %v6828 = vsel %vm471, %v6280, 0
        %v6831 = vsel %vm471, %v6281, 0
        %6833 = vmatprep.subr.bf16.mxu0 0
        %6834 = vmatpush1.bf16.msra.mxu0 %v4735
        %6835 = vmatprep.subr.bf16.mxu0 0
        %6836 = vmatpush1.bf16.msra.mxu0 %v4767
        %6837 = vmatprep.subr.bf16.mxu0 0
        %6838 = vmatpush1.bf16.msra.mxu0 %v4799
        %6839 = vmatprep.subr.bf16.mxu0 0
        %6840 = vmatpush1.bf16.msra.mxu0 %v4831
        %6841 = vmatprep.subr.bf16.mxu0 0
        %6842 = vmatpush1.bf16.msra.mxu0 0
        %6843 = vmatprep.subr.bf16.mxu0 0
        %6844 = vmatpush1.bf16.msra.mxu0 0
        %6845 = vmatprep.subr.bf16.mxu0 0
        %6846 = vmatpush1.bf16.msra.mxu0 0
        %6847 = vmatprep.subr.bf16.mxu0 0
        %6848 = vmatpush1.bf16.msra.mxu0 0
        %6849 = vmatprep.subr.bf16.mxu0 0
        %6850 = vmatpush1.bf16.msra.mxu0 0
        %6851 = vmatprep.subr.bf16.mxu0 0
        %6852 = vmatpush1.bf16.msra.mxu0 0
        %6853 = vmatprep.subr.bf16.mxu0 0
        %6854 = vmatpush1.bf16.msra.mxu0 0
        %6855 = vmatprep.subr.bf16.mxu0 0
        %6856 = vmatpush1.bf16.msra.mxu0 0
        %6857 = vmatprep.subr.bf16.mxu0 0
        %6858 = vmatpush1.bf16.msra.mxu0 0
        %6859 = vmatprep.subr.bf16.mxu0 0
        %6860 = vmatpush1.bf16.msra.mxu0 0
        %6861 = vmatprep.subr.bf16.mxu0 0
        %6862 = vmatpush1.bf16.msra.mxu0 0
        %6863 = vmatprep.subr.bf16.mxu0 0
        %6864 = vmatpush1.bf16.msra.mxu0 0
        %6865 = vmatprep.mubr.bf16.mxu0 0
        %6866 = vmatmul.mubr.bf16.gmra.mrb[0].mxu0 %v6822
        %v6867 = vpop.f32.mrb[0].mxu0
        %v6868 = vadd.f32 0.0, %v6867
        %v6869 = vpop.f32.mrb[0].mxu0
        %v6870 = vpop.f32.mrb[0].mxu0
        %v6871 = vadd.f32 0.0, %v6870
        %v6872 = vpop.f32.mrb[0].mxu0
        %6873 = vmatprep.mubr.bf16.mxu0 0
        %6874 = vmatmul.mubr.bf16.gmra.mrb[0].mxu0 %v6825
        %v6875 = vpop.f32.mrb[0].mxu0
        %v6876 = vadd.f32 0.0, %v6875
        %v6877 = vpop.f32.mrb[0].mxu0
        %v6878 = vpop.f32.mrb[0].mxu0
        %v6879 = vadd.f32 0.0, %v6878
        %v6880 = vpop.f32.mrb[0].mxu0
        %6881 = vmatprep.mubr.bf16.mxu0 0
        %6882 = vmatmul.mubr.bf16.gmra.mrb[0].mxu0 %v6828
        %v6883 = vpop.f32.mrb[0].mxu0
        %v6884 = vadd.f32 0.0, %v6883
        %v6885 = vpop.f32.mrb[0].mxu0
        %v6886 = vpop.f32.mrb[0].mxu0
        %v6887 = vadd.f32 0.0, %v6886
        %v6888 = vpop.f32.mrb[0].mxu0
        %6889 = vmatprep.mubr.bf16.mxu0 0
        %6890 = vmatmul.mubr.bf16.gmra.mrb[0].mxu0 %v6831
        %v6891 = vpop.f32.mrb[0].mxu0
        %v6892 = vadd.f32 0.0, %v6891
        %v6893 = vpop.f32.mrb[0].mxu0
        %v6894 = vpop.f32.mrb[0].mxu0
        %v6895 = vadd.f32 0.0, %v6894
        %v6896 = vpop.f32.mrb[0].mxu0
        %6897 = vdwg.mxu0
        %v6898 = vpack.c.bf16 %v6332, %v6329
        %v6899 = vpack.c.bf16 %v6340, %v6337
        %v6900 = vpack.c.bf16 %v6348, %v6345
        %v6901 = vpack.c.bf16 %v6356, %v6353
        %v6902 = vpack.c.bf16 %v6409, %v6406
        %v6903 = vpack.c.bf16 %v6417, %v6414
        %v6904 = vpack.c.bf16 %v6425, %v6422
        %v6905 = vpack.c.bf16 %v6433, %v6430
        %v6906 = vpack.c.bf16 %v6486, %v6483
        %v6907 = vpack.c.bf16 %v6494, %v6491
        %v6908 = vpack.c.bf16 %v6502, %v6499
        %v6909 = vpack.c.bf16 %v6510, %v6507
        %v6910 = vpack.c.bf16 %v6563, %v6560
        %v6911 = vpack.c.bf16 %v6571, %v6568
        %v6912 = vpack.c.bf16 %v6579, %v6576
        %v6913 = vpack.c.bf16 %v6587, %v6584
        %v6914 = vpack.c.bf16 %v6640, %v6637
        %v6915 = vpack.c.bf16 %v6648, %v6645
        %v6916 = vpack.c.bf16 %v6656, %v6653
        %v6917 = vpack.c.bf16 %v6664, %v6661
        %v6918 = vpack.c.bf16 %v6717, %v6714
        %v6919 = vpack.c.bf16 %v6725, %v6722
        %v6920 = vpack.c.bf16 %v6733, %v6730
        %v6921 = vpack.c.bf16 %v6741, %v6738
        %v6922 = vpack.c.bf16 %v6794, %v6791
        %v6923 = vpack.c.bf16 %v6802, %v6799
        %v6924 = vpack.c.bf16 %v6810, %v6807
        %v6925 = vpack.c.bf16 %v6818, %v6815
        %v6926 = vpack.c.bf16 %v6871, %v6868
        %v6927 = vpack.c.bf16 %v6879, %v6876
        %v6928 = vpack.c.bf16 %v6887, %v6884
        %v6929 = vpack.c.bf16 %v6895, %v6892
        %v6932 = vpack.i.b16 %v6902, %v6898
        %v6934 = vshrl.u32 %v6898, 16
        %v6935 = vshrl.u32 %v6902, 16
        %v6936 = vpack.i.b16 %v6935, %v6934
        %v6940 = vpack.i.b16 %v6910, %v6906
        %v6942 = vshrl.u32 %v6906, 16
        %v6943 = vshrl.u32 %v6910, 16
        %v6944 = vpack.i.b16 %v6943, %v6942
        %v6948 = vpack.i.b16 %v6918, %v6914
        %v6950 = vshrl.u32 %v6914, 16
        %v6951 = vshrl.u32 %v6918, 16
        %v6952 = vpack.i.b16 %v6951, %v6950
        %v6956 = vpack.i.b16 %v6926, %v6922
        %v6958 = vshrl.u32 %v6922, 16
        %v6959 = vshrl.u32 %v6926, 16
        %v6960 = vpack.i.b16 %v6959, %v6958
        %v6964 = vpack.i.b16 %v6903, %v6899
        %v6966 = vshrl.u32 %v6899, 16
        %v6967 = vshrl.u32 %v6903, 16
        %v6968 = vpack.i.b16 %v6967, %v6966
        %v6972 = vpack.i.b16 %v6911, %v6907
        %v6974 = vshrl.u32 %v6907, 16
        %v6975 = vshrl.u32 %v6911, 16
        %v6976 = vpack.i.b16 %v6975, %v6974
        %v6980 = vpack.i.b16 %v6919, %v6915
        %v6982 = vshrl.u32 %v6915, 16
        %v6983 = vshrl.u32 %v6919, 16
        %v6984 = vpack.i.b16 %v6983, %v6982
        %v6988 = vpack.i.b16 %v6927, %v6923
        %v6990 = vshrl.u32 %v6923, 16
        %v6991 = vshrl.u32 %v6927, 16
        %v6992 = vpack.i.b16 %v6991, %v6990
        %v6996 = vpack.i.b16 %v6904, %v6900
        %v6998 = vshrl.u32 %v6900, 16
        %v6999 = vshrl.u32 %v6904, 16
        %v7000 = vpack.i.b16 %v6999, %v6998
        %v7004 = vpack.i.b16 %v6912, %v6908
        %v7006 = vshrl.u32 %v6908, 16
        %v7007 = vshrl.u32 %v6912, 16
        %v7008 = vpack.i.b16 %v7007, %v7006
        %v7012 = vpack.i.b16 %v6920, %v6916
        %v7014 = vshrl.u32 %v6916, 16
        %v7015 = vshrl.u32 %v6920, 16
        %v7016 = vpack.i.b16 %v7015, %v7014
        %v7020 = vpack.i.b16 %v6928, %v6924
        %v7022 = vshrl.u32 %v6924, 16
        %v7023 = vshrl.u32 %v6928, 16
        %v7024 = vpack.i.b16 %v7023, %v7022
        %v7028 = vpack.i.b16 %v6905, %v6901
        %v7030 = vshrl.u32 %v6901, 16
        %v7031 = vshrl.u32 %v6905, 16
        %v7032 = vpack.i.b16 %v7031, %v7030
        %v7036 = vpack.i.b16 %v6913, %v6909
        %v7038 = vshrl.u32 %v6909, 16
        %v7039 = vshrl.u32 %v6913, 16
        %v7040 = vpack.i.b16 %v7039, %v7038
        %v7044 = vpack.i.b16 %v6921, %v6917
        %v7046 = vshrl.u32 %v6917, 16
        %v7047 = vshrl.u32 %v6921, 16
        %v7048 = vpack.i.b16 %v7047, %v7046
        %v7052 = vpack.i.b16 %v6929, %v6925
        %v7054 = vshrl.u32 %v6925, 16
        %v7055 = vshrl.u32 %v6929, 16
        %v7056 = vpack.i.b16 %v7055, %v7054
        %v7058 = vcombine.low %v6932, %v6948
        %v7059 = vcombine.high %v6932, %v6948
        %v7061 = vunpack.c.l.s4 1983009808
        %v7062 = vunpack.c.0.s8 %v7061
        %v7063 = vlaneseq
        %v7064 = vshrl.u32 %v7063, 7
        %v7065 = vsub.s32 %v7062, %v7064
        %v7066 = vrot.slane %v7058, %v7065
        %v7068 = vunpack.c.l.s4 1983009808
        %v7069 = vunpack.c.0.s8 %v7068
        %v7070 = vlaneseq
        %v7071 = vshrl.u32 %v7070, 7
        %v7072 = vsub.s32 %v7069, %v7071
        %v7073 = vrot.slane %v7059, %v7072
        %v7074 = vcombine.low %v6940, %v6956
        %v7075 = vcombine.high %v6940, %v6956
        %v7077 = vunpack.c.l.s4 1983009808
        %v7078 = vunpack.c.0.s8 %v7077
        %v7079 = vlaneseq
        %v7080 = vshrl.u32 %v7079, 7
        %v7081 = vsub.s32 %v7078, %v7080
        %v7082 = vrot.slane %v7074, %v7081
        %v7084 = vunpack.c.l.s4 1983009808
        %v7085 = vunpack.c.0.s8 %v7084
        %v7086 = vlaneseq
        %v7087 = vshrl.u32 %v7086, 7
        %v7088 = vsub.s32 %v7085, %v7087
        %v7089 = vrot.slane %v7075, %v7088
        %v7090 = vcombine.low %v7066, %v7082
        %v7091 = vcombine.high %v7066, %v7082
        %v7093 = vunpack.c.l.s4 1934713408
        %v7094 = vunpack.c.0.s8 %v7093
        %v7095 = vlaneseq
        %v7096 = vshrl.u32 %v7095, 7
        %v7097 = vsub.s32 %v7094, %v7096
        %v7098 = vrot.slane %v7090, %v7097
        %v7100 = vunpack.c.l.s4 1934713408
        %v7101 = vunpack.c.0.s8 %v7100
        %v7102 = vlaneseq
        %v7103 = vshrl.u32 %v7102, 7
        %v7104 = vsub.s32 %v7101, %v7103
        %v7105 = vrot.slane %v7091, %v7104
        %v7106 = vcombine.low %v7073, %v7089
        %v7107 = vcombine.high %v7073, %v7089
        %v7109 = vunpack.c.l.s4 1934713408
        %v7110 = vunpack.c.0.s8 %v7109
        %v7111 = vlaneseq
        %v7112 = vshrl.u32 %v7111, 7
        %v7113 = vsub.s32 %v7110, %v7112
        %v7114 = vrot.slane %v7106, %v7113
        %v7116 = vunpack.c.l.s4 1934713408
        %v7117 = vunpack.c.0.s8 %v7116
        %v7118 = vlaneseq
        %v7119 = vshrl.u32 %v7118, 7
        %v7120 = vsub.s32 %v7117, %v7119
        %v7121 = vrot.slane %v7107, %v7120
        %v7122 = vcombine.high %v7098, 0
        %v7123 = vcombine.high %v7105, 0
        %v7124 = vcombine.high %v7114, 0
        %v7125 = vcombine.high %v7121, 0
        %v7126 = vcombine.low %v6936, %v6952
        %v7127 = vcombine.high %v6936, %v6952
        %v7129 = vunpack.c.l.s4 1983009808
        %v7130 = vunpack.c.0.s8 %v7129
        %v7131 = vlaneseq
        %v7132 = vshrl.u32 %v7131, 7
        %v7133 = vsub.s32 %v7130, %v7132
        %v7134 = vrot.slane %v7126, %v7133
        %v7136 = vunpack.c.l.s4 1983009808
        %v7137 = vunpack.c.0.s8 %v7136
        %v7138 = vlaneseq
        %v7139 = vshrl.u32 %v7138, 7
        %v7140 = vsub.s32 %v7137, %v7139
        %v7141 = vrot.slane %v7127, %v7140
        %v7142 = vcombine.low %v6944, %v6960
        %v7143 = vcombine.high %v6944, %v6960
        %v7145 = vunpack.c.l.s4 1983009808
        %v7146 = vunpack.c.0.s8 %v7145
        %v7147 = vlaneseq
        %v7148 = vshrl.u32 %v7147, 7
        %v7149 = vsub.s32 %v7146, %v7148
        %v7150 = vrot.slane %v7142, %v7149
        %v7152 = vunpack.c.l.s4 1983009808
        %v7153 = vunpack.c.0.s8 %v7152
        %v7154 = vlaneseq
        %v7155 = vshrl.u32 %v7154, 7
        %v7156 = vsub.s32 %v7153, %v7155
        %v7157 = vrot.slane %v7143, %v7156
        %v7158 = vcombine.low %v7134, %v7150
        %v7159 = vcombine.high %v7134, %v7150
        %v7161 = vunpack.c.l.s4 1934713408
        %v7162 = vunpack.c.0.s8 %v7161
        %v7163 = vlaneseq
        %v7164 = vshrl.u32 %v7163, 7
        %v7165 = vsub.s32 %v7162, %v7164
        %v7166 = vrot.slane %v7158, %v7165
        %v7168 = vunpack.c.l.s4 1934713408
        %v7169 = vunpack.c.0.s8 %v7168
        %v7170 = vlaneseq
        %v7171 = vshrl.u32 %v7170, 7
        %v7172 = vsub.s32 %v7169, %v7171
        %v7173 = vrot.slane %v7159, %v7172
        %v7174 = vcombine.low %v7141, %v7157
        %v7175 = vcombine.high %v7141, %v7157
        %v7177 = vunpack.c.l.s4 1934713408
        %v7178 = vunpack.c.0.s8 %v7177
        %v7179 = vlaneseq
        %v7180 = vshrl.u32 %v7179, 7
        %v7181 = vsub.s32 %v7178, %v7180
        %v7182 = vrot.slane %v7174, %v7181
        %v7184 = vunpack.c.l.s4 1934713408
        %v7185 = vunpack.c.0.s8 %v7184
        %v7186 = vlaneseq
        %v7187 = vshrl.u32 %v7186, 7
        %v7188 = vsub.s32 %v7185, %v7187
        %v7189 = vrot.slane %v7175, %v7188
        %v7190 = vcombine.high %v7166, 0
        %v7191 = vcombine.high %v7173, 0
        %v7192 = vcombine.high %v7182, 0
        %v7193 = vcombine.high %v7189, 0
        %v7194 = vcombine.low %v6964, %v6980
        %v7195 = vcombine.high %v6964, %v6980
        %v7197 = vunpack.c.l.s4 1983009808
        %v7198 = vunpack.c.0.s8 %v7197
        %v7199 = vlaneseq
        %v7200 = vshrl.u32 %v7199, 7
        %v7201 = vsub.s32 %v7198, %v7200
        %v7202 = vrot.slane %v7194, %v7201
        %v7204 = vunpack.c.l.s4 1983009808
        %v7205 = vunpack.c.0.s8 %v7204
        %v7206 = vlaneseq
        %v7207 = vshrl.u32 %v7206, 7
        %v7208 = vsub.s32 %v7205, %v7207
        %v7209 = vrot.slane %v7195, %v7208
        %v7210 = vcombine.low %v6972, %v6988
        %v7211 = vcombine.high %v6972, %v6988
        %v7213 = vunpack.c.l.s4 1983009808
        %v7214 = vunpack.c.0.s8 %v7213
        %v7215 = vlaneseq
        %v7216 = vshrl.u32 %v7215, 7
        %v7217 = vsub.s32 %v7214, %v7216
        %v7218 = vrot.slane %v7210, %v7217
        %v7220 = vunpack.c.l.s4 1983009808
        %v7221 = vunpack.c.0.s8 %v7220
        %v7222 = vlaneseq
        %v7223 = vshrl.u32 %v7222, 7
        %v7224 = vsub.s32 %v7221, %v7223
        %v7225 = vrot.slane %v7211, %v7224
        %v7226 = vcombine.low %v7202, %v7218
        %v7227 = vcombine.high %v7202, %v7218
        %v7229 = vunpack.c.l.s4 1934713408
        %v7230 = vunpack.c.0.s8 %v7229
        %v7231 = vlaneseq
        %v7232 = vshrl.u32 %v7231, 7
        %v7233 = vsub.s32 %v7230, %v7232
        %v7234 = vrot.slane %v7226, %v7233
        %v7236 = vunpack.c.l.s4 1934713408
        %v7237 = vunpack.c.0.s8 %v7236
        %v7238 = vlaneseq
        %v7239 = vshrl.u32 %v7238, 7
        %v7240 = vsub.s32 %v7237, %v7239
        %v7241 = vrot.slane %v7227, %v7240
        %v7242 = vcombine.low %v7209, %v7225
        %v7243 = vcombine.high %v7209, %v7225
        %v7245 = vunpack.c.l.s4 1934713408
        %v7246 = vunpack.c.0.s8 %v7245
        %v7247 = vlaneseq
        %v7248 = vshrl.u32 %v7247, 7
        %v7249 = vsub.s32 %v7246, %v7248
        %v7250 = vrot.slane %v7242, %v7249
        %v7252 = vunpack.c.l.s4 1934713408
        %v7253 = vunpack.c.0.s8 %v7252
        %v7254 = vlaneseq
        %v7255 = vshrl.u32 %v7254, 7
        %v7256 = vsub.s32 %v7253, %v7255
        %v7257 = vrot.slane %v7243, %v7256
        %v7258 = vcombine.high %v7234, 0
        %v7259 = vcombine.high %v7241, 0
        %v7260 = vcombine.high %v7250, 0
        %v7261 = vcombine.high %v7257, 0
        %v7262 = vcombine.low %v6968, %v6984
        %v7263 = vcombine.high %v6968, %v6984
        %v7265 = vunpack.c.l.s4 1983009808
        %v7266 = vunpack.c.0.s8 %v7265
        %v7267 = vlaneseq
        %v7268 = vshrl.u32 %v7267, 7
        %v7269 = vsub.s32 %v7266, %v7268
        %v7270 = vrot.slane %v7262, %v7269
        %v7272 = vunpack.c.l.s4 1983009808
        %v7273 = vunpack.c.0.s8 %v7272
        %v7274 = vlaneseq
        %v7275 = vshrl.u32 %v7274, 7
        %v7276 = vsub.s32 %v7273, %v7275
        %v7277 = vrot.slane %v7263, %v7276
        %v7278 = vcombine.low %v6976, %v6992
        %v7279 = vcombine.high %v6976, %v6992
        %v7281 = vunpack.c.l.s4 1983009808
        %v7282 = vunpack.c.0.s8 %v7281
        %v7283 = vlaneseq
        %v7284 = vshrl.u32 %v7283, 7
        %v7285 = vsub.s32 %v7282, %v7284
        %v7286 = vrot.slane %v7278, %v7285
        %v7288 = vunpack.c.l.s4 1983009808
        %v7289 = vunpack.c.0.s8 %v7288
        %v7290 = vlaneseq
        %v7291 = vshrl.u32 %v7290, 7
        %v7292 = vsub.s32 %v7289, %v7291
        %v7293 = vrot.slane %v7279, %v7292
        %v7294 = vcombine.low %v7270, %v7286
        %v7295 = vcombine.high %v7270, %v7286
        %v7297 = vunpack.c.l.s4 1934713408
        %v7298 = vunpack.c.0.s8 %v7297
        %v7299 = vlaneseq
        %v7300 = vshrl.u32 %v7299, 7
        %v7301 = vsub.s32 %v7298, %v7300
        %v7302 = vrot.slane %v7294, %v7301
        %v7304 = vunpack.c.l.s4 1934713408
        %v7305 = vunpack.c.0.s8 %v7304
        %v7306 = vlaneseq
        %v7307 = vshrl.u32 %v7306, 7
        %v7308 = vsub.s32 %v7305, %v7307
        %v7309 = vrot.slane %v7295, %v7308
        %v7310 = vcombine.low %v7277, %v7293
        %v7311 = vcombine.high %v7277, %v7293
        %v7313 = vunpack.c.l.s4 1934713408
        %v7314 = vunpack.c.0.s8 %v7313
        %v7315 = vlaneseq
        %v7316 = vshrl.u32 %v7315, 7
        %v7317 = vsub.s32 %v7314, %v7316
        %v7318 = vrot.slane %v7310, %v7317
        %v7320 = vunpack.c.l.s4 1934713408
        %v7321 = vunpack.c.0.s8 %v7320
        %v7322 = vlaneseq
        %v7323 = vshrl.u32 %v7322, 7
        %v7324 = vsub.s32 %v7321, %v7323
        %v7325 = vrot.slane %v7311, %v7324
        %v7326 = vcombine.high %v7302, 0
        %v7327 = vcombine.high %v7309, 0
        %v7328 = vcombine.high %v7318, 0
        %v7329 = vcombine.high %v7325, 0
        %v7330 = vcombine.low %v6996, %v7012
        %v7331 = vcombine.high %v6996, %v7012
        %v7333 = vunpack.c.l.s4 1983009808
        %v7334 = vunpack.c.0.s8 %v7333
        %v7335 = vlaneseq
        %v7336 = vshrl.u32 %v7335, 7
        %v7337 = vsub.s32 %v7334, %v7336
        %v7338 = vrot.slane %v7330, %v7337
        %v7340 = vunpack.c.l.s4 1983009808
        %v7341 = vunpack.c.0.s8 %v7340
        %v7342 = vlaneseq
        %v7343 = vshrl.u32 %v7342, 7
        %v7344 = vsub.s32 %v7341, %v7343
        %v7345 = vrot.slane %v7331, %v7344
        %v7346 = vcombine.low %v7004, %v7020
        %v7347 = vcombine.high %v7004, %v7020
        %v7349 = vunpack.c.l.s4 1983009808
        %v7350 = vunpack.c.0.s8 %v7349
        %v7351 = vlaneseq
        %v7352 = vshrl.u32 %v7351, 7
        %v7353 = vsub.s32 %v7350, %v7352
        %v7354 = vrot.slane %v7346, %v7353
        %v7356 = vunpack.c.l.s4 1983009808
        %v7357 = vunpack.c.0.s8 %v7356
        %v7358 = vlaneseq
        %v7359 = vshrl.u32 %v7358, 7
        %v7360 = vsub.s32 %v7357, %v7359
        %v7361 = vrot.slane %v7347, %v7360
        %v7362 = vcombine.low %v7338, %v7354
        %v7363 = vcombine.high %v7338, %v7354
        %v7365 = vunpack.c.l.s4 1934713408
        %v7366 = vunpack.c.0.s8 %v7365
        %v7367 = vlaneseq
        %v7368 = vshrl.u32 %v7367, 7
        %v7369 = vsub.s32 %v7366, %v7368
        %v7370 = vrot.slane %v7362, %v7369
        %v7372 = vunpack.c.l.s4 1934713408
        %v7373 = vunpack.c.0.s8 %v7372
        %v7374 = vlaneseq
        %v7375 = vshrl.u32 %v7374, 7
        %v7376 = vsub.s32 %v7373, %v7375
        %v7377 = vrot.slane %v7363, %v7376
        %v7378 = vcombine.low %v7345, %v7361
        %v7379 = vcombine.high %v7345, %v7361
        %v7381 = vunpack.c.l.s4 1934713408
        %v7382 = vunpack.c.0.s8 %v7381
        %v7383 = vlaneseq
        %v7384 = vshrl.u32 %v7383, 7
        %v7385 = vsub.s32 %v7382, %v7384
        %v7386 = vrot.slane %v7378, %v7385
        %v7388 = vunpack.c.l.s4 1934713408
        %v7389 = vunpack.c.0.s8 %v7388
        %v7390 = vlaneseq
        %v7391 = vshrl.u32 %v7390, 7
        %v7392 = vsub.s32 %v7389, %v7391
        %v7393 = vrot.slane %v7379, %v7392
        %v7394 = vcombine.high %v7370, 0
        %v7395 = vcombine.high %v7377, 0
        %v7396 = vcombine.high %v7386, 0
        %v7397 = vcombine.high %v7393, 0
        %v7398 = vcombine.low %v7000, %v7016
        %v7399 = vcombine.high %v7000, %v7016
        %v7401 = vunpack.c.l.s4 1983009808
        %v7402 = vunpack.c.0.s8 %v7401
        %v7403 = vlaneseq
        %v7404 = vshrl.u32 %v7403, 7
        %v7405 = vsub.s32 %v7402, %v7404
        %v7406 = vrot.slane %v7398, %v7405
        %v7408 = vunpack.c.l.s4 1983009808
        %v7409 = vunpack.c.0.s8 %v7408
        %v7410 = vlaneseq
        %v7411 = vshrl.u32 %v7410, 7
        %v7412 = vsub.s32 %v7409, %v7411
        %v7413 = vrot.slane %v7399, %v7412
        %v7414 = vcombine.low %v7008, %v7024
        %v7415 = vcombine.high %v7008, %v7024
        %v7417 = vunpack.c.l.s4 1983009808
        %v7418 = vunpack.c.0.s8 %v7417
        %v7419 = vlaneseq
        %v7420 = vshrl.u32 %v7419, 7
        %v7421 = vsub.s32 %v7418, %v7420
        %v7422 = vrot.slane %v7414, %v7421
        %v7424 = vunpack.c.l.s4 1983009808
        %v7425 = vunpack.c.0.s8 %v7424
        %v7426 = vlaneseq
        %v7427 = vshrl.u32 %v7426, 7
        %v7428 = vsub.s32 %v7425, %v7427
        %v7429 = vrot.slane %v7415, %v7428
        %v7430 = vcombine.low %v7406, %v7422
        %v7431 = vcombine.high %v7406, %v7422
        %v7433 = vunpack.c.l.s4 1934713408
        %v7434 = vunpack.c.0.s8 %v7433
        %v7435 = vlaneseq
        %v7436 = vshrl.u32 %v7435, 7
        %v7437 = vsub.s32 %v7434, %v7436
        %v7438 = vrot.slane %v7430, %v7437
        %v7440 = vunpack.c.l.s4 1934713408
        %v7441 = vunpack.c.0.s8 %v7440
        %v7442 = vlaneseq
        %v7443 = vshrl.u32 %v7442, 7
        %v7444 = vsub.s32 %v7441, %v7443
        %v7445 = vrot.slane %v7431, %v7444
        %v7446 = vcombine.low %v7413, %v7429
        %v7447 = vcombine.high %v7413, %v7429
        %v7449 = vunpack.c.l.s4 1934713408
        %v7450 = vunpack.c.0.s8 %v7449
        %v7451 = vlaneseq
        %v7452 = vshrl.u32 %v7451, 7
        %v7453 = vsub.s32 %v7450, %v7452
        %v7454 = vrot.slane %v7446, %v7453
        %v7456 = vunpack.c.l.s4 1934713408
        %v7457 = vunpack.c.0.s8 %v7456
        %v7458 = vlaneseq
        %v7459 = vshrl.u32 %v7458, 7
        %v7460 = vsub.s32 %v7457, %v7459
        %v7461 = vrot.slane %v7447, %v7460
        %v7462 = vcombine.high %v7438, 0
        %v7463 = vcombine.high %v7445, 0
        %v7464 = vcombine.high %v7454, 0
        %v7465 = vcombine.high %v7461, 0
        %v7466 = vcombine.low %v7028, %v7044
        %v7467 = vcombine.high %v7028, %v7044
        %v7469 = vunpack.c.l.s4 1983009808
        %v7470 = vunpack.c.0.s8 %v7469
        %v7471 = vlaneseq
        %v7472 = vshrl.u32 %v7471, 7
        %v7473 = vsub.s32 %v7470, %v7472
        %v7474 = vrot.slane %v7466, %v7473
        %v7476 = vunpack.c.l.s4 1983009808
        %v7477 = vunpack.c.0.s8 %v7476
        %v7478 = vlaneseq
        %v7479 = vshrl.u32 %v7478, 7
        %v7480 = vsub.s32 %v7477, %v7479
        %v7481 = vrot.slane %v7467, %v7480
        %v7482 = vcombine.low %v7036, %v7052
        %v7483 = vcombine.high %v7036, %v7052
        %v7485 = vunpack.c.l.s4 1983009808
        %v7486 = vunpack.c.0.s8 %v7485
        %v7487 = vlaneseq
        %v7488 = vshrl.u32 %v7487, 7
        %v7489 = vsub.s32 %v7486, %v7488
        %v7490 = vrot.slane %v7482, %v7489
        %v7492 = vunpack.c.l.s4 1983009808
        %v7493 = vunpack.c.0.s8 %v7492
        %v7494 = vlaneseq
        %v7495 = vshrl.u32 %v7494, 7
        %v7496 = vsub.s32 %v7493, %v7495
        %v7497 = vrot.slane %v7483, %v7496
        %v7498 = vcombine.low %v7474, %v7490
        %v7499 = vcombine.high %v7474, %v7490
        %v7501 = vunpack.c.l.s4 1934713408
        %v7502 = vunpack.c.0.s8 %v7501
        %v7503 = vlaneseq
        %v7504 = vshrl.u32 %v7503, 7
        %v7505 = vsub.s32 %v7502, %v7504
        %v7506 = vrot.slane %v7498, %v7505
        %v7508 = vunpack.c.l.s4 1934713408
        %v7509 = vunpack.c.0.s8 %v7508
        %v7510 = vlaneseq
        %v7511 = vshrl.u32 %v7510, 7
        %v7512 = vsub.s32 %v7509, %v7511
        %v7513 = vrot.slane %v7499, %v7512
        %v7514 = vcombine.low %v7481, %v7497
        %v7515 = vcombine.high %v7481, %v7497
        %v7517 = vunpack.c.l.s4 1934713408
        %v7518 = vunpack.c.0.s8 %v7517
        %v7519 = vlaneseq
        %v7520 = vshrl.u32 %v7519, 7
        %v7521 = vsub.s32 %v7518, %v7520
        %v7522 = vrot.slane %v7514, %v7521
        %v7524 = vunpack.c.l.s4 1934713408
        %v7525 = vunpack.c.0.s8 %v7524
        %v7526 = vlaneseq
        %v7527 = vshrl.u32 %v7526, 7
        %v7528 = vsub.s32 %v7525, %v7527
        %v7529 = vrot.slane %v7515, %v7528
        %v7530 = vcombine.high %v7506, 0
        %v7531 = vcombine.high %v7513, 0
        %v7532 = vcombine.high %v7522, 0
        %v7533 = vcombine.high %v7529, 0
        %v7534 = vcombine.low %v7032, %v7048
        %v7535 = vcombine.high %v7032, %v7048
        %v7537 = vunpack.c.l.s4 1983009808
        %v7538 = vunpack.c.0.s8 %v7537
        %v7539 = vlaneseq
        %v7540 = vshrl.u32 %v7539, 7
        %v7541 = vsub.s32 %v7538, %v7540
        %v7542 = vrot.slane %v7534, %v7541
        %v7544 = vunpack.c.l.s4 1983009808
        %v7545 = vunpack.c.0.s8 %v7544
        %v7546 = vlaneseq
        %v7547 = vshrl.u32 %v7546, 7
        %v7548 = vsub.s32 %v7545, %v7547
        %v7549 = vrot.slane %v7535, %v7548
        %v7550 = vcombine.low %v7040, %v7056
        %v7551 = vcombine.high %v7040, %v7056
        %v7553 = vunpack.c.l.s4 1983009808
        %v7554 = vunpack.c.0.s8 %v7553
        %v7555 = vlaneseq
        %v7556 = vshrl.u32 %v7555, 7
        %v7557 = vsub.s32 %v7554, %v7556
        %v7558 = vrot.slane %v7550, %v7557
        %v7560 = vunpack.c.l.s4 1983009808
        %v7561 = vunpack.c.0.s8 %v7560
        %v7562 = vlaneseq
        %v7563 = vshrl.u32 %v7562, 7
        %v7564 = vsub.s32 %v7561, %v7563
        %v7565 = vrot.slane %v7551, %v7564
        %v7566 = vcombine.low %v7542, %v7558
        %v7567 = vcombine.high %v7542, %v7558
        %v7569 = vunpack.c.l.s4 1934713408
        %v7570 = vunpack.c.0.s8 %v7569
        %v7571 = vlaneseq
        %v7572 = vshrl.u32 %v7571, 7
        %v7573 = vsub.s32 %v7570, %v7572
        %v7574 = vrot.slane %v7566, %v7573
        %v7576 = vunpack.c.l.s4 1934713408
        %v7577 = vunpack.c.0.s8 %v7576
        %v7578 = vlaneseq
        %v7579 = vshrl.u32 %v7578, 7
        %v7580 = vsub.s32 %v7577, %v7579
        %v7581 = vrot.slane %v7567, %v7580
        %v7582 = vcombine.low %v7549, %v7565
        %v7583 = vcombine.high %v7549, %v7565
        %v7585 = vunpack.c.l.s4 1934713408
        %v7586 = vunpack.c.0.s8 %v7585
        %v7587 = vlaneseq
        %v7588 = vshrl.u32 %v7587, 7
        %v7589 = vsub.s32 %v7586, %v7588
        %v7590 = vrot.slane %v7582, %v7589
        %v7592 = vunpack.c.l.s4 1934713408
        %v7593 = vunpack.c.0.s8 %v7592
        %v7594 = vlaneseq
        %v7595 = vshrl.u32 %v7594, 7
        %v7596 = vsub.s32 %v7593, %v7595
        %v7597 = vrot.slane %v7583, %v7596
        %v7598 = vcombine.high %v7574, 0
        %v7599 = vcombine.high %v7581, 0
        %v7600 = vcombine.high %v7590, 0
        %v7601 = vcombine.high %v7597, 0
        %v7602 = vcombine.low %v7098, %v7105
        %v7604 = vunpack.c.l.s4 1983009808
        %v7605 = vunpack.c.0.s8 %v7604
        %v7606 = vlaneseq
        %v7607 = vshrl.u32 %v7606, 7
        %v7608 = vsub.s32 %v7605, %v7607
        %v7609 = vrot.slane %v7602, %v7608
        %v7610 = vcombine.low %v7122, %v7123
        %v7612 = vunpack.c.l.s4 1983009808
        %v7613 = vunpack.c.0.s8 %v7612
        %v7614 = vlaneseq
        %v7615 = vshrl.u32 %v7614, 7
        %v7616 = vsub.s32 %v7613, %v7615
        %v7617 = vrot.slane %v7610, %v7616
        %v7618 = vcombine.low %v7114, %v7121
        %v7620 = vunpack.c.l.s4 1983009808
        %v7621 = vunpack.c.0.s8 %v7620
        %v7622 = vlaneseq
        %v7623 = vshrl.u32 %v7622, 7
        %v7624 = vsub.s32 %v7621, %v7623
        %v7625 = vrot.slane %v7618, %v7624
        %v7626 = vcombine.low %v7124, %v7125
        %v7628 = vunpack.c.l.s4 1983009808
        %v7629 = vunpack.c.0.s8 %v7628
        %v7630 = vlaneseq
        %v7631 = vshrl.u32 %v7630, 7
        %v7632 = vsub.s32 %v7629, %v7631
        %v7633 = vrot.slane %v7626, %v7632
        %v7634 = vcombine.low %v7609, %v7617
        %v7635 = vcombine.high %v7609, %v7617
        %v7637 = vunpack.c.l.s4 1934713408
        %v7638 = vunpack.c.0.s8 %v7637
        %v7639 = vlaneseq
        %v7640 = vshrl.u32 %v7639, 7
        %v7641 = vsub.s32 %v7638, %v7640
        %v7642 = vrot.slane %v7634, %v7641
        %v7644 = vunpack.c.l.s4 1934713408
        %v7645 = vunpack.c.0.s8 %v7644
        %v7646 = vlaneseq
        %v7647 = vshrl.u32 %v7646, 7
        %v7648 = vsub.s32 %v7645, %v7647
        %v7649 = vrot.slane %v7635, %v7648
        %v7650 = vcombine.low %v7625, %v7633
        %v7651 = vcombine.high %v7625, %v7633
        %v7653 = vunpack.c.l.s4 1934713408
        %v7654 = vunpack.c.0.s8 %v7653
        %v7655 = vlaneseq
        %v7656 = vshrl.u32 %v7655, 7
        %v7657 = vsub.s32 %v7654, %v7656
        %v7658 = vrot.slane %v7650, %v7657
        %v7660 = vunpack.c.l.s4 1934713408
        %v7661 = vunpack.c.0.s8 %v7660
        %v7662 = vlaneseq
        %v7663 = vshrl.u32 %v7662, 7
        %v7664 = vsub.s32 %v7661, %v7663
        %v7665 = vrot.slane %v7651, %v7664
        %v7666 = vcombine.low %v7642, %v7658
        %v7667 = vcombine.high %v7642, %v7658
        %v7668 = vcombine.low %v7649, %v7665
        %v7669 = vcombine.high %v7649, %v7665
        %v7670 = vcombine.low %v7166, %v7173
        %v7672 = vunpack.c.l.s4 1983009808
        %v7673 = vunpack.c.0.s8 %v7672
        %v7674 = vlaneseq
        %v7675 = vshrl.u32 %v7674, 7
        %v7676 = vsub.s32 %v7673, %v7675
        %v7677 = vrot.slane %v7670, %v7676
        %v7678 = vcombine.low %v7190, %v7191
        %v7680 = vunpack.c.l.s4 1983009808
        %v7681 = vunpack.c.0.s8 %v7680
        %v7682 = vlaneseq
        %v7683 = vshrl.u32 %v7682, 7
        %v7684 = vsub.s32 %v7681, %v7683
        %v7685 = vrot.slane %v7678, %v7684
        %v7686 = vcombine.low %v7182, %v7189
        %v7688 = vunpack.c.l.s4 1983009808
        %v7689 = vunpack.c.0.s8 %v7688
        %v7690 = vlaneseq
        %v7691 = vshrl.u32 %v7690, 7
        %v7692 = vsub.s32 %v7689, %v7691
        %v7693 = vrot.slane %v7686, %v7692
        %v7694 = vcombine.low %v7192, %v7193
        %v7696 = vunpack.c.l.s4 1983009808
        %v7697 = vunpack.c.0.s8 %v7696
        %v7698 = vlaneseq
        %v7699 = vshrl.u32 %v7698, 7
        %v7700 = vsub.s32 %v7697, %v7699
        %v7701 = vrot.slane %v7694, %v7700
        %v7702 = vcombine.low %v7677, %v7685
        %v7703 = vcombine.high %v7677, %v7685
        %v7705 = vunpack.c.l.s4 1934713408
        %v7706 = vunpack.c.0.s8 %v7705
        %v7707 = vlaneseq
        %v7708 = vshrl.u32 %v7707, 7
        %v7709 = vsub.s32 %v7706, %v7708
        %v7710 = vrot.slane %v7702, %v7709
        %v7712 = vunpack.c.l.s4 1934713408
        %v7713 = vunpack.c.0.s8 %v7712
        %v7714 = vlaneseq
        %v7715 = vshrl.u32 %v7714, 7
        %v7716 = vsub.s32 %v7713, %v7715
        %v7717 = vrot.slane %v7703, %v7716
        %v7718 = vcombine.low %v7693, %v7701
        %v7719 = vcombine.high %v7693, %v7701
        %v7721 = vunpack.c.l.s4 1934713408
        %v7722 = vunpack.c.0.s8 %v7721
        %v7723 = vlaneseq
        %v7724 = vshrl.u32 %v7723, 7
        %v7725 = vsub.s32 %v7722, %v7724
        %v7726 = vrot.slane %v7718, %v7725
        %v7728 = vunpack.c.l.s4 1934713408
        %v7729 = vunpack.c.0.s8 %v7728
        %v7730 = vlaneseq
        %v7731 = vshrl.u32 %v7730, 7
        %v7732 = vsub.s32 %v7729, %v7731
        %v7733 = vrot.slane %v7719, %v7732
        %v7734 = vcombine.low %v7710, %v7726
        %v7735 = vcombine.high %v7710, %v7726
        %v7736 = vcombine.low %v7717, %v7733
        %v7737 = vcombine.high %v7717, %v7733
        %v7738 = vcombine.low %v7234, %v7241
        %v7740 = vunpack.c.l.s4 1983009808
        %v7741 = vunpack.c.0.s8 %v7740
        %v7742 = vlaneseq
        %v7743 = vshrl.u32 %v7742, 7
        %v7744 = vsub.s32 %v7741, %v7743
        %v7745 = vrot.slane %v7738, %v7744
        %v7746 = vcombine.low %v7258, %v7259
        %v7748 = vunpack.c.l.s4 1983009808
        %v7749 = vunpack.c.0.s8 %v7748
        %v7750 = vlaneseq
        %v7751 = vshrl.u32 %v7750, 7
        %v7752 = vsub.s32 %v7749, %v7751
        %v7753 = vrot.slane %v7746, %v7752
        %v7754 = vcombine.low %v7250, %v7257
        %v7756 = vunpack.c.l.s4 1983009808
        %v7757 = vunpack.c.0.s8 %v7756
        %v7758 = vlaneseq
        %v7759 = vshrl.u32 %v7758, 7
        %v7760 = vsub.s32 %v7757, %v7759
        %v7761 = vrot.slane %v7754, %v7760
        %v7762 = vcombine.low %v7260, %v7261
        %v7764 = vunpack.c.l.s4 1983009808
        %v7765 = vunpack.c.0.s8 %v7764
        %v7766 = vlaneseq
        %v7767 = vshrl.u32 %v7766, 7
        %v7768 = vsub.s32 %v7765, %v7767
        %v7769 = vrot.slane %v7762, %v7768
        %v7770 = vcombine.low %v7745, %v7753
        %v7771 = vcombine.high %v7745, %v7753
        %v7773 = vunpack.c.l.s4 1934713408
        %v7774 = vunpack.c.0.s8 %v7773
        %v7775 = vlaneseq
        %v7776 = vshrl.u32 %v7775, 7
        %v7777 = vsub.s32 %v7774, %v7776
        %v7778 = vrot.slane %v7770, %v7777
        %v7780 = vunpack.c.l.s4 1934713408
        %v7781 = vunpack.c.0.s8 %v7780
        %v7782 = vlaneseq
        %v7783 = vshrl.u32 %v7782, 7
        %v7784 = vsub.s32 %v7781, %v7783
        %v7785 = vrot.slane %v7771, %v7784
        %v7786 = vcombine.low %v7761, %v7769
        %v7787 = vcombine.high %v7761, %v7769
        %v7789 = vunpack.c.l.s4 1934713408
        %v7790 = vunpack.c.0.s8 %v7789
        %v7791 = vlaneseq
        %v7792 = vshrl.u32 %v7791, 7
        %v7793 = vsub.s32 %v7790, %v7792
        %v7794 = vrot.slane %v7786, %v7793
        %v7796 = vunpack.c.l.s4 1934713408
        %v7797 = vunpack.c.0.s8 %v7796
        %v7798 = vlaneseq
        %v7799 = vshrl.u32 %v7798, 7
        %v7800 = vsub.s32 %v7797, %v7799
        %v7801 = vrot.slane %v7787, %v7800
        %v7802 = vcombine.low %v7778, %v7794
        %v7803 = vcombine.high %v7778, %v7794
        %v7804 = vcombine.low %v7785, %v7801
        %v7805 = vcombine.high %v7785, %v7801
        %v7806 = vcombine.low %v7302, %v7309
        %v7808 = vunpack.c.l.s4 1983009808
        %v7809 = vunpack.c.0.s8 %v7808
        %v7810 = vlaneseq
        %v7811 = vshrl.u32 %v7810, 7
        %v7812 = vsub.s32 %v7809, %v7811
        %v7813 = vrot.slane %v7806, %v7812
        %v7814 = vcombine.low %v7326, %v7327
        %v7816 = vunpack.c.l.s4 1983009808
        %v7817 = vunpack.c.0.s8 %v7816
        %v7818 = vlaneseq
        %v7819 = vshrl.u32 %v7818, 7
        %v7820 = vsub.s32 %v7817, %v7819
        %v7821 = vrot.slane %v7814, %v7820
        %v7822 = vcombine.low %v7318, %v7325
        %v7824 = vunpack.c.l.s4 1983009808
        %v7825 = vunpack.c.0.s8 %v7824
        %v7826 = vlaneseq
        %v7827 = vshrl.u32 %v7826, 7
        %v7828 = vsub.s32 %v7825, %v7827
        %v7829 = vrot.slane %v7822, %v7828
        %v7830 = vcombine.low %v7328, %v7329
        %v7832 = vunpack.c.l.s4 1983009808
        %v7833 = vunpack.c.0.s8 %v7832
        %v7834 = vlaneseq
        %v7835 = vshrl.u32 %v7834, 7
        %v7836 = vsub.s32 %v7833, %v7835
        %v7837 = vrot.slane %v7830, %v7836
        %v7838 = vcombine.low %v7813, %v7821
        %v7839 = vcombine.high %v7813, %v7821
        %v7841 = vunpack.c.l.s4 1934713408
        %v7842 = vunpack.c.0.s8 %v7841
        %v7843 = vlaneseq
        %v7844 = vshrl.u32 %v7843, 7
        %v7845 = vsub.s32 %v7842, %v7844
        %v7846 = vrot.slane %v7838, %v7845
        %v7848 = vunpack.c.l.s4 1934713408
        %v7849 = vunpack.c.0.s8 %v7848
        %v7850 = vlaneseq
        %v7851 = vshrl.u32 %v7850, 7
        %v7852 = vsub.s32 %v7849, %v7851
        %v7853 = vrot.slane %v7839, %v7852
        %v7854 = vcombine.low %v7829, %v7837
        %v7855 = vcombine.high %v7829, %v7837
        %v7857 = vunpack.c.l.s4 1934713408
        %v7858 = vunpack.c.0.s8 %v7857
        %v7859 = vlaneseq
        %v7860 = vshrl.u32 %v7859, 7
        %v7861 = vsub.s32 %v7858, %v7860
        %v7862 = vrot.slane %v7854, %v7861
        %v7864 = vunpack.c.l.s4 1934713408
        %v7865 = vunpack.c.0.s8 %v7864
        %v7866 = vlaneseq
        %v7867 = vshrl.u32 %v7866, 7
        %v7868 = vsub.s32 %v7865, %v7867
        %v7869 = vrot.slane %v7855, %v7868
        %v7870 = vcombine.low %v7846, %v7862
        %v7871 = vcombine.high %v7846, %v7862
        %v7872 = vcombine.low %v7853, %v7869
        %v7873 = vcombine.high %v7853, %v7869
        %v7874 = vcombine.low %v7370, %v7377
        %v7876 = vunpack.c.l.s4 1983009808
        %v7877 = vunpack.c.0.s8 %v7876
        %v7878 = vlaneseq
        %v7879 = vshrl.u32 %v7878, 7
        %v7880 = vsub.s32 %v7877, %v7879
        %v7881 = vrot.slane %v7874, %v7880
        %v7882 = vcombine.low %v7394, %v7395
        %v7884 = vunpack.c.l.s4 1983009808
        %v7885 = vunpack.c.0.s8 %v7884
        %v7886 = vlaneseq
        %v7887 = vshrl.u32 %v7886, 7
        %v7888 = vsub.s32 %v7885, %v7887
        %v7889 = vrot.slane %v7882, %v7888
        %v7890 = vcombine.low %v7386, %v7393
        %v7892 = vunpack.c.l.s4 1983009808
        %v7893 = vunpack.c.0.s8 %v7892
        %v7894 = vlaneseq
        %v7895 = vshrl.u32 %v7894, 7
        %v7896 = vsub.s32 %v7893, %v7895
        %v7897 = vrot.slane %v7890, %v7896
        %v7898 = vcombine.low %v7396, %v7397
        %v7900 = vunpack.c.l.s4 1983009808
        %v7901 = vunpack.c.0.s8 %v7900
        %v7902 = vlaneseq
        %v7903 = vshrl.u32 %v7902, 7
        %v7904 = vsub.s32 %v7901, %v7903
        %v7905 = vrot.slane %v7898, %v7904
        %v7906 = vcombine.low %v7881, %v7889
        %v7907 = vcombine.high %v7881, %v7889
        %v7909 = vunpack.c.l.s4 1934713408
        %v7910 = vunpack.c.0.s8 %v7909
        %v7911 = vlaneseq
        %v7912 = vshrl.u32 %v7911, 7
        %v7913 = vsub.s32 %v7910, %v7912
        %v7914 = vrot.slane %v7906, %v7913
        %v7916 = vunpack.c.l.s4 1934713408
        %v7917 = vunpack.c.0.s8 %v7916
        %v7918 = vlaneseq
        %v7919 = vshrl.u32 %v7918, 7
        %v7920 = vsub.s32 %v7917, %v7919
        %v7921 = vrot.slane %v7907, %v7920
        %v7922 = vcombine.low %v7897, %v7905
        %v7923 = vcombine.high %v7897, %v7905
        %v7925 = vunpack.c.l.s4 1934713408
        %v7926 = vunpack.c.0.s8 %v7925
        %v7927 = vlaneseq
        %v7928 = vshrl.u32 %v7927, 7
        %v7929 = vsub.s32 %v7926, %v7928
        %v7930 = vrot.slane %v7922, %v7929
        %v7932 = vunpack.c.l.s4 1934713408
        %v7933 = vunpack.c.0.s8 %v7932
        %v7934 = vlaneseq
        %v7935 = vshrl.u32 %v7934, 7
        %v7936 = vsub.s32 %v7933, %v7935
        %v7937 = vrot.slane %v7923, %v7936
        %v7938 = vcombine.low %v7914, %v7930
        %v7939 = vcombine.high %v7914, %v7930
        %v7940 = vcombine.low %v7921, %v7937
        %v7941 = vcombine.high %v7921, %v7937
        %v7942 = vcombine.low %v7438, %v7445
        %v7944 = vunpack.c.l.s4 1983009808
        %v7945 = vunpack.c.0.s8 %v7944
        %v7946 = vlaneseq
        %v7947 = vshrl.u32 %v7946, 7
        %v7948 = vsub.s32 %v7945, %v7947
        %v7949 = vrot.slane %v7942, %v7948
        %v7950 = vcombine.low %v7462, %v7463
        %v7952 = vunpack.c.l.s4 1983009808
        %v7953 = vunpack.c.0.s8 %v7952
        %v7954 = vlaneseq
        %v7955 = vshrl.u32 %v7954, 7
        %v7956 = vsub.s32 %v7953, %v7955
        %v7957 = vrot.slane %v7950, %v7956
        %v7958 = vcombine.low %v7454, %v7461
        %v7960 = vunpack.c.l.s4 1983009808
        %v7961 = vunpack.c.0.s8 %v7960
        %v7962 = vlaneseq
        %v7963 = vshrl.u32 %v7962, 7
        %v7964 = vsub.s32 %v7961, %v7963
        %v7965 = vrot.slane %v7958, %v7964
        %v7966 = vcombine.low %v7464, %v7465
        %v7968 = vunpack.c.l.s4 1983009808
        %v7969 = vunpack.c.0.s8 %v7968
        %v7970 = vlaneseq
        %v7971 = vshrl.u32 %v7970, 7
        %v7972 = vsub.s32 %v7969, %v7971
        %v7973 = vrot.slane %v7966, %v7972
        %v7974 = vcombine.low %v7949, %v7957
        %v7975 = vcombine.high %v7949, %v7957
        %v7977 = vunpack.c.l.s4 1934713408
        %v7978 = vunpack.c.0.s8 %v7977
        %v7979 = vlaneseq
        %v7980 = vshrl.u32 %v7979, 7
        %v7981 = vsub.s32 %v7978, %v7980
        %v7982 = vrot.slane %v7974, %v7981
        %v7984 = vunpack.c.l.s4 1934713408
        %v7985 = vunpack.c.0.s8 %v7984
        %v7986 = vlaneseq
        %v7987 = vshrl.u32 %v7986, 7
        %v7988 = vsub.s32 %v7985, %v7987
        %v7989 = vrot.slane %v7975, %v7988
        %v7990 = vcombine.low %v7965, %v7973
        %v7991 = vcombine.high %v7965, %v7973
        %v7993 = vunpack.c.l.s4 1934713408
        %v7994 = vunpack.c.0.s8 %v7993
        %v7995 = vlaneseq
        %v7996 = vshrl.u32 %v7995, 7
        %v7997 = vsub.s32 %v7994, %v7996
        %v7998 = vrot.slane %v7990, %v7997
        %v8000 = vunpack.c.l.s4 1934713408
        %v8001 = vunpack.c.0.s8 %v8000
        %v8002 = vlaneseq
        %v8003 = vshrl.u32 %v8002, 7
        %v8004 = vsub.s32 %v8001, %v8003
        %v8005 = vrot.slane %v7991, %v8004
        %v8006 = vcombine.low %v7982, %v7998
        %v8007 = vcombine.high %v7982, %v7998
        %v8008 = vcombine.low %v7989, %v8005
        %v8009 = vcombine.high %v7989, %v8005
        %v8010 = vcombine.low %v7506, %v7513
        %v8012 = vunpack.c.l.s4 1983009808
        %v8013 = vunpack.c.0.s8 %v8012
        %v8014 = vlaneseq
        %v8015 = vshrl.u32 %v8014, 7
        %v8016 = vsub.s32 %v8013, %v8015
        %v8017 = vrot.slane %v8010, %v8016
        %v8018 = vcombine.low %v7530, %v7531
        %v8020 = vunpack.c.l.s4 1983009808
        %v8021 = vunpack.c.0.s8 %v8020
        %v8022 = vlaneseq
        %v8023 = vshrl.u32 %v8022, 7
        %v8024 = vsub.s32 %v8021, %v8023
        %v8025 = vrot.slane %v8018, %v8024
        %v8026 = vcombine.low %v7522, %v7529
        %v8028 = vunpack.c.l.s4 1983009808
        %v8029 = vunpack.c.0.s8 %v8028
        %v8030 = vlaneseq
        %v8031 = vshrl.u32 %v8030, 7
        %v8032 = vsub.s32 %v8029, %v8031
        %v8033 = vrot.slane %v8026, %v8032
        %v8034 = vcombine.low %v7532, %v7533
        %v8036 = vunpack.c.l.s4 1983009808
        %v8037 = vunpack.c.0.s8 %v8036
        %v8038 = vlaneseq
        %v8039 = vshrl.u32 %v8038, 7
        %v8040 = vsub.s32 %v8037, %v8039
        %v8041 = vrot.slane %v8034, %v8040
        %v8042 = vcombine.low %v8017, %v8025
        %v8043 = vcombine.high %v8017, %v8025
        %v8045 = vunpack.c.l.s4 1934713408
        %v8046 = vunpack.c.0.s8 %v8045
        %v8047 = vlaneseq
        %v8048 = vshrl.u32 %v8047, 7
        %v8049 = vsub.s32 %v8046, %v8048
        %v8050 = vrot.slane %v8042, %v8049
        %v8052 = vunpack.c.l.s4 1934713408
        %v8053 = vunpack.c.0.s8 %v8052
        %v8054 = vlaneseq
        %v8055 = vshrl.u32 %v8054, 7
        %v8056 = vsub.s32 %v8053, %v8055
        %v8057 = vrot.slane %v8043, %v8056
        %v8058 = vcombine.low %v8033, %v8041
        %v8059 = vcombine.high %v8033, %v8041
        %v8061 = vunpack.c.l.s4 1934713408
        %v8062 = vunpack.c.0.s8 %v8061
        %v8063 = vlaneseq
        %v8064 = vshrl.u32 %v8063, 7
        %v8065 = vsub.s32 %v8062, %v8064
        %v8066 = vrot.slane %v8058, %v8065
        %v8068 = vunpack.c.l.s4 1934713408
        %v8069 = vunpack.c.0.s8 %v8068
        %v8070 = vlaneseq
        %v8071 = vshrl.u32 %v8070, 7
        %v8072 = vsub.s32 %v8069, %v8071
        %v8073 = vrot.slane %v8059, %v8072
        %v8074 = vcombine.low %v8050, %v8066
        %v8075 = vcombine.high %v8050, %v8066
        %v8076 = vcombine.low %v8057, %v8073
        %v8077 = vcombine.high %v8057, %v8073
        %v8078 = vcombine.low %v7574, %v7581
        %v8080 = vunpack.c.l.s4 1983009808
        %v8081 = vunpack.c.0.s8 %v8080
        %v8082 = vlaneseq
        %v8083 = vshrl.u32 %v8082, 7
        %v8084 = vsub.s32 %v8081, %v8083
        %v8085 = vrot.slane %v8078, %v8084
        %v8086 = vcombine.low %v7598, %v7599
        %v8088 = vunpack.c.l.s4 1983009808
        %v8089 = vunpack.c.0.s8 %v8088
        %v8090 = vlaneseq
        %v8091 = vshrl.u32 %v8090, 7
        %v8092 = vsub.s32 %v8089, %v8091
        %v8093 = vrot.slane %v8086, %v8092
        %v8094 = vcombine.low %v7590, %v7597
        %v8096 = vunpack.c.l.s4 1983009808
        %v8097 = vunpack.c.0.s8 %v8096
        %v8098 = vlaneseq
        %v8099 = vshrl.u32 %v8098, 7
        %v8100 = vsub.s32 %v8097, %v8099
        %v8101 = vrot.slane %v8094, %v8100
        %v8102 = vcombine.low %v7600, %v7601
        %v8104 = vunpack.c.l.s4 1983009808
        %v8105 = vunpack.c.0.s8 %v8104
        %v8106 = vlaneseq
        %v8107 = vshrl.u32 %v8106, 7
        %v8108 = vsub.s32 %v8105, %v8107
        %v8109 = vrot.slane %v8102, %v8108
        %v8110 = vcombine.low %v8085, %v8093
        %v8111 = vcombine.high %v8085, %v8093
        %v8113 = vunpack.c.l.s4 1934713408
        %v8114 = vunpack.c.0.s8 %v8113
        %v8115 = vlaneseq
        %v8116 = vshrl.u32 %v8115, 7
        %v8117 = vsub.s32 %v8114, %v8116
        %v8118 = vrot.slane %v8110, %v8117
        %v8120 = vunpack.c.l.s4 1934713408
        %v8121 = vunpack.c.0.s8 %v8120
        %v8122 = vlaneseq
        %v8123 = vshrl.u32 %v8122, 7
        %v8124 = vsub.s32 %v8121, %v8123
        %v8125 = vrot.slane %v8111, %v8124
        %v8126 = vcombine.low %v8101, %v8109
        %v8127 = vcombine.high %v8101, %v8109
        %v8129 = vunpack.c.l.s4 1934713408
        %v8130 = vunpack.c.0.s8 %v8129
        %v8131 = vlaneseq
        %v8132 = vshrl.u32 %v8131, 7
        %v8133 = vsub.s32 %v8130, %v8132
        %v8134 = vrot.slane %v8126, %v8133
        %v8136 = vunpack.c.l.s4 1934713408
        %v8137 = vunpack.c.0.s8 %v8136
        %v8138 = vlaneseq
        %v8139 = vshrl.u32 %v8138, 7
        %v8140 = vsub.s32 %v8137, %v8139
        %v8141 = vrot.slane %v8127, %v8140
        %v8142 = vcombine.low %v8118, %v8134
        %v8143 = vcombine.high %v8118, %v8134
        %v8144 = vcombine.low %v8125, %v8141
        %v8145 = vcombine.high %v8125, %v8141
        %v8148 = vpack.i.b16 %v7734, %v7666
        %v8149 = vshrl.u32 %v7666, 16
        %v8150 = vshrl.u32 %v7734, 16
        %v8151 = vpack.i.b16 %v8150, %v8149
        %v8154 = vpack.i.b16 %v7735, %v7667
        %v8155 = vshrl.u32 %v7667, 16
        %v8156 = vshrl.u32 %v7735, 16
        %v8157 = vpack.i.b16 %v8156, %v8155
        %v8160 = vpack.i.b16 %v7736, %v7668
        %v8161 = vshrl.u32 %v7668, 16
        %v8162 = vshrl.u32 %v7736, 16
        %v8163 = vpack.i.b16 %v8162, %v8161
        %v8166 = vpack.i.b16 %v7737, %v7669
        %v8167 = vshrl.u32 %v7669, 16
        %v8168 = vshrl.u32 %v7737, 16
        %v8169 = vpack.i.b16 %v8168, %v8167
        %v8172 = vpack.i.b16 %v7870, %v7802
        %v8173 = vshrl.u32 %v7802, 16
        %v8174 = vshrl.u32 %v7870, 16
        %v8175 = vpack.i.b16 %v8174, %v8173
        %v8178 = vpack.i.b16 %v7871, %v7803
        %v8179 = vshrl.u32 %v7803, 16
        %v8180 = vshrl.u32 %v7871, 16
        %v8181 = vpack.i.b16 %v8180, %v8179
        %v8184 = vpack.i.b16 %v7872, %v7804
        %v8185 = vshrl.u32 %v7804, 16
        %v8186 = vshrl.u32 %v7872, 16
        %v8187 = vpack.i.b16 %v8186, %v8185
        %v8190 = vpack.i.b16 %v7873, %v7805
        %v8191 = vshrl.u32 %v7805, 16
        %v8192 = vshrl.u32 %v7873, 16
        %v8193 = vpack.i.b16 %v8192, %v8191
        %v8196 = vpack.i.b16 %v8006, %v7938
        %v8197 = vshrl.u32 %v7938, 16
        %v8198 = vshrl.u32 %v8006, 16
        %v8199 = vpack.i.b16 %v8198, %v8197
        %v8202 = vpack.i.b16 %v8007, %v7939
        %v8203 = vshrl.u32 %v7939, 16
        %v8204 = vshrl.u32 %v8007, 16
        %v8205 = vpack.i.b16 %v8204, %v8203
        %v8208 = vpack.i.b16 %v8008, %v7940
        %v8209 = vshrl.u32 %v7940, 16
        %v8210 = vshrl.u32 %v8008, 16
        %v8211 = vpack.i.b16 %v8210, %v8209
        %v8214 = vpack.i.b16 %v8009, %v7941
        %v8215 = vshrl.u32 %v7941, 16
        %v8216 = vshrl.u32 %v8009, 16
        %v8217 = vpack.i.b16 %v8216, %v8215
        %v8220 = vpack.i.b16 %v8142, %v8074
        %v8221 = vshrl.u32 %v8074, 16
        %v8222 = vshrl.u32 %v8142, 16
        %v8223 = vpack.i.b16 %v8222, %v8221
        %v8226 = vpack.i.b16 %v8143, %v8075
        %v8227 = vshrl.u32 %v8075, 16
        %v8228 = vshrl.u32 %v8143, 16
        %v8229 = vpack.i.b16 %v8228, %v8227
        %v8232 = vpack.i.b16 %v8144, %v8076
        %v8233 = vshrl.u32 %v8076, 16
        %v8234 = vshrl.u32 %v8144, 16
        %v8235 = vpack.i.b16 %v8234, %v8233
        %v8238 = vpack.i.b16 %v8145, %v8077
        %v8239 = vshrl.u32 %v8077, 16
        %v8240 = vshrl.u32 %v8145, 16
        %v8241 = vpack.i.b16 %v8240, %v8239
        %8242 = vrot.lane.b32.xlu0 %v8151, 8
        %v8243 = vpop.permute.xlu0 %8242
        %8244 = vrot.lane.b32.xlu0 %v8175, 8
        %v8245 = vpop.permute.xlu0 %8244
        %8246 = vrot.lane.b32.xlu0 %v8199, 8
        %v8247 = vpop.permute.xlu0 %8246
        %8248 = vrot.lane.b32.xlu0 %v8223, 8
        %v8249 = vpop.permute.xlu0 %8248
        %8250 = vrot.lane.b32.xlu0 %v8154, 16
        %v8251 = vpop.permute.xlu0 %8250
        %8252 = vrot.lane.b32.xlu0 %v8178, 16
        %v8253 = vpop.permute.xlu0 %8252
        %8254 = vrot.lane.b32.xlu0 %v8202, 16
        %v8255 = vpop.permute.xlu0 %8254
        %8256 = vrot.lane.b32.xlu0 %v8226, 16
        %v8257 = vpop.permute.xlu0 %8256
        %8258 = vrot.lane.b32.xlu0 %v8157, 24
        %v8259 = vpop.permute.xlu0 %8258
        %8260 = vrot.lane.b32.xlu0 %v8181, 24
        %v8261 = vpop.permute.xlu0 %8260
        %8262 = vrot.lane.b32.xlu0 %v8205, 24
        %v8263 = vpop.permute.xlu0 %8262
        %8264 = vrot.lane.b32.xlu0 %v8229, 24
        %v8265 = vpop.permute.xlu0 %8264
        %8266 = vrot.lane.b32.xlu0 %v8160, 32
        %v8267 = vpop.permute.xlu0 %8266
        %8268 = vrot.lane.b32.xlu0 %v8184, 32
        %v8269 = vpop.permute.xlu0 %8268
        %8270 = vrot.lane.b32.xlu0 %v8208, 32
        %v8271 = vpop.permute.xlu0 %8270
        %8272 = vrot.lane.b32.xlu0 %v8232, 32
        %v8273 = vpop.permute.xlu0 %8272
        %8274 = vrot.lane.b32.xlu0 %v8163, 40
        %v8275 = vpop.permute.xlu0 %8274
        %8276 = vrot.lane.b32.xlu0 %v8187, 40
        %v8277 = vpop.permute.xlu0 %8276
        %8278 = vrot.lane.b32.xlu0 %v8211, 40
        %v8279 = vpop.permute.xlu0 %8278
        %8280 = vrot.lane.b32.xlu0 %v8235, 40
        %v8281 = vpop.permute.xlu0 %8280
        %8282 = vrot.lane.b32.xlu0 %v8166, 48
        %v8283 = vpop.permute.xlu0 %8282
        %8284 = vrot.lane.b32.xlu0 %v8190, 48
        %v8285 = vpop.permute.xlu0 %8284
        %8286 = vrot.lane.b32.xlu0 %v8214, 48
        %v8287 = vpop.permute.xlu0 %8286
        %8288 = vrot.lane.b32.xlu0 %v8238, 48
        %v8289 = vpop.permute.xlu0 %8288
        %8290 = vrot.lane.b32.xlu0 %v8169, 56
        %v8291 = vpop.permute.xlu0 %8290
        %8292 = vrot.lane.b32.xlu0 %v8193, 56
        %v8293 = vpop.permute.xlu0 %8292
        %8294 = vrot.lane.b32.xlu0 %v8217, 56
        %v8295 = vpop.permute.xlu0 %8294
        %8296 = vrot.lane.b32.xlu0 %v8241, 56
        %v8297 = vpop.permute.xlu0 %8296
        %v8300 = vsel %vm4833, %v8148, %v8243
        %v8303 = vsel %vm4833, %v8172, %v8245
        %v8306 = vsel %vm4833, %v8196, %v8247
        %v8309 = vsel %vm4833, %v8220, %v8249
        %vm8310 = vcmask 130048
        %v8312 = vsel %vm8310, %v8300, %v8251
        %v8314 = vsel %vm8310, %v8303, %v8253
        %v8316 = vsel %vm8310, %v8306, %v8255
        %v8318 = vsel %vm8310, %v8309, %v8257
        %vm8319 = vcmask 195584
        %v8321 = vsel %vm8319, %v8312, %v8259
        %v8323 = vsel %vm8319, %v8314, %v8261
        %v8325 = vsel %vm8319, %v8316, %v8263
        %v8327 = vsel %vm8319, %v8318, %v8265
        %vm8328 = vcmask 261120
        %v8330 = vsel %vm8328, %v8321, %v8267
        %v8332 = vsel %vm8328, %v8323, %v8269
        %v8334 = vsel %vm8328, %v8325, %v8271
        %v8336 = vsel %vm8328, %v8327, %v8273
        %vm8337 = vcmask 326656
        %v8339 = vsel %vm8337, %v8330, %v8275
        %v8341 = vsel %vm8337, %v8332, %v8277
        %v8343 = vsel %vm8337, %v8334, %v8279
        %v8345 = vsel %vm8337, %v8336, %v8281
        %vm8346 = vcmask 392192
        %v8348 = vsel %vm8346, %v8339, %v8283
        %v8350 = vsel %vm8346, %v8341, %v8285
        %v8352 = vsel %vm8346, %v8343, %v8287
        %v8354 = vsel %vm8346, %v8345, %v8289
        %vm8355 = vcmask 457728
        %v8357 = vsel %vm8355, %v8348, %v8291
        %v8359 = vsel %vm8355, %v8350, %v8293
        %v8361 = vsel %vm8355, %v8352, %v8295
        %v8363 = vsel %vm8355, %v8354, %v8297
        %v8364 = vld [vmem:[#allocation10] sm:$0xf]
        %v8365 = vld [vmem:[#allocation10 + $0x4] sm:$0xf]
        %v8366 = vld [vmem:[#allocation10 + $0x8] sm:$0xf]
        %v8367 = vld [vmem:[#allocation10 + $0xc] sm:$0xf]
        %v8368 = vld [vmem:[#allocation10 + $0x10] sm:$0xf]
        %v8369 = vld [vmem:[#allocation10 + $0x14] sm:$0xf]
        %v8370 = vld [vmem:[#allocation10 + $0x18] sm:$0xf]
        %v8371 = vld [vmem:[#allocation10 + $0x1c] sm:$0xf]
        %v8372 = vld [vmem:[%s7] sm:$0x1]
        %v8374 = vlaneseq
        %v8375 = vshrl.u32 %v8374, 7
        %v8376 = vsub.s32 0, %v8375
        %v8377 = vrot.slane %v8372, %v8376
        %v8387 = vunpack.c.l.b16 %v8364
        %v8388 = vunpack.c.l.b16 %v8365
        %v8389 = vunpack.c.l.b16 %v8366
        %v8390 = vunpack.c.l.b16 %v8367
        %v8391 = vunpack.c.l.b16 %v8368
        %v8392 = vunpack.c.l.b16 %v8369
        %v8393 = vunpack.c.l.b16 %v8370
        %v8394 = vunpack.c.l.b16 %v8371
        %v8395 = vpack.c.b16 %v8388, %v8387
        %v8396 = vpack.c.b16 %v8390, %v8389
        %v8397 = vpack.c.b16 %v8392, %v8391
        %v8398 = vpack.c.b16 %v8394, %v8393
        %v8403 = vsel %vm471, %v8357, 0
        %v8405 = vsel %vm471, %v8359, 0
        %v8407 = vsel %vm471, %v8361, 0
        %v8409 = vsel %vm471, %v8363, 0
        %8411 = vmatprep.subr.bf16.mxu0 0
        %8412 = vmatpush1.bf16.msra.mxu0 %v8395
        %8413 = vmatprep.subr.bf16.mxu0 0
        %8414 = vmatpush1.bf16.msra.mxu0 %v8396
        %8415 = vmatprep.subr.bf16.mxu0 0
        %8416 = vmatpush1.bf16.msra.mxu0 %v8397
        %8417 = vmatprep.subr.bf16.mxu0 0
        %8418 = vmatpush1.bf16.msra.mxu0 %v8398
        %8419 = vmatprep.subr.bf16.mxu0 0
        %8420 = vmatpush1.bf16.msra.mxu0 0
        %8421 = vmatprep.subr.bf16.mxu0 0
        %8422 = vmatpush1.bf16.msra.mxu0 0
        %8423 = vmatprep.subr.bf16.mxu0 0
        %8424 = vmatpush1.bf16.msra.mxu0 0
        %8425 = vmatprep.subr.bf16.mxu0 0
        %8426 = vmatpush1.bf16.msra.mxu0 0
        %8427 = vmatprep.subr.bf16.mxu0 0
        %8428 = vmatpush1.bf16.msra.mxu0 0
        %8429 = vmatprep.subr.bf16.mxu0 0
        %8430 = vmatpush1.bf16.msra.mxu0 0
        %8431 = vmatprep.subr.bf16.mxu0 0
        %8432 = vmatpush1.bf16.msra.mxu0 0
        %8433 = vmatprep.subr.bf16.mxu0 0
        %8434 = vmatpush1.bf16.msra.mxu0 0
        %8435 = vmatprep.subr.bf16.mxu0 0
        %8436 = vmatpush1.bf16.msra.mxu0 0
        %8437 = vmatprep.subr.bf16.mxu0 0
        %8438 = vmatpush1.bf16.msra.mxu0 0
        %8439 = vmatprep.subr.bf16.mxu0 0
        %8440 = vmatpush1.bf16.msra.mxu0 0
        %8441 = vmatprep.subr.bf16.mxu0 0
        %8442 = vmatpush1.bf16.msra.mxu0 0
        %8443 = vmatprep.mubr.bf16.mxu0 0
        %8444 = vmatmul.mubr.bf16.gmra.mrb[0].mxu0 %v8403
        %v8445 = vpop.f32.mrb[0].mxu0
        %v8446 = vadd.f32 %v8377, %v8445
        %v8447 = vpop.f32.mrb[0].mxu0
        %v8448 = vpop.f32.mrb[0].mxu0
        %v8449 = vadd.f32 %v8377, %v8448
        %v8450 = vpop.f32.mrb[0].mxu0
        %8451 = vmatprep.mubr.bf16.mxu0 0
        %8452 = vmatmul.mubr.bf16.gmra.mrb[0].mxu0 %v8405
        %v8453 = vpop.f32.mrb[0].mxu0
        %v8454 = vadd.f32 %v8377, %v8453
        %v8455 = vpop.f32.mrb[0].mxu0
        %v8456 = vpop.f32.mrb[0].mxu0
        %v8457 = vadd.f32 %v8377, %v8456
        %v8458 = vpop.f32.mrb[0].mxu0
        %8459 = vmatprep.mubr.bf16.mxu0 0
        %8460 = vmatmul.mubr.bf16.gmra.mrb[0].mxu0 %v8407
        %v8461 = vpop.f32.mrb[0].mxu0
        %v8462 = vadd.f32 %v8377, %v8461
        %v8463 = vpop.f32.mrb[0].mxu0
        %v8464 = vpop.f32.mrb[0].mxu0
        %v8465 = vadd.f32 %v8377, %v8464
        %v8466 = vpop.f32.mrb[0].mxu0
        %8467 = vmatprep.mubr.bf16.mxu0 0
        %8468 = vmatmul.mubr.bf16.gmra.mrb[0].mxu0 %v8409
        %v8469 = vpop.f32.mrb[0].mxu0
        %v8470 = vadd.f32 %v8377, %v8469
        %v8471 = vpop.f32.mrb[0].mxu0
        %v8472 = vpop.f32.mrb[0].mxu0
        %v8473 = vadd.f32 %v8377, %v8472
        %v8474 = vpop.f32.mrb[0].mxu0
        %8475 = vdwg.mxu0
        %8476 = vst.msk [vmem:[%s406] sm:$0xff] %vm471, %v8446
        %8477 = vst.msk [vmem:[%s406 + $0x8] sm:$0xff] %vm471, %v8449
        %8478 = vst.msk [vmem:[%s406 + $0x10] sm:$0xff] %vm471, %v8454
        %8479 = vst.msk [vmem:[%s406 + $0x18] sm:$0xff] %vm471, %v8457
        %8480 = vst.msk [vmem:[%s406 + $0x20] sm:$0xff] %vm471, %v8462
        %8481 = vst.msk [vmem:[%s406 + $0x28] sm:$0xff] %vm471, %v8465
        %8482 = vst.msk [vmem:[%s406 + $0x30] sm:$0xff] %vm471, %v8470
        %8483 = vst.msk [vmem:[%s406 + $0x38] sm:$0xff] %vm471, %v8473
        %s8484 = sand.u32 %s215, 1
        %s8485 = scalar_lea.sflag [#allocation4], %s8484
        %s8486 = sand.u32 %s215, 1
        %s8487 = smul.addr %s8486, 64
        %s8488 = scalar_lea.vmem [#allocation11], %s8487
        // Predicated region
        $region73: #{tpu_custom_call.1} parent=51 // pred_check
          %p8489 = pneg %p225
        $region74: #{tpu_custom_call.1} parent=51 // pred_check_branch
          %8491 = sbr.rel (%p8489) target = $region76
        $region75: #{tpu_custom_call.1} parent=51 // pred_region
          %s8493 = ssub.s32 1024, 1024
          %8494 = vsyncadd %s8485, %s8493
          %s8495 = smul.addr %s29, 8
          %s8496 = smul.addr %s8495, 128
          %s8497 = scalar_lea.hbm %s8, %s8496
          %s8498 = sshll.u32 %s8488, 4
          %s8499 = int_to_ptr.vmem [resolvable:$true] %s8498
          %8504 = dma.vmem_to_hbm [thread:$0]  %s8499, 1024, %s8497, %s8485, 128, 128, 8
        $region76: #{tpu_custom_call.1} parent=51 // pred_fallthru
          _
      $region52: #{tpu_custom_call.1} parent=5 // pred_fallthru
        _
      %p8505 = scmp.le.s32.totalorder 2, %s24
      // Predicated region
      $region77: #{tpu_custom_call.1} parent=5 // pred_check
        %p8506 = pneg %p8505
      $region78: #{tpu_custom_call.1} parent=5 // pred_check_branch
        %8508 = sbr.rel (%p8506) target = $region80
      $region79: #{tpu_custom_call.1} parent=5 // pred_region
        %s8509 = ssub.s32 %s24, 2
        // Predicated region
        $region81: #{tpu_custom_call.1} parent=79 // pred_check
          %p8510 = pneg %p231
        $region82: #{tpu_custom_call.1} parent=79 // pred_check_branch
          %8512 = sbr.rel (%p8510) target = $region84
        $region83: #{tpu_custom_call.1} parent=79 // pred_region
          %s8513 = sand.u32 %s216, 1
          %s8514 = scalar_lea.sflag [#allocation4], %s8513
          %s8515 = sand.u32 %s216, 1
          %s8516 = smul.addr %s8515, 64
          %s8517 = scalar_lea.vmem [#allocation11], %s8516
          %8518 = dma.done %s8514, 1024
        $region84: #{tpu_custom_call.1} parent=79 // pred_fallthru
          _
      $region80: #{tpu_custom_call.1} parent=5 // pred_fallthru
        _
    $region6: #{tpu_custom_call.1} parent=1 // loop_footer
      %s28 = sadd.s32 1, %s24
    $region7: #{tpu_custom_call.1} parent=1 // loop_footer_branch
      %23 = sbr.rel target = $region3
    $region8: #{tpu_custom_call.1} parent=1 // loop_exit
      _
    %8519 = vsyncpa [#allocation3], 1
    %s8520 = scalar_lea.sflag [#allocation3], 1
    %8521 = vsyncpa %s8520, 1
    %8522 = vsyncpa [#allocation6], 1
    %s8523 = scalar_lea.sflag [#allocation6], 1
    %8524 = vsyncpa %s8523, 1
    %8525 = vsyncpa [#allocation9], 1
    %8526 = vsyncpa [#allocation4], 1
    %s8527 = scalar_lea.sflag [#allocation4], 1
    %8528 = vsyncpa %s8527, 1

</llo_original>
